<compile_context>
chip_gen: v7x
topology: tpu7x:2x2x1
jax: 0.10.0
libtpu: 0.0.40
codegen_flags: <defaults>
</compile_context>

<pallas_src>
import jax
import jax.numpy as jnp
from jax.experimental import pallas as pl
from jax.experimental.pallas import tpu as pltpu


_L_CHUNK = 128  # sequence-axis accumulation chunk (keeps per-tile f32 peak low)


# ------------------------------------------------------------------
# Shared in-kernel helpers
# ------------------------------------------------------------------
def _masked_sum_over_L(h_ref, lens_i32):
    """sum_{l < len[b]} h[b, l, :]  accumulated in f32.  h_ref: (tb, L, D)."""
    tb, L, D = h_ref.shape
    if L > _L_CHUNK and L % _L_CHUNK == 0:
        nchunks = L // _L_CHUNK

        def body(c, acc):
            l0 = pl.multiple_of(c * _L_CHUNK, _L_CHUNK)
            pos = jax.lax.broadcasted_iota(jnp.int32, (tb, _L_CHUNK, 1), 1) + l0
            valid = pos < lens_i32[:, None, :]                       # (tb, Lc, 1)
            hc = h_ref[:, pl.ds(l0, _L_CHUNK), :].astype(jnp.float32)
            return acc + jnp.sum(jnp.where(valid, hc, 0.0), axis=1)

        acc0 = jnp.zeros((tb, D), jnp.float32)
        return jax.lax.fori_loop(0, nchunks, body, acc0, unroll=True)

    pos = jax.lax.broadcasted_iota(jnp.int32, (tb, L, 1), 1)
    valid = pos < lens_i32[:, None, :]                               # (tb, L, 1)
    h = h_ref[...].astype(jnp.float32)
    return jnp.sum(jnp.where(valid, h, 0.0), axis=1)                 # (tb, D)


def _pool_normalize_tile(h_ref, len_ref):
    """Masked mean-pool + L2 normalize for one batch tile.

    The 1/count of the mean cancels under L2 normalization, so we normalize
    the masked sum directly (identical up to the 1e-12/1e-9 eps corner)."""
    lens = len_ref[...].astype(jnp.int32)                            # (tb, 1)
    s = _masked_sum_over_L(h_ref, lens)                              # (tb, D) f32
    sumsq = jnp.sum(s * s, axis=1, keepdims=True)                    # (tb, 1)
    inv_norm = jax.lax.rsqrt(jnp.maximum(sumsq, 1e-24))              # EUP rsqrt
    return s * inv_norm                                              # (tb, D)


def _in_batch_ce(d, t):
    """CrossEntropy(t @ d.T, arange(B)) with mean reduction.  d, t: (B, D) f32."""
    B = d.shape[0]
    # t @ d.T via contraction dims — MXU consumes it without an XLU transpose.
    # TODO(synk): for production B >= ~1024, cast d/t to bf16 (keep f32 acc)
    #             and stripe the CE over row blocks to bound last-step VMEM.
    sim = jax.lax.dot_general(t, d, (((1,), (1,)), ((), ())),
                              preferred_element_type=jnp.float32)    # (B, B)
    row_max = jnp.max(sim, axis=1, keepdims=True)                    # (B, 1)
    lse = jnp.log(jnp.sum(jnp.exp(sim - row_max), axis=1,
                          keepdims=True)) + row_max                  # (B, 1)
    # diag(t @ d.T) is just the row-wise dot product (no iota masking).
    diag = jnp.sum(t * d, axis=1, keepdims=True)                     # (B, 1)
    return jnp.sum(lse - diag, axis=0, keepdims=True) * (1.0 / B)    # (1, 1)


# ------------------------------------------------------------------
# Fused kernel: (pool + normalize) x2  ->  similarity  ->  CE loss
# (single TensorCore; persistent VMEM scratch carries the embeddings)
# ------------------------------------------------------------------
def fused_retriever_kernel(doc_h_ref, doc_len_ref, tgt_h_ref, tgt_len_ref,
                           loss_ref, doc_emb_sc, tgt_emb_sc):
    i = pl.program_id(0)
    nt = pl.num_programs(0)
    tb = doc_h_ref.shape[0]
    B = doc_emb_sc.shape[0]

    row0 = pl.multiple_of(i * tb, tb)
    doc_emb_sc[pl.ds(row0, tb), :] = _pool_normalize_tile(doc_h_ref, doc_len_ref)
    tgt_emb_sc[pl.ds(row0, tb), :] = _pool_normalize_tile(tgt_h_ref, tgt_len_ref)

    # Final grid step: all B embeddings are resident in VMEM scratch.
    # NOTE: requires the (single) grid axis to be sequential ("arbitrary");
    # the multi-TensorCore path uses retriever_forward_split() instead.
    @pl.when(i == nt - 1)
    def _():
        loss_ref[...] = _in_batch_ce(doc_emb_sc[...],
                                     tgt_emb_sc[...]).astype(loss_ref.dtype)


# ------------------------------------------------------------------
# Split kernels (multi-TC chips): parallel pooling + tiny CE kernel
# ------------------------------------------------------------------
def pool_normalize_kernel(doc_h_ref, doc_len_ref, tgt_h_ref, tgt_len_ref,
                          doc_o_ref, tgt_o_ref):
    doc_o_ref[...] = _pool_normalize_tile(doc_h_ref, doc_len_ref).astype(doc_o_ref.dtype)
    tgt_o_ref[...] = _pool_normalize_tile(tgt_h_ref, tgt_len_ref).astype(tgt_o_ref.dtype)


def ce_loss_kernel(doc_e_ref, tgt_e_ref, loss_ref):
    loss_ref[...] = _in_batch_ce(doc_e_ref[...].astype(jnp.float32),
                                 tgt_e_ref[...].astype(jnp.float32)).astype(loss_ref.dtype)


# ------------------------------------------------------------------
# Wrapper helpers: per-generation VMEM budget + tile selection
# ------------------------------------------------------------------
def _vmem_budget_bytes():
    """Target working-set budget per kernel, derived from physical VMEM.
    v5e/v6e: 128 MiB physical -> 40 MiB; v7x: 64 MiB physical -> 40 MiB."""
    cap = 128 * 1024 * 1024
    try:
        info = pltpu.get_tpu_info()
        cap = int(getattr(info, "vmem_capacity_bytes", cap)) or cap
    except Exception:
        pass
    return min(40 * 1024 * 1024, (cap * 5) // 8)


def _vmem_limit_bytes(budget):
    # Explicit scoped-VMEM limit: budget + headroom for compiler temporaries.
    return int(budget + (16 << 20))


def _pick_block_b(B, L, D, in_itemsize, vmem_budget_bytes):
    """Largest batch tile (multiple of 8, dividing B) whose double-buffered
    streams + persistent scratch + last-step temporaries fit the budget."""
    # 2 hidden streams (doc + tgt) x 2 buffers; length rows are lane-padded
    # to 128 lanes of 4B each (tiny but counted).
    per_row = 2 * 2 * (L * D * in_itemsize + 128 * 4)
    persistent = 2 * B * D * 4           # resident (B, D) f32 embeddings x2
    last_step = 3 * B * B * 4            # (B, B) sim + softmax temporaries
    avail = max(vmem_budget_bytes - persistent - last_step, per_row * 8)
    tb = max(1, avail // per_row)
    if B % 8 == 0:
        tb = max(8, (min(tb, B) // 8) * 8)
        while B % tb != 0:
            tb -= 8
    else:
        # TODO(synk): ragged batch fallback ignores the VMEM budget; pad B to
        #             a multiple of 8 upstream for large ragged batches.
        tb = B
    return tb


def _has_multiple_tensorcores():
    try:
        kind = jax.devices()[0].device_kind.lower()
        return any(t in kind for t in ("v7", "v5p", "v4"))
    except Exception:
        return False


def _prep(doc_hidden, doc_lens, tgt_hidden, tgt_lens, block_b, vmem_budget):
    B, L, D = doc_hidden.shape
    itemsize = jnp.dtype(doc_hidden.dtype).itemsize
    budget = vmem_budget if vmem_budget is not None else _vmem_budget_bytes()
    tb = block_b if block_b is not None else _pick_block_b(B, L, D, itemsize, budget)
    assert B % tb == 0, (B, tb)
    nt = B // tb
    lens_doc = doc_lens.reshape(B, 1).astype(jnp.int32)
    lens_tgt = tgt_lens.reshape(B, 1).astype(jnp.int32)
    hid_spec = pl.BlockSpec((tb, L, D), lambda i: (i, 0, 0))
    len_spec = pl.BlockSpec((tb, 1), lambda i: (i, 0))
    return B, L, D, tb, nt, budget, lens_doc, lens_tgt, hid_spec, len_spec


# ------------------------------------------------------------------
# Entry points
# ------------------------------------------------------------------
def retriever_forward_fused(doc_hidden, doc_lens, tgt_hidden, tgt_lens,
                            block_b=None, vmem_budget=None):
    """Single fused pallas_call (best on 1-TC chips: v5e / v6e).
    doc_hidden/tgt_hidden: [B, L, D] last_hidden_state (bf16 or f32);
    doc_lens/tgt_lens: [B] int valid-token counts.  Returns scalar CE loss."""
    (B, L, D, tb, nt, budget, lens_doc, lens_tgt,
     hid_spec, len_spec) = _prep(doc_hidden, doc_lens, tgt_hidden, tgt_lens,
                                 block_b, vmem_budget)

    out = pl.pallas_call(
        fused_retriever_kernel,
        out_shape=jax.ShapeDtypeStruct((1, 1), jnp.float32),
        grid=(nt,),
        in_specs=[hid_spec, len_spec, hid_spec, len_spec],
        out_specs=pl.BlockSpec((1, 1), lambda i: (0, 0)),
        scratch_shapes=[
            pltpu.VMEM((B, D), jnp.float32),   # normalized doc embeddings
            pltpu.VMEM((B, D), jnp.float32),   # normalized target embeddings
        ],
        # The batch axis carries the embedding scratch + final CE step, so it
        # must run sequentially on one core.
        compiler_params=pltpu.CompilerParams(
            dimension_semantics=("arbitrary",),
            vmem_limit_bytes=_vmem_limit_bytes(budget)),
    )(doc_hidden, lens_doc, tgt_hidden, lens_tgt)
    return out[0, 0]


def retriever_forward_split(doc_hidden, doc_lens, tgt_hidden, tgt_lens,
                            block_b=None, vmem_budget=None):
    """Two pallas_calls: (1) mem-bound pooling with a 'parallel' batch grid
    (both TensorCores on v7x stream it), (2) tiny similarity + CE kernel.
    Extra HBM round-trip is only 2*B*D*4 bytes."""
    (B, L, D, tb, nt, budget, lens_doc, lens_tgt,
     hid_spec, len_spec) = _prep(doc_hidden, doc_lens, tgt_hidden, tgt_lens,
                                 block_b, vmem_budget)

    doc_emb, tgt_emb = pl.pallas_call(
        pool_normalize_kernel,
        out_shape=(jax.ShapeDtypeStruct((B, D), jnp.float32),
                   jax.ShapeDtypeStruct((B, D), jnp.float32)),
        grid=(nt,),
        in_specs=[hid_spec, len_spec, hid_spec, len_spec],
        out_specs=(pl.BlockSpec((tb, D), lambda i: (i, 0)),
                   pl.BlockSpec((tb, D), lambda i: (i, 0))),
        compiler_params=pltpu.CompilerParams(
            dimension_semantics=("parallel",),
            vmem_limit_bytes=_vmem_limit_bytes(budget)),
    )(doc_hidden, lens_doc, tgt_hidden, lens_tgt)

    loss = pl.pallas_call(
        ce_loss_kernel,
        out_shape=jax.ShapeDtypeStruct((1, 1), jnp.float32),
    )(doc_emb, tgt_emb)
    return loss[0, 0]


def retriever_loss(doc_hidden, doc_lens, tgt_hidden, tgt_lens,
                   block_b=None, split=None):
    """Dispatcher: fused single-call on 1-TC chips, split two-call on
    multi-TC chips (v7x / v5p / v4)."""
    if split is None:
        split = _has_multiple_tensorcores()
    fn = retriever_forward_split if split else retriever_forward_fused
    return fn(doc_hidden, doc_lens, tgt_hidden, tgt_lens, block_b=block_b)


# ------------------------------------------------------------------
# Pure-JAX reference (matches the PyTorch semantics)
# ------------------------------------------------------------------
def _ref_forward(doc_hidden, doc_lens, tgt_hidden, tgt_lens):
    B, L, D = doc_hidden.shape
    pos = jnp.arange(L)[None, :]

    def pool_norm(h, lens):
        m = (pos < lens[:, None]).astype(jnp.float32)[:, :, None]
        s = jnp.sum(h * m, axis=1)
        cnt = jnp.maximum(jnp.sum(m, axis=1), 1e-9)
        e = s / cnt
        n = jnp.maximum(jnp.linalg.norm(e, axis=1, keepdims=True), 1e-12)
        return e / n

    d = pool_norm(doc_hidden, doc_lens)
    t = pool_norm(tgt_hidden, tgt_lens)
    sim = t @ d.T
    logz = jax.scipy.special.logsumexp(sim, axis=1)
    return jnp.mean(logz - jnp.diagonal(sim))


if __name__ == "__main__":
    # Small synthetic shapes (MiniLM would be e.g. B=32, L=256, D=384).
    B, L, D = 16, 256, 128  # L=256 exercises the chunked L-accumulation path

    key = jax.random.PRNGKey(0)
    k1, k2, k3, k4 = jax.random.split(key, 4)

    # Synthetic "last_hidden_state" outputs of the frozen embedding model.
    doc_hidden_f32 = jax.random.normal(k1, (B, L, D), dtype=jnp.float32)
    tgt_hidden_f32 = jax.random.normal(k2, (B, L, D), dtype=jnp.float32)

    # Variable-length sequences -> valid-token counts (tokenizer prefix masks).
    doc_lens = 4 + jax.random.randint(k3, (B,), 0, L - 4)
    tgt_lens = 4 + jax.random.randint(k4, (B,), 0, L - 4)

    # Perf feedback: store the hidden states bf16 in HBM (halves the
    # mem-bound pooling traffic); the kernel accumulates in f32.
    doc_hidden = doc_hidden_f32.astype(jnp.bfloat16)
    tgt_hidden = tgt_hidden_f32.astype(jnp.bfloat16)

    ref = _ref_forward(doc_hidden.astype(jnp.float32), doc_lens,
                       tgt_hidden.astype(jnp.float32), tgt_lens)

    # block_b=8 -> grid=(2,): exercises the tiled accumulation + final CE path.
    fused = jax.jit(lambda dh, dl, th, tl:
                    retriever_forward_fused(dh, dl, th, tl, block_b=8))
    split = jax.jit(lambda dh, dl, th, tl:
                    retriever_forward_split(dh, dl, th, tl, block_b=8))
    auto = jax.jit(retriever_loss)  # auto tile + auto fused/split selection

    loss_fused = jax.block_until_ready(fused(doc_hidden, doc_lens, tgt_hidden, tgt_lens))
    loss_split = jax.block_until_ready(split(doc_hidden, doc_lens, tgt_hidden, tgt_lens))
    loss_auto = jax.block_until_ready(auto(doc_hidden, doc_lens, tgt_hidden, tgt_lens))

    assert jnp.allclose(loss_fused, ref, atol=1e-5, rtol=1e-5), (loss_fused, ref)
    assert jnp.allclose(loss_split, ref, atol=1e-5, rtol=1e-5), (loss_split, ref)
    assert jnp.allclose(loss_auto, ref, atol=1e-5, rtol=1e-5), (loss_auto, ref)

    print("KERNEL_OK")
</pallas_src>

<mosaic_0001>
module attributes {stable_mosaic.version = 11 : i64} {
  func.func @fused_retriever_kernel(%arg0: i32, %arg1: memref<8x256x128xbf16, #tpu.memory_space<vmem>>, %arg2: memref<8x1xi32, #tpu.memory_space<vmem>>, %arg3: memref<8x256x128xbf16, #tpu.memory_space<vmem>>, %arg4: memref<8x1xi32, #tpu.memory_space<vmem>>, %arg5: memref<1x1xf32, #tpu.memory_space<vmem>>, %arg6: memref<16x128xf32, #tpu.memory_space<vmem>>, %arg7: memref<16x128xf32, #tpu.memory_space<vmem>>) attributes {dimension_semantics = [#tpu.dimension_semantics<arbitrary>], iteration_bounds = array<i64: 2>, scalar_prefetch = 0 : i64, scratch_operands = 2 : i64, tpu.core_type = #tpu.core_type<tc>, window_params = [{transform_indices = @transform_0, window_bounds = array<i64: 8, 256, 128>}, {transform_indices = @transform_1, window_bounds = array<i64: 8, 1>}, {transform_indices = @transform_2, window_bounds = array<i64: 8, 256, 128>}, {transform_indices = @transform_3, window_bounds = array<i64: 8, 1>}, {pipeline_mode = #tpu.pipeline_mode<synchronous>, transform_indices = @transform_4, window_bounds = array<i64: 1, 1>}]} {
    %c8_i32 = arith.constant 8 : i32
    %0 = arith.muli %arg0, %c8_i32 : i32
    %1 = tpu.assume_multiple %0, 8 : i32
    %c0 = arith.constant 0 : index
    %c0_0 = arith.constant 0 : index
    %2 = vector.load %arg2[%c0, %c0_0] : memref<8x1xi32, #tpu.memory_space<vmem>>, vector<8x1xi32>
    %cst = arith.constant 0.000000e+00 : f32
    %3 = vector.broadcast %cst : f32 to vector<8x128xf32>
    %c0_i32 = arith.constant 0 : i32
    %c128_i32 = arith.constant 128 : i32
    %4 = arith.muli %c0_i32, %c128_i32 : i32
    %5 = tpu.assume_multiple %4, 128 : i32
    %6 = tpu.iota {dimensions = array<i32: 1>} : vector<8x128x1xi32>
    %7 = vector.broadcast %5 : i32 to vector<8x128x1xi32>
    %8 = arith.addi %6, %7 : vector<8x128x1xi32>
    %9 = vector.shape_cast %2 : vector<8x1xi32> to vector<8x1x1xi32>
    %10 = vector.broadcast %9 : vector<8x1x1xi32> to vector<8x128x1xi32>
    %11 = arith.cmpi slt, %8, %10 : vector<8x128x1xi32>
    %c0_1 = arith.constant 0 : index
    %12 = arith.index_cast %5 : i32 to index
    %c0_2 = arith.constant 0 : index
    %13 = vector.load %arg1[%c0_1, %12, %c0_2] : memref<8x256x128xbf16, #tpu.memory_space<vmem>>, vector<8x128x128xbf16>
    %14 = arith.extf %13 : vector<8x128x128xbf16> to vector<8x128x128xf32>
    %cst_3 = arith.constant 0.000000e+00 : f32
    %15 = vector.shape_cast %11 : vector<8x128x1xi1> to vector<8x128x1xi1>
    %16 = vector.broadcast %15 : vector<8x128x1xi1> to vector<8x128x128xi1>
    %17 = vector.broadcast %cst_3 : f32 to vector<8x128x128xf32>
    %18 = arith.select %16, %14, %17 : vector<8x128x128xi1>, vector<8x128x128xf32>
    %cst_4 = arith.constant dense<0.000000e+00> : vector<8x128xf32>
    %19 = vector.multi_reduction <add>, %18, %cst_4 [1] : vector<8x128x128xf32> to vector<8x128xf32>
    %20 = arith.addf %3, %19 : vector<8x128xf32>
    %c1_i32 = arith.constant 1 : i32
    %c128_i32_5 = arith.constant 128 : i32
    %21 = arith.muli %c1_i32, %c128_i32_5 : i32
    %22 = tpu.assume_multiple %21, 128 : i32
    %23 = tpu.iota {dimensions = array<i32: 1>} : vector<8x128x1xi32>
    %24 = vector.broadcast %22 : i32 to vector<8x128x1xi32>
    %25 = arith.addi %23, %24 : vector<8x128x1xi32>
    %26 = vector.shape_cast %2 : vector<8x1xi32> to vector<8x1x1xi32>
    %27 = vector.broadcast %26 : vector<8x1x1xi32> to vector<8x128x1xi32>
    %28 = arith.cmpi slt, %25, %27 : vector<8x128x1xi32>
    %c0_6 = arith.constant 0 : index
    %29 = arith.index_cast %22 : i32 to index
    %c0_7 = arith.constant 0 : index
    %30 = vector.load %arg1[%c0_6, %29, %c0_7] : memref<8x256x128xbf16, #tpu.memory_space<vmem>>, vector<8x128x128xbf16>
    %31 = arith.extf %30 : vector<8x128x128xbf16> to vector<8x128x128xf32>
    %cst_8 = arith.constant 0.000000e+00 : f32
    %32 = vector.shape_cast %28 : vector<8x128x1xi1> to vector<8x128x1xi1>
    %33 = vector.broadcast %32 : vector<8x128x1xi1> to vector<8x128x128xi1>
    %34 = vector.broadcast %cst_8 : f32 to vector<8x128x128xf32>
    %35 = arith.select %33, %31, %34 : vector<8x128x128xi1>, vector<8x128x128xf32>
    %cst_9 = arith.constant dense<0.000000e+00> : vector<8x128xf32>
    %36 = vector.multi_reduction <add>, %35, %cst_9 [1] : vector<8x128x128xf32> to vector<8x128xf32>
    %37 = arith.addf %20, %36 : vector<8x128xf32>
    %c2_i32 = arith.constant 2 : i32
    %38 = arith.mulf %37, %37 : vector<8x128xf32>
    %cst_10 = arith.constant dense<0.000000e+00> : vector<8xf32>
    %39 = vector.multi_reduction <add>, %38, %cst_10 [1] : vector<8x128xf32> to vector<8xf32>
    %40 = vector.shape_cast %39 : vector<8xf32> to vector<8x1xf32>
    %cst_11 = arith.constant 1.000000e-24 : f32
    %41 = vector.broadcast %cst_11 : f32 to vector<8x1xf32>
    %42 = arith.maximumf %40, %41 : vector<8x1xf32>
    %43 = math.rsqrt %42 : vector<8x1xf32>
    %44 = vector.broadcast %43 : vector<8x1xf32> to vector<8x128xf32>
    %45 = arith.mulf %37, %44 : vector<8x128xf32>
    %46 = arith.index_cast %1 : i32 to index
    %c0_12 = arith.constant 0 : index
    %47 = vector.load %arg6[%46, %c0_12] : memref<16x128xf32, #tpu.memory_space<vmem>>, vector<8x128xf32>
    tpu.vector_store %arg6[%46, %c0_12], %45 {strides = array<i32>} : memref<16x128xf32, #tpu.memory_space<vmem>>, vector<8x128xf32>,
    %c0_13 = arith.constant 0 : index
    %c0_14 = arith.constant 0 : index
    %48 = vector.load %arg4[%c0_13, %c0_14] : memref<8x1xi32, #tpu.memory_space<vmem>>, vector<8x1xi32>
    %cst_15 = arith.constant 0.000000e+00 : f32
    %49 = vector.broadcast %cst_15 : f32 to vector<8x128xf32>
    %c0_i32_16 = arith.constant 0 : i32
    %c128_i32_17 = arith.constant 128 : i32
    %50 = arith.muli %c0_i32_16, %c128_i32_17 : i32
    %51 = tpu.assume_multiple %50, 128 : i32
    %52 = tpu.iota {dimensions = array<i32: 1>} : vector<8x128x1xi32>
    %53 = vector.broadcast %51 : i32 to vector<8x128x1xi32>
    %54 = arith.addi %52, %53 : vector<8x128x1xi32>
    %55 = vector.shape_cast %48 : vector<8x1xi32> to vector<8x1x1xi32>
    %56 = vector.broadcast %55 : vector<8x1x1xi32> to vector<8x128x1xi32>
    %57 = arith.cmpi slt, %54, %56 : vector<8x128x1xi32>
    %c0_18 = arith.constant 0 : index
    %58 = arith.index_cast %51 : i32 to index
    %c0_19 = arith.constant 0 : index
    %59 = vector.load %arg3[%c0_18, %58, %c0_19] : memref<8x256x128xbf16, #tpu.memory_space<vmem>>, vector<8x128x128xbf16>
    %60 = arith.extf %59 : vector<8x128x128xbf16> to vector<8x128x128xf32>
    %cst_20 = arith.constant 0.000000e+00 : f32
    %61 = vector.shape_cast %57 : vector<8x128x1xi1> to vector<8x128x1xi1>
    %62 = vector.broadcast %61 : vector<8x128x1xi1> to vector<8x128x128xi1>
    %63 = vector.broadcast %cst_20 : f32 to vector<8x128x128xf32>
    %64 = arith.select %62, %60, %63 : vector<8x128x128xi1>, vector<8x128x128xf32>
    %cst_21 = arith.constant dense<0.000000e+00> : vector<8x128xf32>
    %65 = vector.multi_reduction <add>, %64, %cst_21 [1] : vector<8x128x128xf32> to vector<8x128xf32>
    %66 = arith.addf %49, %65 : vector<8x128xf32>
    %c1_i32_22 = arith.constant 1 : i32
    %c128_i32_23 = arith.constant 128 : i32
    %67 = arith.muli %c1_i32_22, %c128_i32_23 : i32
    %68 = tpu.assume_multiple %67, 128 : i32
    %69 = tpu.iota {dimensions = array<i32: 1>} : vector<8x128x1xi32>
    %70 = vector.broadcast %68 : i32 to vector<8x128x1xi32>
    %71 = arith.addi %69, %70 : vector<8x128x1xi32>
    %72 = vector.shape_cast %48 : vector<8x1xi32> to vector<8x1x1xi32>
    %73 = vector.broadcast %72 : vector<8x1x1xi32> to vector<8x128x1xi32>
    %74 = arith.cmpi slt, %71, %73 : vector<8x128x1xi32>
    %c0_24 = arith.constant 0 : index
    %75 = arith.index_cast %68 : i32 to index
    %c0_25 = arith.constant 0 : index
    %76 = vector.load %arg3[%c0_24, %75, %c0_25] : memref<8x256x128xbf16, #tpu.memory_space<vmem>>, vector<8x128x128xbf16>
    %77 = arith.extf %76 : vector<8x128x128xbf16> to vector<8x128x128xf32>
    %cst_26 = arith.constant 0.000000e+00 : f32
    %78 = vector.shape_cast %74 : vector<8x128x1xi1> to vector<8x128x1xi1>
    %79 = vector.broadcast %78 : vector<8x128x1xi1> to vector<8x128x128xi1>
    %80 = vector.broadcast %cst_26 : f32 to vector<8x128x128xf32>
    %81 = arith.select %79, %77, %80 : vector<8x128x128xi1>, vector<8x128x128xf32>
    %cst_27 = arith.constant dense<0.000000e+00> : vector<8x128xf32>
    %82 = vector.multi_reduction <add>, %81, %cst_27 [1] : vector<8x128x128xf32> to vector<8x128xf32>
    %83 = arith.addf %66, %82 : vector<8x128xf32>
    %c2_i32_28 = arith.constant 2 : i32
    %84 = arith.mulf %83, %83 : vector<8x128xf32>
    %cst_29 = arith.constant dense<0.000000e+00> : vector<8xf32>
    %85 = vector.multi_reduction <add>, %84, %cst_29 [1] : vector<8x128xf32> to vector<8xf32>
    %86 = vector.shape_cast %85 : vector<8xf32> to vector<8x1xf32>
    %cst_30 = arith.constant 1.000000e-24 : f32
    %87 = vector.broadcast %cst_30 : f32 to vector<8x1xf32>
    %88 = arith.maximumf %86, %87 : vector<8x1xf32>
    %89 = math.rsqrt %88 : vector<8x1xf32>
    %90 = vector.broadcast %89 : vector<8x1xf32> to vector<8x128xf32>
    %91 = arith.mulf %83, %90 : vector<8x128xf32>
    %92 = arith.index_cast %1 : i32 to index
    %c0_31 = arith.constant 0 : index
    %93 = vector.load %arg7[%92, %c0_31] : memref<16x128xf32, #tpu.memory_space<vmem>>, vector<8x128xf32>
    tpu.vector_store %arg7[%92, %c0_31], %91 {strides = array<i32>} : memref<16x128xf32, #tpu.memory_space<vmem>>, vector<8x128xf32>,
    %c1_i32_32 = arith.constant 1 : i32
    %94 = arith.cmpi eq, %arg0, %c1_i32_32 : i32
    %95 = arith.extui %94 : i1 to i32
    %c0_i32_33 = arith.constant 0 : i32
    %96 = arith.cmpi ne, %95, %c0_i32_33 : i32
    scf.if %96 {
      %c0_34 = arith.constant 0 : index
      %c0_35 = arith.constant 0 : index
      %97 = vector.load %arg6[%c0_34, %c0_35] : memref<16x128xf32, #tpu.memory_space<vmem>>, vector<16x128xf32>
      %c0_36 = arith.constant 0 : index
      %c0_37 = arith.constant 0 : index
      %98 = vector.load %arg7[%c0_36, %c0_37] : memref<16x128xf32, #tpu.memory_space<vmem>>, vector<16x128xf32>
      %cst_38 = arith.constant dense<0.000000e+00> : vector<16x16xf32>
      %99 = tpu.matmul %98, %97, %cst_38 {dimension_numbers = #tpu.dot_dimension_numbers<[1], [1], [0], [0], [0, 0, 1, 0], [], []>} : vector<16x128xf32>, vector<16x128xf32>, vector<16x16xf32> -> vector<16x16xf32>
      %cst_39 = arith.constant dense<0xFF800000> : vector<16xf32>
      %100 = vector.multi_reduction <maximumf>, %99, %cst_39 [1] : vector<16x16xf32> to vector<16xf32>
      %101 = vector.shape_cast %100 : vector<16xf32> to vector<16x1xf32>
      %102 = vector.broadcast %101 : vector<16x1xf32> to vector<16x16xf32>
      %103 = arith.subf %99, %102 : vector<16x16xf32>
      %104 = math.exp %103 : vector<16x16xf32>
      %cst_40 = arith.constant dense<0.000000e+00> : vector<16xf32>
      %105 = vector.multi_reduction <add>, %104, %cst_40 [1] : vector<16x16xf32> to vector<16xf32>
      %106 = vector.shape_cast %105 : vector<16xf32> to vector<16x1xf32>
      %107 = math.log %106 : vector<16x1xf32>
      %108 = arith.addf %107, %101 : vector<16x1xf32>
      %109 = arith.mulf %98, %97 : vector<16x128xf32>
      %cst_41 = arith.constant dense<0.000000e+00> : vector<16xf32>
      %110 = vector.multi_reduction <add>, %109, %cst_41 [1] : vector<16x128xf32> to vector<16xf32>
      %111 = vector.shape_cast %110 : vector<16xf32> to vector<16x1xf32>
      %112 = arith.subf %108, %111 : vector<16x1xf32>
      %cst_42 = arith.constant dense<0.000000e+00> : vector<1xf32>
      %113 = vector.multi_reduction <add>, %112, %cst_42 [0] : vector<16x1xf32> to vector<1xf32>
      %114 = vector.shape_cast %113 : vector<1xf32> to vector<1x1xf32>
      %cst_43 = arith.constant 6.250000e-02 : f32
      %115 = vector.broadcast %cst_43 : f32 to vector<1x1xf32>
      %116 = arith.mulf %114, %115 : vector<1x1xf32>
      %c0_44 = arith.constant 0 : index
      %c0_45 = arith.constant 0 : index
      %117 = vector.load %arg5[%c0_44, %c0_45] : memref<1x1xf32, #tpu.memory_space<vmem>>, vector<1x1xf32>
      tpu.vector_store %arg5[%c0_44, %c0_45], %116 {strides = array<i32>} : memref<1x1xf32, #tpu.memory_space<vmem>>, vector<1x1xf32>,
    } else {
    }
    return
  }
  func.func @transform_0(%arg0: i32) -> (i32, i32, i32) {
    %c0_i32 = arith.constant 0 : i32
    %c0_i32_0 = arith.constant 0 : i32
    %c0_i32_1 = arith.constant 0 : i32
    return %arg0, %c0_i32, %c0_i32_0 : i32, i32, i32
  }
  func.func @transform_1(%arg0: i32) -> (i32, i32) {
    %c0_i32 = arith.constant 0 : i32
    %c0_i32_0 = arith.constant 0 : i32
    return %arg0, %c0_i32 : i32, i32
  }
  func.func @transform_2(%arg0: i32) -> (i32, i32, i32) {
    %c0_i32 = arith.constant 0 : i32
    %c0_i32_0 = arith.constant 0 : i32
    %c0_i32_1 = arith.constant 0 : i32
    return %arg0, %c0_i32, %c0_i32_0 : i32, i32, i32
  }
  func.func @transform_3(%arg0: i32) -> (i32, i32) {
    %c0_i32 = arith.constant 0 : i32
    %c0_i32_0 = arith.constant 0 : i32
    return %arg0, %c0_i32 : i32, i32
  }
  func.func @transform_4(%arg0: i32) -> (i32, i32) {
    %c0_i32 = arith.constant 0 : i32
    %c0_i32_0 = arith.constant 0 : i32
    %c0_i32_1 = arith.constant 0 : i32
    return %c0_i32, %c0_i32_0 : i32, i32
  }
}

</mosaic_0001>

<llo_original>
// kernel: _lambda_.1
$region0: #{_lambda_.1}
  #allocation0 [shape = 'u32[]', space=smem, size = 0x4, offset = 0x4, fixed_abs, tag = 'smem constant byte address 0x4 - core index']
  #allocation1 [shape = 'u32[144,128]{1,0:T(1,128)}', space=vmem, size = 0x12000, scoped, tag = 'internal scratch']
  #allocation2 [shape = 'f32[16,128]{1,0:T(8,128)}', space=vmem, size = 0x2000, scoped, tag = 'scratch operand']
  #allocation3 [shape = 'f32[16,128]{1,0:T(8,128)}', space=vmem, size = 0x2000, scoped, tag = 'scratch operand']
  %s0 = inlined_call_operand.hbm [shape: bf16[16,256,128], index: 0, kind: input, shape index: {}]
  %s1 = inlined_call_operand.vmem [shape: s32[16,1], index: 1, kind: input, shape index: {}]
  %s2 = inlined_call_operand.hbm [shape: bf16[16,256,128], index: 2, kind: input, shape index: {}]
  %s3 = inlined_call_operand.vmem [shape: s32[16,1], index: 3, kind: input, shape index: {}]
  %s4 = inlined_call_operand.hbm [shape: f32[1,1], index: 4, kind: output, shape index: {}]
  %s5 = sld [smem:[#allocation0]]
  $region61: #{_lambda_.1} parent=0
    _
  %s7 = ssub.s32 1, %s5
  %s8 = scalar_select 0, %s7, %s5
  $region1: #{_lambda_.1} parent=0
    #allocation4 [shape = 'u8[1048576]{0}', space=vmem, size = 0x100000, scoped, tag = 'input window, operand 0']
    #allocation5 [shape = 's32[2]{0}', space=sflag, size = 0x8, scoped, tag = 'scoped memory for _lambda_.1']
    #allocation6 [shape = 's32[2]{0}', space=sflag, size = 0x8, scoped, tag = 'scoped memory for _lambda_.1']
    #allocation7 [shape = 'u8[1048576]{0}', space=vmem, size = 0x100000, scoped, tag = 'input window, operand 2']
    #allocation8 [shape = 's32[2]{0}', space=sflag, size = 0x8, scoped, tag = 'scoped memory for _lambda_.1']
    #allocation9 [shape = 'u8[512]{0}', space=vmem, size = 0x400, scoped, tag = 'output window, operand 0, single buffered']
    %9 = vsyncpa [#allocation5], 0
    %s10 = scalar_lea.sflag [#allocation5], 1
    %11 = vsyncpa %s10, 0
    %12 = vsyncpa [#allocation8], 0
    %s13 = scalar_lea.sflag [#allocation8], 1
    %14 = vsyncpa %s13, 0
    %15 = vsyncpa [#allocation6], 0
    loop: start=0, step=1, limit=4
    $region2: #{_lambda_.1} parent=1 // loop_pre_header
      _
    $region3: #{_lambda_.1} parent=1 // loop_header
      %s17 = sphi 0, %s21
      %p18 = scmp.ge.s32.totalorder %s17, 4
      %s27 = sphi 0, %s29
      %s30 = sphi 0, %s27
      %s31 = sphi 0, %s30
      %s47 = sphi 0, %s31
      %s53 = sphi 0, %s55
      %s56 = sphi 0, %s53
      %s57 = sphi 0, %s56
      %s73 = sphi 0, %s57
      %s79 = sphi 0, %s81
      %s82 = sphi 0, %s79
      %s83 = sphi 0, %s82
      %s99 = sphi 0, %s83
      %s105 = sphi 0, %s107
      %s108 = sphi 0, %s105
      %s109 = sphi 0, %s108
      %s125 = sphi 0, %s109
      %s129 = sphi 0, %s129
      %s131 = sphi 0, %s129
      %s132 = sphi 0, %s131
      %s146 = sphi 0, %s132
    $region4: #{_lambda_.1} parent=1 // loop_header_branch
      %20 = sbr.rel (%p18) target = $region8
    $region5: #{_lambda_.1} parent=1 // loop_body
      %s22 = ssub.s32 %s17, 1
      %s23 = ssub.s32 %s17, 2
      %s24 = sadd.s32 %s17, 1
      %s25 = ssub.s32 %s17, %s24
      %p26 = scmp.eq.s32.totalorder %s25, 0
      %s28 = sadd.s32 %s27, 1
      %s29 = scalar_select %p26, %s27, %s28
      %p32 = pneg %p26
      %p33 = scmp.eq.s32.totalorder %s17, 1
      %p34 = por %p32, %p33
      %p35 = scmp.ne.s32.totalorder %s27, %s30
      %p36 = scmp.eq.s32.totalorder %s17, 0
      %p37 = por %p35, %p36
      %p38 = scmp.ne.s32.totalorder %s27, %s30
      %p39 = scmp.eq.s32.totalorder %s22, 1
      %p40 = por %p38, %p39
      %p41 = scmp.ne.s32.totalorder %s30, %s31
      %p42 = scmp.eq.s32.totalorder %s22, 0
      %p43 = por %p41, %p42
      %p44 = scmp.ne.s32.totalorder %s30, %s31
      %p45 = scmp.eq.s32.totalorder %s23, 1
      %p46 = por %p44, %p45
      %p48 = scmp.ne.s32.totalorder %s31, %s47
      %p49 = scmp.eq.s32.totalorder %s23, 0
      %p50 = por %p48, %p49
      %s51 = ssub.s32 %s17, %s24
      %p52 = scmp.eq.s32.totalorder %s51, 0
      %s54 = sadd.s32 %s53, 1
      %s55 = scalar_select %p52, %s53, %s54
      %p58 = pneg %p52
      %p59 = scmp.eq.s32.totalorder %s17, 1
      %p60 = por %p58, %p59
      %p61 = scmp.ne.s32.totalorder %s53, %s56
      %p62 = scmp.eq.s32.totalorder %s17, 0
      %p63 = por %p61, %p62
      %p64 = scmp.ne.s32.totalorder %s53, %s56
      %p65 = scmp.eq.s32.totalorder %s22, 1
      %p66 = por %p64, %p65
      %p67 = scmp.ne.s32.totalorder %s56, %s57
      %p68 = scmp.eq.s32.totalorder %s22, 0
      %p69 = por %p67, %p68
      %p70 = scmp.ne.s32.totalorder %s56, %s57
      %p71 = scmp.eq.s32.totalorder %s23, 1
      %p72 = por %p70, %p71
      %p74 = scmp.ne.s32.totalorder %s57, %s73
      %p75 = scmp.eq.s32.totalorder %s23, 0
      %p76 = por %p74, %p75
      %s77 = ssub.s32 %s17, %s24
      %p78 = scmp.eq.s32.totalorder %s77, 0
      %s80 = sadd.s32 %s79, 1
      %s81 = scalar_select %p78, %s79, %s80
      %p84 = pneg %p78
      %p85 = scmp.eq.s32.totalorder %s17, 1
      %p86 = por %p84, %p85
      %p87 = scmp.ne.s32.totalorder %s79, %s82
      %p88 = scmp.eq.s32.totalorder %s17, 0
      %p89 = por %p87, %p88
      %p90 = scmp.ne.s32.totalorder %s79, %s82
      %p91 = scmp.eq.s32.totalorder %s22, 1
      %p92 = por %p90, %p91
      %p93 = scmp.ne.s32.totalorder %s82, %s83
      %p94 = scmp.eq.s32.totalorder %s22, 0
      %p95 = por %p93, %p94
      %p96 = scmp.ne.s32.totalorder %s82, %s83
      %p97 = scmp.eq.s32.totalorder %s23, 1
      %p98 = por %p96, %p97
      %p100 = scmp.ne.s32.totalorder %s83, %s99
      %p101 = scmp.eq.s32.totalorder %s23, 0
      %p102 = por %p100, %p101
      %s103 = ssub.s32 %s17, %s24
      %p104 = scmp.eq.s32.totalorder %s103, 0
      %s106 = sadd.s32 %s105, 1
      %s107 = scalar_select %p104, %s105, %s106
      %p110 = pneg %p104
      %p111 = scmp.eq.s32.totalorder %s17, 1
      %p112 = por %p110, %p111
      %p113 = scmp.ne.s32.totalorder %s105, %s108
      %p114 = scmp.eq.s32.totalorder %s17, 0
      %p115 = por %p113, %p114
      %p116 = scmp.ne.s32.totalorder %s105, %s108
      %p117 = scmp.eq.s32.totalorder %s22, 1
      %p118 = por %p116, %p117
      %p119 = scmp.ne.s32.totalorder %s108, %s109
      %p120 = scmp.eq.s32.totalorder %s22, 0
      %p121 = por %p119, %p120
      %p122 = scmp.ne.s32.totalorder %s108, %s109
      %p123 = scmp.eq.s32.totalorder %s23, 1
      %p124 = por %p122, %p123
      %p126 = scmp.ne.s32.totalorder %s109, %s125
      %p127 = scmp.eq.s32.totalorder %s23, 0
      %p128 = por %p126, %p127
      %s130 = sadd.s32 %s129, 1
      %p133 = scmp.eq.s32.totalorder %s17, 1
      %p134 = scmp.ne.s32.totalorder %s129, %s131
      %p135 = scmp.eq.s32.totalorder %s17, 0
      %p136 = por %p134, %p135
      %p137 = scmp.ne.s32.totalorder %s129, %s131
      %p138 = scmp.eq.s32.totalorder %s22, 1
      %p139 = por %p137, %p138
      %p140 = scmp.ne.s32.totalorder %s131, %s132
      %p141 = scmp.eq.s32.totalorder %s22, 0
      %p142 = por %p140, %p141
      %p143 = scmp.ne.s32.totalorder %s131, %s132
      %p144 = scmp.eq.s32.totalorder %s23, 1
      %p145 = por %p143, %p144
      %p147 = scmp.ne.s32.totalorder %s132, %s146
      %p148 = scmp.eq.s32.totalorder %s23, 0
      %p149 = por %p147, %p148
      %p150 = scmp.le.s32.totalorder 1, %s17
      %p151 = scmp.lt.s32.totalorder %s17, 3
      %p152 = pnand %p150, %p151
      %p153 = pneg %p152
      // Predicated region
      $region9: #{_lambda_.1} parent=5 // pred_check
        _
      $region10: #{_lambda_.1} parent=5 // pred_check_branch
        %155 = sbr.rel (%p152) target = $region12
      $region11: #{_lambda_.1} parent=5 // pred_region
        %s156 = ssub.s32 %s17, 1
      $region12: #{_lambda_.1} parent=5 // pred_fallthru
        _
      %p157 = scmp.lt.s32.totalorder %s17, 2
      // Predicated region
      $region13: #{_lambda_.1} parent=5 // pred_check
        %p158 = pneg %p157
      $region14: #{_lambda_.1} parent=5 // pred_check_branch
        %160 = sbr.rel (%p158) target = $region16
      $region15: #{_lambda_.1} parent=5 // pred_region
        // Predicated region
        $region17: #{_lambda_.1} parent=15 // pred_check
          %p161 = pneg %p37
        $region18: #{_lambda_.1} parent=15 // pred_check_branch
          %163 = sbr.rel (%p161) target = $region20
        $region19: #{_lambda_.1} parent=15 // pred_region
          %s164 = sand.u32 %s27, 1
          %s165 = scalar_lea.sflag [#allocation5], %s164
          %s166 = sand.u32 %s27, 1
          %s167 = smul.addr %s166, 1024
          %s168 = scalar_lea.vmem [#allocation4], %s167
          %s169 = smul.u32 8, %s17
          %s171 = ssub.s32 16384, 16384
          %172 = vsyncadd %s165, %s171
          %s173 = smul.addr %s169, 32
          %s174 = smul.addr %s173, 64
          %s175 = scalar_lea.hbm %s0, %s174
          %s176 = sshll.u32 %s168, 4
          %s177 = int_to_ptr.vmem [resolvable:$true] %s176
          %182 = dma.hbm_to_vmem [thread:$0]  %s175, 16384, %s177, %s165, 64, 64, 4
        $region20: #{_lambda_.1} parent=15 // pred_fallthru
          _
        // Predicated region
        $region21: #{_lambda_.1} parent=15 // pred_check
          %p183 = pneg %p63
        $region22: #{_lambda_.1} parent=15 // pred_check_branch
          %185 = sbr.rel (%p183) target = $region24
        $region23: #{_lambda_.1} parent=15 // pred_region
          %p186 = scmp.lt.s32.totalorder %s17, 1
          %s187 = scalar_select %p186, %s17, 1
          %s188 = smul.addr %s187, 8
          %s189 = scalar_lea.vmem %s1, %s188
        $region24: #{_lambda_.1} parent=15 // pred_fallthru
          _
        // Predicated region
        $region25: #{_lambda_.1} parent=15 // pred_check
          %p190 = pneg %p89
        $region26: #{_lambda_.1} parent=15 // pred_check_branch
          %192 = sbr.rel (%p190) target = $region28
        $region27: #{_lambda_.1} parent=15 // pred_region
          %s193 = sand.u32 %s79, 1
          %s194 = scalar_lea.sflag [#allocation8], %s193
          %s195 = sand.u32 %s79, 1
          %s196 = smul.addr %s195, 1024
          %s197 = scalar_lea.vmem [#allocation7], %s196
          %s198 = smul.u32 8, %s17
          %s200 = ssub.s32 16384, 16384
          %201 = vsyncadd %s194, %s200
          %s202 = smul.addr %s198, 32
          %s203 = smul.addr %s202, 64
          %s204 = scalar_lea.hbm %s2, %s203
          %s205 = sshll.u32 %s197, 4
          %s206 = int_to_ptr.vmem [resolvable:$true] %s205
          %211 = dma.hbm_to_vmem [thread:$0]  %s204, 16384, %s206, %s194, 64, 64, 4
        $region28: #{_lambda_.1} parent=15 // pred_fallthru
          _
        // Predicated region
        $region29: #{_lambda_.1} parent=15 // pred_check
          %p212 = pneg %p115
        $region30: #{_lambda_.1} parent=15 // pred_check_branch
          %214 = sbr.rel (%p212) target = $region32
        $region31: #{_lambda_.1} parent=15 // pred_region
          %p215 = scmp.lt.s32.totalorder %s17, 1
          %s216 = scalar_select %p215, %s17, 1
          %s217 = smul.addr %s216, 8
          %s218 = scalar_lea.vmem %s3, %s217
        $region32: #{_lambda_.1} parent=15 // pred_fallthru
          _
      $region16: #{_lambda_.1} parent=5 // pred_fallthru
        _
      %p219 = scmp.le.s32.totalorder 1, %s17
      %p220 = scmp.lt.s32.totalorder %s17, 3
      %p221 = pnand %p219, %p220
      %p222 = pneg %p221
      // Predicated region
      $region33: #{_lambda_.1} parent=5 // pred_check
        _
      $region34: #{_lambda_.1} parent=5 // pred_check_branch
        %224 = sbr.rel (%p221) target = $region36
      $region35: #{_lambda_.1} parent=5 // pred_region
        %s225 = ssub.s32 %s17, 1
        %s226 = sand.u32 %s30, 1
        %s227 = scalar_lea.sflag [#allocation5], %s226
        %s228 = sand.u32 %s30, 1
        %s229 = smul.addr %s228, 1024
        %s230 = scalar_lea.vmem [#allocation4], %s229
        // Predicated region
        $region37: #{_lambda_.1} parent=35 // pred_check
          %p231 = pneg %p43
        $region38: #{_lambda_.1} parent=35 // pred_check_branch
          %233 = sbr.rel (%p231) target = $region40
        $region39: #{_lambda_.1} parent=35 // pred_region
          %234 = dma.done %s227, 16384
        $region40: #{_lambda_.1} parent=35 // pred_fallthru
          _
        %s235 = sand.u32 %s82, 1
        %s236 = scalar_lea.sflag [#allocation8], %s235
        %s237 = sand.u32 %s82, 1
        %s238 = smul.addr %s237, 1024
        %s239 = scalar_lea.vmem [#allocation7], %s238
        // Predicated region
        $region41: #{_lambda_.1} parent=35 // pred_check
          %p240 = pneg %p95
        $region42: #{_lambda_.1} parent=35 // pred_check_branch
          %242 = sbr.rel (%p240) target = $region44
        $region43: #{_lambda_.1} parent=35 // pred_region
          %243 = dma.done %s236, 16384
        $region44: #{_lambda_.1} parent=35 // pred_fallthru
          _
        %s244 = sand.u32 %s30, 1
        %s245 = scalar_lea.sflag [#allocation5], %s244
        %s246 = sand.u32 %s30, 1
        %s247 = smul.addr %s246, 1024
        %s248 = scalar_lea.vmem [#allocation4], %s247
        %p249 = pneg %p43
        %p250 = pneg %p40
        %p251 = scmp.lt.s32.totalorder %s22, 1
        %s252 = scalar_select %p251, %s22, 1
        %s253 = smul.addr %s252, 8
        %s254 = scalar_lea.vmem %s1, %s253
        %p255 = pneg %p69
        %p256 = pneg %p66
        %s257 = sand.u32 %s82, 1
        %s258 = scalar_lea.sflag [#allocation8], %s257
        %s259 = sand.u32 %s82, 1
        %s260 = smul.addr %s259, 1024
        %s261 = scalar_lea.vmem [#allocation7], %s260
        %p262 = pneg %p95
        %p263 = pneg %p92
        %p264 = scmp.lt.s32.totalorder %s22, 1
        %s265 = scalar_select %p264, %s22, 1
        %s266 = smul.addr %s265, 8
        %s267 = scalar_lea.vmem %s3, %s266
        %p268 = pneg %p121
        %p269 = pneg %p118
        %p270 = pneg %p142
        %p271 = pneg %p139
        %s272 = smul.u32 8, %s22
        %p273 = scmp.lt.s32.totalorder %s22, 1
        %s274 = scalar_select %p273, %s22, 1
        %s275 = smul.addr %s274, 8
        %s276 = scalar_lea.vmem %s1, %s275
        %s277 = smul.u32 8, %s22
        %p278 = scmp.lt.s32.totalorder %s22, 1
        %s279 = scalar_select %p278, %s22, 1
        %s280 = smul.addr %s279, 8
        %s281 = scalar_lea.vmem %s3, %s280
        %s282 = smul.u32 %s22, 8
        %v283 = vld [vmem:[%s276] sm:$0xff]
        %v284 = vlaneseq
        %v285 = vshrl.u32 %v284, 7
        %v286 = vadd.s32 %v285, 8
        %v287 = vadd.s32 %v285, 16
        %v288 = vadd.s32 %v285, 24
        %v289 = vadd.s32 %v285, 32
        %v290 = vadd.s32 %v285, 40
        %v291 = vadd.s32 %v285, 48
        %v292 = vadd.s32 %v285, 56
        %v293 = vadd.s32 %v285, 64
        %v294 = vadd.s32 %v285, 72
        %v295 = vadd.s32 %v285, 80
        %v296 = vadd.s32 %v285, 88
        %v297 = vadd.s32 %v285, 96
        %v298 = vadd.s32 %v285, 104
        %v299 = vadd.s32 %v285, 112
        %v300 = vadd.s32 %v285, 120
        %v301 = vstv 0
        %v302 = vadd.s32 %v285, %v301
        %v303 = vadd.s32 %v286, %v301
        %v304 = vadd.s32 %v287, %v301
        %v305 = vadd.s32 %v288, %v301
        %v306 = vadd.s32 %v289, %v301
        %v307 = vadd.s32 %v290, %v301
        %v308 = vadd.s32 %v291, %v301
        %v309 = vadd.s32 %v292, %v301
        %v310 = vadd.s32 %v293, %v301
        %v311 = vadd.s32 %v294, %v301
        %v312 = vadd.s32 %v295, %v301
        %v313 = vadd.s32 %v296, %v301
        %v314 = vadd.s32 %v297, %v301
        %v315 = vadd.s32 %v298, %v301
        %v316 = vadd.s32 %v299, %v301
        %v317 = vadd.s32 %v300, %v301
        %v318 = vcombine.high %v283, %v283
        %v320 = vunpack.c.l.s4 1966171168
        %v321 = vunpack.c.0.s8 %v320
        %v322 = vlaneseq
        %v323 = vshrl.u32 %v322, 7
        %v324 = vsub.s32 %v321, %v323
        %v325 = vrot.slane %v283, %v324
        %v327 = vunpack.c.l.s4 1966171168
        %v328 = vunpack.c.0.s8 %v327
        %v329 = vlaneseq
        %v330 = vshrl.u32 %v329, 7
        %v331 = vsub.s32 %v328, %v330
        %v332 = vrot.slane %v318, %v331
        %v333 = vcombine.high %v325, %v325
        %v334 = vcombine.high %v332, %v332
        %v336 = vunpack.c.l.s4 1966171168
        %v337 = vunpack.c.0.s8 %v336
        %v338 = vlaneseq
        %v339 = vshrl.u32 %v338, 7
        %v340 = vsub.s32 %v337, %v339
        %v341 = vrot.slane %v325, %v340
        %v343 = vunpack.c.l.s4 1966171168
        %v344 = vunpack.c.0.s8 %v343
        %v345 = vlaneseq
        %v346 = vshrl.u32 %v345, 7
        %v347 = vsub.s32 %v344, %v346
        %v348 = vrot.slane %v332, %v347
        %v350 = vunpack.c.l.s4 1966171168
        %v351 = vunpack.c.0.s8 %v350
        %v352 = vlaneseq
        %v353 = vshrl.u32 %v352, 7
        %v354 = vsub.s32 %v351, %v353
        %v355 = vrot.slane %v333, %v354
        %v357 = vunpack.c.l.s4 1966171168
        %v358 = vunpack.c.0.s8 %v357
        %v359 = vlaneseq
        %v360 = vshrl.u32 %v359, 7
        %v361 = vsub.s32 %v358, %v360
        %v362 = vrot.slane %v334, %v361
        %v363 = vcombine.high %v341, %v341
        %v364 = vcombine.high %v348, %v348
        %v365 = vcombine.high %v355, %v355
        %v366 = vcombine.high %v362, %v362
        %v367 = vlaneseq
        %v368 = vshrl.u32 %v367, 7
        %v369 = vsub.s32 0, %v368
        %v370 = vrot.slane %v341, %v369
        %v371 = vlaneseq
        %v372 = vshrl.u32 %v371, 7
        %v373 = vsub.s32 0, %v372
        %v374 = vrot.slane %v355, %v373
        %v375 = vlaneseq
        %v376 = vshrl.u32 %v375, 7
        %v377 = vsub.s32 0, %v376
        %v378 = vrot.slane %v363, %v377
        %v379 = vlaneseq
        %v380 = vshrl.u32 %v379, 7
        %v381 = vsub.s32 0, %v380
        %v382 = vrot.slane %v365, %v381
        %v383 = vlaneseq
        %v384 = vshrl.u32 %v383, 7
        %v385 = vsub.s32 0, %v384
        %v386 = vrot.slane %v348, %v385
        %v387 = vlaneseq
        %v388 = vshrl.u32 %v387, 7
        %v389 = vsub.s32 0, %v388
        %v390 = vrot.slane %v362, %v389
        %v391 = vlaneseq
        %v392 = vshrl.u32 %v391, 7
        %v393 = vsub.s32 0, %v392
        %v394 = vrot.slane %v364, %v393
        %v395 = vlaneseq
        %v396 = vshrl.u32 %v395, 7
        %v397 = vsub.s32 0, %v396
        %v398 = vrot.slane %v366, %v397
        %vm399 = vcmp.lt.s32.totalorder %v302, %v370
        %vm400 = vcmp.lt.s32.totalorder %v303, %v370
        %vm401 = vcmp.lt.s32.totalorder %v304, %v370
        %vm402 = vcmp.lt.s32.totalorder %v305, %v370
        %vm403 = vcmp.lt.s32.totalorder %v306, %v370
        %vm404 = vcmp.lt.s32.totalorder %v307, %v370
        %vm405 = vcmp.lt.s32.totalorder %v308, %v370
        %vm406 = vcmp.lt.s32.totalorder %v309, %v370
        %vm407 = vcmp.lt.s32.totalorder %v310, %v370
        %vm408 = vcmp.lt.s32.totalorder %v311, %v370
        %vm409 = vcmp.lt.s32.totalorder %v312, %v370
        %vm410 = vcmp.lt.s32.totalorder %v313, %v370
        %vm411 = vcmp.lt.s32.totalorder %v314, %v370
        %vm412 = vcmp.lt.s32.totalorder %v315, %v370
        %vm413 = vcmp.lt.s32.totalorder %v316, %v370
        %vm414 = vcmp.lt.s32.totalorder %v317, %v370
        %vm415 = vcmp.lt.s32.totalorder %v302, %v374
        %vm416 = vcmp.lt.s32.totalorder %v303, %v374
        %vm417 = vcmp.lt.s32.totalorder %v304, %v374
        %vm418 = vcmp.lt.s32.totalorder %v305, %v374
        %vm419 = vcmp.lt.s32.totalorder %v306, %v374
        %vm420 = vcmp.lt.s32.totalorder %v307, %v374
        %vm421 = vcmp.lt.s32.totalorder %v308, %v374
        %vm422 = vcmp.lt.s32.totalorder %v309, %v374
        %vm423 = vcmp.lt.s32.totalorder %v310, %v374
        %vm424 = vcmp.lt.s32.totalorder %v311, %v374
        %vm425 = vcmp.lt.s32.totalorder %v312, %v374
        %vm426 = vcmp.lt.s32.totalorder %v313, %v374
        %vm427 = vcmp.lt.s32.totalorder %v314, %v374
        %vm428 = vcmp.lt.s32.totalorder %v315, %v374
        %vm429 = vcmp.lt.s32.totalorder %v316, %v374
        %vm430 = vcmp.lt.s32.totalorder %v317, %v374
        %vm431 = vcmp.lt.s32.totalorder %v302, %v378
        %vm432 = vcmp.lt.s32.totalorder %v303, %v378
        %vm433 = vcmp.lt.s32.totalorder %v304, %v378
        %vm434 = vcmp.lt.s32.totalorder %v305, %v378
        %vm435 = vcmp.lt.s32.totalorder %v306, %v378
        %vm436 = vcmp.lt.s32.totalorder %v307, %v378
        %vm437 = vcmp.lt.s32.totalorder %v308, %v378
        %vm438 = vcmp.lt.s32.totalorder %v309, %v378
        %vm439 = vcmp.lt.s32.totalorder %v310, %v378
        %vm440 = vcmp.lt.s32.totalorder %v311, %v378
        %vm441 = vcmp.lt.s32.totalorder %v312, %v378
        %vm442 = vcmp.lt.s32.totalorder %v313, %v378
        %vm443 = vcmp.lt.s32.totalorder %v314, %v378
        %vm444 = vcmp.lt.s32.totalorder %v315, %v378
        %vm445 = vcmp.lt.s32.totalorder %v316, %v378
        %vm446 = vcmp.lt.s32.totalorder %v317, %v378
        %vm447 = vcmp.lt.s32.totalorder %v302, %v382
        %vm448 = vcmp.lt.s32.totalorder %v303, %v382
        %vm449 = vcmp.lt.s32.totalorder %v304, %v382
        %vm450 = vcmp.lt.s32.totalorder %v305, %v382
        %vm451 = vcmp.lt.s32.totalorder %v306, %v382
        %vm452 = vcmp.lt.s32.totalorder %v307, %v382
        %vm453 = vcmp.lt.s32.totalorder %v308, %v382
        %vm454 = vcmp.lt.s32.totalorder %v309, %v382
        %vm455 = vcmp.lt.s32.totalorder %v310, %v382
        %vm456 = vcmp.lt.s32.totalorder %v311, %v382
        %vm457 = vcmp.lt.s32.totalorder %v312, %v382
        %vm458 = vcmp.lt.s32.totalorder %v313, %v382
        %vm459 = vcmp.lt.s32.totalorder %v314, %v382
        %vm460 = vcmp.lt.s32.totalorder %v315, %v382
        %vm461 = vcmp.lt.s32.totalorder %v316, %v382
        %vm462 = vcmp.lt.s32.totalorder %v317, %v382
        %vm463 = vcmp.lt.s32.totalorder %v302, %v386
        %vm464 = vcmp.lt.s32.totalorder %v303, %v386
        %vm465 = vcmp.lt.s32.totalorder %v304, %v386
        %vm466 = vcmp.lt.s32.totalorder %v305, %v386
        %vm467 = vcmp.lt.s32.totalorder %v306, %v386
        %vm468 = vcmp.lt.s32.totalorder %v307, %v386
        %vm469 = vcmp.lt.s32.totalorder %v308, %v386
        %vm470 = vcmp.lt.s32.totalorder %v309, %v386
        %vm471 = vcmp.lt.s32.totalorder %v310, %v386
        %vm472 = vcmp.lt.s32.totalorder %v311, %v386
        %vm473 = vcmp.lt.s32.totalorder %v312, %v386
        %vm474 = vcmp.lt.s32.totalorder %v313, %v386
        %vm475 = vcmp.lt.s32.totalorder %v314, %v386
        %vm476 = vcmp.lt.s32.totalorder %v315, %v386
        %vm477 = vcmp.lt.s32.totalorder %v316, %v386
        %vm478 = vcmp.lt.s32.totalorder %v317, %v386
        %vm479 = vcmp.lt.s32.totalorder %v302, %v390
        %vm480 = vcmp.lt.s32.totalorder %v303, %v390
        %vm481 = vcmp.lt.s32.totalorder %v304, %v390
        %vm482 = vcmp.lt.s32.totalorder %v305, %v390
        %vm483 = vcmp.lt.s32.totalorder %v306, %v390
        %vm484 = vcmp.lt.s32.totalorder %v307, %v390
        %vm485 = vcmp.lt.s32.totalorder %v308, %v390
        %vm486 = vcmp.lt.s32.totalorder %v309, %v390
        %vm487 = vcmp.lt.s32.totalorder %v310, %v390
        %vm488 = vcmp.lt.s32.totalorder %v311, %v390
        %vm489 = vcmp.lt.s32.totalorder %v312, %v390
        %vm490 = vcmp.lt.s32.totalorder %v313, %v390
        %vm491 = vcmp.lt.s32.totalorder %v314, %v390
        %vm492 = vcmp.lt.s32.totalorder %v315, %v390
        %vm493 = vcmp.lt.s32.totalorder %v316, %v390
        %vm494 = vcmp.lt.s32.totalorder %v317, %v390
        %vm495 = vcmp.lt.s32.totalorder %v302, %v394
        %vm496 = vcmp.lt.s32.totalorder %v303, %v394
        %vm497 = vcmp.lt.s32.totalorder %v304, %v394
        %vm498 = vcmp.lt.s32.totalorder %v305, %v394
        %vm499 = vcmp.lt.s32.totalorder %v306, %v394
        %vm500 = vcmp.lt.s32.totalorder %v307, %v394
        %vm501 = vcmp.lt.s32.totalorder %v308, %v394
        %vm502 = vcmp.lt.s32.totalorder %v309, %v394
        %vm503 = vcmp.lt.s32.totalorder %v310, %v394
        %vm504 = vcmp.lt.s32.totalorder %v311, %v394
        %vm505 = vcmp.lt.s32.totalorder %v312, %v394
        %vm506 = vcmp.lt.s32.totalorder %v313, %v394
        %vm507 = vcmp.lt.s32.totalorder %v314, %v394
        %vm508 = vcmp.lt.s32.totalorder %v315, %v394
        %vm509 = vcmp.lt.s32.totalorder %v316, %v394
        %vm510 = vcmp.lt.s32.totalorder %v317, %v394
        %vm511 = vcmp.lt.s32.totalorder %v302, %v398
        %vm512 = vcmp.lt.s32.totalorder %v303, %v398
        %vm513 = vcmp.lt.s32.totalorder %v304, %v398
        %vm514 = vcmp.lt.s32.totalorder %v305, %v398
        %vm515 = vcmp.lt.s32.totalorder %v306, %v398
        %vm516 = vcmp.lt.s32.totalorder %v307, %v398
        %vm517 = vcmp.lt.s32.totalorder %v308, %v398
        %vm518 = vcmp.lt.s32.totalorder %v309, %v398
        %vm519 = vcmp.lt.s32.totalorder %v310, %v398
        %vm520 = vcmp.lt.s32.totalorder %v311, %v398
        %vm521 = vcmp.lt.s32.totalorder %v312, %v398
        %vm522 = vcmp.lt.s32.totalorder %v313, %v398
        %vm523 = vcmp.lt.s32.totalorder %v314, %v398
        %vm524 = vcmp.lt.s32.totalorder %v315, %v398
        %vm525 = vcmp.lt.s32.totalorder %v316, %v398
        %vm526 = vcmp.lt.s32.totalorder %v317, %v398
        %v527 = vld [vmem:[%s230] sm:$0xf]
        %v528 = vld [vmem:[%s230 + $0x4] sm:$0xf]
        %v529 = vld [vmem:[%s230 + $0x8] sm:$0xf]
        %v530 = vld [vmem:[%s230 + $0xc] sm:$0xf]
        %v531 = vld [vmem:[%s230 + $0x10] sm:$0xf]
        %v532 = vld [vmem:[%s230 + $0x14] sm:$0xf]
        %v533 = vld [vmem:[%s230 + $0x18] sm:$0xf]
        %v534 = vld [vmem:[%s230 + $0x1c] sm:$0xf]
        %v535 = vld [vmem:[%s230 + $0x20] sm:$0xf]
        %v536 = vld [vmem:[%s230 + $0x24] sm:$0xf]
        %v537 = vld [vmem:[%s230 + $0x28] sm:$0xf]
        %v538 = vld [vmem:[%s230 + $0x2c] sm:$0xf]
        %v539 = vld [vmem:[%s230 + $0x30] sm:$0xf]
        %v540 = vld [vmem:[%s230 + $0x34] sm:$0xf]
        %v541 = vld [vmem:[%s230 + $0x38] sm:$0xf]
        %v542 = vld [vmem:[%s230 + $0x3c] sm:$0xf]
        %v543 = vld [vmem:[%s230 + $0x80] sm:$0xf]
        %v544 = vld [vmem:[%s230 + $0x84] sm:$0xf]
        %v545 = vld [vmem:[%s230 + $0x88] sm:$0xf]
        %v546 = vld [vmem:[%s230 + $0x8c] sm:$0xf]
        %v547 = vld [vmem:[%s230 + $0x90] sm:$0xf]
        %v548 = vld [vmem:[%s230 + $0x94] sm:$0xf]
        %v549 = vld [vmem:[%s230 + $0x98] sm:$0xf]
        %v550 = vld [vmem:[%s230 + $0x9c] sm:$0xf]
        %v551 = vld [vmem:[%s230 + $0xa0] sm:$0xf]
        %v552 = vld [vmem:[%s230 + $0xa4] sm:$0xf]
        %v553 = vld [vmem:[%s230 + $0xa8] sm:$0xf]
        %v554 = vld [vmem:[%s230 + $0xac] sm:$0xf]
        %v555 = vld [vmem:[%s230 + $0xb0] sm:$0xf]
        %v556 = vld [vmem:[%s230 + $0xb4] sm:$0xf]
        %v557 = vld [vmem:[%s230 + $0xb8] sm:$0xf]
        %v558 = vld [vmem:[%s230 + $0xbc] sm:$0xf]
        %v559 = vld [vmem:[%s230 + $0x100] sm:$0xf]
        %v560 = vld [vmem:[%s230 + $0x104] sm:$0xf]
        %v561 = vld [vmem:[%s230 + $0x108] sm:$0xf]
        %v562 = vld [vmem:[%s230 + $0x10c] sm:$0xf]
        %v563 = vld [vmem:[%s230 + $0x110] sm:$0xf]
        %v564 = vld [vmem:[%s230 + $0x114] sm:$0xf]
        %v565 = vld [vmem:[%s230 + $0x118] sm:$0xf]
        %v566 = vld [vmem:[%s230 + $0x11c] sm:$0xf]
        %v567 = vld [vmem:[%s230 + $0x120] sm:$0xf]
        %v568 = vld [vmem:[%s230 + $0x124] sm:$0xf]
        %v569 = vld [vmem:[%s230 + $0x128] sm:$0xf]
        %v570 = vld [vmem:[%s230 + $0x12c] sm:$0xf]
        %v571 = vld [vmem:[%s230 + $0x130] sm:$0xf]
        %v572 = vld [vmem:[%s230 + $0x134] sm:$0xf]
        %v573 = vld [vmem:[%s230 + $0x138] sm:$0xf]
        %v574 = vld [vmem:[%s230 + $0x13c] sm:$0xf]
        %v575 = vld [vmem:[%s230 + $0x180] sm:$0xf]
        %v576 = vld [vmem:[%s230 + $0x184] sm:$0xf]
        %v577 = vld [vmem:[%s230 + $0x188] sm:$0xf]
        %v578 = vld [vmem:[%s230 + $0x18c] sm:$0xf]
        %v579 = vld [vmem:[%s230 + $0x190] sm:$0xf]
        %v580 = vld [vmem:[%s230 + $0x194] sm:$0xf]
        %v581 = vld [vmem:[%s230 + $0x198] sm:$0xf]
        %v582 = vld [vmem:[%s230 + $0x19c] sm:$0xf]
        %v583 = vld [vmem:[%s230 + $0x1a0] sm:$0xf]
        %v584 = vld [vmem:[%s230 + $0x1a4] sm:$0xf]
        %v585 = vld [vmem:[%s230 + $0x1a8] sm:$0xf]
        %v586 = vld [vmem:[%s230 + $0x1ac] sm:$0xf]
        %v587 = vld [vmem:[%s230 + $0x1b0] sm:$0xf]
        %v588 = vld [vmem:[%s230 + $0x1b4] sm:$0xf]
        %v589 = vld [vmem:[%s230 + $0x1b8] sm:$0xf]
        %v590 = vld [vmem:[%s230 + $0x1bc] sm:$0xf]
        %v591 = vld [vmem:[%s230 + $0x200] sm:$0xf]
        %v592 = vld [vmem:[%s230 + $0x204] sm:$0xf]
        %v593 = vld [vmem:[%s230 + $0x208] sm:$0xf]
        %v594 = vld [vmem:[%s230 + $0x20c] sm:$0xf]
        %v595 = vld [vmem:[%s230 + $0x210] sm:$0xf]
        %v596 = vld [vmem:[%s230 + $0x214] sm:$0xf]
        %v597 = vld [vmem:[%s230 + $0x218] sm:$0xf]
        %v598 = vld [vmem:[%s230 + $0x21c] sm:$0xf]
        %v599 = vld [vmem:[%s230 + $0x220] sm:$0xf]
        %v600 = vld [vmem:[%s230 + $0x224] sm:$0xf]
        %v601 = vld [vmem:[%s230 + $0x228] sm:$0xf]
        %v602 = vld [vmem:[%s230 + $0x22c] sm:$0xf]
        %v603 = vld [vmem:[%s230 + $0x230] sm:$0xf]
        %v604 = vld [vmem:[%s230 + $0x234] sm:$0xf]
        %v605 = vld [vmem:[%s230 + $0x238] sm:$0xf]
        %v606 = vld [vmem:[%s230 + $0x23c] sm:$0xf]
        %v607 = vld [vmem:[%s230 + $0x280] sm:$0xf]
        %v608 = vld [vmem:[%s230 + $0x284] sm:$0xf]
        %v609 = vld [vmem:[%s230 + $0x288] sm:$0xf]
        %v610 = vld [vmem:[%s230 + $0x28c] sm:$0xf]
        %v611 = vld [vmem:[%s230 + $0x290] sm:$0xf]
        %v612 = vld [vmem:[%s230 + $0x294] sm:$0xf]
        %v613 = vld [vmem:[%s230 + $0x298] sm:$0xf]
        %v614 = vld [vmem:[%s230 + $0x29c] sm:$0xf]
        %v615 = vld [vmem:[%s230 + $0x2a0] sm:$0xf]
        %v616 = vld [vmem:[%s230 + $0x2a4] sm:$0xf]
        %v617 = vld [vmem:[%s230 + $0x2a8] sm:$0xf]
        %v618 = vld [vmem:[%s230 + $0x2ac] sm:$0xf]
        %v619 = vld [vmem:[%s230 + $0x2b0] sm:$0xf]
        %v620 = vld [vmem:[%s230 + $0x2b4] sm:$0xf]
        %v621 = vld [vmem:[%s230 + $0x2b8] sm:$0xf]
        %v622 = vld [vmem:[%s230 + $0x2bc] sm:$0xf]
        %v623 = vld [vmem:[%s230 + $0x300] sm:$0xf]
        %v624 = vld [vmem:[%s230 + $0x304] sm:$0xf]
        %v625 = vld [vmem:[%s230 + $0x308] sm:$0xf]
        %v626 = vld [vmem:[%s230 + $0x30c] sm:$0xf]
        %v627 = vld [vmem:[%s230 + $0x310] sm:$0xf]
        %v628 = vld [vmem:[%s230 + $0x314] sm:$0xf]
        %v629 = vld [vmem:[%s230 + $0x318] sm:$0xf]
        %v630 = vld [vmem:[%s230 + $0x31c] sm:$0xf]
        %v631 = vld [vmem:[%s230 + $0x320] sm:$0xf]
        %v632 = vld [vmem:[%s230 + $0x324] sm:$0xf]
        %v633 = vld [vmem:[%s230 + $0x328] sm:$0xf]
        %v634 = vld [vmem:[%s230 + $0x32c] sm:$0xf]
        %v635 = vld [vmem:[%s230 + $0x330] sm:$0xf]
        %v636 = vld [vmem:[%s230 + $0x334] sm:$0xf]
        %v637 = vld [vmem:[%s230 + $0x338] sm:$0xf]
        %v638 = vld [vmem:[%s230 + $0x33c] sm:$0xf]
        %v639 = vld [vmem:[%s230 + $0x380] sm:$0xf]
        %v640 = vld [vmem:[%s230 + $0x384] sm:$0xf]
        %v641 = vld [vmem:[%s230 + $0x388] sm:$0xf]
        %v642 = vld [vmem:[%s230 + $0x38c] sm:$0xf]
        %v643 = vld [vmem:[%s230 + $0x390] sm:$0xf]
        %v644 = vld [vmem:[%s230 + $0x394] sm:$0xf]
        %v645 = vld [vmem:[%s230 + $0x398] sm:$0xf]
        %v646 = vld [vmem:[%s230 + $0x39c] sm:$0xf]
        %v647 = vld [vmem:[%s230 + $0x3a0] sm:$0xf]
        %v648 = vld [vmem:[%s230 + $0x3a4] sm:$0xf]
        %v649 = vld [vmem:[%s230 + $0x3a8] sm:$0xf]
        %v650 = vld [vmem:[%s230 + $0x3ac] sm:$0xf]
        %v651 = vld [vmem:[%s230 + $0x3b0] sm:$0xf]
        %v652 = vld [vmem:[%s230 + $0x3b4] sm:$0xf]
        %v653 = vld [vmem:[%s230 + $0x3b8] sm:$0xf]
        %v654 = vld [vmem:[%s230 + $0x3bc] sm:$0xf]
        %v655 = vunpack.c.l.bf16 %v527
        %v656 = vunpack.c.l.bf16 %v528
        %v657 = vunpack.c.l.bf16 %v529
        %v658 = vunpack.c.l.bf16 %v530
        %v659 = vunpack.c.l.bf16 %v531
        %v660 = vunpack.c.l.bf16 %v532
        %v661 = vunpack.c.l.bf16 %v533
        %v662 = vunpack.c.l.bf16 %v534
        %v663 = vunpack.c.l.bf16 %v535
        %v664 = vunpack.c.l.bf16 %v536
        %v665 = vunpack.c.l.bf16 %v537
        %v666 = vunpack.c.l.bf16 %v538
        %v667 = vunpack.c.l.bf16 %v539
        %v668 = vunpack.c.l.bf16 %v540
        %v669 = vunpack.c.l.bf16 %v541
        %v670 = vunpack.c.l.bf16 %v542
        %v671 = vunpack.c.l.bf16 %v543
        %v672 = vunpack.c.l.bf16 %v544
        %v673 = vunpack.c.l.bf16 %v545
        %v674 = vunpack.c.l.bf16 %v546
        %v675 = vunpack.c.l.bf16 %v547
        %v676 = vunpack.c.l.bf16 %v548
        %v677 = vunpack.c.l.bf16 %v549
        %v678 = vunpack.c.l.bf16 %v550
        %v679 = vunpack.c.l.bf16 %v551
        %v680 = vunpack.c.l.bf16 %v552
        %v681 = vunpack.c.l.bf16 %v553
        %v682 = vunpack.c.l.bf16 %v554
        %v683 = vunpack.c.l.bf16 %v555
        %v684 = vunpack.c.l.bf16 %v556
        %v685 = vunpack.c.l.bf16 %v557
        %v686 = vunpack.c.l.bf16 %v558
        %v687 = vunpack.c.l.bf16 %v559
        %v688 = vunpack.c.l.bf16 %v560
        %v689 = vunpack.c.l.bf16 %v561
        %v690 = vunpack.c.l.bf16 %v562
        %v691 = vunpack.c.l.bf16 %v563
        %v692 = vunpack.c.l.bf16 %v564
        %v693 = vunpack.c.l.bf16 %v565
        %v694 = vunpack.c.l.bf16 %v566
        %v695 = vunpack.c.l.bf16 %v567
        %v696 = vunpack.c.l.bf16 %v568
        %v697 = vunpack.c.l.bf16 %v569
        %v698 = vunpack.c.l.bf16 %v570
        %v699 = vunpack.c.l.bf16 %v571
        %v700 = vunpack.c.l.bf16 %v572
        %v701 = vunpack.c.l.bf16 %v573
        %v702 = vunpack.c.l.bf16 %v574
        %v703 = vunpack.c.l.bf16 %v575
        %v704 = vunpack.c.l.bf16 %v576
        %v705 = vunpack.c.l.bf16 %v577
        %v706 = vunpack.c.l.bf16 %v578
        %v707 = vunpack.c.l.bf16 %v579
        %v708 = vunpack.c.l.bf16 %v580
        %v709 = vunpack.c.l.bf16 %v581
        %v710 = vunpack.c.l.bf16 %v582
        %v711 = vunpack.c.l.bf16 %v583
        %v712 = vunpack.c.l.bf16 %v584
        %v713 = vunpack.c.l.bf16 %v585
        %v714 = vunpack.c.l.bf16 %v586
        %v715 = vunpack.c.l.bf16 %v587
        %v716 = vunpack.c.l.bf16 %v588
        %v717 = vunpack.c.l.bf16 %v589
        %v718 = vunpack.c.l.bf16 %v590
        %v719 = vunpack.c.l.bf16 %v591
        %v720 = vunpack.c.l.bf16 %v592
        %v721 = vunpack.c.l.bf16 %v593
        %v722 = vunpack.c.l.bf16 %v594
        %v723 = vunpack.c.l.bf16 %v595
        %v724 = vunpack.c.l.bf16 %v596
        %v725 = vunpack.c.l.bf16 %v597
        %v726 = vunpack.c.l.bf16 %v598
        %v727 = vunpack.c.l.bf16 %v599
        %v728 = vunpack.c.l.bf16 %v600
        %v729 = vunpack.c.l.bf16 %v601
        %v730 = vunpack.c.l.bf16 %v602
        %v731 = vunpack.c.l.bf16 %v603
        %v732 = vunpack.c.l.bf16 %v604
        %v733 = vunpack.c.l.bf16 %v605
        %v734 = vunpack.c.l.bf16 %v606
        %v735 = vunpack.c.l.bf16 %v607
        %v736 = vunpack.c.l.bf16 %v608
        %v737 = vunpack.c.l.bf16 %v609
        %v738 = vunpack.c.l.bf16 %v610
        %v739 = vunpack.c.l.bf16 %v611
        %v740 = vunpack.c.l.bf16 %v612
        %v741 = vunpack.c.l.bf16 %v613
        %v742 = vunpack.c.l.bf16 %v614
        %v743 = vunpack.c.l.bf16 %v615
        %v744 = vunpack.c.l.bf16 %v616
        %v745 = vunpack.c.l.bf16 %v617
        %v746 = vunpack.c.l.bf16 %v618
        %v747 = vunpack.c.l.bf16 %v619
        %v748 = vunpack.c.l.bf16 %v620
        %v749 = vunpack.c.l.bf16 %v621
        %v750 = vunpack.c.l.bf16 %v622
        %v751 = vunpack.c.l.bf16 %v623
        %v752 = vunpack.c.l.bf16 %v624
        %v753 = vunpack.c.l.bf16 %v625
        %v754 = vunpack.c.l.bf16 %v626
        %v755 = vunpack.c.l.bf16 %v627
        %v756 = vunpack.c.l.bf16 %v628
        %v757 = vunpack.c.l.bf16 %v629
        %v758 = vunpack.c.l.bf16 %v630
        %v759 = vunpack.c.l.bf16 %v631
        %v760 = vunpack.c.l.bf16 %v632
        %v761 = vunpack.c.l.bf16 %v633
        %v762 = vunpack.c.l.bf16 %v634
        %v763 = vunpack.c.l.bf16 %v635
        %v764 = vunpack.c.l.bf16 %v636
        %v765 = vunpack.c.l.bf16 %v637
        %v766 = vunpack.c.l.bf16 %v638
        %v767 = vunpack.c.l.bf16 %v639
        %v768 = vunpack.c.l.bf16 %v640
        %v769 = vunpack.c.l.bf16 %v641
        %v770 = vunpack.c.l.bf16 %v642
        %v771 = vunpack.c.l.bf16 %v643
        %v772 = vunpack.c.l.bf16 %v644
        %v773 = vunpack.c.l.bf16 %v645
        %v774 = vunpack.c.l.bf16 %v646
        %v775 = vunpack.c.l.bf16 %v647
        %v776 = vunpack.c.l.bf16 %v648
        %v777 = vunpack.c.l.bf16 %v649
        %v778 = vunpack.c.l.bf16 %v650
        %v779 = vunpack.c.l.bf16 %v651
        %v780 = vunpack.c.l.bf16 %v652
        %v781 = vunpack.c.l.bf16 %v653
        %v782 = vunpack.c.l.bf16 %v654
        %v783 = vsel %vm399, 1, 0
        %v784 = vsel %vm400, 1, 0
        %v785 = vsel %vm401, 1, 0
        %v786 = vsel %vm402, 1, 0
        %v787 = vsel %vm403, 1, 0
        %v788 = vsel %vm404, 1, 0
        %v789 = vsel %vm405, 1, 0
        %v790 = vsel %vm406, 1, 0
        %v791 = vsel %vm407, 1, 0
        %v792 = vsel %vm408, 1, 0
        %v793 = vsel %vm409, 1, 0
        %v794 = vsel %vm410, 1, 0
        %v795 = vsel %vm411, 1, 0
        %v796 = vsel %vm412, 1, 0
        %v797 = vsel %vm413, 1, 0
        %v798 = vsel %vm414, 1, 0
        %v799 = vsel %vm415, 1, 0
        %v800 = vsel %vm416, 1, 0
        %v801 = vsel %vm417, 1, 0
        %v802 = vsel %vm418, 1, 0
        %v803 = vsel %vm419, 1, 0
        %v804 = vsel %vm420, 1, 0
        %v805 = vsel %vm421, 1, 0
        %v806 = vsel %vm422, 1, 0
        %v807 = vsel %vm423, 1, 0
        %v808 = vsel %vm424, 1, 0
        %v809 = vsel %vm425, 1, 0
        %v810 = vsel %vm426, 1, 0
        %v811 = vsel %vm427, 1, 0
        %v812 = vsel %vm428, 1, 0
        %v813 = vsel %vm429, 1, 0
        %v814 = vsel %vm430, 1, 0
        %v815 = vsel %vm431, 1, 0
        %v816 = vsel %vm432, 1, 0
        %v817 = vsel %vm433, 1, 0
        %v818 = vsel %vm434, 1, 0
        %v819 = vsel %vm435, 1, 0
        %v820 = vsel %vm436, 1, 0
        %v821 = vsel %vm437, 1, 0
        %v822 = vsel %vm438, 1, 0
        %v823 = vsel %vm439, 1, 0
        %v824 = vsel %vm440, 1, 0
        %v825 = vsel %vm441, 1, 0
        %v826 = vsel %vm442, 1, 0
        %v827 = vsel %vm443, 1, 0
        %v828 = vsel %vm444, 1, 0
        %v829 = vsel %vm445, 1, 0
        %v830 = vsel %vm446, 1, 0
        %v831 = vsel %vm447, 1, 0
        %v832 = vsel %vm448, 1, 0
        %v833 = vsel %vm449, 1, 0
        %v834 = vsel %vm450, 1, 0
        %v835 = vsel %vm451, 1, 0
        %v836 = vsel %vm452, 1, 0
        %v837 = vsel %vm453, 1, 0
        %v838 = vsel %vm454, 1, 0
        %v839 = vsel %vm455, 1, 0
        %v840 = vsel %vm456, 1, 0
        %v841 = vsel %vm457, 1, 0
        %v842 = vsel %vm458, 1, 0
        %v843 = vsel %vm459, 1, 0
        %v844 = vsel %vm460, 1, 0
        %v845 = vsel %vm461, 1, 0
        %v846 = vsel %vm462, 1, 0
        %v847 = vsel %vm463, 1, 0
        %v848 = vsel %vm464, 1, 0
        %v849 = vsel %vm465, 1, 0
        %v850 = vsel %vm466, 1, 0
        %v851 = vsel %vm467, 1, 0
        %v852 = vsel %vm468, 1, 0
        %v853 = vsel %vm469, 1, 0
        %v854 = vsel %vm470, 1, 0
        %v855 = vsel %vm471, 1, 0
        %v856 = vsel %vm472, 1, 0
        %v857 = vsel %vm473, 1, 0
        %v858 = vsel %vm474, 1, 0
        %v859 = vsel %vm475, 1, 0
        %v860 = vsel %vm476, 1, 0
        %v861 = vsel %vm477, 1, 0
        %v862 = vsel %vm478, 1, 0
        %v863 = vsel %vm479, 1, 0
        %v864 = vsel %vm480, 1, 0
        %v865 = vsel %vm481, 1, 0
        %v866 = vsel %vm482, 1, 0
        %v867 = vsel %vm483, 1, 0
        %v868 = vsel %vm484, 1, 0
        %v869 = vsel %vm485, 1, 0
        %v870 = vsel %vm486, 1, 0
        %v871 = vsel %vm487, 1, 0
        %v872 = vsel %vm488, 1, 0
        %v873 = vsel %vm489, 1, 0
        %v874 = vsel %vm490, 1, 0
        %v875 = vsel %vm491, 1, 0
        %v876 = vsel %vm492, 1, 0
        %v877 = vsel %vm493, 1, 0
        %v878 = vsel %vm494, 1, 0
        %v879 = vsel %vm495, 1, 0
        %v880 = vsel %vm496, 1, 0
        %v881 = vsel %vm497, 1, 0
        %v882 = vsel %vm498, 1, 0
        %v883 = vsel %vm499, 1, 0
        %v884 = vsel %vm500, 1, 0
        %v885 = vsel %vm501, 1, 0
        %v886 = vsel %vm502, 1, 0
        %v887 = vsel %vm503, 1, 0
        %v888 = vsel %vm504, 1, 0
        %v889 = vsel %vm505, 1, 0
        %v890 = vsel %vm506, 1, 0
        %v891 = vsel %vm507, 1, 0
        %v892 = vsel %vm508, 1, 0
        %v893 = vsel %vm509, 1, 0
        %v894 = vsel %vm510, 1, 0
        %v895 = vsel %vm511, 1, 0
        %v896 = vsel %vm512, 1, 0
        %v897 = vsel %vm513, 1, 0
        %v898 = vsel %vm514, 1, 0
        %v899 = vsel %vm515, 1, 0
        %v900 = vsel %vm516, 1, 0
        %v901 = vsel %vm517, 1, 0
        %v902 = vsel %vm518, 1, 0
        %v903 = vsel %vm519, 1, 0
        %v904 = vsel %vm520, 1, 0
        %v905 = vsel %vm521, 1, 0
        %v906 = vsel %vm522, 1, 0
        %v907 = vsel %vm523, 1, 0
        %v908 = vsel %vm524, 1, 0
        %v909 = vsel %vm525, 1, 0
        %v910 = vsel %vm526, 1, 0
        %911 = vset.pattern.permute.xlu0 0
        %912 = vperm.xlu0 %911, %v783
        %v913 = vpop.permute.xlu0 %912
        %914 = vset.pattern.permute.xlu0 0
        %915 = vperm.xlu0 %914, %v784
        %v916 = vpop.permute.xlu0 %915
        %917 = vset.pattern.permute.xlu0 0
        %918 = vperm.xlu0 %917, %v785
        %v919 = vpop.permute.xlu0 %918
        %920 = vset.pattern.permute.xlu0 0
        %921 = vperm.xlu0 %920, %v786
        %v922 = vpop.permute.xlu0 %921
        %923 = vset.pattern.permute.xlu0 0
        %924 = vperm.xlu0 %923, %v787
        %v925 = vpop.permute.xlu0 %924
        %926 = vset.pattern.permute.xlu0 0
        %927 = vperm.xlu0 %926, %v788
        %v928 = vpop.permute.xlu0 %927
        %929 = vset.pattern.permute.xlu0 0
        %930 = vperm.xlu0 %929, %v789
        %v931 = vpop.permute.xlu0 %930
        %932 = vset.pattern.permute.xlu0 0
        %933 = vperm.xlu0 %932, %v790
        %v934 = vpop.permute.xlu0 %933
        %935 = vset.pattern.permute.xlu0 0
        %936 = vperm.xlu0 %935, %v791
        %v937 = vpop.permute.xlu0 %936
        %938 = vset.pattern.permute.xlu0 0
        %939 = vperm.xlu0 %938, %v792
        %v940 = vpop.permute.xlu0 %939
        %941 = vset.pattern.permute.xlu0 0
        %942 = vperm.xlu0 %941, %v793
        %v943 = vpop.permute.xlu0 %942
        %944 = vset.pattern.permute.xlu0 0
        %945 = vperm.xlu0 %944, %v794
        %v946 = vpop.permute.xlu0 %945
        %947 = vset.pattern.permute.xlu0 0
        %948 = vperm.xlu0 %947, %v795
        %v949 = vpop.permute.xlu0 %948
        %950 = vset.pattern.permute.xlu0 0
        %951 = vperm.xlu0 %950, %v796
        %v952 = vpop.permute.xlu0 %951
        %953 = vset.pattern.permute.xlu0 0
        %954 = vperm.xlu0 %953, %v797
        %v955 = vpop.permute.xlu0 %954
        %956 = vset.pattern.permute.xlu0 0
        %957 = vperm.xlu0 %956, %v798
        %v958 = vpop.permute.xlu0 %957
        %959 = vset.pattern.permute.xlu0 0
        %960 = vperm.xlu0 %959, %v799
        %v961 = vpop.permute.xlu0 %960
        %962 = vset.pattern.permute.xlu0 0
        %963 = vperm.xlu0 %962, %v800
        %v964 = vpop.permute.xlu0 %963
        %965 = vset.pattern.permute.xlu0 0
        %966 = vperm.xlu0 %965, %v801
        %v967 = vpop.permute.xlu0 %966
        %968 = vset.pattern.permute.xlu0 0
        %969 = vperm.xlu0 %968, %v802
        %v970 = vpop.permute.xlu0 %969
        %971 = vset.pattern.permute.xlu0 0
        %972 = vperm.xlu0 %971, %v803
        %v973 = vpop.permute.xlu0 %972
        %974 = vset.pattern.permute.xlu0 0
        %975 = vperm.xlu0 %974, %v804
        %v976 = vpop.permute.xlu0 %975
        %977 = vset.pattern.permute.xlu0 0
        %978 = vperm.xlu0 %977, %v805
        %v979 = vpop.permute.xlu0 %978
        %980 = vset.pattern.permute.xlu0 0
        %981 = vperm.xlu0 %980, %v806
        %v982 = vpop.permute.xlu0 %981
        %983 = vset.pattern.permute.xlu0 0
        %984 = vperm.xlu0 %983, %v807
        %v985 = vpop.permute.xlu0 %984
        %986 = vset.pattern.permute.xlu0 0
        %987 = vperm.xlu0 %986, %v808
        %v988 = vpop.permute.xlu0 %987
        %989 = vset.pattern.permute.xlu0 0
        %990 = vperm.xlu0 %989, %v809
        %v991 = vpop.permute.xlu0 %990
        %992 = vset.pattern.permute.xlu0 0
        %993 = vperm.xlu0 %992, %v810
        %v994 = vpop.permute.xlu0 %993
        %995 = vset.pattern.permute.xlu0 0
        %996 = vperm.xlu0 %995, %v811
        %v997 = vpop.permute.xlu0 %996
        %998 = vset.pattern.permute.xlu0 0
        %999 = vperm.xlu0 %998, %v812
        %v1000 = vpop.permute.xlu0 %999
        %1001 = vset.pattern.permute.xlu0 0
        %1002 = vperm.xlu0 %1001, %v813
        %v1003 = vpop.permute.xlu0 %1002
        %1004 = vset.pattern.permute.xlu0 0
        %1005 = vperm.xlu0 %1004, %v814
        %v1006 = vpop.permute.xlu0 %1005
        %1007 = vset.pattern.permute.xlu0 0
        %1008 = vperm.xlu0 %1007, %v815
        %v1009 = vpop.permute.xlu0 %1008
        %1010 = vset.pattern.permute.xlu0 0
        %1011 = vperm.xlu0 %1010, %v816
        %v1012 = vpop.permute.xlu0 %1011
        %1013 = vset.pattern.permute.xlu0 0
        %1014 = vperm.xlu0 %1013, %v817
        %v1015 = vpop.permute.xlu0 %1014
        %1016 = vset.pattern.permute.xlu0 0
        %1017 = vperm.xlu0 %1016, %v818
        %v1018 = vpop.permute.xlu0 %1017
        %1019 = vset.pattern.permute.xlu0 0
        %1020 = vperm.xlu0 %1019, %v819
        %v1021 = vpop.permute.xlu0 %1020
        %1022 = vset.pattern.permute.xlu0 0
        %1023 = vperm.xlu0 %1022, %v820
        %v1024 = vpop.permute.xlu0 %1023
        %1025 = vset.pattern.permute.xlu0 0
        %1026 = vperm.xlu0 %1025, %v821
        %v1027 = vpop.permute.xlu0 %1026
        %1028 = vset.pattern.permute.xlu0 0
        %1029 = vperm.xlu0 %1028, %v822
        %v1030 = vpop.permute.xlu0 %1029
        %1031 = vset.pattern.permute.xlu0 0
        %1032 = vperm.xlu0 %1031, %v823
        %v1033 = vpop.permute.xlu0 %1032
        %1034 = vset.pattern.permute.xlu0 0
        %1035 = vperm.xlu0 %1034, %v824
        %v1036 = vpop.permute.xlu0 %1035
        %1037 = vset.pattern.permute.xlu0 0
        %1038 = vperm.xlu0 %1037, %v825
        %v1039 = vpop.permute.xlu0 %1038
        %1040 = vset.pattern.permute.xlu0 0
        %1041 = vperm.xlu0 %1040, %v826
        %v1042 = vpop.permute.xlu0 %1041
        %1043 = vset.pattern.permute.xlu0 0
        %1044 = vperm.xlu0 %1043, %v827
        %v1045 = vpop.permute.xlu0 %1044
        %1046 = vset.pattern.permute.xlu0 0
        %1047 = vperm.xlu0 %1046, %v828
        %v1048 = vpop.permute.xlu0 %1047
        %1049 = vset.pattern.permute.xlu0 0
        %1050 = vperm.xlu0 %1049, %v829
        %v1051 = vpop.permute.xlu0 %1050
        %1052 = vset.pattern.permute.xlu0 0
        %1053 = vperm.xlu0 %1052, %v830
        %v1054 = vpop.permute.xlu0 %1053
        %1055 = vset.pattern.permute.xlu0 0
        %1056 = vperm.xlu0 %1055, %v831
        %v1057 = vpop.permute.xlu0 %1056
        %1058 = vset.pattern.permute.xlu0 0
        %1059 = vperm.xlu0 %1058, %v832
        %v1060 = vpop.permute.xlu0 %1059
        %1061 = vset.pattern.permute.xlu0 0
        %1062 = vperm.xlu0 %1061, %v833
        %v1063 = vpop.permute.xlu0 %1062
        %1064 = vset.pattern.permute.xlu0 0
        %1065 = vperm.xlu0 %1064, %v834
        %v1066 = vpop.permute.xlu0 %1065
        %1067 = vset.pattern.permute.xlu0 0
        %1068 = vperm.xlu0 %1067, %v835
        %v1069 = vpop.permute.xlu0 %1068
        %1070 = vset.pattern.permute.xlu0 0
        %1071 = vperm.xlu0 %1070, %v836
        %v1072 = vpop.permute.xlu0 %1071
        %1073 = vset.pattern.permute.xlu0 0
        %1074 = vperm.xlu0 %1073, %v837
        %v1075 = vpop.permute.xlu0 %1074
        %1076 = vset.pattern.permute.xlu0 0
        %1077 = vperm.xlu0 %1076, %v838
        %v1078 = vpop.permute.xlu0 %1077
        %1079 = vset.pattern.permute.xlu0 0
        %1080 = vperm.xlu0 %1079, %v839
        %v1081 = vpop.permute.xlu0 %1080
        %1082 = vset.pattern.permute.xlu0 0
        %1083 = vperm.xlu0 %1082, %v840
        %v1084 = vpop.permute.xlu0 %1083
        %1085 = vset.pattern.permute.xlu0 0
        %1086 = vperm.xlu0 %1085, %v841
        %v1087 = vpop.permute.xlu0 %1086
        %1088 = vset.pattern.permute.xlu0 0
        %1089 = vperm.xlu0 %1088, %v842
        %v1090 = vpop.permute.xlu0 %1089
        %1091 = vset.pattern.permute.xlu0 0
        %1092 = vperm.xlu0 %1091, %v843
        %v1093 = vpop.permute.xlu0 %1092
        %1094 = vset.pattern.permute.xlu0 0
        %1095 = vperm.xlu0 %1094, %v844
        %v1096 = vpop.permute.xlu0 %1095
        %1097 = vset.pattern.permute.xlu0 0
        %1098 = vperm.xlu0 %1097, %v845
        %v1099 = vpop.permute.xlu0 %1098
        %1100 = vset.pattern.permute.xlu0 0
        %1101 = vperm.xlu0 %1100, %v846
        %v1102 = vpop.permute.xlu0 %1101
        %1103 = vset.pattern.permute.xlu0 0
        %1104 = vperm.xlu0 %1103, %v847
        %v1105 = vpop.permute.xlu0 %1104
        %1106 = vset.pattern.permute.xlu0 0
        %1107 = vperm.xlu0 %1106, %v848
        %v1108 = vpop.permute.xlu0 %1107
        %1109 = vset.pattern.permute.xlu0 0
        %1110 = vperm.xlu0 %1109, %v849
        %v1111 = vpop.permute.xlu0 %1110
        %1112 = vset.pattern.permute.xlu0 0
        %1113 = vperm.xlu0 %1112, %v850
        %v1114 = vpop.permute.xlu0 %1113
        %1115 = vset.pattern.permute.xlu0 0
        %1116 = vperm.xlu0 %1115, %v851
        %v1117 = vpop.permute.xlu0 %1116
        %1118 = vset.pattern.permute.xlu0 0
        %1119 = vperm.xlu0 %1118, %v852
        %v1120 = vpop.permute.xlu0 %1119
        %1121 = vset.pattern.permute.xlu0 0
        %1122 = vperm.xlu0 %1121, %v853
        %v1123 = vpop.permute.xlu0 %1122
        %1124 = vset.pattern.permute.xlu0 0
        %1125 = vperm.xlu0 %1124, %v854
        %v1126 = vpop.permute.xlu0 %1125
        %1127 = vset.pattern.permute.xlu0 0
        %1128 = vperm.xlu0 %1127, %v855
        %v1129 = vpop.permute.xlu0 %1128
        %1130 = vset.pattern.permute.xlu0 0
        %1131 = vperm.xlu0 %1130, %v856
        %v1132 = vpop.permute.xlu0 %1131
        %1133 = vset.pattern.permute.xlu0 0
        %1134 = vperm.xlu0 %1133, %v857
        %v1135 = vpop.permute.xlu0 %1134
        %1136 = vset.pattern.permute.xlu0 0
        %1137 = vperm.xlu0 %1136, %v858
        %v1138 = vpop.permute.xlu0 %1137
        %1139 = vset.pattern.permute.xlu0 0
        %1140 = vperm.xlu0 %1139, %v859
        %v1141 = vpop.permute.xlu0 %1140
        %1142 = vset.pattern.permute.xlu0 0
        %1143 = vperm.xlu0 %1142, %v860
        %v1144 = vpop.permute.xlu0 %1143
        %1145 = vset.pattern.permute.xlu0 0
        %1146 = vperm.xlu0 %1145, %v861
        %v1147 = vpop.permute.xlu0 %1146
        %1148 = vset.pattern.permute.xlu0 0
        %1149 = vperm.xlu0 %1148, %v862
        %v1150 = vpop.permute.xlu0 %1149
        %1151 = vset.pattern.permute.xlu0 0
        %1152 = vperm.xlu0 %1151, %v863
        %v1153 = vpop.permute.xlu0 %1152
        %1154 = vset.pattern.permute.xlu0 0
        %1155 = vperm.xlu0 %1154, %v864
        %v1156 = vpop.permute.xlu0 %1155
        %1157 = vset.pattern.permute.xlu0 0
        %1158 = vperm.xlu0 %1157, %v865
        %v1159 = vpop.permute.xlu0 %1158
        %1160 = vset.pattern.permute.xlu0 0
        %1161 = vperm.xlu0 %1160, %v866
        %v1162 = vpop.permute.xlu0 %1161
        %1163 = vset.pattern.permute.xlu0 0
        %1164 = vperm.xlu0 %1163, %v867
        %v1165 = vpop.permute.xlu0 %1164
        %1166 = vset.pattern.permute.xlu0 0
        %1167 = vperm.xlu0 %1166, %v868
        %v1168 = vpop.permute.xlu0 %1167
        %1169 = vset.pattern.permute.xlu0 0
        %1170 = vperm.xlu0 %1169, %v869
        %v1171 = vpop.permute.xlu0 %1170
        %1172 = vset.pattern.permute.xlu0 0
        %1173 = vperm.xlu0 %1172, %v870
        %v1174 = vpop.permute.xlu0 %1173
        %1175 = vset.pattern.permute.xlu0 0
        %1176 = vperm.xlu0 %1175, %v871
        %v1177 = vpop.permute.xlu0 %1176
        %1178 = vset.pattern.permute.xlu0 0
        %1179 = vperm.xlu0 %1178, %v872
        %v1180 = vpop.permute.xlu0 %1179
        %1181 = vset.pattern.permute.xlu0 0
        %1182 = vperm.xlu0 %1181, %v873
        %v1183 = vpop.permute.xlu0 %1182
        %1184 = vset.pattern.permute.xlu0 0
        %1185 = vperm.xlu0 %1184, %v874
        %v1186 = vpop.permute.xlu0 %1185
        %1187 = vset.pattern.permute.xlu0 0
        %1188 = vperm.xlu0 %1187, %v875
        %v1189 = vpop.permute.xlu0 %1188
        %1190 = vset.pattern.permute.xlu0 0
        %1191 = vperm.xlu0 %1190, %v876
        %v1192 = vpop.permute.xlu0 %1191
        %1193 = vset.pattern.permute.xlu0 0
        %1194 = vperm.xlu0 %1193, %v877
        %v1195 = vpop.permute.xlu0 %1194
        %1196 = vset.pattern.permute.xlu0 0
        %1197 = vperm.xlu0 %1196, %v878
        %v1198 = vpop.permute.xlu0 %1197
        %1199 = vset.pattern.permute.xlu0 0
        %1200 = vperm.xlu0 %1199, %v879
        %v1201 = vpop.permute.xlu0 %1200
        %1202 = vset.pattern.permute.xlu0 0
        %1203 = vperm.xlu0 %1202, %v880
        %v1204 = vpop.permute.xlu0 %1203
        %1205 = vset.pattern.permute.xlu0 0
        %1206 = vperm.xlu0 %1205, %v881
        %v1207 = vpop.permute.xlu0 %1206
        %1208 = vset.pattern.permute.xlu0 0
        %1209 = vperm.xlu0 %1208, %v882
        %v1210 = vpop.permute.xlu0 %1209
        %1211 = vset.pattern.permute.xlu0 0
        %1212 = vperm.xlu0 %1211, %v883
        %v1213 = vpop.permute.xlu0 %1212
        %1214 = vset.pattern.permute.xlu0 0
        %1215 = vperm.xlu0 %1214, %v884
        %v1216 = vpop.permute.xlu0 %1215
        %1217 = vset.pattern.permute.xlu0 0
        %1218 = vperm.xlu0 %1217, %v885
        %v1219 = vpop.permute.xlu0 %1218
        %1220 = vset.pattern.permute.xlu0 0
        %1221 = vperm.xlu0 %1220, %v886
        %v1222 = vpop.permute.xlu0 %1221
        %1223 = vset.pattern.permute.xlu0 0
        %1224 = vperm.xlu0 %1223, %v887
        %v1225 = vpop.permute.xlu0 %1224
        %1226 = vset.pattern.permute.xlu0 0
        %1227 = vperm.xlu0 %1226, %v888
        %v1228 = vpop.permute.xlu0 %1227
        %1229 = vset.pattern.permute.xlu0 0
        %1230 = vperm.xlu0 %1229, %v889
        %v1231 = vpop.permute.xlu0 %1230
        %1232 = vset.pattern.permute.xlu0 0
        %1233 = vperm.xlu0 %1232, %v890
        %v1234 = vpop.permute.xlu0 %1233
        %1235 = vset.pattern.permute.xlu0 0
        %1236 = vperm.xlu0 %1235, %v891
        %v1237 = vpop.permute.xlu0 %1236
        %1238 = vset.pattern.permute.xlu0 0
        %1239 = vperm.xlu0 %1238, %v892
        %v1240 = vpop.permute.xlu0 %1239
        %1241 = vset.pattern.permute.xlu0 0
        %1242 = vperm.xlu0 %1241, %v893
        %v1243 = vpop.permute.xlu0 %1242
        %1244 = vset.pattern.permute.xlu0 0
        %1245 = vperm.xlu0 %1244, %v894
        %v1246 = vpop.permute.xlu0 %1245
        %1247 = vset.pattern.permute.xlu0 0
        %1248 = vperm.xlu0 %1247, %v895
        %v1249 = vpop.permute.xlu0 %1248
        %1250 = vset.pattern.permute.xlu0 0
        %1251 = vperm.xlu0 %1250, %v896
        %v1252 = vpop.permute.xlu0 %1251
        %1253 = vset.pattern.permute.xlu0 0
        %1254 = vperm.xlu0 %1253, %v897
        %v1255 = vpop.permute.xlu0 %1254
        %1256 = vset.pattern.permute.xlu0 0
        %1257 = vperm.xlu0 %1256, %v898
        %v1258 = vpop.permute.xlu0 %1257
        %1259 = vset.pattern.permute.xlu0 0
        %1260 = vperm.xlu0 %1259, %v899
        %v1261 = vpop.permute.xlu0 %1260
        %1262 = vset.pattern.permute.xlu0 0
        %1263 = vperm.xlu0 %1262, %v900
        %v1264 = vpop.permute.xlu0 %1263
        %1265 = vset.pattern.permute.xlu0 0
        %1266 = vperm.xlu0 %1265, %v901
        %v1267 = vpop.permute.xlu0 %1266
        %1268 = vset.pattern.permute.xlu0 0
        %1269 = vperm.xlu0 %1268, %v902
        %v1270 = vpop.permute.xlu0 %1269
        %1271 = vset.pattern.permute.xlu0 0
        %1272 = vperm.xlu0 %1271, %v903
        %v1273 = vpop.permute.xlu0 %1272
        %1274 = vset.pattern.permute.xlu0 0
        %1275 = vperm.xlu0 %1274, %v904
        %v1276 = vpop.permute.xlu0 %1275
        %1277 = vset.pattern.permute.xlu0 0
        %1278 = vperm.xlu0 %1277, %v905
        %v1279 = vpop.permute.xlu0 %1278
        %1280 = vset.pattern.permute.xlu0 0
        %1281 = vperm.xlu0 %1280, %v906
        %v1282 = vpop.permute.xlu0 %1281
        %1283 = vset.pattern.permute.xlu0 0
        %1284 = vperm.xlu0 %1283, %v907
        %v1285 = vpop.permute.xlu0 %1284
        %1286 = vset.pattern.permute.xlu0 0
        %1287 = vperm.xlu0 %1286, %v908
        %v1288 = vpop.permute.xlu0 %1287
        %1289 = vset.pattern.permute.xlu0 0
        %1290 = vperm.xlu0 %1289, %v909
        %v1291 = vpop.permute.xlu0 %1290
        %1292 = vset.pattern.permute.xlu0 0
        %1293 = vperm.xlu0 %1292, %v910
        %v1294 = vpop.permute.xlu0 %1293
        %vm1295 = vcmp.eq.s32.totalorder %v913, 1
        %vm1296 = vcmp.eq.s32.totalorder %v916, 1
        %vm1297 = vcmp.eq.s32.totalorder %v919, 1
        %vm1298 = vcmp.eq.s32.totalorder %v922, 1
        %vm1299 = vcmp.eq.s32.totalorder %v925, 1
        %vm1300 = vcmp.eq.s32.totalorder %v928, 1
        %vm1301 = vcmp.eq.s32.totalorder %v931, 1
        %vm1302 = vcmp.eq.s32.totalorder %v934, 1
        %vm1303 = vcmp.eq.s32.totalorder %v937, 1
        %vm1304 = vcmp.eq.s32.totalorder %v940, 1
        %vm1305 = vcmp.eq.s32.totalorder %v943, 1
        %vm1306 = vcmp.eq.s32.totalorder %v946, 1
        %vm1307 = vcmp.eq.s32.totalorder %v949, 1
        %vm1308 = vcmp.eq.s32.totalorder %v952, 1
        %vm1309 = vcmp.eq.s32.totalorder %v955, 1
        %vm1310 = vcmp.eq.s32.totalorder %v958, 1
        %vm1311 = vcmp.eq.s32.totalorder %v961, 1
        %vm1312 = vcmp.eq.s32.totalorder %v964, 1
        %vm1313 = vcmp.eq.s32.totalorder %v967, 1
        %vm1314 = vcmp.eq.s32.totalorder %v970, 1
        %vm1315 = vcmp.eq.s32.totalorder %v973, 1
        %vm1316 = vcmp.eq.s32.totalorder %v976, 1
        %vm1317 = vcmp.eq.s32.totalorder %v979, 1
        %vm1318 = vcmp.eq.s32.totalorder %v982, 1
        %vm1319 = vcmp.eq.s32.totalorder %v985, 1
        %vm1320 = vcmp.eq.s32.totalorder %v988, 1
        %vm1321 = vcmp.eq.s32.totalorder %v991, 1
        %vm1322 = vcmp.eq.s32.totalorder %v994, 1
        %vm1323 = vcmp.eq.s32.totalorder %v997, 1
        %vm1324 = vcmp.eq.s32.totalorder %v1000, 1
        %vm1325 = vcmp.eq.s32.totalorder %v1003, 1
        %vm1326 = vcmp.eq.s32.totalorder %v1006, 1
        %vm1327 = vcmp.eq.s32.totalorder %v1009, 1
        %vm1328 = vcmp.eq.s32.totalorder %v1012, 1
        %vm1329 = vcmp.eq.s32.totalorder %v1015, 1
        %vm1330 = vcmp.eq.s32.totalorder %v1018, 1
        %vm1331 = vcmp.eq.s32.totalorder %v1021, 1
        %vm1332 = vcmp.eq.s32.totalorder %v1024, 1
        %vm1333 = vcmp.eq.s32.totalorder %v1027, 1
        %vm1334 = vcmp.eq.s32.totalorder %v1030, 1
        %vm1335 = vcmp.eq.s32.totalorder %v1033, 1
        %vm1336 = vcmp.eq.s32.totalorder %v1036, 1
        %vm1337 = vcmp.eq.s32.totalorder %v1039, 1
        %vm1338 = vcmp.eq.s32.totalorder %v1042, 1
        %vm1339 = vcmp.eq.s32.totalorder %v1045, 1
        %vm1340 = vcmp.eq.s32.totalorder %v1048, 1
        %vm1341 = vcmp.eq.s32.totalorder %v1051, 1
        %vm1342 = vcmp.eq.s32.totalorder %v1054, 1
        %vm1343 = vcmp.eq.s32.totalorder %v1057, 1
        %vm1344 = vcmp.eq.s32.totalorder %v1060, 1
        %vm1345 = vcmp.eq.s32.totalorder %v1063, 1
        %vm1346 = vcmp.eq.s32.totalorder %v1066, 1
        %vm1347 = vcmp.eq.s32.totalorder %v1069, 1
        %vm1348 = vcmp.eq.s32.totalorder %v1072, 1
        %vm1349 = vcmp.eq.s32.totalorder %v1075, 1
        %vm1350 = vcmp.eq.s32.totalorder %v1078, 1
        %vm1351 = vcmp.eq.s32.totalorder %v1081, 1
        %vm1352 = vcmp.eq.s32.totalorder %v1084, 1
        %vm1353 = vcmp.eq.s32.totalorder %v1087, 1
        %vm1354 = vcmp.eq.s32.totalorder %v1090, 1
        %vm1355 = vcmp.eq.s32.totalorder %v1093, 1
        %vm1356 = vcmp.eq.s32.totalorder %v1096, 1
        %vm1357 = vcmp.eq.s32.totalorder %v1099, 1
        %vm1358 = vcmp.eq.s32.totalorder %v1102, 1
        %vm1359 = vcmp.eq.s32.totalorder %v1105, 1
        %vm1360 = vcmp.eq.s32.totalorder %v1108, 1
        %vm1361 = vcmp.eq.s32.totalorder %v1111, 1
        %vm1362 = vcmp.eq.s32.totalorder %v1114, 1
        %vm1363 = vcmp.eq.s32.totalorder %v1117, 1
        %vm1364 = vcmp.eq.s32.totalorder %v1120, 1
        %vm1365 = vcmp.eq.s32.totalorder %v1123, 1
        %vm1366 = vcmp.eq.s32.totalorder %v1126, 1
        %vm1367 = vcmp.eq.s32.totalorder %v1129, 1
        %vm1368 = vcmp.eq.s32.totalorder %v1132, 1
        %vm1369 = vcmp.eq.s32.totalorder %v1135, 1
        %vm1370 = vcmp.eq.s32.totalorder %v1138, 1
        %vm1371 = vcmp.eq.s32.totalorder %v1141, 1
        %vm1372 = vcmp.eq.s32.totalorder %v1144, 1
        %vm1373 = vcmp.eq.s32.totalorder %v1147, 1
        %vm1374 = vcmp.eq.s32.totalorder %v1150, 1
        %vm1375 = vcmp.eq.s32.totalorder %v1153, 1
        %vm1376 = vcmp.eq.s32.totalorder %v1156, 1
        %vm1377 = vcmp.eq.s32.totalorder %v1159, 1
        %vm1378 = vcmp.eq.s32.totalorder %v1162, 1
        %vm1379 = vcmp.eq.s32.totalorder %v1165, 1
        %vm1380 = vcmp.eq.s32.totalorder %v1168, 1
        %vm1381 = vcmp.eq.s32.totalorder %v1171, 1
        %vm1382 = vcmp.eq.s32.totalorder %v1174, 1
        %vm1383 = vcmp.eq.s32.totalorder %v1177, 1
        %vm1384 = vcmp.eq.s32.totalorder %v1180, 1
        %vm1385 = vcmp.eq.s32.totalorder %v1183, 1
        %vm1386 = vcmp.eq.s32.totalorder %v1186, 1
        %vm1387 = vcmp.eq.s32.totalorder %v1189, 1
        %vm1388 = vcmp.eq.s32.totalorder %v1192, 1
        %vm1389 = vcmp.eq.s32.totalorder %v1195, 1
        %vm1390 = vcmp.eq.s32.totalorder %v1198, 1
        %vm1391 = vcmp.eq.s32.totalorder %v1201, 1
        %vm1392 = vcmp.eq.s32.totalorder %v1204, 1
        %vm1393 = vcmp.eq.s32.totalorder %v1207, 1
        %vm1394 = vcmp.eq.s32.totalorder %v1210, 1
        %vm1395 = vcmp.eq.s32.totalorder %v1213, 1
        %vm1396 = vcmp.eq.s32.totalorder %v1216, 1
        %vm1397 = vcmp.eq.s32.totalorder %v1219, 1
        %vm1398 = vcmp.eq.s32.totalorder %v1222, 1
        %vm1399 = vcmp.eq.s32.totalorder %v1225, 1
        %vm1400 = vcmp.eq.s32.totalorder %v1228, 1
        %vm1401 = vcmp.eq.s32.totalorder %v1231, 1
        %vm1402 = vcmp.eq.s32.totalorder %v1234, 1
        %vm1403 = vcmp.eq.s32.totalorder %v1237, 1
        %vm1404 = vcmp.eq.s32.totalorder %v1240, 1
        %vm1405 = vcmp.eq.s32.totalorder %v1243, 1
        %vm1406 = vcmp.eq.s32.totalorder %v1246, 1
        %vm1407 = vcmp.eq.s32.totalorder %v1249, 1
        %vm1408 = vcmp.eq.s32.totalorder %v1252, 1
        %vm1409 = vcmp.eq.s32.totalorder %v1255, 1
        %vm1410 = vcmp.eq.s32.totalorder %v1258, 1
        %vm1411 = vcmp.eq.s32.totalorder %v1261, 1
        %vm1412 = vcmp.eq.s32.totalorder %v1264, 1
        %vm1413 = vcmp.eq.s32.totalorder %v1267, 1
        %vm1414 = vcmp.eq.s32.totalorder %v1270, 1
        %vm1415 = vcmp.eq.s32.totalorder %v1273, 1
        %vm1416 = vcmp.eq.s32.totalorder %v1276, 1
        %vm1417 = vcmp.eq.s32.totalorder %v1279, 1
        %vm1418 = vcmp.eq.s32.totalorder %v1282, 1
        %vm1419 = vcmp.eq.s32.totalorder %v1285, 1
        %vm1420 = vcmp.eq.s32.totalorder %v1288, 1
        %vm1421 = vcmp.eq.s32.totalorder %v1291, 1
        %vm1422 = vcmp.eq.s32.totalorder %v1294, 1
        %v1423 = vsel %vm1295, %v655, 0.0
        %v1424 = vsel %vm1296, %v656, 0.0
        %v1425 = vsel %vm1297, %v657, 0.0
        %v1426 = vsel %vm1298, %v658, 0.0
        %v1427 = vsel %vm1299, %v659, 0.0
        %v1428 = vsel %vm1300, %v660, 0.0
        %v1429 = vsel %vm1301, %v661, 0.0
        %v1430 = vsel %vm1302, %v662, 0.0
        %v1431 = vsel %vm1303, %v663, 0.0
        %v1432 = vsel %vm1304, %v664, 0.0
        %v1433 = vsel %vm1305, %v665, 0.0
        %v1434 = vsel %vm1306, %v666, 0.0
        %v1435 = vsel %vm1307, %v667, 0.0
        %v1436 = vsel %vm1308, %v668, 0.0
        %v1437 = vsel %vm1309, %v669, 0.0
        %v1438 = vsel %vm1310, %v670, 0.0
        %v1439 = vsel %vm1311, %v671, 0.0
        %v1440 = vsel %vm1312, %v672, 0.0
        %v1441 = vsel %vm1313, %v673, 0.0
        %v1442 = vsel %vm1314, %v674, 0.0
        %v1443 = vsel %vm1315, %v675, 0.0
        %v1444 = vsel %vm1316, %v676, 0.0
        %v1445 = vsel %vm1317, %v677, 0.0
        %v1446 = vsel %vm1318, %v678, 0.0
        %v1447 = vsel %vm1319, %v679, 0.0
        %v1448 = vsel %vm1320, %v680, 0.0
        %v1449 = vsel %vm1321, %v681, 0.0
        %v1450 = vsel %vm1322, %v682, 0.0
        %v1451 = vsel %vm1323, %v683, 0.0
        %v1452 = vsel %vm1324, %v684, 0.0
        %v1453 = vsel %vm1325, %v685, 0.0
        %v1454 = vsel %vm1326, %v686, 0.0
        %v1455 = vsel %vm1327, %v687, 0.0
        %v1456 = vsel %vm1328, %v688, 0.0
        %v1457 = vsel %vm1329, %v689, 0.0
        %v1458 = vsel %vm1330, %v690, 0.0
        %v1459 = vsel %vm1331, %v691, 0.0
        %v1460 = vsel %vm1332, %v692, 0.0
        %v1461 = vsel %vm1333, %v693, 0.0
        %v1462 = vsel %vm1334, %v694, 0.0
        %v1463 = vsel %vm1335, %v695, 0.0
        %v1464 = vsel %vm1336, %v696, 0.0
        %v1465 = vsel %vm1337, %v697, 0.0
        %v1466 = vsel %vm1338, %v698, 0.0
        %v1467 = vsel %vm1339, %v699, 0.0
        %v1468 = vsel %vm1340, %v700, 0.0
        %v1469 = vsel %vm1341, %v701, 0.0
        %v1470 = vsel %vm1342, %v702, 0.0
        %v1471 = vsel %vm1343, %v703, 0.0
        %v1472 = vsel %vm1344, %v704, 0.0
        %v1473 = vsel %vm1345, %v705, 0.0
        %v1474 = vsel %vm1346, %v706, 0.0
        %v1475 = vsel %vm1347, %v707, 0.0
        %v1476 = vsel %vm1348, %v708, 0.0
        %v1477 = vsel %vm1349, %v709, 0.0
        %v1478 = vsel %vm1350, %v710, 0.0
        %v1479 = vsel %vm1351, %v711, 0.0
        %v1480 = vsel %vm1352, %v712, 0.0
        %v1481 = vsel %vm1353, %v713, 0.0
        %v1482 = vsel %vm1354, %v714, 0.0
        %v1483 = vsel %vm1355, %v715, 0.0
        %v1484 = vsel %vm1356, %v716, 0.0
        %v1485 = vsel %vm1357, %v717, 0.0
        %v1486 = vsel %vm1358, %v718, 0.0
        %v1487 = vsel %vm1359, %v719, 0.0
        %v1488 = vsel %vm1360, %v720, 0.0
        %v1489 = vsel %vm1361, %v721, 0.0
        %v1490 = vsel %vm1362, %v722, 0.0
        %v1491 = vsel %vm1363, %v723, 0.0
        %v1492 = vsel %vm1364, %v724, 0.0
        %v1493 = vsel %vm1365, %v725, 0.0
        %v1494 = vsel %vm1366, %v726, 0.0
        %v1495 = vsel %vm1367, %v727, 0.0
        %v1496 = vsel %vm1368, %v728, 0.0
        %v1497 = vsel %vm1369, %v729, 0.0
        %v1498 = vsel %vm1370, %v730, 0.0
        %v1499 = vsel %vm1371, %v731, 0.0
        %v1500 = vsel %vm1372, %v732, 0.0
        %v1501 = vsel %vm1373, %v733, 0.0
        %v1502 = vsel %vm1374, %v734, 0.0
        %v1503 = vsel %vm1375, %v735, 0.0
        %v1504 = vsel %vm1376, %v736, 0.0
        %v1505 = vsel %vm1377, %v737, 0.0
        %v1506 = vsel %vm1378, %v738, 0.0
        %v1507 = vsel %vm1379, %v739, 0.0
        %v1508 = vsel %vm1380, %v740, 0.0
        %v1509 = vsel %vm1381, %v741, 0.0
        %v1510 = vsel %vm1382, %v742, 0.0
        %v1511 = vsel %vm1383, %v743, 0.0
        %v1512 = vsel %vm1384, %v744, 0.0
        %v1513 = vsel %vm1385, %v745, 0.0
        %v1514 = vsel %vm1386, %v746, 0.0
        %v1515 = vsel %vm1387, %v747, 0.0
        %v1516 = vsel %vm1388, %v748, 0.0
        %v1517 = vsel %vm1389, %v749, 0.0
        %v1518 = vsel %vm1390, %v750, 0.0
        %v1519 = vsel %vm1391, %v751, 0.0
        %v1520 = vsel %vm1392, %v752, 0.0
        %v1521 = vsel %vm1393, %v753, 0.0
        %v1522 = vsel %vm1394, %v754, 0.0
        %v1523 = vsel %vm1395, %v755, 0.0
        %v1524 = vsel %vm1396, %v756, 0.0
        %v1525 = vsel %vm1397, %v757, 0.0
        %v1526 = vsel %vm1398, %v758, 0.0
        %v1527 = vsel %vm1399, %v759, 0.0
        %v1528 = vsel %vm1400, %v760, 0.0
        %v1529 = vsel %vm1401, %v761, 0.0
        %v1530 = vsel %vm1402, %v762, 0.0
        %v1531 = vsel %vm1403, %v763, 0.0
        %v1532 = vsel %vm1404, %v764, 0.0
        %v1533 = vsel %vm1405, %v765, 0.0
        %v1534 = vsel %vm1406, %v766, 0.0
        %v1535 = vsel %vm1407, %v767, 0.0
        %v1536 = vsel %vm1408, %v768, 0.0
        %v1537 = vsel %vm1409, %v769, 0.0
        %v1538 = vsel %vm1410, %v770, 0.0
        %v1539 = vsel %vm1411, %v771, 0.0
        %v1540 = vsel %vm1412, %v772, 0.0
        %v1541 = vsel %vm1413, %v773, 0.0
        %v1542 = vsel %vm1414, %v774, 0.0
        %v1543 = vsel %vm1415, %v775, 0.0
        %v1544 = vsel %vm1416, %v776, 0.0
        %v1545 = vsel %vm1417, %v777, 0.0
        %v1546 = vsel %vm1418, %v778, 0.0
        %v1547 = vsel %vm1419, %v779, 0.0
        %v1548 = vsel %vm1420, %v780, 0.0
        %v1549 = vsel %vm1421, %v781, 0.0
        %v1550 = vsel %vm1422, %v782, 0.0
        %v1551 = vadd.f32 %v1423, %v1424
        %v1552 = vadd.f32 %v1551, %v1425
        %v1553 = vadd.f32 %v1552, %v1426
        %v1554 = vadd.f32 %v1553, %v1427
        %v1555 = vadd.f32 %v1554, %v1428
        %v1556 = vadd.f32 %v1555, %v1429
        %v1557 = vadd.f32 %v1556, %v1430
        %v1558 = vadd.f32 %v1557, %v1431
        %v1559 = vadd.f32 %v1558, %v1432
        %v1560 = vadd.f32 %v1559, %v1433
        %v1561 = vadd.f32 %v1560, %v1434
        %v1562 = vadd.f32 %v1561, %v1435
        %v1563 = vadd.f32 %v1562, %v1436
        %v1564 = vadd.f32 %v1563, %v1437
        %v1565 = vadd.f32 %v1564, %v1438
        %v1566 = vrot.slane %v1565, 4
        %v1567 = vadd.f32 %v1565, %v1566
        %v1568 = vrot.slane %v1567, 2
        %v1569 = vadd.f32 %v1567, %v1568
        %v1570 = vrot.slane %v1569, 1
        %v1571 = vadd.f32 %v1569, %v1570
        %v1572 = vadd.f32 %v1439, %v1440
        %v1573 = vadd.f32 %v1572, %v1441
        %v1574 = vadd.f32 %v1573, %v1442
        %v1575 = vadd.f32 %v1574, %v1443
        %v1576 = vadd.f32 %v1575, %v1444
        %v1577 = vadd.f32 %v1576, %v1445
        %v1578 = vadd.f32 %v1577, %v1446
        %v1579 = vadd.f32 %v1578, %v1447
        %v1580 = vadd.f32 %v1579, %v1448
        %v1581 = vadd.f32 %v1580, %v1449
        %v1582 = vadd.f32 %v1581, %v1450
        %v1583 = vadd.f32 %v1582, %v1451
        %v1584 = vadd.f32 %v1583, %v1452
        %v1585 = vadd.f32 %v1584, %v1453
        %v1586 = vadd.f32 %v1585, %v1454
        %v1587 = vrot.slane %v1586, 4
        %v1588 = vadd.f32 %v1586, %v1587
        %v1589 = vrot.slane %v1588, 2
        %v1590 = vadd.f32 %v1588, %v1589
        %v1591 = vrot.slane %v1590, 1
        %v1592 = vadd.f32 %v1590, %v1591
        %v1593 = vadd.f32 %v1455, %v1456
        %v1594 = vadd.f32 %v1593, %v1457
        %v1595 = vadd.f32 %v1594, %v1458
        %v1596 = vadd.f32 %v1595, %v1459
        %v1597 = vadd.f32 %v1596, %v1460
        %v1598 = vadd.f32 %v1597, %v1461
        %v1599 = vadd.f32 %v1598, %v1462
        %v1600 = vadd.f32 %v1599, %v1463
        %v1601 = vadd.f32 %v1600, %v1464
        %v1602 = vadd.f32 %v1601, %v1465
        %v1603 = vadd.f32 %v1602, %v1466
        %v1604 = vadd.f32 %v1603, %v1467
        %v1605 = vadd.f32 %v1604, %v1468
        %v1606 = vadd.f32 %v1605, %v1469
        %v1607 = vadd.f32 %v1606, %v1470
        %v1608 = vrot.slane %v1607, 4
        %v1609 = vadd.f32 %v1607, %v1608
        %v1610 = vrot.slane %v1609, 2
        %v1611 = vadd.f32 %v1609, %v1610
        %v1612 = vrot.slane %v1611, 1
        %v1613 = vadd.f32 %v1611, %v1612
        %v1614 = vadd.f32 %v1471, %v1472
        %v1615 = vadd.f32 %v1614, %v1473
        %v1616 = vadd.f32 %v1615, %v1474
        %v1617 = vadd.f32 %v1616, %v1475
        %v1618 = vadd.f32 %v1617, %v1476
        %v1619 = vadd.f32 %v1618, %v1477
        %v1620 = vadd.f32 %v1619, %v1478
        %v1621 = vadd.f32 %v1620, %v1479
        %v1622 = vadd.f32 %v1621, %v1480
        %v1623 = vadd.f32 %v1622, %v1481
        %v1624 = vadd.f32 %v1623, %v1482
        %v1625 = vadd.f32 %v1624, %v1483
        %v1626 = vadd.f32 %v1625, %v1484
        %v1627 = vadd.f32 %v1626, %v1485
        %v1628 = vadd.f32 %v1627, %v1486
        %v1629 = vrot.slane %v1628, 4
        %v1630 = vadd.f32 %v1628, %v1629
        %v1631 = vrot.slane %v1630, 2
        %v1632 = vadd.f32 %v1630, %v1631
        %v1633 = vrot.slane %v1632, 1
        %v1634 = vadd.f32 %v1632, %v1633
        %v1635 = vadd.f32 %v1487, %v1488
        %v1636 = vadd.f32 %v1635, %v1489
        %v1637 = vadd.f32 %v1636, %v1490
        %v1638 = vadd.f32 %v1637, %v1491
        %v1639 = vadd.f32 %v1638, %v1492
        %v1640 = vadd.f32 %v1639, %v1493
        %v1641 = vadd.f32 %v1640, %v1494
        %v1642 = vadd.f32 %v1641, %v1495
        %v1643 = vadd.f32 %v1642, %v1496
        %v1644 = vadd.f32 %v1643, %v1497
        %v1645 = vadd.f32 %v1644, %v1498
        %v1646 = vadd.f32 %v1645, %v1499
        %v1647 = vadd.f32 %v1646, %v1500
        %v1648 = vadd.f32 %v1647, %v1501
        %v1649 = vadd.f32 %v1648, %v1502
        %v1650 = vrot.slane %v1649, 4
        %v1651 = vadd.f32 %v1649, %v1650
        %v1652 = vrot.slane %v1651, 2
        %v1653 = vadd.f32 %v1651, %v1652
        %v1654 = vrot.slane %v1653, 1
        %v1655 = vadd.f32 %v1653, %v1654
        %v1656 = vadd.f32 %v1503, %v1504
        %v1657 = vadd.f32 %v1656, %v1505
        %v1658 = vadd.f32 %v1657, %v1506
        %v1659 = vadd.f32 %v1658, %v1507
        %v1660 = vadd.f32 %v1659, %v1508
        %v1661 = vadd.f32 %v1660, %v1509
        %v1662 = vadd.f32 %v1661, %v1510
        %v1663 = vadd.f32 %v1662, %v1511
        %v1664 = vadd.f32 %v1663, %v1512
        %v1665 = vadd.f32 %v1664, %v1513
        %v1666 = vadd.f32 %v1665, %v1514
        %v1667 = vadd.f32 %v1666, %v1515
        %v1668 = vadd.f32 %v1667, %v1516
        %v1669 = vadd.f32 %v1668, %v1517
        %v1670 = vadd.f32 %v1669, %v1518
        %v1671 = vrot.slane %v1670, 4
        %v1672 = vadd.f32 %v1670, %v1671
        %v1673 = vrot.slane %v1672, 2
        %v1674 = vadd.f32 %v1672, %v1673
        %v1675 = vrot.slane %v1674, 1
        %v1676 = vadd.f32 %v1674, %v1675
        %v1677 = vadd.f32 %v1519, %v1520
        %v1678 = vadd.f32 %v1677, %v1521
        %v1679 = vadd.f32 %v1678, %v1522
        %v1680 = vadd.f32 %v1679, %v1523
        %v1681 = vadd.f32 %v1680, %v1524
        %v1682 = vadd.f32 %v1681, %v1525
        %v1683 = vadd.f32 %v1682, %v1526
        %v1684 = vadd.f32 %v1683, %v1527
        %v1685 = vadd.f32 %v1684, %v1528
        %v1686 = vadd.f32 %v1685, %v1529
        %v1687 = vadd.f32 %v1686, %v1530
        %v1688 = vadd.f32 %v1687, %v1531
        %v1689 = vadd.f32 %v1688, %v1532
        %v1690 = vadd.f32 %v1689, %v1533
        %v1691 = vadd.f32 %v1690, %v1534
        %v1692 = vrot.slane %v1691, 4
        %v1693 = vadd.f32 %v1691, %v1692
        %v1694 = vrot.slane %v1693, 2
        %v1695 = vadd.f32 %v1693, %v1694
        %v1696 = vrot.slane %v1695, 1
        %v1697 = vadd.f32 %v1695, %v1696
        %v1698 = vadd.f32 %v1535, %v1536
        %v1699 = vadd.f32 %v1698, %v1537
        %v1700 = vadd.f32 %v1699, %v1538
        %v1701 = vadd.f32 %v1700, %v1539
        %v1702 = vadd.f32 %v1701, %v1540
        %v1703 = vadd.f32 %v1702, %v1541
        %v1704 = vadd.f32 %v1703, %v1542
        %v1705 = vadd.f32 %v1704, %v1543
        %v1706 = vadd.f32 %v1705, %v1544
        %v1707 = vadd.f32 %v1706, %v1545
        %v1708 = vadd.f32 %v1707, %v1546
        %v1709 = vadd.f32 %v1708, %v1547
        %v1710 = vadd.f32 %v1709, %v1548
        %v1711 = vadd.f32 %v1710, %v1549
        %v1712 = vadd.f32 %v1711, %v1550
        %v1713 = vrot.slane %v1712, 4
        %v1714 = vadd.f32 %v1712, %v1713
        %v1715 = vrot.slane %v1714, 2
        %v1716 = vadd.f32 %v1714, %v1715
        %v1717 = vrot.slane %v1716, 1
        %v1718 = vadd.f32 %v1716, %v1717
        %v1719 = vadd.f32 %v1571, 0.0
        %v1720 = vadd.f32 %v1592, 0.0
        %v1721 = vadd.f32 %v1613, 0.0
        %v1722 = vadd.f32 %v1634, 0.0
        %v1723 = vadd.f32 %v1655, 0.0
        %v1724 = vadd.f32 %v1676, 0.0
        %v1725 = vadd.f32 %v1697, 0.0
        %v1726 = vadd.f32 %v1718, 0.0
        %v1727 = vstv 128
        %v1728 = vadd.s32 %v285, %v1727
        %v1729 = vadd.s32 %v286, %v1727
        %v1730 = vadd.s32 %v287, %v1727
        %v1731 = vadd.s32 %v288, %v1727
        %v1732 = vadd.s32 %v289, %v1727
        %v1733 = vadd.s32 %v290, %v1727
        %v1734 = vadd.s32 %v291, %v1727
        %v1735 = vadd.s32 %v292, %v1727
        %v1736 = vadd.s32 %v293, %v1727
        %v1737 = vadd.s32 %v294, %v1727
        %v1738 = vadd.s32 %v295, %v1727
        %v1739 = vadd.s32 %v296, %v1727
        %v1740 = vadd.s32 %v297, %v1727
        %v1741 = vadd.s32 %v298, %v1727
        %v1742 = vadd.s32 %v299, %v1727
        %v1743 = vadd.s32 %v300, %v1727
        %vm1744 = vcmp.lt.s32.totalorder %v1728, %v370
        %vm1745 = vcmp.lt.s32.totalorder %v1729, %v370
        %vm1746 = vcmp.lt.s32.totalorder %v1730, %v370
        %vm1747 = vcmp.lt.s32.totalorder %v1731, %v370
        %vm1748 = vcmp.lt.s32.totalorder %v1732, %v370
        %vm1749 = vcmp.lt.s32.totalorder %v1733, %v370
        %vm1750 = vcmp.lt.s32.totalorder %v1734, %v370
        %vm1751 = vcmp.lt.s32.totalorder %v1735, %v370
        %vm1752 = vcmp.lt.s32.totalorder %v1736, %v370
        %vm1753 = vcmp.lt.s32.totalorder %v1737, %v370
        %vm1754 = vcmp.lt.s32.totalorder %v1738, %v370
        %vm1755 = vcmp.lt.s32.totalorder %v1739, %v370
        %vm1756 = vcmp.lt.s32.totalorder %v1740, %v370
        %vm1757 = vcmp.lt.s32.totalorder %v1741, %v370
        %vm1758 = vcmp.lt.s32.totalorder %v1742, %v370
        %vm1759 = vcmp.lt.s32.totalorder %v1743, %v370
        %vm1760 = vcmp.lt.s32.totalorder %v1728, %v374
        %vm1761 = vcmp.lt.s32.totalorder %v1729, %v374
        %vm1762 = vcmp.lt.s32.totalorder %v1730, %v374
        %vm1763 = vcmp.lt.s32.totalorder %v1731, %v374
        %vm1764 = vcmp.lt.s32.totalorder %v1732, %v374
        %vm1765 = vcmp.lt.s32.totalorder %v1733, %v374
        %vm1766 = vcmp.lt.s32.totalorder %v1734, %v374
        %vm1767 = vcmp.lt.s32.totalorder %v1735, %v374
        %vm1768 = vcmp.lt.s32.totalorder %v1736, %v374
        %vm1769 = vcmp.lt.s32.totalorder %v1737, %v374
        %vm1770 = vcmp.lt.s32.totalorder %v1738, %v374
        %vm1771 = vcmp.lt.s32.totalorder %v1739, %v374
        %vm1772 = vcmp.lt.s32.totalorder %v1740, %v374
        %vm1773 = vcmp.lt.s32.totalorder %v1741, %v374
        %vm1774 = vcmp.lt.s32.totalorder %v1742, %v374
        %vm1775 = vcmp.lt.s32.totalorder %v1743, %v374
        %vm1776 = vcmp.lt.s32.totalorder %v1728, %v378
        %vm1777 = vcmp.lt.s32.totalorder %v1729, %v378
        %vm1778 = vcmp.lt.s32.totalorder %v1730, %v378
        %vm1779 = vcmp.lt.s32.totalorder %v1731, %v378
        %vm1780 = vcmp.lt.s32.totalorder %v1732, %v378
        %vm1781 = vcmp.lt.s32.totalorder %v1733, %v378
        %vm1782 = vcmp.lt.s32.totalorder %v1734, %v378
        %vm1783 = vcmp.lt.s32.totalorder %v1735, %v378
        %vm1784 = vcmp.lt.s32.totalorder %v1736, %v378
        %vm1785 = vcmp.lt.s32.totalorder %v1737, %v378
        %vm1786 = vcmp.lt.s32.totalorder %v1738, %v378
        %vm1787 = vcmp.lt.s32.totalorder %v1739, %v378
        %vm1788 = vcmp.lt.s32.totalorder %v1740, %v378
        %vm1789 = vcmp.lt.s32.totalorder %v1741, %v378
        %vm1790 = vcmp.lt.s32.totalorder %v1742, %v378
        %vm1791 = vcmp.lt.s32.totalorder %v1743, %v378
        %vm1792 = vcmp.lt.s32.totalorder %v1728, %v382
        %vm1793 = vcmp.lt.s32.totalorder %v1729, %v382
        %vm1794 = vcmp.lt.s32.totalorder %v1730, %v382
        %vm1795 = vcmp.lt.s32.totalorder %v1731, %v382
        %vm1796 = vcmp.lt.s32.totalorder %v1732, %v382
        %vm1797 = vcmp.lt.s32.totalorder %v1733, %v382
        %vm1798 = vcmp.lt.s32.totalorder %v1734, %v382
        %vm1799 = vcmp.lt.s32.totalorder %v1735, %v382
        %vm1800 = vcmp.lt.s32.totalorder %v1736, %v382
        %vm1801 = vcmp.lt.s32.totalorder %v1737, %v382
        %vm1802 = vcmp.lt.s32.totalorder %v1738, %v382
        %vm1803 = vcmp.lt.s32.totalorder %v1739, %v382
        %vm1804 = vcmp.lt.s32.totalorder %v1740, %v382
        %vm1805 = vcmp.lt.s32.totalorder %v1741, %v382
        %vm1806 = vcmp.lt.s32.totalorder %v1742, %v382
        %vm1807 = vcmp.lt.s32.totalorder %v1743, %v382
        %vm1808 = vcmp.lt.s32.totalorder %v1728, %v386
        %vm1809 = vcmp.lt.s32.totalorder %v1729, %v386
        %vm1810 = vcmp.lt.s32.totalorder %v1730, %v386
        %vm1811 = vcmp.lt.s32.totalorder %v1731, %v386
        %vm1812 = vcmp.lt.s32.totalorder %v1732, %v386
        %vm1813 = vcmp.lt.s32.totalorder %v1733, %v386
        %vm1814 = vcmp.lt.s32.totalorder %v1734, %v386
        %vm1815 = vcmp.lt.s32.totalorder %v1735, %v386
        %vm1816 = vcmp.lt.s32.totalorder %v1736, %v386
        %vm1817 = vcmp.lt.s32.totalorder %v1737, %v386
        %vm1818 = vcmp.lt.s32.totalorder %v1738, %v386
        %vm1819 = vcmp.lt.s32.totalorder %v1739, %v386
        %vm1820 = vcmp.lt.s32.totalorder %v1740, %v386
        %vm1821 = vcmp.lt.s32.totalorder %v1741, %v386
        %vm1822 = vcmp.lt.s32.totalorder %v1742, %v386
        %vm1823 = vcmp.lt.s32.totalorder %v1743, %v386
        %vm1824 = vcmp.lt.s32.totalorder %v1728, %v390
        %vm1825 = vcmp.lt.s32.totalorder %v1729, %v390
        %vm1826 = vcmp.lt.s32.totalorder %v1730, %v390
        %vm1827 = vcmp.lt.s32.totalorder %v1731, %v390
        %vm1828 = vcmp.lt.s32.totalorder %v1732, %v390
        %vm1829 = vcmp.lt.s32.totalorder %v1733, %v390
        %vm1830 = vcmp.lt.s32.totalorder %v1734, %v390
        %vm1831 = vcmp.lt.s32.totalorder %v1735, %v390
        %vm1832 = vcmp.lt.s32.totalorder %v1736, %v390
        %vm1833 = vcmp.lt.s32.totalorder %v1737, %v390
        %vm1834 = vcmp.lt.s32.totalorder %v1738, %v390
        %vm1835 = vcmp.lt.s32.totalorder %v1739, %v390
        %vm1836 = vcmp.lt.s32.totalorder %v1740, %v390
        %vm1837 = vcmp.lt.s32.totalorder %v1741, %v390
        %vm1838 = vcmp.lt.s32.totalorder %v1742, %v390
        %vm1839 = vcmp.lt.s32.totalorder %v1743, %v390
        %vm1840 = vcmp.lt.s32.totalorder %v1728, %v394
        %vm1841 = vcmp.lt.s32.totalorder %v1729, %v394
        %vm1842 = vcmp.lt.s32.totalorder %v1730, %v394
        %vm1843 = vcmp.lt.s32.totalorder %v1731, %v394
        %vm1844 = vcmp.lt.s32.totalorder %v1732, %v394
        %vm1845 = vcmp.lt.s32.totalorder %v1733, %v394
        %vm1846 = vcmp.lt.s32.totalorder %v1734, %v394
        %vm1847 = vcmp.lt.s32.totalorder %v1735, %v394
        %vm1848 = vcmp.lt.s32.totalorder %v1736, %v394
        %vm1849 = vcmp.lt.s32.totalorder %v1737, %v394
        %vm1850 = vcmp.lt.s32.totalorder %v1738, %v394
        %vm1851 = vcmp.lt.s32.totalorder %v1739, %v394
        %vm1852 = vcmp.lt.s32.totalorder %v1740, %v394
        %vm1853 = vcmp.lt.s32.totalorder %v1741, %v394
        %vm1854 = vcmp.lt.s32.totalorder %v1742, %v394
        %vm1855 = vcmp.lt.s32.totalorder %v1743, %v394
        %vm1856 = vcmp.lt.s32.totalorder %v1728, %v398
        %vm1857 = vcmp.lt.s32.totalorder %v1729, %v398
        %vm1858 = vcmp.lt.s32.totalorder %v1730, %v398
        %vm1859 = vcmp.lt.s32.totalorder %v1731, %v398
        %vm1860 = vcmp.lt.s32.totalorder %v1732, %v398
        %vm1861 = vcmp.lt.s32.totalorder %v1733, %v398
        %vm1862 = vcmp.lt.s32.totalorder %v1734, %v398
        %vm1863 = vcmp.lt.s32.totalorder %v1735, %v398
        %vm1864 = vcmp.lt.s32.totalorder %v1736, %v398
        %vm1865 = vcmp.lt.s32.totalorder %v1737, %v398
        %vm1866 = vcmp.lt.s32.totalorder %v1738, %v398
        %vm1867 = vcmp.lt.s32.totalorder %v1739, %v398
        %vm1868 = vcmp.lt.s32.totalorder %v1740, %v398
        %vm1869 = vcmp.lt.s32.totalorder %v1741, %v398
        %vm1870 = vcmp.lt.s32.totalorder %v1742, %v398
        %vm1871 = vcmp.lt.s32.totalorder %v1743, %v398
        %s1872 = scalar_lea.vmem %s230, 64 [#allocation4]
        %v1873 = vld [vmem:[%s1872] sm:$0xf]
        %v1874 = vld [vmem:[%s1872 + $0x4] sm:$0xf]
        %v1875 = vld [vmem:[%s1872 + $0x8] sm:$0xf]
        %v1876 = vld [vmem:[%s1872 + $0xc] sm:$0xf]
        %v1877 = vld [vmem:[%s1872 + $0x10] sm:$0xf]
        %v1878 = vld [vmem:[%s1872 + $0x14] sm:$0xf]
        %v1879 = vld [vmem:[%s1872 + $0x18] sm:$0xf]
        %v1880 = vld [vmem:[%s1872 + $0x1c] sm:$0xf]
        %v1881 = vld [vmem:[%s1872 + $0x20] sm:$0xf]
        %v1882 = vld [vmem:[%s1872 + $0x24] sm:$0xf]
        %v1883 = vld [vmem:[%s1872 + $0x28] sm:$0xf]
        %v1884 = vld [vmem:[%s1872 + $0x2c] sm:$0xf]
        %v1885 = vld [vmem:[%s1872 + $0x30] sm:$0xf]
        %v1886 = vld [vmem:[%s1872 + $0x34] sm:$0xf]
        %v1887 = vld [vmem:[%s1872 + $0x38] sm:$0xf]
        %v1888 = vld [vmem:[%s1872 + $0x3c] sm:$0xf]
        %v1889 = vld [vmem:[%s1872 + $0x80] sm:$0xf]
        %v1890 = vld [vmem:[%s1872 + $0x84] sm:$0xf]
        %v1891 = vld [vmem:[%s1872 + $0x88] sm:$0xf]
        %v1892 = vld [vmem:[%s1872 + $0x8c] sm:$0xf]
        %v1893 = vld [vmem:[%s1872 + $0x90] sm:$0xf]
        %v1894 = vld [vmem:[%s1872 + $0x94] sm:$0xf]
        %v1895 = vld [vmem:[%s1872 + $0x98] sm:$0xf]
        %v1896 = vld [vmem:[%s1872 + $0x9c] sm:$0xf]
        %v1897 = vld [vmem:[%s1872 + $0xa0] sm:$0xf]
        %v1898 = vld [vmem:[%s1872 + $0xa4] sm:$0xf]
        %v1899 = vld [vmem:[%s1872 + $0xa8] sm:$0xf]
        %v1900 = vld [vmem:[%s1872 + $0xac] sm:$0xf]
        %v1901 = vld [vmem:[%s1872 + $0xb0] sm:$0xf]
        %v1902 = vld [vmem:[%s1872 + $0xb4] sm:$0xf]
        %v1903 = vld [vmem:[%s1872 + $0xb8] sm:$0xf]
        %v1904 = vld [vmem:[%s1872 + $0xbc] sm:$0xf]
        %v1905 = vld [vmem:[%s1872 + $0x100] sm:$0xf]
        %v1906 = vld [vmem:[%s1872 + $0x104] sm:$0xf]
        %v1907 = vld [vmem:[%s1872 + $0x108] sm:$0xf]
        %v1908 = vld [vmem:[%s1872 + $0x10c] sm:$0xf]
        %v1909 = vld [vmem:[%s1872 + $0x110] sm:$0xf]
        %v1910 = vld [vmem:[%s1872 + $0x114] sm:$0xf]
        %v1911 = vld [vmem:[%s1872 + $0x118] sm:$0xf]
        %v1912 = vld [vmem:[%s1872 + $0x11c] sm:$0xf]
        %v1913 = vld [vmem:[%s1872 + $0x120] sm:$0xf]
        %v1914 = vld [vmem:[%s1872 + $0x124] sm:$0xf]
        %v1915 = vld [vmem:[%s1872 + $0x128] sm:$0xf]
        %v1916 = vld [vmem:[%s1872 + $0x12c] sm:$0xf]
        %v1917 = vld [vmem:[%s1872 + $0x130] sm:$0xf]
        %v1918 = vld [vmem:[%s1872 + $0x134] sm:$0xf]
        %v1919 = vld [vmem:[%s1872 + $0x138] sm:$0xf]
        %v1920 = vld [vmem:[%s1872 + $0x13c] sm:$0xf]
        %v1921 = vld [vmem:[%s1872 + $0x180] sm:$0xf]
        %v1922 = vld [vmem:[%s1872 + $0x184] sm:$0xf]
        %v1923 = vld [vmem:[%s1872 + $0x188] sm:$0xf]
        %v1924 = vld [vmem:[%s1872 + $0x18c] sm:$0xf]
        %v1925 = vld [vmem:[%s1872 + $0x190] sm:$0xf]
        %v1926 = vld [vmem:[%s1872 + $0x194] sm:$0xf]
        %v1927 = vld [vmem:[%s1872 + $0x198] sm:$0xf]
        %v1928 = vld [vmem:[%s1872 + $0x19c] sm:$0xf]
        %v1929 = vld [vmem:[%s1872 + $0x1a0] sm:$0xf]
        %v1930 = vld [vmem:[%s1872 + $0x1a4] sm:$0xf]
        %v1931 = vld [vmem:[%s1872 + $0x1a8] sm:$0xf]
        %v1932 = vld [vmem:[%s1872 + $0x1ac] sm:$0xf]
        %v1933 = vld [vmem:[%s1872 + $0x1b0] sm:$0xf]
        %v1934 = vld [vmem:[%s1872 + $0x1b4] sm:$0xf]
        %v1935 = vld [vmem:[%s1872 + $0x1b8] sm:$0xf]
        %v1936 = vld [vmem:[%s1872 + $0x1bc] sm:$0xf]
        %v1937 = vld [vmem:[%s1872 + $0x200] sm:$0xf]
        %v1938 = vld [vmem:[%s1872 + $0x204] sm:$0xf]
        %v1939 = vld [vmem:[%s1872 + $0x208] sm:$0xf]
        %v1940 = vld [vmem:[%s1872 + $0x20c] sm:$0xf]
        %v1941 = vld [vmem:[%s1872 + $0x210] sm:$0xf]
        %v1942 = vld [vmem:[%s1872 + $0x214] sm:$0xf]
        %v1943 = vld [vmem:[%s1872 + $0x218] sm:$0xf]
        %v1944 = vld [vmem:[%s1872 + $0x21c] sm:$0xf]
        %v1945 = vld [vmem:[%s1872 + $0x220] sm:$0xf]
        %v1946 = vld [vmem:[%s1872 + $0x224] sm:$0xf]
        %v1947 = vld [vmem:[%s1872 + $0x228] sm:$0xf]
        %v1948 = vld [vmem:[%s1872 + $0x22c] sm:$0xf]
        %v1949 = vld [vmem:[%s1872 + $0x230] sm:$0xf]
        %v1950 = vld [vmem:[%s1872 + $0x234] sm:$0xf]
        %v1951 = vld [vmem:[%s1872 + $0x238] sm:$0xf]
        %v1952 = vld [vmem:[%s1872 + $0x23c] sm:$0xf]
        %v1953 = vld [vmem:[%s1872 + $0x280] sm:$0xf]
        %v1954 = vld [vmem:[%s1872 + $0x284] sm:$0xf]
        %v1955 = vld [vmem:[%s1872 + $0x288] sm:$0xf]
        %v1956 = vld [vmem:[%s1872 + $0x28c] sm:$0xf]
        %v1957 = vld [vmem:[%s1872 + $0x290] sm:$0xf]
        %v1958 = vld [vmem:[%s1872 + $0x294] sm:$0xf]
        %v1959 = vld [vmem:[%s1872 + $0x298] sm:$0xf]
        %v1960 = vld [vmem:[%s1872 + $0x29c] sm:$0xf]
        %v1961 = vld [vmem:[%s1872 + $0x2a0] sm:$0xf]
        %v1962 = vld [vmem:[%s1872 + $0x2a4] sm:$0xf]
        %v1963 = vld [vmem:[%s1872 + $0x2a8] sm:$0xf]
        %v1964 = vld [vmem:[%s1872 + $0x2ac] sm:$0xf]
        %v1965 = vld [vmem:[%s1872 + $0x2b0] sm:$0xf]
        %v1966 = vld [vmem:[%s1872 + $0x2b4] sm:$0xf]
        %v1967 = vld [vmem:[%s1872 + $0x2b8] sm:$0xf]
        %v1968 = vld [vmem:[%s1872 + $0x2bc] sm:$0xf]
        %v1969 = vld [vmem:[%s1872 + $0x300] sm:$0xf]
        %v1970 = vld [vmem:[%s1872 + $0x304] sm:$0xf]
        %v1971 = vld [vmem:[%s1872 + $0x308] sm:$0xf]
        %v1972 = vld [vmem:[%s1872 + $0x30c] sm:$0xf]
        %v1973 = vld [vmem:[%s1872 + $0x310] sm:$0xf]
        %v1974 = vld [vmem:[%s1872 + $0x314] sm:$0xf]
        %v1975 = vld [vmem:[%s1872 + $0x318] sm:$0xf]
        %v1976 = vld [vmem:[%s1872 + $0x31c] sm:$0xf]
        %v1977 = vld [vmem:[%s1872 + $0x320] sm:$0xf]
        %v1978 = vld [vmem:[%s1872 + $0x324] sm:$0xf]
        %v1979 = vld [vmem:[%s1872 + $0x328] sm:$0xf]
        %v1980 = vld [vmem:[%s1872 + $0x32c] sm:$0xf]
        %v1981 = vld [vmem:[%s1872 + $0x330] sm:$0xf]
        %v1982 = vld [vmem:[%s1872 + $0x334] sm:$0xf]
        %v1983 = vld [vmem:[%s1872 + $0x338] sm:$0xf]
        %v1984 = vld [vmem:[%s1872 + $0x33c] sm:$0xf]
        %v1985 = vld [vmem:[%s1872 + $0x380] sm:$0xf]
        %v1986 = vld [vmem:[%s1872 + $0x384] sm:$0xf]
        %v1987 = vld [vmem:[%s1872 + $0x388] sm:$0xf]
        %v1988 = vld [vmem:[%s1872 + $0x38c] sm:$0xf]
        %v1989 = vld [vmem:[%s1872 + $0x390] sm:$0xf]
        %v1990 = vld [vmem:[%s1872 + $0x394] sm:$0xf]
        %v1991 = vld [vmem:[%s1872 + $0x398] sm:$0xf]
        %v1992 = vld [vmem:[%s1872 + $0x39c] sm:$0xf]
        %v1993 = vld [vmem:[%s1872 + $0x3a0] sm:$0xf]
        %v1994 = vld [vmem:[%s1872 + $0x3a4] sm:$0xf]
        %v1995 = vld [vmem:[%s1872 + $0x3a8] sm:$0xf]
        %v1996 = vld [vmem:[%s1872 + $0x3ac] sm:$0xf]
        %v1997 = vld [vmem:[%s1872 + $0x3b0] sm:$0xf]
        %v1998 = vld [vmem:[%s1872 + $0x3b4] sm:$0xf]
        %v1999 = vld [vmem:[%s1872 + $0x3b8] sm:$0xf]
        %v2000 = vld [vmem:[%s1872 + $0x3bc] sm:$0xf]
        %v2001 = vunpack.c.l.bf16 %v1873
        %v2002 = vunpack.c.l.bf16 %v1874
        %v2003 = vunpack.c.l.bf16 %v1875
        %v2004 = vunpack.c.l.bf16 %v1876
        %v2005 = vunpack.c.l.bf16 %v1877
        %v2006 = vunpack.c.l.bf16 %v1878
        %v2007 = vunpack.c.l.bf16 %v1879
        %v2008 = vunpack.c.l.bf16 %v1880
        %v2009 = vunpack.c.l.bf16 %v1881
        %v2010 = vunpack.c.l.bf16 %v1882
        %v2011 = vunpack.c.l.bf16 %v1883
        %v2012 = vunpack.c.l.bf16 %v1884
        %v2013 = vunpack.c.l.bf16 %v1885
        %v2014 = vunpack.c.l.bf16 %v1886
        %v2015 = vunpack.c.l.bf16 %v1887
        %v2016 = vunpack.c.l.bf16 %v1888
        %v2017 = vunpack.c.l.bf16 %v1889
        %v2018 = vunpack.c.l.bf16 %v1890
        %v2019 = vunpack.c.l.bf16 %v1891
        %v2020 = vunpack.c.l.bf16 %v1892
        %v2021 = vunpack.c.l.bf16 %v1893
        %v2022 = vunpack.c.l.bf16 %v1894
        %v2023 = vunpack.c.l.bf16 %v1895
        %v2024 = vunpack.c.l.bf16 %v1896
        %v2025 = vunpack.c.l.bf16 %v1897
        %v2026 = vunpack.c.l.bf16 %v1898
        %v2027 = vunpack.c.l.bf16 %v1899
        %v2028 = vunpack.c.l.bf16 %v1900
        %v2029 = vunpack.c.l.bf16 %v1901
        %v2030 = vunpack.c.l.bf16 %v1902
        %v2031 = vunpack.c.l.bf16 %v1903
        %v2032 = vunpack.c.l.bf16 %v1904
        %v2033 = vunpack.c.l.bf16 %v1905
        %v2034 = vunpack.c.l.bf16 %v1906
        %v2035 = vunpack.c.l.bf16 %v1907
        %v2036 = vunpack.c.l.bf16 %v1908
        %v2037 = vunpack.c.l.bf16 %v1909
        %v2038 = vunpack.c.l.bf16 %v1910
        %v2039 = vunpack.c.l.bf16 %v1911
        %v2040 = vunpack.c.l.bf16 %v1912
        %v2041 = vunpack.c.l.bf16 %v1913
        %v2042 = vunpack.c.l.bf16 %v1914
        %v2043 = vunpack.c.l.bf16 %v1915
        %v2044 = vunpack.c.l.bf16 %v1916
        %v2045 = vunpack.c.l.bf16 %v1917
        %v2046 = vunpack.c.l.bf16 %v1918
        %v2047 = vunpack.c.l.bf16 %v1919
        %v2048 = vunpack.c.l.bf16 %v1920
        %v2049 = vunpack.c.l.bf16 %v1921
        %v2050 = vunpack.c.l.bf16 %v1922
        %v2051 = vunpack.c.l.bf16 %v1923
        %v2052 = vunpack.c.l.bf16 %v1924
        %v2053 = vunpack.c.l.bf16 %v1925
        %v2054 = vunpack.c.l.bf16 %v1926
        %v2055 = vunpack.c.l.bf16 %v1927
        %v2056 = vunpack.c.l.bf16 %v1928
        %v2057 = vunpack.c.l.bf16 %v1929
        %v2058 = vunpack.c.l.bf16 %v1930
        %v2059 = vunpack.c.l.bf16 %v1931
        %v2060 = vunpack.c.l.bf16 %v1932
        %v2061 = vunpack.c.l.bf16 %v1933
        %v2062 = vunpack.c.l.bf16 %v1934
        %v2063 = vunpack.c.l.bf16 %v1935
        %v2064 = vunpack.c.l.bf16 %v1936
        %v2065 = vunpack.c.l.bf16 %v1937
        %v2066 = vunpack.c.l.bf16 %v1938
        %v2067 = vunpack.c.l.bf16 %v1939
        %v2068 = vunpack.c.l.bf16 %v1940
        %v2069 = vunpack.c.l.bf16 %v1941
        %v2070 = vunpack.c.l.bf16 %v1942
        %v2071 = vunpack.c.l.bf16 %v1943
        %v2072 = vunpack.c.l.bf16 %v1944
        %v2073 = vunpack.c.l.bf16 %v1945
        %v2074 = vunpack.c.l.bf16 %v1946
        %v2075 = vunpack.c.l.bf16 %v1947
        %v2076 = vunpack.c.l.bf16 %v1948
        %v2077 = vunpack.c.l.bf16 %v1949
        %v2078 = vunpack.c.l.bf16 %v1950
        %v2079 = vunpack.c.l.bf16 %v1951
        %v2080 = vunpack.c.l.bf16 %v1952
        %v2081 = vunpack.c.l.bf16 %v1953
        %v2082 = vunpack.c.l.bf16 %v1954
        %v2083 = vunpack.c.l.bf16 %v1955
        %v2084 = vunpack.c.l.bf16 %v1956
        %v2085 = vunpack.c.l.bf16 %v1957
        %v2086 = vunpack.c.l.bf16 %v1958
        %v2087 = vunpack.c.l.bf16 %v1959
        %v2088 = vunpack.c.l.bf16 %v1960
        %v2089 = vunpack.c.l.bf16 %v1961
        %v2090 = vunpack.c.l.bf16 %v1962
        %v2091 = vunpack.c.l.bf16 %v1963
        %v2092 = vunpack.c.l.bf16 %v1964
        %v2093 = vunpack.c.l.bf16 %v1965
        %v2094 = vunpack.c.l.bf16 %v1966
        %v2095 = vunpack.c.l.bf16 %v1967
        %v2096 = vunpack.c.l.bf16 %v1968
        %v2097 = vunpack.c.l.bf16 %v1969
        %v2098 = vunpack.c.l.bf16 %v1970
        %v2099 = vunpack.c.l.bf16 %v1971
        %v2100 = vunpack.c.l.bf16 %v1972
        %v2101 = vunpack.c.l.bf16 %v1973
        %v2102 = vunpack.c.l.bf16 %v1974
        %v2103 = vunpack.c.l.bf16 %v1975
        %v2104 = vunpack.c.l.bf16 %v1976
        %v2105 = vunpack.c.l.bf16 %v1977
        %v2106 = vunpack.c.l.bf16 %v1978
        %v2107 = vunpack.c.l.bf16 %v1979
        %v2108 = vunpack.c.l.bf16 %v1980
        %v2109 = vunpack.c.l.bf16 %v1981
        %v2110 = vunpack.c.l.bf16 %v1982
        %v2111 = vunpack.c.l.bf16 %v1983
        %v2112 = vunpack.c.l.bf16 %v1984
        %v2113 = vunpack.c.l.bf16 %v1985
        %v2114 = vunpack.c.l.bf16 %v1986
        %v2115 = vunpack.c.l.bf16 %v1987
        %v2116 = vunpack.c.l.bf16 %v1988
        %v2117 = vunpack.c.l.bf16 %v1989
        %v2118 = vunpack.c.l.bf16 %v1990
        %v2119 = vunpack.c.l.bf16 %v1991
        %v2120 = vunpack.c.l.bf16 %v1992
        %v2121 = vunpack.c.l.bf16 %v1993
        %v2122 = vunpack.c.l.bf16 %v1994
        %v2123 = vunpack.c.l.bf16 %v1995
        %v2124 = vunpack.c.l.bf16 %v1996
        %v2125 = vunpack.c.l.bf16 %v1997
        %v2126 = vunpack.c.l.bf16 %v1998
        %v2127 = vunpack.c.l.bf16 %v1999
        %v2128 = vunpack.c.l.bf16 %v2000
        %v2129 = vsel %vm1744, 1, 0
        %v2130 = vsel %vm1745, 1, 0
        %v2131 = vsel %vm1746, 1, 0
        %v2132 = vsel %vm1747, 1, 0
        %v2133 = vsel %vm1748, 1, 0
        %v2134 = vsel %vm1749, 1, 0
        %v2135 = vsel %vm1750, 1, 0
        %v2136 = vsel %vm1751, 1, 0
        %v2137 = vsel %vm1752, 1, 0
        %v2138 = vsel %vm1753, 1, 0
        %v2139 = vsel %vm1754, 1, 0
        %v2140 = vsel %vm1755, 1, 0
        %v2141 = vsel %vm1756, 1, 0
        %v2142 = vsel %vm1757, 1, 0
        %v2143 = vsel %vm1758, 1, 0
        %v2144 = vsel %vm1759, 1, 0
        %v2145 = vsel %vm1760, 1, 0
        %v2146 = vsel %vm1761, 1, 0
        %v2147 = vsel %vm1762, 1, 0
        %v2148 = vsel %vm1763, 1, 0
        %v2149 = vsel %vm1764, 1, 0
        %v2150 = vsel %vm1765, 1, 0
        %v2151 = vsel %vm1766, 1, 0
        %v2152 = vsel %vm1767, 1, 0
        %v2153 = vsel %vm1768, 1, 0
        %v2154 = vsel %vm1769, 1, 0
        %v2155 = vsel %vm1770, 1, 0
        %v2156 = vsel %vm1771, 1, 0
        %v2157 = vsel %vm1772, 1, 0
        %v2158 = vsel %vm1773, 1, 0
        %v2159 = vsel %vm1774, 1, 0
        %v2160 = vsel %vm1775, 1, 0
        %v2161 = vsel %vm1776, 1, 0
        %v2162 = vsel %vm1777, 1, 0
        %v2163 = vsel %vm1778, 1, 0
        %v2164 = vsel %vm1779, 1, 0
        %v2165 = vsel %vm1780, 1, 0
        %v2166 = vsel %vm1781, 1, 0
        %v2167 = vsel %vm1782, 1, 0
        %v2168 = vsel %vm1783, 1, 0
        %v2169 = vsel %vm1784, 1, 0
        %v2170 = vsel %vm1785, 1, 0
        %v2171 = vsel %vm1786, 1, 0
        %v2172 = vsel %vm1787, 1, 0
        %v2173 = vsel %vm1788, 1, 0
        %v2174 = vsel %vm1789, 1, 0
        %v2175 = vsel %vm1790, 1, 0
        %v2176 = vsel %vm1791, 1, 0
        %v2177 = vsel %vm1792, 1, 0
        %v2178 = vsel %vm1793, 1, 0
        %v2179 = vsel %vm1794, 1, 0
        %v2180 = vsel %vm1795, 1, 0
        %v2181 = vsel %vm1796, 1, 0
        %v2182 = vsel %vm1797, 1, 0
        %v2183 = vsel %vm1798, 1, 0
        %v2184 = vsel %vm1799, 1, 0
        %v2185 = vsel %vm1800, 1, 0
        %v2186 = vsel %vm1801, 1, 0
        %v2187 = vsel %vm1802, 1, 0
        %v2188 = vsel %vm1803, 1, 0
        %v2189 = vsel %vm1804, 1, 0
        %v2190 = vsel %vm1805, 1, 0
        %v2191 = vsel %vm1806, 1, 0
        %v2192 = vsel %vm1807, 1, 0
        %v2193 = vsel %vm1808, 1, 0
        %v2194 = vsel %vm1809, 1, 0
        %v2195 = vsel %vm1810, 1, 0
        %v2196 = vsel %vm1811, 1, 0
        %v2197 = vsel %vm1812, 1, 0
        %v2198 = vsel %vm1813, 1, 0
        %v2199 = vsel %vm1814, 1, 0
        %v2200 = vsel %vm1815, 1, 0
        %v2201 = vsel %vm1816, 1, 0
        %v2202 = vsel %vm1817, 1, 0
        %v2203 = vsel %vm1818, 1, 0
        %v2204 = vsel %vm1819, 1, 0
        %v2205 = vsel %vm1820, 1, 0
        %v2206 = vsel %vm1821, 1, 0
        %v2207 = vsel %vm1822, 1, 0
        %v2208 = vsel %vm1823, 1, 0
        %v2209 = vsel %vm1824, 1, 0
        %v2210 = vsel %vm1825, 1, 0
        %v2211 = vsel %vm1826, 1, 0
        %v2212 = vsel %vm1827, 1, 0
        %v2213 = vsel %vm1828, 1, 0
        %v2214 = vsel %vm1829, 1, 0
        %v2215 = vsel %vm1830, 1, 0
        %v2216 = vsel %vm1831, 1, 0
        %v2217 = vsel %vm1832, 1, 0
        %v2218 = vsel %vm1833, 1, 0
        %v2219 = vsel %vm1834, 1, 0
        %v2220 = vsel %vm1835, 1, 0
        %v2221 = vsel %vm1836, 1, 0
        %v2222 = vsel %vm1837, 1, 0
        %v2223 = vsel %vm1838, 1, 0
        %v2224 = vsel %vm1839, 1, 0
        %v2225 = vsel %vm1840, 1, 0
        %v2226 = vsel %vm1841, 1, 0
        %v2227 = vsel %vm1842, 1, 0
        %v2228 = vsel %vm1843, 1, 0
        %v2229 = vsel %vm1844, 1, 0
        %v2230 = vsel %vm1845, 1, 0
        %v2231 = vsel %vm1846, 1, 0
        %v2232 = vsel %vm1847, 1, 0
        %v2233 = vsel %vm1848, 1, 0
        %v2234 = vsel %vm1849, 1, 0
        %v2235 = vsel %vm1850, 1, 0
        %v2236 = vsel %vm1851, 1, 0
        %v2237 = vsel %vm1852, 1, 0
        %v2238 = vsel %vm1853, 1, 0
        %v2239 = vsel %vm1854, 1, 0
        %v2240 = vsel %vm1855, 1, 0
        %v2241 = vsel %vm1856, 1, 0
        %v2242 = vsel %vm1857, 1, 0
        %v2243 = vsel %vm1858, 1, 0
        %v2244 = vsel %vm1859, 1, 0
        %v2245 = vsel %vm1860, 1, 0
        %v2246 = vsel %vm1861, 1, 0
        %v2247 = vsel %vm1862, 1, 0
        %v2248 = vsel %vm1863, 1, 0
        %v2249 = vsel %vm1864, 1, 0
        %v2250 = vsel %vm1865, 1, 0
        %v2251 = vsel %vm1866, 1, 0
        %v2252 = vsel %vm1867, 1, 0
        %v2253 = vsel %vm1868, 1, 0
        %v2254 = vsel %vm1869, 1, 0
        %v2255 = vsel %vm1870, 1, 0
        %v2256 = vsel %vm1871, 1, 0
        %2257 = vset.pattern.permute.xlu0 0
        %2258 = vperm.xlu0 %2257, %v2129
        %v2259 = vpop.permute.xlu0 %2258
        %2260 = vset.pattern.permute.xlu0 0
        %2261 = vperm.xlu0 %2260, %v2130
        %v2262 = vpop.permute.xlu0 %2261
        %2263 = vset.pattern.permute.xlu0 0
        %2264 = vperm.xlu0 %2263, %v2131
        %v2265 = vpop.permute.xlu0 %2264
        %2266 = vset.pattern.permute.xlu0 0
        %2267 = vperm.xlu0 %2266, %v2132
        %v2268 = vpop.permute.xlu0 %2267
        %2269 = vset.pattern.permute.xlu0 0
        %2270 = vperm.xlu0 %2269, %v2133
        %v2271 = vpop.permute.xlu0 %2270
        %2272 = vset.pattern.permute.xlu0 0
        %2273 = vperm.xlu0 %2272, %v2134
        %v2274 = vpop.permute.xlu0 %2273
        %2275 = vset.pattern.permute.xlu0 0
        %2276 = vperm.xlu0 %2275, %v2135
        %v2277 = vpop.permute.xlu0 %2276
        %2278 = vset.pattern.permute.xlu0 0
        %2279 = vperm.xlu0 %2278, %v2136
        %v2280 = vpop.permute.xlu0 %2279
        %2281 = vset.pattern.permute.xlu0 0
        %2282 = vperm.xlu0 %2281, %v2137
        %v2283 = vpop.permute.xlu0 %2282
        %2284 = vset.pattern.permute.xlu0 0
        %2285 = vperm.xlu0 %2284, %v2138
        %v2286 = vpop.permute.xlu0 %2285
        %2287 = vset.pattern.permute.xlu0 0
        %2288 = vperm.xlu0 %2287, %v2139
        %v2289 = vpop.permute.xlu0 %2288
        %2290 = vset.pattern.permute.xlu0 0
        %2291 = vperm.xlu0 %2290, %v2140
        %v2292 = vpop.permute.xlu0 %2291
        %2293 = vset.pattern.permute.xlu0 0
        %2294 = vperm.xlu0 %2293, %v2141
        %v2295 = vpop.permute.xlu0 %2294
        %2296 = vset.pattern.permute.xlu0 0
        %2297 = vperm.xlu0 %2296, %v2142
        %v2298 = vpop.permute.xlu0 %2297
        %2299 = vset.pattern.permute.xlu0 0
        %2300 = vperm.xlu0 %2299, %v2143
        %v2301 = vpop.permute.xlu0 %2300
        %2302 = vset.pattern.permute.xlu0 0
        %2303 = vperm.xlu0 %2302, %v2144
        %v2304 = vpop.permute.xlu0 %2303
        %2305 = vset.pattern.permute.xlu0 0
        %2306 = vperm.xlu0 %2305, %v2145
        %v2307 = vpop.permute.xlu0 %2306
        %2308 = vset.pattern.permute.xlu0 0
        %2309 = vperm.xlu0 %2308, %v2146
        %v2310 = vpop.permute.xlu0 %2309
        %2311 = vset.pattern.permute.xlu0 0
        %2312 = vperm.xlu0 %2311, %v2147
        %v2313 = vpop.permute.xlu0 %2312
        %2314 = vset.pattern.permute.xlu0 0
        %2315 = vperm.xlu0 %2314, %v2148
        %v2316 = vpop.permute.xlu0 %2315
        %2317 = vset.pattern.permute.xlu0 0
        %2318 = vperm.xlu0 %2317, %v2149
        %v2319 = vpop.permute.xlu0 %2318
        %2320 = vset.pattern.permute.xlu0 0
        %2321 = vperm.xlu0 %2320, %v2150
        %v2322 = vpop.permute.xlu0 %2321
        %2323 = vset.pattern.permute.xlu0 0
        %2324 = vperm.xlu0 %2323, %v2151
        %v2325 = vpop.permute.xlu0 %2324
        %2326 = vset.pattern.permute.xlu0 0
        %2327 = vperm.xlu0 %2326, %v2152
        %v2328 = vpop.permute.xlu0 %2327
        %2329 = vset.pattern.permute.xlu0 0
        %2330 = vperm.xlu0 %2329, %v2153
        %v2331 = vpop.permute.xlu0 %2330
        %2332 = vset.pattern.permute.xlu0 0
        %2333 = vperm.xlu0 %2332, %v2154
        %v2334 = vpop.permute.xlu0 %2333
        %2335 = vset.pattern.permute.xlu0 0
        %2336 = vperm.xlu0 %2335, %v2155
        %v2337 = vpop.permute.xlu0 %2336
        %2338 = vset.pattern.permute.xlu0 0
        %2339 = vperm.xlu0 %2338, %v2156
        %v2340 = vpop.permute.xlu0 %2339
        %2341 = vset.pattern.permute.xlu0 0
        %2342 = vperm.xlu0 %2341, %v2157
        %v2343 = vpop.permute.xlu0 %2342
        %2344 = vset.pattern.permute.xlu0 0
        %2345 = vperm.xlu0 %2344, %v2158
        %v2346 = vpop.permute.xlu0 %2345
        %2347 = vset.pattern.permute.xlu0 0
        %2348 = vperm.xlu0 %2347, %v2159
        %v2349 = vpop.permute.xlu0 %2348
        %2350 = vset.pattern.permute.xlu0 0
        %2351 = vperm.xlu0 %2350, %v2160
        %v2352 = vpop.permute.xlu0 %2351
        %2353 = vset.pattern.permute.xlu0 0
        %2354 = vperm.xlu0 %2353, %v2161
        %v2355 = vpop.permute.xlu0 %2354
        %2356 = vset.pattern.permute.xlu0 0
        %2357 = vperm.xlu0 %2356, %v2162
        %v2358 = vpop.permute.xlu0 %2357
        %2359 = vset.pattern.permute.xlu0 0
        %2360 = vperm.xlu0 %2359, %v2163
        %v2361 = vpop.permute.xlu0 %2360
        %2362 = vset.pattern.permute.xlu0 0
        %2363 = vperm.xlu0 %2362, %v2164
        %v2364 = vpop.permute.xlu0 %2363
        %2365 = vset.pattern.permute.xlu0 0
        %2366 = vperm.xlu0 %2365, %v2165
        %v2367 = vpop.permute.xlu0 %2366
        %2368 = vset.pattern.permute.xlu0 0
        %2369 = vperm.xlu0 %2368, %v2166
        %v2370 = vpop.permute.xlu0 %2369
        %2371 = vset.pattern.permute.xlu0 0
        %2372 = vperm.xlu0 %2371, %v2167
        %v2373 = vpop.permute.xlu0 %2372
        %2374 = vset.pattern.permute.xlu0 0
        %2375 = vperm.xlu0 %2374, %v2168
        %v2376 = vpop.permute.xlu0 %2375
        %2377 = vset.pattern.permute.xlu0 0
        %2378 = vperm.xlu0 %2377, %v2169
        %v2379 = vpop.permute.xlu0 %2378
        %2380 = vset.pattern.permute.xlu0 0
        %2381 = vperm.xlu0 %2380, %v2170
        %v2382 = vpop.permute.xlu0 %2381
        %2383 = vset.pattern.permute.xlu0 0
        %2384 = vperm.xlu0 %2383, %v2171
        %v2385 = vpop.permute.xlu0 %2384
        %2386 = vset.pattern.permute.xlu0 0
        %2387 = vperm.xlu0 %2386, %v2172
        %v2388 = vpop.permute.xlu0 %2387
        %2389 = vset.pattern.permute.xlu0 0
        %2390 = vperm.xlu0 %2389, %v2173
        %v2391 = vpop.permute.xlu0 %2390
        %2392 = vset.pattern.permute.xlu0 0
        %2393 = vperm.xlu0 %2392, %v2174
        %v2394 = vpop.permute.xlu0 %2393
        %2395 = vset.pattern.permute.xlu0 0
        %2396 = vperm.xlu0 %2395, %v2175
        %v2397 = vpop.permute.xlu0 %2396
        %2398 = vset.pattern.permute.xlu0 0
        %2399 = vperm.xlu0 %2398, %v2176
        %v2400 = vpop.permute.xlu0 %2399
        %2401 = vset.pattern.permute.xlu0 0
        %2402 = vperm.xlu0 %2401, %v2177
        %v2403 = vpop.permute.xlu0 %2402
        %2404 = vset.pattern.permute.xlu0 0
        %2405 = vperm.xlu0 %2404, %v2178
        %v2406 = vpop.permute.xlu0 %2405
        %2407 = vset.pattern.permute.xlu0 0
        %2408 = vperm.xlu0 %2407, %v2179
        %v2409 = vpop.permute.xlu0 %2408
        %2410 = vset.pattern.permute.xlu0 0
        %2411 = vperm.xlu0 %2410, %v2180
        %v2412 = vpop.permute.xlu0 %2411
        %2413 = vset.pattern.permute.xlu0 0
        %2414 = vperm.xlu0 %2413, %v2181
        %v2415 = vpop.permute.xlu0 %2414
        %2416 = vset.pattern.permute.xlu0 0
        %2417 = vperm.xlu0 %2416, %v2182
        %v2418 = vpop.permute.xlu0 %2417
        %2419 = vset.pattern.permute.xlu0 0
        %2420 = vperm.xlu0 %2419, %v2183
        %v2421 = vpop.permute.xlu0 %2420
        %2422 = vset.pattern.permute.xlu0 0
        %2423 = vperm.xlu0 %2422, %v2184
        %v2424 = vpop.permute.xlu0 %2423
        %2425 = vset.pattern.permute.xlu0 0
        %2426 = vperm.xlu0 %2425, %v2185
        %v2427 = vpop.permute.xlu0 %2426
        %2428 = vset.pattern.permute.xlu0 0
        %2429 = vperm.xlu0 %2428, %v2186
        %v2430 = vpop.permute.xlu0 %2429
        %2431 = vset.pattern.permute.xlu0 0
        %2432 = vperm.xlu0 %2431, %v2187
        %v2433 = vpop.permute.xlu0 %2432
        %2434 = vset.pattern.permute.xlu0 0
        %2435 = vperm.xlu0 %2434, %v2188
        %v2436 = vpop.permute.xlu0 %2435
        %2437 = vset.pattern.permute.xlu0 0
        %2438 = vperm.xlu0 %2437, %v2189
        %v2439 = vpop.permute.xlu0 %2438
        %2440 = vset.pattern.permute.xlu0 0
        %2441 = vperm.xlu0 %2440, %v2190
        %v2442 = vpop.permute.xlu0 %2441
        %2443 = vset.pattern.permute.xlu0 0
        %2444 = vperm.xlu0 %2443, %v2191
        %v2445 = vpop.permute.xlu0 %2444
        %2446 = vset.pattern.permute.xlu0 0
        %2447 = vperm.xlu0 %2446, %v2192
        %v2448 = vpop.permute.xlu0 %2447
        %2449 = vset.pattern.permute.xlu0 0
        %2450 = vperm.xlu0 %2449, %v2193
        %v2451 = vpop.permute.xlu0 %2450
        %2452 = vset.pattern.permute.xlu0 0
        %2453 = vperm.xlu0 %2452, %v2194
        %v2454 = vpop.permute.xlu0 %2453
        %2455 = vset.pattern.permute.xlu0 0
        %2456 = vperm.xlu0 %2455, %v2195
        %v2457 = vpop.permute.xlu0 %2456
        %2458 = vset.pattern.permute.xlu0 0
        %2459 = vperm.xlu0 %2458, %v2196
        %v2460 = vpop.permute.xlu0 %2459
        %2461 = vset.pattern.permute.xlu0 0
        %2462 = vperm.xlu0 %2461, %v2197
        %v2463 = vpop.permute.xlu0 %2462
        %2464 = vset.pattern.permute.xlu0 0
        %2465 = vperm.xlu0 %2464, %v2198
        %v2466 = vpop.permute.xlu0 %2465
        %2467 = vset.pattern.permute.xlu0 0
        %2468 = vperm.xlu0 %2467, %v2199
        %v2469 = vpop.permute.xlu0 %2468
        %2470 = vset.pattern.permute.xlu0 0
        %2471 = vperm.xlu0 %2470, %v2200
        %v2472 = vpop.permute.xlu0 %2471
        %2473 = vset.pattern.permute.xlu0 0
        %2474 = vperm.xlu0 %2473, %v2201
        %v2475 = vpop.permute.xlu0 %2474
        %2476 = vset.pattern.permute.xlu0 0
        %2477 = vperm.xlu0 %2476, %v2202
        %v2478 = vpop.permute.xlu0 %2477
        %2479 = vset.pattern.permute.xlu0 0
        %2480 = vperm.xlu0 %2479, %v2203
        %v2481 = vpop.permute.xlu0 %2480
        %2482 = vset.pattern.permute.xlu0 0
        %2483 = vperm.xlu0 %2482, %v2204
        %v2484 = vpop.permute.xlu0 %2483
        %2485 = vset.pattern.permute.xlu0 0
        %2486 = vperm.xlu0 %2485, %v2205
        %v2487 = vpop.permute.xlu0 %2486
        %2488 = vset.pattern.permute.xlu0 0
        %2489 = vperm.xlu0 %2488, %v2206
        %v2490 = vpop.permute.xlu0 %2489
        %2491 = vset.pattern.permute.xlu0 0
        %2492 = vperm.xlu0 %2491, %v2207
        %v2493 = vpop.permute.xlu0 %2492
        %2494 = vset.pattern.permute.xlu0 0
        %2495 = vperm.xlu0 %2494, %v2208
        %v2496 = vpop.permute.xlu0 %2495
        %2497 = vset.pattern.permute.xlu0 0
        %2498 = vperm.xlu0 %2497, %v2209
        %v2499 = vpop.permute.xlu0 %2498
        %2500 = vset.pattern.permute.xlu0 0
        %2501 = vperm.xlu0 %2500, %v2210
        %v2502 = vpop.permute.xlu0 %2501
        %2503 = vset.pattern.permute.xlu0 0
        %2504 = vperm.xlu0 %2503, %v2211
        %v2505 = vpop.permute.xlu0 %2504
        %2506 = vset.pattern.permute.xlu0 0
        %2507 = vperm.xlu0 %2506, %v2212
        %v2508 = vpop.permute.xlu0 %2507
        %2509 = vset.pattern.permute.xlu0 0
        %2510 = vperm.xlu0 %2509, %v2213
        %v2511 = vpop.permute.xlu0 %2510
        %2512 = vset.pattern.permute.xlu0 0
        %2513 = vperm.xlu0 %2512, %v2214
        %v2514 = vpop.permute.xlu0 %2513
        %2515 = vset.pattern.permute.xlu0 0
        %2516 = vperm.xlu0 %2515, %v2215
        %v2517 = vpop.permute.xlu0 %2516
        %2518 = vset.pattern.permute.xlu0 0
        %2519 = vperm.xlu0 %2518, %v2216
        %v2520 = vpop.permute.xlu0 %2519
        %2521 = vset.pattern.permute.xlu0 0
        %2522 = vperm.xlu0 %2521, %v2217
        %v2523 = vpop.permute.xlu0 %2522
        %2524 = vset.pattern.permute.xlu0 0
        %2525 = vperm.xlu0 %2524, %v2218
        %v2526 = vpop.permute.xlu0 %2525
        %2527 = vset.pattern.permute.xlu0 0
        %2528 = vperm.xlu0 %2527, %v2219
        %v2529 = vpop.permute.xlu0 %2528
        %2530 = vset.pattern.permute.xlu0 0
        %2531 = vperm.xlu0 %2530, %v2220
        %v2532 = vpop.permute.xlu0 %2531
        %2533 = vset.pattern.permute.xlu0 0
        %2534 = vperm.xlu0 %2533, %v2221
        %v2535 = vpop.permute.xlu0 %2534
        %2536 = vset.pattern.permute.xlu0 0
        %2537 = vperm.xlu0 %2536, %v2222
        %v2538 = vpop.permute.xlu0 %2537
        %2539 = vset.pattern.permute.xlu0 0
        %2540 = vperm.xlu0 %2539, %v2223
        %v2541 = vpop.permute.xlu0 %2540
        %2542 = vset.pattern.permute.xlu0 0
        %2543 = vperm.xlu0 %2542, %v2224
        %v2544 = vpop.permute.xlu0 %2543
        %2545 = vset.pattern.permute.xlu0 0
        %2546 = vperm.xlu0 %2545, %v2225
        %v2547 = vpop.permute.xlu0 %2546
        %2548 = vset.pattern.permute.xlu0 0
        %2549 = vperm.xlu0 %2548, %v2226
        %v2550 = vpop.permute.xlu0 %2549
        %2551 = vset.pattern.permute.xlu0 0
        %2552 = vperm.xlu0 %2551, %v2227
        %v2553 = vpop.permute.xlu0 %2552
        %2554 = vset.pattern.permute.xlu0 0
        %2555 = vperm.xlu0 %2554, %v2228
        %v2556 = vpop.permute.xlu0 %2555
        %2557 = vset.pattern.permute.xlu0 0
        %2558 = vperm.xlu0 %2557, %v2229
        %v2559 = vpop.permute.xlu0 %2558
        %2560 = vset.pattern.permute.xlu0 0
        %2561 = vperm.xlu0 %2560, %v2230
        %v2562 = vpop.permute.xlu0 %2561
        %2563 = vset.pattern.permute.xlu0 0
        %2564 = vperm.xlu0 %2563, %v2231
        %v2565 = vpop.permute.xlu0 %2564
        %2566 = vset.pattern.permute.xlu0 0
        %2567 = vperm.xlu0 %2566, %v2232
        %v2568 = vpop.permute.xlu0 %2567
        %2569 = vset.pattern.permute.xlu0 0
        %2570 = vperm.xlu0 %2569, %v2233
        %v2571 = vpop.permute.xlu0 %2570
        %2572 = vset.pattern.permute.xlu0 0
        %2573 = vperm.xlu0 %2572, %v2234
        %v2574 = vpop.permute.xlu0 %2573
        %2575 = vset.pattern.permute.xlu0 0
        %2576 = vperm.xlu0 %2575, %v2235
        %v2577 = vpop.permute.xlu0 %2576
        %2578 = vset.pattern.permute.xlu0 0
        %2579 = vperm.xlu0 %2578, %v2236
        %v2580 = vpop.permute.xlu0 %2579
        %2581 = vset.pattern.permute.xlu0 0
        %2582 = vperm.xlu0 %2581, %v2237
        %v2583 = vpop.permute.xlu0 %2582
        %2584 = vset.pattern.permute.xlu0 0
        %2585 = vperm.xlu0 %2584, %v2238
        %v2586 = vpop.permute.xlu0 %2585
        %2587 = vset.pattern.permute.xlu0 0
        %2588 = vperm.xlu0 %2587, %v2239
        %v2589 = vpop.permute.xlu0 %2588
        %2590 = vset.pattern.permute.xlu0 0
        %2591 = vperm.xlu0 %2590, %v2240
        %v2592 = vpop.permute.xlu0 %2591
        %2593 = vset.pattern.permute.xlu0 0
        %2594 = vperm.xlu0 %2593, %v2241
        %v2595 = vpop.permute.xlu0 %2594
        %2596 = vset.pattern.permute.xlu0 0
        %2597 = vperm.xlu0 %2596, %v2242
        %v2598 = vpop.permute.xlu0 %2597
        %2599 = vset.pattern.permute.xlu0 0
        %2600 = vperm.xlu0 %2599, %v2243
        %v2601 = vpop.permute.xlu0 %2600
        %2602 = vset.pattern.permute.xlu0 0
        %2603 = vperm.xlu0 %2602, %v2244
        %v2604 = vpop.permute.xlu0 %2603
        %2605 = vset.pattern.permute.xlu0 0
        %2606 = vperm.xlu0 %2605, %v2245
        %v2607 = vpop.permute.xlu0 %2606
        %2608 = vset.pattern.permute.xlu0 0
        %2609 = vperm.xlu0 %2608, %v2246
        %v2610 = vpop.permute.xlu0 %2609
        %2611 = vset.pattern.permute.xlu0 0
        %2612 = vperm.xlu0 %2611, %v2247
        %v2613 = vpop.permute.xlu0 %2612
        %2614 = vset.pattern.permute.xlu0 0
        %2615 = vperm.xlu0 %2614, %v2248
        %v2616 = vpop.permute.xlu0 %2615
        %2617 = vset.pattern.permute.xlu0 0
        %2618 = vperm.xlu0 %2617, %v2249
        %v2619 = vpop.permute.xlu0 %2618
        %2620 = vset.pattern.permute.xlu0 0
        %2621 = vperm.xlu0 %2620, %v2250
        %v2622 = vpop.permute.xlu0 %2621
        %2623 = vset.pattern.permute.xlu0 0
        %2624 = vperm.xlu0 %2623, %v2251
        %v2625 = vpop.permute.xlu0 %2624
        %2626 = vset.pattern.permute.xlu0 0
        %2627 = vperm.xlu0 %2626, %v2252
        %v2628 = vpop.permute.xlu0 %2627
        %2629 = vset.pattern.permute.xlu0 0
        %2630 = vperm.xlu0 %2629, %v2253
        %v2631 = vpop.permute.xlu0 %2630
        %2632 = vset.pattern.permute.xlu0 0
        %2633 = vperm.xlu0 %2632, %v2254
        %v2634 = vpop.permute.xlu0 %2633
        %2635 = vset.pattern.permute.xlu0 0
        %2636 = vperm.xlu0 %2635, %v2255
        %v2637 = vpop.permute.xlu0 %2636
        %2638 = vset.pattern.permute.xlu0 0
        %2639 = vperm.xlu0 %2638, %v2256
        %v2640 = vpop.permute.xlu0 %2639
        %vm2641 = vcmp.eq.s32.totalorder %v2259, 1
        %vm2642 = vcmp.eq.s32.totalorder %v2262, 1
        %vm2643 = vcmp.eq.s32.totalorder %v2265, 1
        %vm2644 = vcmp.eq.s32.totalorder %v2268, 1
        %vm2645 = vcmp.eq.s32.totalorder %v2271, 1
        %vm2646 = vcmp.eq.s32.totalorder %v2274, 1
        %vm2647 = vcmp.eq.s32.totalorder %v2277, 1
        %vm2648 = vcmp.eq.s32.totalorder %v2280, 1
        %vm2649 = vcmp.eq.s32.totalorder %v2283, 1
        %vm2650 = vcmp.eq.s32.totalorder %v2286, 1
        %vm2651 = vcmp.eq.s32.totalorder %v2289, 1
        %vm2652 = vcmp.eq.s32.totalorder %v2292, 1
        %vm2653 = vcmp.eq.s32.totalorder %v2295, 1
        %vm2654 = vcmp.eq.s32.totalorder %v2298, 1
        %vm2655 = vcmp.eq.s32.totalorder %v2301, 1
        %vm2656 = vcmp.eq.s32.totalorder %v2304, 1
        %vm2657 = vcmp.eq.s32.totalorder %v2307, 1
        %vm2658 = vcmp.eq.s32.totalorder %v2310, 1
        %vm2659 = vcmp.eq.s32.totalorder %v2313, 1
        %vm2660 = vcmp.eq.s32.totalorder %v2316, 1
        %vm2661 = vcmp.eq.s32.totalorder %v2319, 1
        %vm2662 = vcmp.eq.s32.totalorder %v2322, 1
        %vm2663 = vcmp.eq.s32.totalorder %v2325, 1
        %vm2664 = vcmp.eq.s32.totalorder %v2328, 1
        %vm2665 = vcmp.eq.s32.totalorder %v2331, 1
        %vm2666 = vcmp.eq.s32.totalorder %v2334, 1
        %vm2667 = vcmp.eq.s32.totalorder %v2337, 1
        %vm2668 = vcmp.eq.s32.totalorder %v2340, 1
        %vm2669 = vcmp.eq.s32.totalorder %v2343, 1
        %vm2670 = vcmp.eq.s32.totalorder %v2346, 1
        %vm2671 = vcmp.eq.s32.totalorder %v2349, 1
        %vm2672 = vcmp.eq.s32.totalorder %v2352, 1
        %vm2673 = vcmp.eq.s32.totalorder %v2355, 1
        %vm2674 = vcmp.eq.s32.totalorder %v2358, 1
        %vm2675 = vcmp.eq.s32.totalorder %v2361, 1
        %vm2676 = vcmp.eq.s32.totalorder %v2364, 1
        %vm2677 = vcmp.eq.s32.totalorder %v2367, 1
        %vm2678 = vcmp.eq.s32.totalorder %v2370, 1
        %vm2679 = vcmp.eq.s32.totalorder %v2373, 1
        %vm2680 = vcmp.eq.s32.totalorder %v2376, 1
        %vm2681 = vcmp.eq.s32.totalorder %v2379, 1
        %vm2682 = vcmp.eq.s32.totalorder %v2382, 1
        %vm2683 = vcmp.eq.s32.totalorder %v2385, 1
        %vm2684 = vcmp.eq.s32.totalorder %v2388, 1
        %vm2685 = vcmp.eq.s32.totalorder %v2391, 1
        %vm2686 = vcmp.eq.s32.totalorder %v2394, 1
        %vm2687 = vcmp.eq.s32.totalorder %v2397, 1
        %vm2688 = vcmp.eq.s32.totalorder %v2400, 1
        %vm2689 = vcmp.eq.s32.totalorder %v2403, 1
        %vm2690 = vcmp.eq.s32.totalorder %v2406, 1
        %vm2691 = vcmp.eq.s32.totalorder %v2409, 1
        %vm2692 = vcmp.eq.s32.totalorder %v2412, 1
        %vm2693 = vcmp.eq.s32.totalorder %v2415, 1
        %vm2694 = vcmp.eq.s32.totalorder %v2418, 1
        %vm2695 = vcmp.eq.s32.totalorder %v2421, 1
        %vm2696 = vcmp.eq.s32.totalorder %v2424, 1
        %vm2697 = vcmp.eq.s32.totalorder %v2427, 1
        %vm2698 = vcmp.eq.s32.totalorder %v2430, 1
        %vm2699 = vcmp.eq.s32.totalorder %v2433, 1
        %vm2700 = vcmp.eq.s32.totalorder %v2436, 1
        %vm2701 = vcmp.eq.s32.totalorder %v2439, 1
        %vm2702 = vcmp.eq.s32.totalorder %v2442, 1
        %vm2703 = vcmp.eq.s32.totalorder %v2445, 1
        %vm2704 = vcmp.eq.s32.totalorder %v2448, 1
        %vm2705 = vcmp.eq.s32.totalorder %v2451, 1
        %vm2706 = vcmp.eq.s32.totalorder %v2454, 1
        %vm2707 = vcmp.eq.s32.totalorder %v2457, 1
        %vm2708 = vcmp.eq.s32.totalorder %v2460, 1
        %vm2709 = vcmp.eq.s32.totalorder %v2463, 1
        %vm2710 = vcmp.eq.s32.totalorder %v2466, 1
        %vm2711 = vcmp.eq.s32.totalorder %v2469, 1
        %vm2712 = vcmp.eq.s32.totalorder %v2472, 1
        %vm2713 = vcmp.eq.s32.totalorder %v2475, 1
        %vm2714 = vcmp.eq.s32.totalorder %v2478, 1
        %vm2715 = vcmp.eq.s32.totalorder %v2481, 1
        %vm2716 = vcmp.eq.s32.totalorder %v2484, 1
        %vm2717 = vcmp.eq.s32.totalorder %v2487, 1
        %vm2718 = vcmp.eq.s32.totalorder %v2490, 1
        %vm2719 = vcmp.eq.s32.totalorder %v2493, 1
        %vm2720 = vcmp.eq.s32.totalorder %v2496, 1
        %vm2721 = vcmp.eq.s32.totalorder %v2499, 1
        %vm2722 = vcmp.eq.s32.totalorder %v2502, 1
        %vm2723 = vcmp.eq.s32.totalorder %v2505, 1
        %vm2724 = vcmp.eq.s32.totalorder %v2508, 1
        %vm2725 = vcmp.eq.s32.totalorder %v2511, 1
        %vm2726 = vcmp.eq.s32.totalorder %v2514, 1
        %vm2727 = vcmp.eq.s32.totalorder %v2517, 1
        %vm2728 = vcmp.eq.s32.totalorder %v2520, 1
        %vm2729 = vcmp.eq.s32.totalorder %v2523, 1
        %vm2730 = vcmp.eq.s32.totalorder %v2526, 1
        %vm2731 = vcmp.eq.s32.totalorder %v2529, 1
        %vm2732 = vcmp.eq.s32.totalorder %v2532, 1
        %vm2733 = vcmp.eq.s32.totalorder %v2535, 1
        %vm2734 = vcmp.eq.s32.totalorder %v2538, 1
        %vm2735 = vcmp.eq.s32.totalorder %v2541, 1
        %vm2736 = vcmp.eq.s32.totalorder %v2544, 1
        %vm2737 = vcmp.eq.s32.totalorder %v2547, 1
        %vm2738 = vcmp.eq.s32.totalorder %v2550, 1
        %vm2739 = vcmp.eq.s32.totalorder %v2553, 1
        %vm2740 = vcmp.eq.s32.totalorder %v2556, 1
        %vm2741 = vcmp.eq.s32.totalorder %v2559, 1
        %vm2742 = vcmp.eq.s32.totalorder %v2562, 1
        %vm2743 = vcmp.eq.s32.totalorder %v2565, 1
        %vm2744 = vcmp.eq.s32.totalorder %v2568, 1
        %vm2745 = vcmp.eq.s32.totalorder %v2571, 1
        %vm2746 = vcmp.eq.s32.totalorder %v2574, 1
        %vm2747 = vcmp.eq.s32.totalorder %v2577, 1
        %vm2748 = vcmp.eq.s32.totalorder %v2580, 1
        %vm2749 = vcmp.eq.s32.totalorder %v2583, 1
        %vm2750 = vcmp.eq.s32.totalorder %v2586, 1
        %vm2751 = vcmp.eq.s32.totalorder %v2589, 1
        %vm2752 = vcmp.eq.s32.totalorder %v2592, 1
        %vm2753 = vcmp.eq.s32.totalorder %v2595, 1
        %vm2754 = vcmp.eq.s32.totalorder %v2598, 1
        %vm2755 = vcmp.eq.s32.totalorder %v2601, 1
        %vm2756 = vcmp.eq.s32.totalorder %v2604, 1
        %vm2757 = vcmp.eq.s32.totalorder %v2607, 1
        %vm2758 = vcmp.eq.s32.totalorder %v2610, 1
        %vm2759 = vcmp.eq.s32.totalorder %v2613, 1
        %vm2760 = vcmp.eq.s32.totalorder %v2616, 1
        %vm2761 = vcmp.eq.s32.totalorder %v2619, 1
        %vm2762 = vcmp.eq.s32.totalorder %v2622, 1
        %vm2763 = vcmp.eq.s32.totalorder %v2625, 1
        %vm2764 = vcmp.eq.s32.totalorder %v2628, 1
        %vm2765 = vcmp.eq.s32.totalorder %v2631, 1
        %vm2766 = vcmp.eq.s32.totalorder %v2634, 1
        %vm2767 = vcmp.eq.s32.totalorder %v2637, 1
        %vm2768 = vcmp.eq.s32.totalorder %v2640, 1
        %v2769 = vsel %vm2641, %v2001, 0.0
        %v2770 = vsel %vm2642, %v2002, 0.0
        %v2771 = vsel %vm2643, %v2003, 0.0
        %v2772 = vsel %vm2644, %v2004, 0.0
        %v2773 = vsel %vm2645, %v2005, 0.0
        %v2774 = vsel %vm2646, %v2006, 0.0
        %v2775 = vsel %vm2647, %v2007, 0.0
        %v2776 = vsel %vm2648, %v2008, 0.0
        %v2777 = vsel %vm2649, %v2009, 0.0
        %v2778 = vsel %vm2650, %v2010, 0.0
        %v2779 = vsel %vm2651, %v2011, 0.0
        %v2780 = vsel %vm2652, %v2012, 0.0
        %v2781 = vsel %vm2653, %v2013, 0.0
        %v2782 = vsel %vm2654, %v2014, 0.0
        %v2783 = vsel %vm2655, %v2015, 0.0
        %v2784 = vsel %vm2656, %v2016, 0.0
        %v2785 = vsel %vm2657, %v2017, 0.0
        %v2786 = vsel %vm2658, %v2018, 0.0
        %v2787 = vsel %vm2659, %v2019, 0.0
        %v2788 = vsel %vm2660, %v2020, 0.0
        %v2789 = vsel %vm2661, %v2021, 0.0
        %v2790 = vsel %vm2662, %v2022, 0.0
        %v2791 = vsel %vm2663, %v2023, 0.0
        %v2792 = vsel %vm2664, %v2024, 0.0
        %v2793 = vsel %vm2665, %v2025, 0.0
        %v2794 = vsel %vm2666, %v2026, 0.0
        %v2795 = vsel %vm2667, %v2027, 0.0
        %v2796 = vsel %vm2668, %v2028, 0.0
        %v2797 = vsel %vm2669, %v2029, 0.0
        %v2798 = vsel %vm2670, %v2030, 0.0
        %v2799 = vsel %vm2671, %v2031, 0.0
        %v2800 = vsel %vm2672, %v2032, 0.0
        %v2801 = vsel %vm2673, %v2033, 0.0
        %v2802 = vsel %vm2674, %v2034, 0.0
        %v2803 = vsel %vm2675, %v2035, 0.0
        %v2804 = vsel %vm2676, %v2036, 0.0
        %v2805 = vsel %vm2677, %v2037, 0.0
        %v2806 = vsel %vm2678, %v2038, 0.0
        %v2807 = vsel %vm2679, %v2039, 0.0
        %v2808 = vsel %vm2680, %v2040, 0.0
        %v2809 = vsel %vm2681, %v2041, 0.0
        %v2810 = vsel %vm2682, %v2042, 0.0
        %v2811 = vsel %vm2683, %v2043, 0.0
        %v2812 = vsel %vm2684, %v2044, 0.0
        %v2813 = vsel %vm2685, %v2045, 0.0
        %v2814 = vsel %vm2686, %v2046, 0.0
        %v2815 = vsel %vm2687, %v2047, 0.0
        %v2816 = vsel %vm2688, %v2048, 0.0
        %v2817 = vsel %vm2689, %v2049, 0.0
        %v2818 = vsel %vm2690, %v2050, 0.0
        %v2819 = vsel %vm2691, %v2051, 0.0
        %v2820 = vsel %vm2692, %v2052, 0.0
        %v2821 = vsel %vm2693, %v2053, 0.0
        %v2822 = vsel %vm2694, %v2054, 0.0
        %v2823 = vsel %vm2695, %v2055, 0.0
        %v2824 = vsel %vm2696, %v2056, 0.0
        %v2825 = vsel %vm2697, %v2057, 0.0
        %v2826 = vsel %vm2698, %v2058, 0.0
        %v2827 = vsel %vm2699, %v2059, 0.0
        %v2828 = vsel %vm2700, %v2060, 0.0
        %v2829 = vsel %vm2701, %v2061, 0.0
        %v2830 = vsel %vm2702, %v2062, 0.0
        %v2831 = vsel %vm2703, %v2063, 0.0
        %v2832 = vsel %vm2704, %v2064, 0.0
        %v2833 = vsel %vm2705, %v2065, 0.0
        %v2834 = vsel %vm2706, %v2066, 0.0
        %v2835 = vsel %vm2707, %v2067, 0.0
        %v2836 = vsel %vm2708, %v2068, 0.0
        %v2837 = vsel %vm2709, %v2069, 0.0
        %v2838 = vsel %vm2710, %v2070, 0.0
        %v2839 = vsel %vm2711, %v2071, 0.0
        %v2840 = vsel %vm2712, %v2072, 0.0
        %v2841 = vsel %vm2713, %v2073, 0.0
        %v2842 = vsel %vm2714, %v2074, 0.0
        %v2843 = vsel %vm2715, %v2075, 0.0
        %v2844 = vsel %vm2716, %v2076, 0.0
        %v2845 = vsel %vm2717, %v2077, 0.0
        %v2846 = vsel %vm2718, %v2078, 0.0
        %v2847 = vsel %vm2719, %v2079, 0.0
        %v2848 = vsel %vm2720, %v2080, 0.0
        %v2849 = vsel %vm2721, %v2081, 0.0
        %v2850 = vsel %vm2722, %v2082, 0.0
        %v2851 = vsel %vm2723, %v2083, 0.0
        %v2852 = vsel %vm2724, %v2084, 0.0
        %v2853 = vsel %vm2725, %v2085, 0.0
        %v2854 = vsel %vm2726, %v2086, 0.0
        %v2855 = vsel %vm2727, %v2087, 0.0
        %v2856 = vsel %vm2728, %v2088, 0.0
        %v2857 = vsel %vm2729, %v2089, 0.0
        %v2858 = vsel %vm2730, %v2090, 0.0
        %v2859 = vsel %vm2731, %v2091, 0.0
        %v2860 = vsel %vm2732, %v2092, 0.0
        %v2861 = vsel %vm2733, %v2093, 0.0
        %v2862 = vsel %vm2734, %v2094, 0.0
        %v2863 = vsel %vm2735, %v2095, 0.0
        %v2864 = vsel %vm2736, %v2096, 0.0
        %v2865 = vsel %vm2737, %v2097, 0.0
        %v2866 = vsel %vm2738, %v2098, 0.0
        %v2867 = vsel %vm2739, %v2099, 0.0
        %v2868 = vsel %vm2740, %v2100, 0.0
        %v2869 = vsel %vm2741, %v2101, 0.0
        %v2870 = vsel %vm2742, %v2102, 0.0
        %v2871 = vsel %vm2743, %v2103, 0.0
        %v2872 = vsel %vm2744, %v2104, 0.0
        %v2873 = vsel %vm2745, %v2105, 0.0
        %v2874 = vsel %vm2746, %v2106, 0.0
        %v2875 = vsel %vm2747, %v2107, 0.0
        %v2876 = vsel %vm2748, %v2108, 0.0
        %v2877 = vsel %vm2749, %v2109, 0.0
        %v2878 = vsel %vm2750, %v2110, 0.0
        %v2879 = vsel %vm2751, %v2111, 0.0
        %v2880 = vsel %vm2752, %v2112, 0.0
        %v2881 = vsel %vm2753, %v2113, 0.0
        %v2882 = vsel %vm2754, %v2114, 0.0
        %v2883 = vsel %vm2755, %v2115, 0.0
        %v2884 = vsel %vm2756, %v2116, 0.0
        %v2885 = vsel %vm2757, %v2117, 0.0
        %v2886 = vsel %vm2758, %v2118, 0.0
        %v2887 = vsel %vm2759, %v2119, 0.0
        %v2888 = vsel %vm2760, %v2120, 0.0
        %v2889 = vsel %vm2761, %v2121, 0.0
        %v2890 = vsel %vm2762, %v2122, 0.0
        %v2891 = vsel %vm2763, %v2123, 0.0
        %v2892 = vsel %vm2764, %v2124, 0.0
        %v2893 = vsel %vm2765, %v2125, 0.0
        %v2894 = vsel %vm2766, %v2126, 0.0
        %v2895 = vsel %vm2767, %v2127, 0.0
        %v2896 = vsel %vm2768, %v2128, 0.0
        %v2897 = vadd.f32 %v2769, %v2770
        %v2898 = vadd.f32 %v2897, %v2771
        %v2899 = vadd.f32 %v2898, %v2772
        %v2900 = vadd.f32 %v2899, %v2773
        %v2901 = vadd.f32 %v2900, %v2774
        %v2902 = vadd.f32 %v2901, %v2775
        %v2903 = vadd.f32 %v2902, %v2776
        %v2904 = vadd.f32 %v2903, %v2777
        %v2905 = vadd.f32 %v2904, %v2778
        %v2906 = vadd.f32 %v2905, %v2779
        %v2907 = vadd.f32 %v2906, %v2780
        %v2908 = vadd.f32 %v2907, %v2781
        %v2909 = vadd.f32 %v2908, %v2782
        %v2910 = vadd.f32 %v2909, %v2783
        %v2911 = vadd.f32 %v2910, %v2784
        %v2912 = vrot.slane %v2911, 4
        %v2913 = vadd.f32 %v2911, %v2912
        %v2914 = vrot.slane %v2913, 2
        %v2915 = vadd.f32 %v2913, %v2914
        %v2916 = vrot.slane %v2915, 1
        %v2917 = vadd.f32 %v2915, %v2916
        %v2918 = vadd.f32 %v2785, %v2786
        %v2919 = vadd.f32 %v2918, %v2787
        %v2920 = vadd.f32 %v2919, %v2788
        %v2921 = vadd.f32 %v2920, %v2789
        %v2922 = vadd.f32 %v2921, %v2790
        %v2923 = vadd.f32 %v2922, %v2791
        %v2924 = vadd.f32 %v2923, %v2792
        %v2925 = vadd.f32 %v2924, %v2793
        %v2926 = vadd.f32 %v2925, %v2794
        %v2927 = vadd.f32 %v2926, %v2795
        %v2928 = vadd.f32 %v2927, %v2796
        %v2929 = vadd.f32 %v2928, %v2797
        %v2930 = vadd.f32 %v2929, %v2798
        %v2931 = vadd.f32 %v2930, %v2799
        %v2932 = vadd.f32 %v2931, %v2800
        %v2933 = vrot.slane %v2932, 4
        %v2934 = vadd.f32 %v2932, %v2933
        %v2935 = vrot.slane %v2934, 2
        %v2936 = vadd.f32 %v2934, %v2935
        %v2937 = vrot.slane %v2936, 1
        %v2938 = vadd.f32 %v2936, %v2937
        %v2939 = vadd.f32 %v2801, %v2802
        %v2940 = vadd.f32 %v2939, %v2803
        %v2941 = vadd.f32 %v2940, %v2804
        %v2942 = vadd.f32 %v2941, %v2805
        %v2943 = vadd.f32 %v2942, %v2806
        %v2944 = vadd.f32 %v2943, %v2807
        %v2945 = vadd.f32 %v2944, %v2808
        %v2946 = vadd.f32 %v2945, %v2809
        %v2947 = vadd.f32 %v2946, %v2810
        %v2948 = vadd.f32 %v2947, %v2811
        %v2949 = vadd.f32 %v2948, %v2812
        %v2950 = vadd.f32 %v2949, %v2813
        %v2951 = vadd.f32 %v2950, %v2814
        %v2952 = vadd.f32 %v2951, %v2815
        %v2953 = vadd.f32 %v2952, %v2816
        %v2954 = vrot.slane %v2953, 4
        %v2955 = vadd.f32 %v2953, %v2954
        %v2956 = vrot.slane %v2955, 2
        %v2957 = vadd.f32 %v2955, %v2956
        %v2958 = vrot.slane %v2957, 1
        %v2959 = vadd.f32 %v2957, %v2958
        %v2960 = vadd.f32 %v2817, %v2818
        %v2961 = vadd.f32 %v2960, %v2819
        %v2962 = vadd.f32 %v2961, %v2820
        %v2963 = vadd.f32 %v2962, %v2821
        %v2964 = vadd.f32 %v2963, %v2822
        %v2965 = vadd.f32 %v2964, %v2823
        %v2966 = vadd.f32 %v2965, %v2824
        %v2967 = vadd.f32 %v2966, %v2825
        %v2968 = vadd.f32 %v2967, %v2826
        %v2969 = vadd.f32 %v2968, %v2827
        %v2970 = vadd.f32 %v2969, %v2828
        %v2971 = vadd.f32 %v2970, %v2829
        %v2972 = vadd.f32 %v2971, %v2830
        %v2973 = vadd.f32 %v2972, %v2831
        %v2974 = vadd.f32 %v2973, %v2832
        %v2975 = vrot.slane %v2974, 4
        %v2976 = vadd.f32 %v2974, %v2975
        %v2977 = vrot.slane %v2976, 2
        %v2978 = vadd.f32 %v2976, %v2977
        %v2979 = vrot.slane %v2978, 1
        %v2980 = vadd.f32 %v2978, %v2979
        %v2981 = vadd.f32 %v2833, %v2834
        %v2982 = vadd.f32 %v2981, %v2835
        %v2983 = vadd.f32 %v2982, %v2836
        %v2984 = vadd.f32 %v2983, %v2837
        %v2985 = vadd.f32 %v2984, %v2838
        %v2986 = vadd.f32 %v2985, %v2839
        %v2987 = vadd.f32 %v2986, %v2840
        %v2988 = vadd.f32 %v2987, %v2841
        %v2989 = vadd.f32 %v2988, %v2842
        %v2990 = vadd.f32 %v2989, %v2843
        %v2991 = vadd.f32 %v2990, %v2844
        %v2992 = vadd.f32 %v2991, %v2845
        %v2993 = vadd.f32 %v2992, %v2846
        %v2994 = vadd.f32 %v2993, %v2847
        %v2995 = vadd.f32 %v2994, %v2848
        %v2996 = vrot.slane %v2995, 4
        %v2997 = vadd.f32 %v2995, %v2996
        %v2998 = vrot.slane %v2997, 2
        %v2999 = vadd.f32 %v2997, %v2998
        %v3000 = vrot.slane %v2999, 1
        %v3001 = vadd.f32 %v2999, %v3000
        %v3002 = vadd.f32 %v2849, %v2850
        %v3003 = vadd.f32 %v3002, %v2851
        %v3004 = vadd.f32 %v3003, %v2852
        %v3005 = vadd.f32 %v3004, %v2853
        %v3006 = vadd.f32 %v3005, %v2854
        %v3007 = vadd.f32 %v3006, %v2855
        %v3008 = vadd.f32 %v3007, %v2856
        %v3009 = vadd.f32 %v3008, %v2857
        %v3010 = vadd.f32 %v3009, %v2858
        %v3011 = vadd.f32 %v3010, %v2859
        %v3012 = vadd.f32 %v3011, %v2860
        %v3013 = vadd.f32 %v3012, %v2861
        %v3014 = vadd.f32 %v3013, %v2862
        %v3015 = vadd.f32 %v3014, %v2863
        %v3016 = vadd.f32 %v3015, %v2864
        %v3017 = vrot.slane %v3016, 4
        %v3018 = vadd.f32 %v3016, %v3017
        %v3019 = vrot.slane %v3018, 2
        %v3020 = vadd.f32 %v3018, %v3019
        %v3021 = vrot.slane %v3020, 1
        %v3022 = vadd.f32 %v3020, %v3021
        %v3023 = vadd.f32 %v2865, %v2866
        %v3024 = vadd.f32 %v3023, %v2867
        %v3025 = vadd.f32 %v3024, %v2868
        %v3026 = vadd.f32 %v3025, %v2869
        %v3027 = vadd.f32 %v3026, %v2870
        %v3028 = vadd.f32 %v3027, %v2871
        %v3029 = vadd.f32 %v3028, %v2872
        %v3030 = vadd.f32 %v3029, %v2873
        %v3031 = vadd.f32 %v3030, %v2874
        %v3032 = vadd.f32 %v3031, %v2875
        %v3033 = vadd.f32 %v3032, %v2876
        %v3034 = vadd.f32 %v3033, %v2877
        %v3035 = vadd.f32 %v3034, %v2878
        %v3036 = vadd.f32 %v3035, %v2879
        %v3037 = vadd.f32 %v3036, %v2880
        %v3038 = vrot.slane %v3037, 4
        %v3039 = vadd.f32 %v3037, %v3038
        %v3040 = vrot.slane %v3039, 2
        %v3041 = vadd.f32 %v3039, %v3040
        %v3042 = vrot.slane %v3041, 1
        %v3043 = vadd.f32 %v3041, %v3042
        %v3044 = vadd.f32 %v2881, %v2882
        %v3045 = vadd.f32 %v3044, %v2883
        %v3046 = vadd.f32 %v3045, %v2884
        %v3047 = vadd.f32 %v3046, %v2885
        %v3048 = vadd.f32 %v3047, %v2886
        %v3049 = vadd.f32 %v3048, %v2887
        %v3050 = vadd.f32 %v3049, %v2888
        %v3051 = vadd.f32 %v3050, %v2889
        %v3052 = vadd.f32 %v3051, %v2890
        %v3053 = vadd.f32 %v3052, %v2891
        %v3054 = vadd.f32 %v3053, %v2892
        %v3055 = vadd.f32 %v3054, %v2893
        %v3056 = vadd.f32 %v3055, %v2894
        %v3057 = vadd.f32 %v3056, %v2895
        %v3058 = vadd.f32 %v3057, %v2896
        %v3059 = vrot.slane %v3058, 4
        %v3060 = vadd.f32 %v3058, %v3059
        %v3061 = vrot.slane %v3060, 2
        %v3062 = vadd.f32 %v3060, %v3061
        %v3063 = vrot.slane %v3062, 1
        %v3064 = vadd.f32 %v3062, %v3063
        %v3065 = vadd.f32 %v1719, %v2917
        %v3066 = vadd.f32 %v1720, %v2938
        %v3067 = vadd.f32 %v1721, %v2959
        %v3068 = vadd.f32 %v1722, %v2980
        %v3069 = vadd.f32 %v1723, %v3001
        %v3070 = vadd.f32 %v1724, %v3022
        %v3071 = vadd.f32 %v1725, %v3043
        %v3072 = vadd.f32 %v1726, %v3064
        %v3073 = vmul.f32 %v3065, %v3065
        %v3074 = vmul.f32 %v3066, %v3066
        %v3075 = vmul.f32 %v3067, %v3067
        %v3076 = vmul.f32 %v3068, %v3068
        %v3077 = vmul.f32 %v3069, %v3069
        %v3078 = vmul.f32 %v3070, %v3070
        %v3079 = vmul.f32 %v3071, %v3071
        %v3080 = vmul.f32 %v3072, %v3072
        %vm3089 = vcmask 1041409
        %v3090 = vsel %vm3089, %v3074, %v3073
        %vm3091 = vcmask 1042434
        %v3092 = vsel %vm3091, %v3075, %v3090
        %vm3093 = vcmask 1043459
        %v3094 = vsel %vm3093, %v3076, %v3092
        %vm3095 = vcmask 1044484
        %v3096 = vsel %vm3095, %v3077, %v3094
        %vm3097 = vcmask 1045509
        %v3098 = vsel %vm3097, %v3078, %v3096
        %vm3099 = vcmask 1046534
        %v3100 = vsel %vm3099, %v3079, %v3098
        %vm3101 = vcmask 1047559
        %v3102 = vsel %vm3101, %v3080, %v3100
        %3104 = vadd.xlane.f32.xlu0 %v3102
        %v3105 = vpop.xlane.xlu0 %3104
        %v3106 = vmax.f32 %v3105, 1e-24
        %v3107 = vrsqrt.pop %v3106
        %v3109 = vrot.slane %v3107, 1
        %v3110 = vrot.slane %v3107, 2
        %v3111 = vrot.slane %v3107, 3
        %v3112 = vrot.slane %v3107, 4
        %v3113 = vrot.slane %v3107, 5
        %v3114 = vrot.slane %v3107, 6
        %v3115 = vrot.slane %v3107, 7
        %v3124 = vmul.f32 %v3065, %v3107
        %v3125 = vmul.f32 %v3066, %v3109
        %v3126 = vmul.f32 %v3067, %v3110
        %v3127 = vmul.f32 %v3068, %v3111
        %v3128 = vmul.f32 %v3069, %v3112
        %v3129 = vmul.f32 %v3070, %v3113
        %v3130 = vmul.f32 %v3071, %v3114
        %v3131 = vmul.f32 %v3072, %v3115
        %v3140 = vrot.slane %v3125, 7
        %v3141 = vsel %vm3089, %v3140, %v3124
        %v3142 = vrot.slane %v3126, 6
        %v3143 = vsel %vm3091, %v3142, %v3141
        %v3144 = vrot.slane %v3127, 5
        %v3145 = vsel %vm3093, %v3144, %v3143
        %v3146 = vrot.slane %v3128, 4
        %v3147 = vsel %vm3095, %v3146, %v3145
        %v3148 = vrot.slane %v3129, 3
        %v3149 = vsel %vm3097, %v3148, %v3147
        %v3150 = vrot.slane %v3130, 2
        %v3151 = vsel %vm3099, %v3150, %v3149
        %v3152 = vrot.slane %v3131, 1
        %v3153 = vsel %vm3101, %v3152, %v3151
        %s3155 = scalar_lea.vmem [#allocation2], %s282
        %3156 = vst [vmem:[%s3155] sm:$0xff] %v3153
        %v3157 = vld [vmem:[%s281] sm:$0xff]
        %v3158 = vcombine.high %v3157, %v3157
        %v3160 = vunpack.c.l.s4 1966171168
        %v3161 = vunpack.c.0.s8 %v3160
        %v3162 = vlaneseq
        %v3163 = vshrl.u32 %v3162, 7
        %v3164 = vsub.s32 %v3161, %v3163
        %v3165 = vrot.slane %v3157, %v3164
        %v3167 = vunpack.c.l.s4 1966171168
        %v3168 = vunpack.c.0.s8 %v3167
        %v3169 = vlaneseq
        %v3170 = vshrl.u32 %v3169, 7
        %v3171 = vsub.s32 %v3168, %v3170
        %v3172 = vrot.slane %v3158, %v3171
        %v3173 = vcombine.high %v3165, %v3165
        %v3174 = vcombine.high %v3172, %v3172
        %v3176 = vunpack.c.l.s4 1966171168
        %v3177 = vunpack.c.0.s8 %v3176
        %v3178 = vlaneseq
        %v3179 = vshrl.u32 %v3178, 7
        %v3180 = vsub.s32 %v3177, %v3179
        %v3181 = vrot.slane %v3165, %v3180
        %v3183 = vunpack.c.l.s4 1966171168
        %v3184 = vunpack.c.0.s8 %v3183
        %v3185 = vlaneseq
        %v3186 = vshrl.u32 %v3185, 7
        %v3187 = vsub.s32 %v3184, %v3186
        %v3188 = vrot.slane %v3172, %v3187
        %v3190 = vunpack.c.l.s4 1966171168
        %v3191 = vunpack.c.0.s8 %v3190
        %v3192 = vlaneseq
        %v3193 = vshrl.u32 %v3192, 7
        %v3194 = vsub.s32 %v3191, %v3193
        %v3195 = vrot.slane %v3173, %v3194
        %v3197 = vunpack.c.l.s4 1966171168
        %v3198 = vunpack.c.0.s8 %v3197
        %v3199 = vlaneseq
        %v3200 = vshrl.u32 %v3199, 7
        %v3201 = vsub.s32 %v3198, %v3200
        %v3202 = vrot.slane %v3174, %v3201
        %v3203 = vcombine.high %v3181, %v3181
        %v3204 = vcombine.high %v3188, %v3188
        %v3205 = vcombine.high %v3195, %v3195
        %v3206 = vcombine.high %v3202, %v3202
        %v3207 = vlaneseq
        %v3208 = vshrl.u32 %v3207, 7
        %v3209 = vsub.s32 0, %v3208
        %v3210 = vrot.slane %v3181, %v3209
        %v3211 = vlaneseq
        %v3212 = vshrl.u32 %v3211, 7
        %v3213 = vsub.s32 0, %v3212
        %v3214 = vrot.slane %v3195, %v3213
        %v3215 = vlaneseq
        %v3216 = vshrl.u32 %v3215, 7
        %v3217 = vsub.s32 0, %v3216
        %v3218 = vrot.slane %v3203, %v3217
        %v3219 = vlaneseq
        %v3220 = vshrl.u32 %v3219, 7
        %v3221 = vsub.s32 0, %v3220
        %v3222 = vrot.slane %v3205, %v3221
        %v3223 = vlaneseq
        %v3224 = vshrl.u32 %v3223, 7
        %v3225 = vsub.s32 0, %v3224
        %v3226 = vrot.slane %v3188, %v3225
        %v3227 = vlaneseq
        %v3228 = vshrl.u32 %v3227, 7
        %v3229 = vsub.s32 0, %v3228
        %v3230 = vrot.slane %v3202, %v3229
        %v3231 = vlaneseq
        %v3232 = vshrl.u32 %v3231, 7
        %v3233 = vsub.s32 0, %v3232
        %v3234 = vrot.slane %v3204, %v3233
        %v3235 = vlaneseq
        %v3236 = vshrl.u32 %v3235, 7
        %v3237 = vsub.s32 0, %v3236
        %v3238 = vrot.slane %v3206, %v3237
        %vm3239 = vcmp.lt.s32.totalorder %v302, %v3210
        %vm3240 = vcmp.lt.s32.totalorder %v303, %v3210
        %vm3241 = vcmp.lt.s32.totalorder %v304, %v3210
        %vm3242 = vcmp.lt.s32.totalorder %v305, %v3210
        %vm3243 = vcmp.lt.s32.totalorder %v306, %v3210
        %vm3244 = vcmp.lt.s32.totalorder %v307, %v3210
        %vm3245 = vcmp.lt.s32.totalorder %v308, %v3210
        %vm3246 = vcmp.lt.s32.totalorder %v309, %v3210
        %vm3247 = vcmp.lt.s32.totalorder %v310, %v3210
        %vm3248 = vcmp.lt.s32.totalorder %v311, %v3210
        %vm3249 = vcmp.lt.s32.totalorder %v312, %v3210
        %vm3250 = vcmp.lt.s32.totalorder %v313, %v3210
        %vm3251 = vcmp.lt.s32.totalorder %v314, %v3210
        %vm3252 = vcmp.lt.s32.totalorder %v315, %v3210
        %vm3253 = vcmp.lt.s32.totalorder %v316, %v3210
        %vm3254 = vcmp.lt.s32.totalorder %v317, %v3210
        %vm3255 = vcmp.lt.s32.totalorder %v302, %v3214
        %vm3256 = vcmp.lt.s32.totalorder %v303, %v3214
        %vm3257 = vcmp.lt.s32.totalorder %v304, %v3214
        %vm3258 = vcmp.lt.s32.totalorder %v305, %v3214
        %vm3259 = vcmp.lt.s32.totalorder %v306, %v3214
        %vm3260 = vcmp.lt.s32.totalorder %v307, %v3214
        %vm3261 = vcmp.lt.s32.totalorder %v308, %v3214
        %vm3262 = vcmp.lt.s32.totalorder %v309, %v3214
        %vm3263 = vcmp.lt.s32.totalorder %v310, %v3214
        %vm3264 = vcmp.lt.s32.totalorder %v311, %v3214
        %vm3265 = vcmp.lt.s32.totalorder %v312, %v3214
        %vm3266 = vcmp.lt.s32.totalorder %v313, %v3214
        %vm3267 = vcmp.lt.s32.totalorder %v314, %v3214
        %vm3268 = vcmp.lt.s32.totalorder %v315, %v3214
        %vm3269 = vcmp.lt.s32.totalorder %v316, %v3214
        %vm3270 = vcmp.lt.s32.totalorder %v317, %v3214
        %vm3271 = vcmp.lt.s32.totalorder %v302, %v3218
        %vm3272 = vcmp.lt.s32.totalorder %v303, %v3218
        %vm3273 = vcmp.lt.s32.totalorder %v304, %v3218
        %vm3274 = vcmp.lt.s32.totalorder %v305, %v3218
        %vm3275 = vcmp.lt.s32.totalorder %v306, %v3218
        %vm3276 = vcmp.lt.s32.totalorder %v307, %v3218
        %vm3277 = vcmp.lt.s32.totalorder %v308, %v3218
        %vm3278 = vcmp.lt.s32.totalorder %v309, %v3218
        %vm3279 = vcmp.lt.s32.totalorder %v310, %v3218
        %vm3280 = vcmp.lt.s32.totalorder %v311, %v3218
        %vm3281 = vcmp.lt.s32.totalorder %v312, %v3218
        %vm3282 = vcmp.lt.s32.totalorder %v313, %v3218
        %vm3283 = vcmp.lt.s32.totalorder %v314, %v3218
        %vm3284 = vcmp.lt.s32.totalorder %v315, %v3218
        %vm3285 = vcmp.lt.s32.totalorder %v316, %v3218
        %vm3286 = vcmp.lt.s32.totalorder %v317, %v3218
        %vm3287 = vcmp.lt.s32.totalorder %v302, %v3222
        %vm3288 = vcmp.lt.s32.totalorder %v303, %v3222
        %vm3289 = vcmp.lt.s32.totalorder %v304, %v3222
        %vm3290 = vcmp.lt.s32.totalorder %v305, %v3222
        %vm3291 = vcmp.lt.s32.totalorder %v306, %v3222
        %vm3292 = vcmp.lt.s32.totalorder %v307, %v3222
        %vm3293 = vcmp.lt.s32.totalorder %v308, %v3222
        %vm3294 = vcmp.lt.s32.totalorder %v309, %v3222
        %vm3295 = vcmp.lt.s32.totalorder %v310, %v3222
        %vm3296 = vcmp.lt.s32.totalorder %v311, %v3222
        %vm3297 = vcmp.lt.s32.totalorder %v312, %v3222
        %vm3298 = vcmp.lt.s32.totalorder %v313, %v3222
        %vm3299 = vcmp.lt.s32.totalorder %v314, %v3222
        %vm3300 = vcmp.lt.s32.totalorder %v315, %v3222
        %vm3301 = vcmp.lt.s32.totalorder %v316, %v3222
        %vm3302 = vcmp.lt.s32.totalorder %v317, %v3222
        %vm3303 = vcmp.lt.s32.totalorder %v302, %v3226
        %vm3304 = vcmp.lt.s32.totalorder %v303, %v3226
        %vm3305 = vcmp.lt.s32.totalorder %v304, %v3226
        %vm3306 = vcmp.lt.s32.totalorder %v305, %v3226
        %vm3307 = vcmp.lt.s32.totalorder %v306, %v3226
        %vm3308 = vcmp.lt.s32.totalorder %v307, %v3226
        %vm3309 = vcmp.lt.s32.totalorder %v308, %v3226
        %vm3310 = vcmp.lt.s32.totalorder %v309, %v3226
        %vm3311 = vcmp.lt.s32.totalorder %v310, %v3226
        %vm3312 = vcmp.lt.s32.totalorder %v311, %v3226
        %vm3313 = vcmp.lt.s32.totalorder %v312, %v3226
        %vm3314 = vcmp.lt.s32.totalorder %v313, %v3226
        %vm3315 = vcmp.lt.s32.totalorder %v314, %v3226
        %vm3316 = vcmp.lt.s32.totalorder %v315, %v3226
        %vm3317 = vcmp.lt.s32.totalorder %v316, %v3226
        %vm3318 = vcmp.lt.s32.totalorder %v317, %v3226
        %vm3319 = vcmp.lt.s32.totalorder %v302, %v3230
        %vm3320 = vcmp.lt.s32.totalorder %v303, %v3230
        %vm3321 = vcmp.lt.s32.totalorder %v304, %v3230
        %vm3322 = vcmp.lt.s32.totalorder %v305, %v3230
        %vm3323 = vcmp.lt.s32.totalorder %v306, %v3230
        %vm3324 = vcmp.lt.s32.totalorder %v307, %v3230
        %vm3325 = vcmp.lt.s32.totalorder %v308, %v3230
        %vm3326 = vcmp.lt.s32.totalorder %v309, %v3230
        %vm3327 = vcmp.lt.s32.totalorder %v310, %v3230
        %vm3328 = vcmp.lt.s32.totalorder %v311, %v3230
        %vm3329 = vcmp.lt.s32.totalorder %v312, %v3230
        %vm3330 = vcmp.lt.s32.totalorder %v313, %v3230
        %vm3331 = vcmp.lt.s32.totalorder %v314, %v3230
        %vm3332 = vcmp.lt.s32.totalorder %v315, %v3230
        %vm3333 = vcmp.lt.s32.totalorder %v316, %v3230
        %vm3334 = vcmp.lt.s32.totalorder %v317, %v3230
        %vm3335 = vcmp.lt.s32.totalorder %v302, %v3234
        %vm3336 = vcmp.lt.s32.totalorder %v303, %v3234
        %vm3337 = vcmp.lt.s32.totalorder %v304, %v3234
        %vm3338 = vcmp.lt.s32.totalorder %v305, %v3234
        %vm3339 = vcmp.lt.s32.totalorder %v306, %v3234
        %vm3340 = vcmp.lt.s32.totalorder %v307, %v3234
        %vm3341 = vcmp.lt.s32.totalorder %v308, %v3234
        %vm3342 = vcmp.lt.s32.totalorder %v309, %v3234
        %vm3343 = vcmp.lt.s32.totalorder %v310, %v3234
        %vm3344 = vcmp.lt.s32.totalorder %v311, %v3234
        %vm3345 = vcmp.lt.s32.totalorder %v312, %v3234
        %vm3346 = vcmp.lt.s32.totalorder %v313, %v3234
        %vm3347 = vcmp.lt.s32.totalorder %v314, %v3234
        %vm3348 = vcmp.lt.s32.totalorder %v315, %v3234
        %vm3349 = vcmp.lt.s32.totalorder %v316, %v3234
        %vm3350 = vcmp.lt.s32.totalorder %v317, %v3234
        %vm3351 = vcmp.lt.s32.totalorder %v302, %v3238
        %vm3352 = vcmp.lt.s32.totalorder %v303, %v3238
        %vm3353 = vcmp.lt.s32.totalorder %v304, %v3238
        %vm3354 = vcmp.lt.s32.totalorder %v305, %v3238
        %vm3355 = vcmp.lt.s32.totalorder %v306, %v3238
        %vm3356 = vcmp.lt.s32.totalorder %v307, %v3238
        %vm3357 = vcmp.lt.s32.totalorder %v308, %v3238
        %vm3358 = vcmp.lt.s32.totalorder %v309, %v3238
        %vm3359 = vcmp.lt.s32.totalorder %v310, %v3238
        %vm3360 = vcmp.lt.s32.totalorder %v311, %v3238
        %vm3361 = vcmp.lt.s32.totalorder %v312, %v3238
        %vm3362 = vcmp.lt.s32.totalorder %v313, %v3238
        %vm3363 = vcmp.lt.s32.totalorder %v314, %v3238
        %vm3364 = vcmp.lt.s32.totalorder %v315, %v3238
        %vm3365 = vcmp.lt.s32.totalorder %v316, %v3238
        %vm3366 = vcmp.lt.s32.totalorder %v317, %v3238
        %v3367 = vld [vmem:[%s239] sm:$0xf]
        %v3368 = vld [vmem:[%s239 + $0x4] sm:$0xf]
        %v3369 = vld [vmem:[%s239 + $0x8] sm:$0xf]
        %v3370 = vld [vmem:[%s239 + $0xc] sm:$0xf]
        %v3371 = vld [vmem:[%s239 + $0x10] sm:$0xf]
        %v3372 = vld [vmem:[%s239 + $0x14] sm:$0xf]
        %v3373 = vld [vmem:[%s239 + $0x18] sm:$0xf]
        %v3374 = vld [vmem:[%s239 + $0x1c] sm:$0xf]
        %v3375 = vld [vmem:[%s239 + $0x20] sm:$0xf]
        %v3376 = vld [vmem:[%s239 + $0x24] sm:$0xf]
        %v3377 = vld [vmem:[%s239 + $0x28] sm:$0xf]
        %v3378 = vld [vmem:[%s239 + $0x2c] sm:$0xf]
        %v3379 = vld [vmem:[%s239 + $0x30] sm:$0xf]
        %v3380 = vld [vmem:[%s239 + $0x34] sm:$0xf]
        %v3381 = vld [vmem:[%s239 + $0x38] sm:$0xf]
        %v3382 = vld [vmem:[%s239 + $0x3c] sm:$0xf]
        %v3383 = vld [vmem:[%s239 + $0x80] sm:$0xf]
        %v3384 = vld [vmem:[%s239 + $0x84] sm:$0xf]
        %v3385 = vld [vmem:[%s239 + $0x88] sm:$0xf]
        %v3386 = vld [vmem:[%s239 + $0x8c] sm:$0xf]
        %v3387 = vld [vmem:[%s239 + $0x90] sm:$0xf]
        %v3388 = vld [vmem:[%s239 + $0x94] sm:$0xf]
        %v3389 = vld [vmem:[%s239 + $0x98] sm:$0xf]
        %v3390 = vld [vmem:[%s239 + $0x9c] sm:$0xf]
        %v3391 = vld [vmem:[%s239 + $0xa0] sm:$0xf]
        %v3392 = vld [vmem:[%s239 + $0xa4] sm:$0xf]
        %v3393 = vld [vmem:[%s239 + $0xa8] sm:$0xf]
        %v3394 = vld [vmem:[%s239 + $0xac] sm:$0xf]
        %v3395 = vld [vmem:[%s239 + $0xb0] sm:$0xf]
        %v3396 = vld [vmem:[%s239 + $0xb4] sm:$0xf]
        %v3397 = vld [vmem:[%s239 + $0xb8] sm:$0xf]
        %v3398 = vld [vmem:[%s239 + $0xbc] sm:$0xf]
        %v3399 = vld [vmem:[%s239 + $0x100] sm:$0xf]
        %v3400 = vld [vmem:[%s239 + $0x104] sm:$0xf]
        %v3401 = vld [vmem:[%s239 + $0x108] sm:$0xf]
        %v3402 = vld [vmem:[%s239 + $0x10c] sm:$0xf]
        %v3403 = vld [vmem:[%s239 + $0x110] sm:$0xf]
        %v3404 = vld [vmem:[%s239 + $0x114] sm:$0xf]
        %v3405 = vld [vmem:[%s239 + $0x118] sm:$0xf]
        %v3406 = vld [vmem:[%s239 + $0x11c] sm:$0xf]
        %v3407 = vld [vmem:[%s239 + $0x120] sm:$0xf]
        %v3408 = vld [vmem:[%s239 + $0x124] sm:$0xf]
        %v3409 = vld [vmem:[%s239 + $0x128] sm:$0xf]
        %v3410 = vld [vmem:[%s239 + $0x12c] sm:$0xf]
        %v3411 = vld [vmem:[%s239 + $0x130] sm:$0xf]
        %v3412 = vld [vmem:[%s239 + $0x134] sm:$0xf]
        %v3413 = vld [vmem:[%s239 + $0x138] sm:$0xf]
        %v3414 = vld [vmem:[%s239 + $0x13c] sm:$0xf]
        %v3415 = vld [vmem:[%s239 + $0x180] sm:$0xf]
        %v3416 = vld [vmem:[%s239 + $0x184] sm:$0xf]
        %v3417 = vld [vmem:[%s239 + $0x188] sm:$0xf]
        %v3418 = vld [vmem:[%s239 + $0x18c] sm:$0xf]
        %v3419 = vld [vmem:[%s239 + $0x190] sm:$0xf]
        %v3420 = vld [vmem:[%s239 + $0x194] sm:$0xf]
        %v3421 = vld [vmem:[%s239 + $0x198] sm:$0xf]
        %v3422 = vld [vmem:[%s239 + $0x19c] sm:$0xf]
        %v3423 = vld [vmem:[%s239 + $0x1a0] sm:$0xf]
        %v3424 = vld [vmem:[%s239 + $0x1a4] sm:$0xf]
        %v3425 = vld [vmem:[%s239 + $0x1a8] sm:$0xf]
        %v3426 = vld [vmem:[%s239 + $0x1ac] sm:$0xf]
        %v3427 = vld [vmem:[%s239 + $0x1b0] sm:$0xf]
        %v3428 = vld [vmem:[%s239 + $0x1b4] sm:$0xf]
        %v3429 = vld [vmem:[%s239 + $0x1b8] sm:$0xf]
        %v3430 = vld [vmem:[%s239 + $0x1bc] sm:$0xf]
        %v3431 = vld [vmem:[%s239 + $0x200] sm:$0xf]
        %v3432 = vld [vmem:[%s239 + $0x204] sm:$0xf]
        %v3433 = vld [vmem:[%s239 + $0x208] sm:$0xf]
        %v3434 = vld [vmem:[%s239 + $0x20c] sm:$0xf]
        %v3435 = vld [vmem:[%s239 + $0x210] sm:$0xf]
        %v3436 = vld [vmem:[%s239 + $0x214] sm:$0xf]
        %v3437 = vld [vmem:[%s239 + $0x218] sm:$0xf]
        %v3438 = vld [vmem:[%s239 + $0x21c] sm:$0xf]
        %v3439 = vld [vmem:[%s239 + $0x220] sm:$0xf]
        %v3440 = vld [vmem:[%s239 + $0x224] sm:$0xf]
        %v3441 = vld [vmem:[%s239 + $0x228] sm:$0xf]
        %v3442 = vld [vmem:[%s239 + $0x22c] sm:$0xf]
        %v3443 = vld [vmem:[%s239 + $0x230] sm:$0xf]
        %v3444 = vld [vmem:[%s239 + $0x234] sm:$0xf]
        %v3445 = vld [vmem:[%s239 + $0x238] sm:$0xf]
        %v3446 = vld [vmem:[%s239 + $0x23c] sm:$0xf]
        %v3447 = vld [vmem:[%s239 + $0x280] sm:$0xf]
        %v3448 = vld [vmem:[%s239 + $0x284] sm:$0xf]
        %v3449 = vld [vmem:[%s239 + $0x288] sm:$0xf]
        %v3450 = vld [vmem:[%s239 + $0x28c] sm:$0xf]
        %v3451 = vld [vmem:[%s239 + $0x290] sm:$0xf]
        %v3452 = vld [vmem:[%s239 + $0x294] sm:$0xf]
        %v3453 = vld [vmem:[%s239 + $0x298] sm:$0xf]
        %v3454 = vld [vmem:[%s239 + $0x29c] sm:$0xf]
        %v3455 = vld [vmem:[%s239 + $0x2a0] sm:$0xf]
        %v3456 = vld [vmem:[%s239 + $0x2a4] sm:$0xf]
        %v3457 = vld [vmem:[%s239 + $0x2a8] sm:$0xf]
        %v3458 = vld [vmem:[%s239 + $0x2ac] sm:$0xf]
        %v3459 = vld [vmem:[%s239 + $0x2b0] sm:$0xf]
        %v3460 = vld [vmem:[%s239 + $0x2b4] sm:$0xf]
        %v3461 = vld [vmem:[%s239 + $0x2b8] sm:$0xf]
        %v3462 = vld [vmem:[%s239 + $0x2bc] sm:$0xf]
        %v3463 = vld [vmem:[%s239 + $0x300] sm:$0xf]
        %v3464 = vld [vmem:[%s239 + $0x304] sm:$0xf]
        %v3465 = vld [vmem:[%s239 + $0x308] sm:$0xf]
        %v3466 = vld [vmem:[%s239 + $0x30c] sm:$0xf]
        %v3467 = vld [vmem:[%s239 + $0x310] sm:$0xf]
        %v3468 = vld [vmem:[%s239 + $0x314] sm:$0xf]
        %v3469 = vld [vmem:[%s239 + $0x318] sm:$0xf]
        %v3470 = vld [vmem:[%s239 + $0x31c] sm:$0xf]
        %v3471 = vld [vmem:[%s239 + $0x320] sm:$0xf]
        %v3472 = vld [vmem:[%s239 + $0x324] sm:$0xf]
        %v3473 = vld [vmem:[%s239 + $0x328] sm:$0xf]
        %v3474 = vld [vmem:[%s239 + $0x32c] sm:$0xf]
        %v3475 = vld [vmem:[%s239 + $0x330] sm:$0xf]
        %v3476 = vld [vmem:[%s239 + $0x334] sm:$0xf]
        %v3477 = vld [vmem:[%s239 + $0x338] sm:$0xf]
        %v3478 = vld [vmem:[%s239 + $0x33c] sm:$0xf]
        %v3479 = vld [vmem:[%s239 + $0x380] sm:$0xf]
        %v3480 = vld [vmem:[%s239 + $0x384] sm:$0xf]
        %v3481 = vld [vmem:[%s239 + $0x388] sm:$0xf]
        %v3482 = vld [vmem:[%s239 + $0x38c] sm:$0xf]
        %v3483 = vld [vmem:[%s239 + $0x390] sm:$0xf]
        %v3484 = vld [vmem:[%s239 + $0x394] sm:$0xf]
        %v3485 = vld [vmem:[%s239 + $0x398] sm:$0xf]
        %v3486 = vld [vmem:[%s239 + $0x39c] sm:$0xf]
        %v3487 = vld [vmem:[%s239 + $0x3a0] sm:$0xf]
        %v3488 = vld [vmem:[%s239 + $0x3a4] sm:$0xf]
        %v3489 = vld [vmem:[%s239 + $0x3a8] sm:$0xf]
        %v3490 = vld [vmem:[%s239 + $0x3ac] sm:$0xf]
        %v3491 = vld [vmem:[%s239 + $0x3b0] sm:$0xf]
        %v3492 = vld [vmem:[%s239 + $0x3b4] sm:$0xf]
        %v3493 = vld [vmem:[%s239 + $0x3b8] sm:$0xf]
        %v3494 = vld [vmem:[%s239 + $0x3bc] sm:$0xf]
        %v3495 = vunpack.c.l.bf16 %v3367
        %v3496 = vunpack.c.l.bf16 %v3368
        %v3497 = vunpack.c.l.bf16 %v3369
        %v3498 = vunpack.c.l.bf16 %v3370
        %v3499 = vunpack.c.l.bf16 %v3371
        %v3500 = vunpack.c.l.bf16 %v3372
        %v3501 = vunpack.c.l.bf16 %v3373
        %v3502 = vunpack.c.l.bf16 %v3374
        %v3503 = vunpack.c.l.bf16 %v3375
        %v3504 = vunpack.c.l.bf16 %v3376
        %v3505 = vunpack.c.l.bf16 %v3377
        %v3506 = vunpack.c.l.bf16 %v3378
        %v3507 = vunpack.c.l.bf16 %v3379
        %v3508 = vunpack.c.l.bf16 %v3380
        %v3509 = vunpack.c.l.bf16 %v3381
        %v3510 = vunpack.c.l.bf16 %v3382
        %v3511 = vunpack.c.l.bf16 %v3383
        %v3512 = vunpack.c.l.bf16 %v3384
        %v3513 = vunpack.c.l.bf16 %v3385
        %v3514 = vunpack.c.l.bf16 %v3386
        %v3515 = vunpack.c.l.bf16 %v3387
        %v3516 = vunpack.c.l.bf16 %v3388
        %v3517 = vunpack.c.l.bf16 %v3389
        %v3518 = vunpack.c.l.bf16 %v3390
        %v3519 = vunpack.c.l.bf16 %v3391
        %v3520 = vunpack.c.l.bf16 %v3392
        %v3521 = vunpack.c.l.bf16 %v3393
        %v3522 = vunpack.c.l.bf16 %v3394
        %v3523 = vunpack.c.l.bf16 %v3395
        %v3524 = vunpack.c.l.bf16 %v3396
        %v3525 = vunpack.c.l.bf16 %v3397
        %v3526 = vunpack.c.l.bf16 %v3398
        %v3527 = vunpack.c.l.bf16 %v3399
        %v3528 = vunpack.c.l.bf16 %v3400
        %v3529 = vunpack.c.l.bf16 %v3401
        %v3530 = vunpack.c.l.bf16 %v3402
        %v3531 = vunpack.c.l.bf16 %v3403
        %v3532 = vunpack.c.l.bf16 %v3404
        %v3533 = vunpack.c.l.bf16 %v3405
        %v3534 = vunpack.c.l.bf16 %v3406
        %v3535 = vunpack.c.l.bf16 %v3407
        %v3536 = vunpack.c.l.bf16 %v3408
        %v3537 = vunpack.c.l.bf16 %v3409
        %v3538 = vunpack.c.l.bf16 %v3410
        %v3539 = vunpack.c.l.bf16 %v3411
        %v3540 = vunpack.c.l.bf16 %v3412
        %v3541 = vunpack.c.l.bf16 %v3413
        %v3542 = vunpack.c.l.bf16 %v3414
        %v3543 = vunpack.c.l.bf16 %v3415
        %v3544 = vunpack.c.l.bf16 %v3416
        %v3545 = vunpack.c.l.bf16 %v3417
        %v3546 = vunpack.c.l.bf16 %v3418
        %v3547 = vunpack.c.l.bf16 %v3419
        %v3548 = vunpack.c.l.bf16 %v3420
        %v3549 = vunpack.c.l.bf16 %v3421
        %v3550 = vunpack.c.l.bf16 %v3422
        %v3551 = vunpack.c.l.bf16 %v3423
        %v3552 = vunpack.c.l.bf16 %v3424
        %v3553 = vunpack.c.l.bf16 %v3425
        %v3554 = vunpack.c.l.bf16 %v3426
        %v3555 = vunpack.c.l.bf16 %v3427
        %v3556 = vunpack.c.l.bf16 %v3428
        %v3557 = vunpack.c.l.bf16 %v3429
        %v3558 = vunpack.c.l.bf16 %v3430
        %v3559 = vunpack.c.l.bf16 %v3431
        %v3560 = vunpack.c.l.bf16 %v3432
        %v3561 = vunpack.c.l.bf16 %v3433
        %v3562 = vunpack.c.l.bf16 %v3434
        %v3563 = vunpack.c.l.bf16 %v3435
        %v3564 = vunpack.c.l.bf16 %v3436
        %v3565 = vunpack.c.l.bf16 %v3437
        %v3566 = vunpack.c.l.bf16 %v3438
        %v3567 = vunpack.c.l.bf16 %v3439
        %v3568 = vunpack.c.l.bf16 %v3440
        %v3569 = vunpack.c.l.bf16 %v3441
        %v3570 = vunpack.c.l.bf16 %v3442
        %v3571 = vunpack.c.l.bf16 %v3443
        %v3572 = vunpack.c.l.bf16 %v3444
        %v3573 = vunpack.c.l.bf16 %v3445
        %v3574 = vunpack.c.l.bf16 %v3446
        %v3575 = vunpack.c.l.bf16 %v3447
        %v3576 = vunpack.c.l.bf16 %v3448
        %v3577 = vunpack.c.l.bf16 %v3449
        %v3578 = vunpack.c.l.bf16 %v3450
        %v3579 = vunpack.c.l.bf16 %v3451
        %v3580 = vunpack.c.l.bf16 %v3452
        %v3581 = vunpack.c.l.bf16 %v3453
        %v3582 = vunpack.c.l.bf16 %v3454
        %v3583 = vunpack.c.l.bf16 %v3455
        %v3584 = vunpack.c.l.bf16 %v3456
        %v3585 = vunpack.c.l.bf16 %v3457
        %v3586 = vunpack.c.l.bf16 %v3458
        %v3587 = vunpack.c.l.bf16 %v3459
        %v3588 = vunpack.c.l.bf16 %v3460
        %v3589 = vunpack.c.l.bf16 %v3461
        %v3590 = vunpack.c.l.bf16 %v3462
        %v3591 = vunpack.c.l.bf16 %v3463
        %v3592 = vunpack.c.l.bf16 %v3464
        %v3593 = vunpack.c.l.bf16 %v3465
        %v3594 = vunpack.c.l.bf16 %v3466
        %v3595 = vunpack.c.l.bf16 %v3467
        %v3596 = vunpack.c.l.bf16 %v3468
        %v3597 = vunpack.c.l.bf16 %v3469
        %v3598 = vunpack.c.l.bf16 %v3470
        %v3599 = vunpack.c.l.bf16 %v3471
        %v3600 = vunpack.c.l.bf16 %v3472
        %v3601 = vunpack.c.l.bf16 %v3473
        %v3602 = vunpack.c.l.bf16 %v3474
        %v3603 = vunpack.c.l.bf16 %v3475
        %v3604 = vunpack.c.l.bf16 %v3476
        %v3605 = vunpack.c.l.bf16 %v3477
        %v3606 = vunpack.c.l.bf16 %v3478
        %v3607 = vunpack.c.l.bf16 %v3479
        %v3608 = vunpack.c.l.bf16 %v3480
        %v3609 = vunpack.c.l.bf16 %v3481
        %v3610 = vunpack.c.l.bf16 %v3482
        %v3611 = vunpack.c.l.bf16 %v3483
        %v3612 = vunpack.c.l.bf16 %v3484
        %v3613 = vunpack.c.l.bf16 %v3485
        %v3614 = vunpack.c.l.bf16 %v3486
        %v3615 = vunpack.c.l.bf16 %v3487
        %v3616 = vunpack.c.l.bf16 %v3488
        %v3617 = vunpack.c.l.bf16 %v3489
        %v3618 = vunpack.c.l.bf16 %v3490
        %v3619 = vunpack.c.l.bf16 %v3491
        %v3620 = vunpack.c.l.bf16 %v3492
        %v3621 = vunpack.c.l.bf16 %v3493
        %v3622 = vunpack.c.l.bf16 %v3494
        %v3623 = vsel %vm3239, 1, 0
        %v3624 = vsel %vm3240, 1, 0
        %v3625 = vsel %vm3241, 1, 0
        %v3626 = vsel %vm3242, 1, 0
        %v3627 = vsel %vm3243, 1, 0
        %v3628 = vsel %vm3244, 1, 0
        %v3629 = vsel %vm3245, 1, 0
        %v3630 = vsel %vm3246, 1, 0
        %v3631 = vsel %vm3247, 1, 0
        %v3632 = vsel %vm3248, 1, 0
        %v3633 = vsel %vm3249, 1, 0
        %v3634 = vsel %vm3250, 1, 0
        %v3635 = vsel %vm3251, 1, 0
        %v3636 = vsel %vm3252, 1, 0
        %v3637 = vsel %vm3253, 1, 0
        %v3638 = vsel %vm3254, 1, 0
        %v3639 = vsel %vm3255, 1, 0
        %v3640 = vsel %vm3256, 1, 0
        %v3641 = vsel %vm3257, 1, 0
        %v3642 = vsel %vm3258, 1, 0
        %v3643 = vsel %vm3259, 1, 0
        %v3644 = vsel %vm3260, 1, 0
        %v3645 = vsel %vm3261, 1, 0
        %v3646 = vsel %vm3262, 1, 0
        %v3647 = vsel %vm3263, 1, 0
        %v3648 = vsel %vm3264, 1, 0
        %v3649 = vsel %vm3265, 1, 0
        %v3650 = vsel %vm3266, 1, 0
        %v3651 = vsel %vm3267, 1, 0
        %v3652 = vsel %vm3268, 1, 0
        %v3653 = vsel %vm3269, 1, 0
        %v3654 = vsel %vm3270, 1, 0
        %v3655 = vsel %vm3271, 1, 0
        %v3656 = vsel %vm3272, 1, 0
        %v3657 = vsel %vm3273, 1, 0
        %v3658 = vsel %vm3274, 1, 0
        %v3659 = vsel %vm3275, 1, 0
        %v3660 = vsel %vm3276, 1, 0
        %v3661 = vsel %vm3277, 1, 0
        %v3662 = vsel %vm3278, 1, 0
        %v3663 = vsel %vm3279, 1, 0
        %v3664 = vsel %vm3280, 1, 0
        %v3665 = vsel %vm3281, 1, 0
        %v3666 = vsel %vm3282, 1, 0
        %v3667 = vsel %vm3283, 1, 0
        %v3668 = vsel %vm3284, 1, 0
        %v3669 = vsel %vm3285, 1, 0
        %v3670 = vsel %vm3286, 1, 0
        %v3671 = vsel %vm3287, 1, 0
        %v3672 = vsel %vm3288, 1, 0
        %v3673 = vsel %vm3289, 1, 0
        %v3674 = vsel %vm3290, 1, 0
        %v3675 = vsel %vm3291, 1, 0
        %v3676 = vsel %vm3292, 1, 0
        %v3677 = vsel %vm3293, 1, 0
        %v3678 = vsel %vm3294, 1, 0
        %v3679 = vsel %vm3295, 1, 0
        %v3680 = vsel %vm3296, 1, 0
        %v3681 = vsel %vm3297, 1, 0
        %v3682 = vsel %vm3298, 1, 0
        %v3683 = vsel %vm3299, 1, 0
        %v3684 = vsel %vm3300, 1, 0
        %v3685 = vsel %vm3301, 1, 0
        %v3686 = vsel %vm3302, 1, 0
        %v3687 = vsel %vm3303, 1, 0
        %v3688 = vsel %vm3304, 1, 0
        %v3689 = vsel %vm3305, 1, 0
        %v3690 = vsel %vm3306, 1, 0
        %v3691 = vsel %vm3307, 1, 0
        %v3692 = vsel %vm3308, 1, 0
        %v3693 = vsel %vm3309, 1, 0
        %v3694 = vsel %vm3310, 1, 0
        %v3695 = vsel %vm3311, 1, 0
        %v3696 = vsel %vm3312, 1, 0
        %v3697 = vsel %vm3313, 1, 0
        %v3698 = vsel %vm3314, 1, 0
        %v3699 = vsel %vm3315, 1, 0
        %v3700 = vsel %vm3316, 1, 0
        %v3701 = vsel %vm3317, 1, 0
        %v3702 = vsel %vm3318, 1, 0
        %v3703 = vsel %vm3319, 1, 0
        %v3704 = vsel %vm3320, 1, 0
        %v3705 = vsel %vm3321, 1, 0
        %v3706 = vsel %vm3322, 1, 0
        %v3707 = vsel %vm3323, 1, 0
        %v3708 = vsel %vm3324, 1, 0
        %v3709 = vsel %vm3325, 1, 0
        %v3710 = vsel %vm3326, 1, 0
        %v3711 = vsel %vm3327, 1, 0
        %v3712 = vsel %vm3328, 1, 0
        %v3713 = vsel %vm3329, 1, 0
        %v3714 = vsel %vm3330, 1, 0
        %v3715 = vsel %vm3331, 1, 0
        %v3716 = vsel %vm3332, 1, 0
        %v3717 = vsel %vm3333, 1, 0
        %v3718 = vsel %vm3334, 1, 0
        %v3719 = vsel %vm3335, 1, 0
        %v3720 = vsel %vm3336, 1, 0
        %v3721 = vsel %vm3337, 1, 0
        %v3722 = vsel %vm3338, 1, 0
        %v3723 = vsel %vm3339, 1, 0
        %v3724 = vsel %vm3340, 1, 0
        %v3725 = vsel %vm3341, 1, 0
        %v3726 = vsel %vm3342, 1, 0
        %v3727 = vsel %vm3343, 1, 0
        %v3728 = vsel %vm3344, 1, 0
        %v3729 = vsel %vm3345, 1, 0
        %v3730 = vsel %vm3346, 1, 0
        %v3731 = vsel %vm3347, 1, 0
        %v3732 = vsel %vm3348, 1, 0
        %v3733 = vsel %vm3349, 1, 0
        %v3734 = vsel %vm3350, 1, 0
        %v3735 = vsel %vm3351, 1, 0
        %v3736 = vsel %vm3352, 1, 0
        %v3737 = vsel %vm3353, 1, 0
        %v3738 = vsel %vm3354, 1, 0
        %v3739 = vsel %vm3355, 1, 0
        %v3740 = vsel %vm3356, 1, 0
        %v3741 = vsel %vm3357, 1, 0
        %v3742 = vsel %vm3358, 1, 0
        %v3743 = vsel %vm3359, 1, 0
        %v3744 = vsel %vm3360, 1, 0
        %v3745 = vsel %vm3361, 1, 0
        %v3746 = vsel %vm3362, 1, 0
        %v3747 = vsel %vm3363, 1, 0
        %v3748 = vsel %vm3364, 1, 0
        %v3749 = vsel %vm3365, 1, 0
        %v3750 = vsel %vm3366, 1, 0
        %3751 = vset.pattern.permute.xlu0 0
        %3752 = vperm.xlu0 %3751, %v3623
        %v3753 = vpop.permute.xlu0 %3752
        %3754 = vset.pattern.permute.xlu0 0
        %3755 = vperm.xlu0 %3754, %v3624
        %v3756 = vpop.permute.xlu0 %3755
        %3757 = vset.pattern.permute.xlu0 0
        %3758 = vperm.xlu0 %3757, %v3625
        %v3759 = vpop.permute.xlu0 %3758
        %3760 = vset.pattern.permute.xlu0 0
        %3761 = vperm.xlu0 %3760, %v3626
        %v3762 = vpop.permute.xlu0 %3761
        %3763 = vset.pattern.permute.xlu0 0
        %3764 = vperm.xlu0 %3763, %v3627
        %v3765 = vpop.permute.xlu0 %3764
        %3766 = vset.pattern.permute.xlu0 0
        %3767 = vperm.xlu0 %3766, %v3628
        %v3768 = vpop.permute.xlu0 %3767
        %3769 = vset.pattern.permute.xlu0 0
        %3770 = vperm.xlu0 %3769, %v3629
        %v3771 = vpop.permute.xlu0 %3770
        %3772 = vset.pattern.permute.xlu0 0
        %3773 = vperm.xlu0 %3772, %v3630
        %v3774 = vpop.permute.xlu0 %3773
        %3775 = vset.pattern.permute.xlu0 0
        %3776 = vperm.xlu0 %3775, %v3631
        %v3777 = vpop.permute.xlu0 %3776
        %3778 = vset.pattern.permute.xlu0 0
        %3779 = vperm.xlu0 %3778, %v3632
        %v3780 = vpop.permute.xlu0 %3779
        %3781 = vset.pattern.permute.xlu0 0
        %3782 = vperm.xlu0 %3781, %v3633
        %v3783 = vpop.permute.xlu0 %3782
        %3784 = vset.pattern.permute.xlu0 0
        %3785 = vperm.xlu0 %3784, %v3634
        %v3786 = vpop.permute.xlu0 %3785
        %3787 = vset.pattern.permute.xlu0 0
        %3788 = vperm.xlu0 %3787, %v3635
        %v3789 = vpop.permute.xlu0 %3788
        %3790 = vset.pattern.permute.xlu0 0
        %3791 = vperm.xlu0 %3790, %v3636
        %v3792 = vpop.permute.xlu0 %3791
        %3793 = vset.pattern.permute.xlu0 0
        %3794 = vperm.xlu0 %3793, %v3637
        %v3795 = vpop.permute.xlu0 %3794
        %3796 = vset.pattern.permute.xlu0 0
        %3797 = vperm.xlu0 %3796, %v3638
        %v3798 = vpop.permute.xlu0 %3797
        %3799 = vset.pattern.permute.xlu0 0
        %3800 = vperm.xlu0 %3799, %v3639
        %v3801 = vpop.permute.xlu0 %3800
        %3802 = vset.pattern.permute.xlu0 0
        %3803 = vperm.xlu0 %3802, %v3640
        %v3804 = vpop.permute.xlu0 %3803
        %3805 = vset.pattern.permute.xlu0 0
        %3806 = vperm.xlu0 %3805, %v3641
        %v3807 = vpop.permute.xlu0 %3806
        %3808 = vset.pattern.permute.xlu0 0
        %3809 = vperm.xlu0 %3808, %v3642
        %v3810 = vpop.permute.xlu0 %3809
        %3811 = vset.pattern.permute.xlu0 0
        %3812 = vperm.xlu0 %3811, %v3643
        %v3813 = vpop.permute.xlu0 %3812
        %3814 = vset.pattern.permute.xlu0 0
        %3815 = vperm.xlu0 %3814, %v3644
        %v3816 = vpop.permute.xlu0 %3815
        %3817 = vset.pattern.permute.xlu0 0
        %3818 = vperm.xlu0 %3817, %v3645
        %v3819 = vpop.permute.xlu0 %3818
        %3820 = vset.pattern.permute.xlu0 0
        %3821 = vperm.xlu0 %3820, %v3646
        %v3822 = vpop.permute.xlu0 %3821
        %3823 = vset.pattern.permute.xlu0 0
        %3824 = vperm.xlu0 %3823, %v3647
        %v3825 = vpop.permute.xlu0 %3824
        %3826 = vset.pattern.permute.xlu0 0
        %3827 = vperm.xlu0 %3826, %v3648
        %v3828 = vpop.permute.xlu0 %3827
        %3829 = vset.pattern.permute.xlu0 0
        %3830 = vperm.xlu0 %3829, %v3649
        %v3831 = vpop.permute.xlu0 %3830
        %3832 = vset.pattern.permute.xlu0 0
        %3833 = vperm.xlu0 %3832, %v3650
        %v3834 = vpop.permute.xlu0 %3833
        %3835 = vset.pattern.permute.xlu0 0
        %3836 = vperm.xlu0 %3835, %v3651
        %v3837 = vpop.permute.xlu0 %3836
        %3838 = vset.pattern.permute.xlu0 0
        %3839 = vperm.xlu0 %3838, %v3652
        %v3840 = vpop.permute.xlu0 %3839
        %3841 = vset.pattern.permute.xlu0 0
        %3842 = vperm.xlu0 %3841, %v3653
        %v3843 = vpop.permute.xlu0 %3842
        %3844 = vset.pattern.permute.xlu0 0
        %3845 = vperm.xlu0 %3844, %v3654
        %v3846 = vpop.permute.xlu0 %3845
        %3847 = vset.pattern.permute.xlu0 0
        %3848 = vperm.xlu0 %3847, %v3655
        %v3849 = vpop.permute.xlu0 %3848
        %3850 = vset.pattern.permute.xlu0 0
        %3851 = vperm.xlu0 %3850, %v3656
        %v3852 = vpop.permute.xlu0 %3851
        %3853 = vset.pattern.permute.xlu0 0
        %3854 = vperm.xlu0 %3853, %v3657
        %v3855 = vpop.permute.xlu0 %3854
        %3856 = vset.pattern.permute.xlu0 0
        %3857 = vperm.xlu0 %3856, %v3658
        %v3858 = vpop.permute.xlu0 %3857
        %3859 = vset.pattern.permute.xlu0 0
        %3860 = vperm.xlu0 %3859, %v3659
        %v3861 = vpop.permute.xlu0 %3860
        %3862 = vset.pattern.permute.xlu0 0
        %3863 = vperm.xlu0 %3862, %v3660
        %v3864 = vpop.permute.xlu0 %3863
        %3865 = vset.pattern.permute.xlu0 0
        %3866 = vperm.xlu0 %3865, %v3661
        %v3867 = vpop.permute.xlu0 %3866
        %3868 = vset.pattern.permute.xlu0 0
        %3869 = vperm.xlu0 %3868, %v3662
        %v3870 = vpop.permute.xlu0 %3869
        %3871 = vset.pattern.permute.xlu0 0
        %3872 = vperm.xlu0 %3871, %v3663
        %v3873 = vpop.permute.xlu0 %3872
        %3874 = vset.pattern.permute.xlu0 0
        %3875 = vperm.xlu0 %3874, %v3664
        %v3876 = vpop.permute.xlu0 %3875
        %3877 = vset.pattern.permute.xlu0 0
        %3878 = vperm.xlu0 %3877, %v3665
        %v3879 = vpop.permute.xlu0 %3878
        %3880 = vset.pattern.permute.xlu0 0
        %3881 = vperm.xlu0 %3880, %v3666
        %v3882 = vpop.permute.xlu0 %3881
        %3883 = vset.pattern.permute.xlu0 0
        %3884 = vperm.xlu0 %3883, %v3667
        %v3885 = vpop.permute.xlu0 %3884
        %3886 = vset.pattern.permute.xlu0 0
        %3887 = vperm.xlu0 %3886, %v3668
        %v3888 = vpop.permute.xlu0 %3887
        %3889 = vset.pattern.permute.xlu0 0
        %3890 = vperm.xlu0 %3889, %v3669
        %v3891 = vpop.permute.xlu0 %3890
        %3892 = vset.pattern.permute.xlu0 0
        %3893 = vperm.xlu0 %3892, %v3670
        %v3894 = vpop.permute.xlu0 %3893
        %3895 = vset.pattern.permute.xlu0 0
        %3896 = vperm.xlu0 %3895, %v3671
        %v3897 = vpop.permute.xlu0 %3896
        %3898 = vset.pattern.permute.xlu0 0
        %3899 = vperm.xlu0 %3898, %v3672
        %v3900 = vpop.permute.xlu0 %3899
        %3901 = vset.pattern.permute.xlu0 0
        %3902 = vperm.xlu0 %3901, %v3673
        %v3903 = vpop.permute.xlu0 %3902
        %3904 = vset.pattern.permute.xlu0 0
        %3905 = vperm.xlu0 %3904, %v3674
        %v3906 = vpop.permute.xlu0 %3905
        %3907 = vset.pattern.permute.xlu0 0
        %3908 = vperm.xlu0 %3907, %v3675
        %v3909 = vpop.permute.xlu0 %3908
        %3910 = vset.pattern.permute.xlu0 0
        %3911 = vperm.xlu0 %3910, %v3676
        %v3912 = vpop.permute.xlu0 %3911
        %3913 = vset.pattern.permute.xlu0 0
        %3914 = vperm.xlu0 %3913, %v3677
        %v3915 = vpop.permute.xlu0 %3914
        %3916 = vset.pattern.permute.xlu0 0
        %3917 = vperm.xlu0 %3916, %v3678
        %v3918 = vpop.permute.xlu0 %3917
        %3919 = vset.pattern.permute.xlu0 0
        %3920 = vperm.xlu0 %3919, %v3679
        %v3921 = vpop.permute.xlu0 %3920
        %3922 = vset.pattern.permute.xlu0 0
        %3923 = vperm.xlu0 %3922, %v3680
        %v3924 = vpop.permute.xlu0 %3923
        %3925 = vset.pattern.permute.xlu0 0
        %3926 = vperm.xlu0 %3925, %v3681
        %v3927 = vpop.permute.xlu0 %3926
        %3928 = vset.pattern.permute.xlu0 0
        %3929 = vperm.xlu0 %3928, %v3682
        %v3930 = vpop.permute.xlu0 %3929
        %3931 = vset.pattern.permute.xlu0 0
        %3932 = vperm.xlu0 %3931, %v3683
        %v3933 = vpop.permute.xlu0 %3932
        %3934 = vset.pattern.permute.xlu0 0
        %3935 = vperm.xlu0 %3934, %v3684
        %v3936 = vpop.permute.xlu0 %3935
        %3937 = vset.pattern.permute.xlu0 0
        %3938 = vperm.xlu0 %3937, %v3685
        %v3939 = vpop.permute.xlu0 %3938
        %3940 = vset.pattern.permute.xlu0 0
        %3941 = vperm.xlu0 %3940, %v3686
        %v3942 = vpop.permute.xlu0 %3941
        %3943 = vset.pattern.permute.xlu0 0
        %3944 = vperm.xlu0 %3943, %v3687
        %v3945 = vpop.permute.xlu0 %3944
        %3946 = vset.pattern.permute.xlu0 0
        %3947 = vperm.xlu0 %3946, %v3688
        %v3948 = vpop.permute.xlu0 %3947
        %3949 = vset.pattern.permute.xlu0 0
        %3950 = vperm.xlu0 %3949, %v3689
        %v3951 = vpop.permute.xlu0 %3950
        %3952 = vset.pattern.permute.xlu0 0
        %3953 = vperm.xlu0 %3952, %v3690
        %v3954 = vpop.permute.xlu0 %3953
        %3955 = vset.pattern.permute.xlu0 0
        %3956 = vperm.xlu0 %3955, %v3691
        %v3957 = vpop.permute.xlu0 %3956
        %3958 = vset.pattern.permute.xlu0 0
        %3959 = vperm.xlu0 %3958, %v3692
        %v3960 = vpop.permute.xlu0 %3959
        %3961 = vset.pattern.permute.xlu0 0
        %3962 = vperm.xlu0 %3961, %v3693
        %v3963 = vpop.permute.xlu0 %3962
        %3964 = vset.pattern.permute.xlu0 0
        %3965 = vperm.xlu0 %3964, %v3694
        %v3966 = vpop.permute.xlu0 %3965
        %3967 = vset.pattern.permute.xlu0 0
        %3968 = vperm.xlu0 %3967, %v3695
        %v3969 = vpop.permute.xlu0 %3968
        %3970 = vset.pattern.permute.xlu0 0
        %3971 = vperm.xlu0 %3970, %v3696
        %v3972 = vpop.permute.xlu0 %3971
        %3973 = vset.pattern.permute.xlu0 0
        %3974 = vperm.xlu0 %3973, %v3697
        %v3975 = vpop.permute.xlu0 %3974
        %3976 = vset.pattern.permute.xlu0 0
        %3977 = vperm.xlu0 %3976, %v3698
        %v3978 = vpop.permute.xlu0 %3977
        %3979 = vset.pattern.permute.xlu0 0
        %3980 = vperm.xlu0 %3979, %v3699
        %v3981 = vpop.permute.xlu0 %3980
        %3982 = vset.pattern.permute.xlu0 0
        %3983 = vperm.xlu0 %3982, %v3700
        %v3984 = vpop.permute.xlu0 %3983
        %3985 = vset.pattern.permute.xlu0 0
        %3986 = vperm.xlu0 %3985, %v3701
        %v3987 = vpop.permute.xlu0 %3986
        %3988 = vset.pattern.permute.xlu0 0
        %3989 = vperm.xlu0 %3988, %v3702
        %v3990 = vpop.permute.xlu0 %3989
        %3991 = vset.pattern.permute.xlu0 0
        %3992 = vperm.xlu0 %3991, %v3703
        %v3993 = vpop.permute.xlu0 %3992
        %3994 = vset.pattern.permute.xlu0 0
        %3995 = vperm.xlu0 %3994, %v3704
        %v3996 = vpop.permute.xlu0 %3995
        %3997 = vset.pattern.permute.xlu0 0
        %3998 = vperm.xlu0 %3997, %v3705
        %v3999 = vpop.permute.xlu0 %3998
        %4000 = vset.pattern.permute.xlu0 0
        %4001 = vperm.xlu0 %4000, %v3706
        %v4002 = vpop.permute.xlu0 %4001
        %4003 = vset.pattern.permute.xlu0 0
        %4004 = vperm.xlu0 %4003, %v3707
        %v4005 = vpop.permute.xlu0 %4004
        %4006 = vset.pattern.permute.xlu0 0
        %4007 = vperm.xlu0 %4006, %v3708
        %v4008 = vpop.permute.xlu0 %4007
        %4009 = vset.pattern.permute.xlu0 0
        %4010 = vperm.xlu0 %4009, %v3709
        %v4011 = vpop.permute.xlu0 %4010
        %4012 = vset.pattern.permute.xlu0 0
        %4013 = vperm.xlu0 %4012, %v3710
        %v4014 = vpop.permute.xlu0 %4013
        %4015 = vset.pattern.permute.xlu0 0
        %4016 = vperm.xlu0 %4015, %v3711
        %v4017 = vpop.permute.xlu0 %4016
        %4018 = vset.pattern.permute.xlu0 0
        %4019 = vperm.xlu0 %4018, %v3712
        %v4020 = vpop.permute.xlu0 %4019
        %4021 = vset.pattern.permute.xlu0 0
        %4022 = vperm.xlu0 %4021, %v3713
        %v4023 = vpop.permute.xlu0 %4022
        %4024 = vset.pattern.permute.xlu0 0
        %4025 = vperm.xlu0 %4024, %v3714
        %v4026 = vpop.permute.xlu0 %4025
        %4027 = vset.pattern.permute.xlu0 0
        %4028 = vperm.xlu0 %4027, %v3715
        %v4029 = vpop.permute.xlu0 %4028
        %4030 = vset.pattern.permute.xlu0 0
        %4031 = vperm.xlu0 %4030, %v3716
        %v4032 = vpop.permute.xlu0 %4031
        %4033 = vset.pattern.permute.xlu0 0
        %4034 = vperm.xlu0 %4033, %v3717
        %v4035 = vpop.permute.xlu0 %4034
        %4036 = vset.pattern.permute.xlu0 0
        %4037 = vperm.xlu0 %4036, %v3718
        %v4038 = vpop.permute.xlu0 %4037
        %4039 = vset.pattern.permute.xlu0 0
        %4040 = vperm.xlu0 %4039, %v3719
        %v4041 = vpop.permute.xlu0 %4040
        %4042 = vset.pattern.permute.xlu0 0
        %4043 = vperm.xlu0 %4042, %v3720
        %v4044 = vpop.permute.xlu0 %4043
        %4045 = vset.pattern.permute.xlu0 0
        %4046 = vperm.xlu0 %4045, %v3721
        %v4047 = vpop.permute.xlu0 %4046
        %4048 = vset.pattern.permute.xlu0 0
        %4049 = vperm.xlu0 %4048, %v3722
        %v4050 = vpop.permute.xlu0 %4049
        %4051 = vset.pattern.permute.xlu0 0
        %4052 = vperm.xlu0 %4051, %v3723
        %v4053 = vpop.permute.xlu0 %4052
        %4054 = vset.pattern.permute.xlu0 0
        %4055 = vperm.xlu0 %4054, %v3724
        %v4056 = vpop.permute.xlu0 %4055
        %4057 = vset.pattern.permute.xlu0 0
        %4058 = vperm.xlu0 %4057, %v3725
        %v4059 = vpop.permute.xlu0 %4058
        %4060 = vset.pattern.permute.xlu0 0
        %4061 = vperm.xlu0 %4060, %v3726
        %v4062 = vpop.permute.xlu0 %4061
        %4063 = vset.pattern.permute.xlu0 0
        %4064 = vperm.xlu0 %4063, %v3727
        %v4065 = vpop.permute.xlu0 %4064
        %4066 = vset.pattern.permute.xlu0 0
        %4067 = vperm.xlu0 %4066, %v3728
        %v4068 = vpop.permute.xlu0 %4067
        %4069 = vset.pattern.permute.xlu0 0
        %4070 = vperm.xlu0 %4069, %v3729
        %v4071 = vpop.permute.xlu0 %4070
        %4072 = vset.pattern.permute.xlu0 0
        %4073 = vperm.xlu0 %4072, %v3730
        %v4074 = vpop.permute.xlu0 %4073
        %4075 = vset.pattern.permute.xlu0 0
        %4076 = vperm.xlu0 %4075, %v3731
        %v4077 = vpop.permute.xlu0 %4076
        %4078 = vset.pattern.permute.xlu0 0
        %4079 = vperm.xlu0 %4078, %v3732
        %v4080 = vpop.permute.xlu0 %4079
        %4081 = vset.pattern.permute.xlu0 0
        %4082 = vperm.xlu0 %4081, %v3733
        %v4083 = vpop.permute.xlu0 %4082
        %4084 = vset.pattern.permute.xlu0 0
        %4085 = vperm.xlu0 %4084, %v3734
        %v4086 = vpop.permute.xlu0 %4085
        %4087 = vset.pattern.permute.xlu0 0
        %4088 = vperm.xlu0 %4087, %v3735
        %v4089 = vpop.permute.xlu0 %4088
        %4090 = vset.pattern.permute.xlu0 0
        %4091 = vperm.xlu0 %4090, %v3736
        %v4092 = vpop.permute.xlu0 %4091
        %4093 = vset.pattern.permute.xlu0 0
        %4094 = vperm.xlu0 %4093, %v3737
        %v4095 = vpop.permute.xlu0 %4094
        %4096 = vset.pattern.permute.xlu0 0
        %4097 = vperm.xlu0 %4096, %v3738
        %v4098 = vpop.permute.xlu0 %4097
        %4099 = vset.pattern.permute.xlu0 0
        %4100 = vperm.xlu0 %4099, %v3739
        %v4101 = vpop.permute.xlu0 %4100
        %4102 = vset.pattern.permute.xlu0 0
        %4103 = vperm.xlu0 %4102, %v3740
        %v4104 = vpop.permute.xlu0 %4103
        %4105 = vset.pattern.permute.xlu0 0
        %4106 = vperm.xlu0 %4105, %v3741
        %v4107 = vpop.permute.xlu0 %4106
        %4108 = vset.pattern.permute.xlu0 0
        %4109 = vperm.xlu0 %4108, %v3742
        %v4110 = vpop.permute.xlu0 %4109
        %4111 = vset.pattern.permute.xlu0 0
        %4112 = vperm.xlu0 %4111, %v3743
        %v4113 = vpop.permute.xlu0 %4112
        %4114 = vset.pattern.permute.xlu0 0
        %4115 = vperm.xlu0 %4114, %v3744
        %v4116 = vpop.permute.xlu0 %4115
        %4117 = vset.pattern.permute.xlu0 0
        %4118 = vperm.xlu0 %4117, %v3745
        %v4119 = vpop.permute.xlu0 %4118
        %4120 = vset.pattern.permute.xlu0 0
        %4121 = vperm.xlu0 %4120, %v3746
        %v4122 = vpop.permute.xlu0 %4121
        %4123 = vset.pattern.permute.xlu0 0
        %4124 = vperm.xlu0 %4123, %v3747
        %v4125 = vpop.permute.xlu0 %4124
        %4126 = vset.pattern.permute.xlu0 0
        %4127 = vperm.xlu0 %4126, %v3748
        %v4128 = vpop.permute.xlu0 %4127
        %4129 = vset.pattern.permute.xlu0 0
        %4130 = vperm.xlu0 %4129, %v3749
        %v4131 = vpop.permute.xlu0 %4130
        %4132 = vset.pattern.permute.xlu0 0
        %4133 = vperm.xlu0 %4132, %v3750
        %v4134 = vpop.permute.xlu0 %4133
        %vm4135 = vcmp.eq.s32.totalorder %v3753, 1
        %vm4136 = vcmp.eq.s32.totalorder %v3756, 1
        %vm4137 = vcmp.eq.s32.totalorder %v3759, 1
        %vm4138 = vcmp.eq.s32.totalorder %v3762, 1
        %vm4139 = vcmp.eq.s32.totalorder %v3765, 1
        %vm4140 = vcmp.eq.s32.totalorder %v3768, 1
        %vm4141 = vcmp.eq.s32.totalorder %v3771, 1
        %vm4142 = vcmp.eq.s32.totalorder %v3774, 1
        %vm4143 = vcmp.eq.s32.totalorder %v3777, 1
        %vm4144 = vcmp.eq.s32.totalorder %v3780, 1
        %vm4145 = vcmp.eq.s32.totalorder %v3783, 1
        %vm4146 = vcmp.eq.s32.totalorder %v3786, 1
        %vm4147 = vcmp.eq.s32.totalorder %v3789, 1
        %vm4148 = vcmp.eq.s32.totalorder %v3792, 1
        %vm4149 = vcmp.eq.s32.totalorder %v3795, 1
        %vm4150 = vcmp.eq.s32.totalorder %v3798, 1
        %vm4151 = vcmp.eq.s32.totalorder %v3801, 1
        %vm4152 = vcmp.eq.s32.totalorder %v3804, 1
        %vm4153 = vcmp.eq.s32.totalorder %v3807, 1
        %vm4154 = vcmp.eq.s32.totalorder %v3810, 1
        %vm4155 = vcmp.eq.s32.totalorder %v3813, 1
        %vm4156 = vcmp.eq.s32.totalorder %v3816, 1
        %vm4157 = vcmp.eq.s32.totalorder %v3819, 1
        %vm4158 = vcmp.eq.s32.totalorder %v3822, 1
        %vm4159 = vcmp.eq.s32.totalorder %v3825, 1
        %vm4160 = vcmp.eq.s32.totalorder %v3828, 1
        %vm4161 = vcmp.eq.s32.totalorder %v3831, 1
        %vm4162 = vcmp.eq.s32.totalorder %v3834, 1
        %vm4163 = vcmp.eq.s32.totalorder %v3837, 1
        %vm4164 = vcmp.eq.s32.totalorder %v3840, 1
        %vm4165 = vcmp.eq.s32.totalorder %v3843, 1
        %vm4166 = vcmp.eq.s32.totalorder %v3846, 1
        %vm4167 = vcmp.eq.s32.totalorder %v3849, 1
        %vm4168 = vcmp.eq.s32.totalorder %v3852, 1
        %vm4169 = vcmp.eq.s32.totalorder %v3855, 1
        %vm4170 = vcmp.eq.s32.totalorder %v3858, 1
        %vm4171 = vcmp.eq.s32.totalorder %v3861, 1
        %vm4172 = vcmp.eq.s32.totalorder %v3864, 1
        %vm4173 = vcmp.eq.s32.totalorder %v3867, 1
        %vm4174 = vcmp.eq.s32.totalorder %v3870, 1
        %vm4175 = vcmp.eq.s32.totalorder %v3873, 1
        %vm4176 = vcmp.eq.s32.totalorder %v3876, 1
        %vm4177 = vcmp.eq.s32.totalorder %v3879, 1
        %vm4178 = vcmp.eq.s32.totalorder %v3882, 1
        %vm4179 = vcmp.eq.s32.totalorder %v3885, 1
        %vm4180 = vcmp.eq.s32.totalorder %v3888, 1
        %vm4181 = vcmp.eq.s32.totalorder %v3891, 1
        %vm4182 = vcmp.eq.s32.totalorder %v3894, 1
        %vm4183 = vcmp.eq.s32.totalorder %v3897, 1
        %vm4184 = vcmp.eq.s32.totalorder %v3900, 1
        %vm4185 = vcmp.eq.s32.totalorder %v3903, 1
        %vm4186 = vcmp.eq.s32.totalorder %v3906, 1
        %vm4187 = vcmp.eq.s32.totalorder %v3909, 1
        %vm4188 = vcmp.eq.s32.totalorder %v3912, 1
        %vm4189 = vcmp.eq.s32.totalorder %v3915, 1
        %vm4190 = vcmp.eq.s32.totalorder %v3918, 1
        %vm4191 = vcmp.eq.s32.totalorder %v3921, 1
        %vm4192 = vcmp.eq.s32.totalorder %v3924, 1
        %vm4193 = vcmp.eq.s32.totalorder %v3927, 1
        %vm4194 = vcmp.eq.s32.totalorder %v3930, 1
        %vm4195 = vcmp.eq.s32.totalorder %v3933, 1
        %vm4196 = vcmp.eq.s32.totalorder %v3936, 1
        %vm4197 = vcmp.eq.s32.totalorder %v3939, 1
        %vm4198 = vcmp.eq.s32.totalorder %v3942, 1
        %vm4199 = vcmp.eq.s32.totalorder %v3945, 1
        %vm4200 = vcmp.eq.s32.totalorder %v3948, 1
        %vm4201 = vcmp.eq.s32.totalorder %v3951, 1
        %vm4202 = vcmp.eq.s32.totalorder %v3954, 1
        %vm4203 = vcmp.eq.s32.totalorder %v3957, 1
        %vm4204 = vcmp.eq.s32.totalorder %v3960, 1
        %vm4205 = vcmp.eq.s32.totalorder %v3963, 1
        %vm4206 = vcmp.eq.s32.totalorder %v3966, 1
        %vm4207 = vcmp.eq.s32.totalorder %v3969, 1
        %vm4208 = vcmp.eq.s32.totalorder %v3972, 1
        %vm4209 = vcmp.eq.s32.totalorder %v3975, 1
        %vm4210 = vcmp.eq.s32.totalorder %v3978, 1
        %vm4211 = vcmp.eq.s32.totalorder %v3981, 1
        %vm4212 = vcmp.eq.s32.totalorder %v3984, 1
        %vm4213 = vcmp.eq.s32.totalorder %v3987, 1
        %vm4214 = vcmp.eq.s32.totalorder %v3990, 1
        %vm4215 = vcmp.eq.s32.totalorder %v3993, 1
        %vm4216 = vcmp.eq.s32.totalorder %v3996, 1
        %vm4217 = vcmp.eq.s32.totalorder %v3999, 1
        %vm4218 = vcmp.eq.s32.totalorder %v4002, 1
        %vm4219 = vcmp.eq.s32.totalorder %v4005, 1
        %vm4220 = vcmp.eq.s32.totalorder %v4008, 1
        %vm4221 = vcmp.eq.s32.totalorder %v4011, 1
        %vm4222 = vcmp.eq.s32.totalorder %v4014, 1
        %vm4223 = vcmp.eq.s32.totalorder %v4017, 1
        %vm4224 = vcmp.eq.s32.totalorder %v4020, 1
        %vm4225 = vcmp.eq.s32.totalorder %v4023, 1
        %vm4226 = vcmp.eq.s32.totalorder %v4026, 1
        %vm4227 = vcmp.eq.s32.totalorder %v4029, 1
        %vm4228 = vcmp.eq.s32.totalorder %v4032, 1
        %vm4229 = vcmp.eq.s32.totalorder %v4035, 1
        %vm4230 = vcmp.eq.s32.totalorder %v4038, 1
        %vm4231 = vcmp.eq.s32.totalorder %v4041, 1
        %vm4232 = vcmp.eq.s32.totalorder %v4044, 1
        %vm4233 = vcmp.eq.s32.totalorder %v4047, 1
        %vm4234 = vcmp.eq.s32.totalorder %v4050, 1
        %vm4235 = vcmp.eq.s32.totalorder %v4053, 1
        %vm4236 = vcmp.eq.s32.totalorder %v4056, 1
        %vm4237 = vcmp.eq.s32.totalorder %v4059, 1
        %vm4238 = vcmp.eq.s32.totalorder %v4062, 1
        %vm4239 = vcmp.eq.s32.totalorder %v4065, 1
        %vm4240 = vcmp.eq.s32.totalorder %v4068, 1
        %vm4241 = vcmp.eq.s32.totalorder %v4071, 1
        %vm4242 = vcmp.eq.s32.totalorder %v4074, 1
        %vm4243 = vcmp.eq.s32.totalorder %v4077, 1
        %vm4244 = vcmp.eq.s32.totalorder %v4080, 1
        %vm4245 = vcmp.eq.s32.totalorder %v4083, 1
        %vm4246 = vcmp.eq.s32.totalorder %v4086, 1
        %vm4247 = vcmp.eq.s32.totalorder %v4089, 1
        %vm4248 = vcmp.eq.s32.totalorder %v4092, 1
        %vm4249 = vcmp.eq.s32.totalorder %v4095, 1
        %vm4250 = vcmp.eq.s32.totalorder %v4098, 1
        %vm4251 = vcmp.eq.s32.totalorder %v4101, 1
        %vm4252 = vcmp.eq.s32.totalorder %v4104, 1
        %vm4253 = vcmp.eq.s32.totalorder %v4107, 1
        %vm4254 = vcmp.eq.s32.totalorder %v4110, 1
        %vm4255 = vcmp.eq.s32.totalorder %v4113, 1
        %vm4256 = vcmp.eq.s32.totalorder %v4116, 1
        %vm4257 = vcmp.eq.s32.totalorder %v4119, 1
        %vm4258 = vcmp.eq.s32.totalorder %v4122, 1
        %vm4259 = vcmp.eq.s32.totalorder %v4125, 1
        %vm4260 = vcmp.eq.s32.totalorder %v4128, 1
        %vm4261 = vcmp.eq.s32.totalorder %v4131, 1
        %vm4262 = vcmp.eq.s32.totalorder %v4134, 1
        %v4263 = vsel %vm4135, %v3495, 0.0
        %v4264 = vsel %vm4136, %v3496, 0.0
        %v4265 = vsel %vm4137, %v3497, 0.0
        %v4266 = vsel %vm4138, %v3498, 0.0
        %v4267 = vsel %vm4139, %v3499, 0.0
        %v4268 = vsel %vm4140, %v3500, 0.0
        %v4269 = vsel %vm4141, %v3501, 0.0
        %v4270 = vsel %vm4142, %v3502, 0.0
        %v4271 = vsel %vm4143, %v3503, 0.0
        %v4272 = vsel %vm4144, %v3504, 0.0
        %v4273 = vsel %vm4145, %v3505, 0.0
        %v4274 = vsel %vm4146, %v3506, 0.0
        %v4275 = vsel %vm4147, %v3507, 0.0
        %v4276 = vsel %vm4148, %v3508, 0.0
        %v4277 = vsel %vm4149, %v3509, 0.0
        %v4278 = vsel %vm4150, %v3510, 0.0
        %v4279 = vsel %vm4151, %v3511, 0.0
        %v4280 = vsel %vm4152, %v3512, 0.0
        %v4281 = vsel %vm4153, %v3513, 0.0
        %v4282 = vsel %vm4154, %v3514, 0.0
        %v4283 = vsel %vm4155, %v3515, 0.0
        %v4284 = vsel %vm4156, %v3516, 0.0
        %v4285 = vsel %vm4157, %v3517, 0.0
        %v4286 = vsel %vm4158, %v3518, 0.0
        %v4287 = vsel %vm4159, %v3519, 0.0
        %v4288 = vsel %vm4160, %v3520, 0.0
        %v4289 = vsel %vm4161, %v3521, 0.0
        %v4290 = vsel %vm4162, %v3522, 0.0
        %v4291 = vsel %vm4163, %v3523, 0.0
        %v4292 = vsel %vm4164, %v3524, 0.0
        %v4293 = vsel %vm4165, %v3525, 0.0
        %v4294 = vsel %vm4166, %v3526, 0.0
        %v4295 = vsel %vm4167, %v3527, 0.0
        %v4296 = vsel %vm4168, %v3528, 0.0
        %v4297 = vsel %vm4169, %v3529, 0.0
        %v4298 = vsel %vm4170, %v3530, 0.0
        %v4299 = vsel %vm4171, %v3531, 0.0
        %v4300 = vsel %vm4172, %v3532, 0.0
        %v4301 = vsel %vm4173, %v3533, 0.0
        %v4302 = vsel %vm4174, %v3534, 0.0
        %v4303 = vsel %vm4175, %v3535, 0.0
        %v4304 = vsel %vm4176, %v3536, 0.0
        %v4305 = vsel %vm4177, %v3537, 0.0
        %v4306 = vsel %vm4178, %v3538, 0.0
        %v4307 = vsel %vm4179, %v3539, 0.0
        %v4308 = vsel %vm4180, %v3540, 0.0
        %v4309 = vsel %vm4181, %v3541, 0.0
        %v4310 = vsel %vm4182, %v3542, 0.0
        %v4311 = vsel %vm4183, %v3543, 0.0
        %v4312 = vsel %vm4184, %v3544, 0.0
        %v4313 = vsel %vm4185, %v3545, 0.0
        %v4314 = vsel %vm4186, %v3546, 0.0
        %v4315 = vsel %vm4187, %v3547, 0.0
        %v4316 = vsel %vm4188, %v3548, 0.0
        %v4317 = vsel %vm4189, %v3549, 0.0
        %v4318 = vsel %vm4190, %v3550, 0.0
        %v4319 = vsel %vm4191, %v3551, 0.0
        %v4320 = vsel %vm4192, %v3552, 0.0
        %v4321 = vsel %vm4193, %v3553, 0.0
        %v4322 = vsel %vm4194, %v3554, 0.0
        %v4323 = vsel %vm4195, %v3555, 0.0
        %v4324 = vsel %vm4196, %v3556, 0.0
        %v4325 = vsel %vm4197, %v3557, 0.0
        %v4326 = vsel %vm4198, %v3558, 0.0
        %v4327 = vsel %vm4199, %v3559, 0.0
        %v4328 = vsel %vm4200, %v3560, 0.0
        %v4329 = vsel %vm4201, %v3561, 0.0
        %v4330 = vsel %vm4202, %v3562, 0.0
        %v4331 = vsel %vm4203, %v3563, 0.0
        %v4332 = vsel %vm4204, %v3564, 0.0
        %v4333 = vsel %vm4205, %v3565, 0.0
        %v4334 = vsel %vm4206, %v3566, 0.0
        %v4335 = vsel %vm4207, %v3567, 0.0
        %v4336 = vsel %vm4208, %v3568, 0.0
        %v4337 = vsel %vm4209, %v3569, 0.0
        %v4338 = vsel %vm4210, %v3570, 0.0
        %v4339 = vsel %vm4211, %v3571, 0.0
        %v4340 = vsel %vm4212, %v3572, 0.0
        %v4341 = vsel %vm4213, %v3573, 0.0
        %v4342 = vsel %vm4214, %v3574, 0.0
        %v4343 = vsel %vm4215, %v3575, 0.0
        %v4344 = vsel %vm4216, %v3576, 0.0
        %v4345 = vsel %vm4217, %v3577, 0.0
        %v4346 = vsel %vm4218, %v3578, 0.0
        %v4347 = vsel %vm4219, %v3579, 0.0
        %v4348 = vsel %vm4220, %v3580, 0.0
        %v4349 = vsel %vm4221, %v3581, 0.0
        %v4350 = vsel %vm4222, %v3582, 0.0
        %v4351 = vsel %vm4223, %v3583, 0.0
        %v4352 = vsel %vm4224, %v3584, 0.0
        %v4353 = vsel %vm4225, %v3585, 0.0
        %v4354 = vsel %vm4226, %v3586, 0.0
        %v4355 = vsel %vm4227, %v3587, 0.0
        %v4356 = vsel %vm4228, %v3588, 0.0
        %v4357 = vsel %vm4229, %v3589, 0.0
        %v4358 = vsel %vm4230, %v3590, 0.0
        %v4359 = vsel %vm4231, %v3591, 0.0
        %v4360 = vsel %vm4232, %v3592, 0.0
        %v4361 = vsel %vm4233, %v3593, 0.0
        %v4362 = vsel %vm4234, %v3594, 0.0
        %v4363 = vsel %vm4235, %v3595, 0.0
        %v4364 = vsel %vm4236, %v3596, 0.0
        %v4365 = vsel %vm4237, %v3597, 0.0
        %v4366 = vsel %vm4238, %v3598, 0.0
        %v4367 = vsel %vm4239, %v3599, 0.0
        %v4368 = vsel %vm4240, %v3600, 0.0
        %v4369 = vsel %vm4241, %v3601, 0.0
        %v4370 = vsel %vm4242, %v3602, 0.0
        %v4371 = vsel %vm4243, %v3603, 0.0
        %v4372 = vsel %vm4244, %v3604, 0.0
        %v4373 = vsel %vm4245, %v3605, 0.0
        %v4374 = vsel %vm4246, %v3606, 0.0
        %v4375 = vsel %vm4247, %v3607, 0.0
        %v4376 = vsel %vm4248, %v3608, 0.0
        %v4377 = vsel %vm4249, %v3609, 0.0
        %v4378 = vsel %vm4250, %v3610, 0.0
        %v4379 = vsel %vm4251, %v3611, 0.0
        %v4380 = vsel %vm4252, %v3612, 0.0
        %v4381 = vsel %vm4253, %v3613, 0.0
        %v4382 = vsel %vm4254, %v3614, 0.0
        %v4383 = vsel %vm4255, %v3615, 0.0
        %v4384 = vsel %vm4256, %v3616, 0.0
        %v4385 = vsel %vm4257, %v3617, 0.0
        %v4386 = vsel %vm4258, %v3618, 0.0
        %v4387 = vsel %vm4259, %v3619, 0.0
        %v4388 = vsel %vm4260, %v3620, 0.0
        %v4389 = vsel %vm4261, %v3621, 0.0
        %v4390 = vsel %vm4262, %v3622, 0.0
        %v4391 = vadd.f32 %v4263, %v4264
        %v4392 = vadd.f32 %v4391, %v4265
        %v4393 = vadd.f32 %v4392, %v4266
        %v4394 = vadd.f32 %v4393, %v4267
        %v4395 = vadd.f32 %v4394, %v4268
        %v4396 = vadd.f32 %v4395, %v4269
        %v4397 = vadd.f32 %v4396, %v4270
        %v4398 = vadd.f32 %v4397, %v4271
        %v4399 = vadd.f32 %v4398, %v4272
        %v4400 = vadd.f32 %v4399, %v4273
        %v4401 = vadd.f32 %v4400, %v4274
        %v4402 = vadd.f32 %v4401, %v4275
        %v4403 = vadd.f32 %v4402, %v4276
        %v4404 = vadd.f32 %v4403, %v4277
        %v4405 = vadd.f32 %v4404, %v4278
        %v4406 = vrot.slane %v4405, 4
        %v4407 = vadd.f32 %v4405, %v4406
        %v4408 = vrot.slane %v4407, 2
        %v4409 = vadd.f32 %v4407, %v4408
        %v4410 = vrot.slane %v4409, 1
        %v4411 = vadd.f32 %v4409, %v4410
        %v4412 = vadd.f32 %v4279, %v4280
        %v4413 = vadd.f32 %v4412, %v4281
        %v4414 = vadd.f32 %v4413, %v4282
        %v4415 = vadd.f32 %v4414, %v4283
        %v4416 = vadd.f32 %v4415, %v4284
        %v4417 = vadd.f32 %v4416, %v4285
        %v4418 = vadd.f32 %v4417, %v4286
        %v4419 = vadd.f32 %v4418, %v4287
        %v4420 = vadd.f32 %v4419, %v4288
        %v4421 = vadd.f32 %v4420, %v4289
        %v4422 = vadd.f32 %v4421, %v4290
        %v4423 = vadd.f32 %v4422, %v4291
        %v4424 = vadd.f32 %v4423, %v4292
        %v4425 = vadd.f32 %v4424, %v4293
        %v4426 = vadd.f32 %v4425, %v4294
        %v4427 = vrot.slane %v4426, 4
        %v4428 = vadd.f32 %v4426, %v4427
        %v4429 = vrot.slane %v4428, 2
        %v4430 = vadd.f32 %v4428, %v4429
        %v4431 = vrot.slane %v4430, 1
        %v4432 = vadd.f32 %v4430, %v4431
        %v4433 = vadd.f32 %v4295, %v4296
        %v4434 = vadd.f32 %v4433, %v4297
        %v4435 = vadd.f32 %v4434, %v4298
        %v4436 = vadd.f32 %v4435, %v4299
        %v4437 = vadd.f32 %v4436, %v4300
        %v4438 = vadd.f32 %v4437, %v4301
        %v4439 = vadd.f32 %v4438, %v4302
        %v4440 = vadd.f32 %v4439, %v4303
        %v4441 = vadd.f32 %v4440, %v4304
        %v4442 = vadd.f32 %v4441, %v4305
        %v4443 = vadd.f32 %v4442, %v4306
        %v4444 = vadd.f32 %v4443, %v4307
        %v4445 = vadd.f32 %v4444, %v4308
        %v4446 = vadd.f32 %v4445, %v4309
        %v4447 = vadd.f32 %v4446, %v4310
        %v4448 = vrot.slane %v4447, 4
        %v4449 = vadd.f32 %v4447, %v4448
        %v4450 = vrot.slane %v4449, 2
        %v4451 = vadd.f32 %v4449, %v4450
        %v4452 = vrot.slane %v4451, 1
        %v4453 = vadd.f32 %v4451, %v4452
        %v4454 = vadd.f32 %v4311, %v4312
        %v4455 = vadd.f32 %v4454, %v4313
        %v4456 = vadd.f32 %v4455, %v4314
        %v4457 = vadd.f32 %v4456, %v4315
        %v4458 = vadd.f32 %v4457, %v4316
        %v4459 = vadd.f32 %v4458, %v4317
        %v4460 = vadd.f32 %v4459, %v4318
        %v4461 = vadd.f32 %v4460, %v4319
        %v4462 = vadd.f32 %v4461, %v4320
        %v4463 = vadd.f32 %v4462, %v4321
        %v4464 = vadd.f32 %v4463, %v4322
        %v4465 = vadd.f32 %v4464, %v4323
        %v4466 = vadd.f32 %v4465, %v4324
        %v4467 = vadd.f32 %v4466, %v4325
        %v4468 = vadd.f32 %v4467, %v4326
        %v4469 = vrot.slane %v4468, 4
        %v4470 = vadd.f32 %v4468, %v4469
        %v4471 = vrot.slane %v4470, 2
        %v4472 = vadd.f32 %v4470, %v4471
        %v4473 = vrot.slane %v4472, 1
        %v4474 = vadd.f32 %v4472, %v4473
        %v4475 = vadd.f32 %v4327, %v4328
        %v4476 = vadd.f32 %v4475, %v4329
        %v4477 = vadd.f32 %v4476, %v4330
        %v4478 = vadd.f32 %v4477, %v4331
        %v4479 = vadd.f32 %v4478, %v4332
        %v4480 = vadd.f32 %v4479, %v4333
        %v4481 = vadd.f32 %v4480, %v4334
        %v4482 = vadd.f32 %v4481, %v4335
        %v4483 = vadd.f32 %v4482, %v4336
        %v4484 = vadd.f32 %v4483, %v4337
        %v4485 = vadd.f32 %v4484, %v4338
        %v4486 = vadd.f32 %v4485, %v4339
        %v4487 = vadd.f32 %v4486, %v4340
        %v4488 = vadd.f32 %v4487, %v4341
        %v4489 = vadd.f32 %v4488, %v4342
        %v4490 = vrot.slane %v4489, 4
        %v4491 = vadd.f32 %v4489, %v4490
        %v4492 = vrot.slane %v4491, 2
        %v4493 = vadd.f32 %v4491, %v4492
        %v4494 = vrot.slane %v4493, 1
        %v4495 = vadd.f32 %v4493, %v4494
        %v4496 = vadd.f32 %v4343, %v4344
        %v4497 = vadd.f32 %v4496, %v4345
        %v4498 = vadd.f32 %v4497, %v4346
        %v4499 = vadd.f32 %v4498, %v4347
        %v4500 = vadd.f32 %v4499, %v4348
        %v4501 = vadd.f32 %v4500, %v4349
        %v4502 = vadd.f32 %v4501, %v4350
        %v4503 = vadd.f32 %v4502, %v4351
        %v4504 = vadd.f32 %v4503, %v4352
        %v4505 = vadd.f32 %v4504, %v4353
        %v4506 = vadd.f32 %v4505, %v4354
        %v4507 = vadd.f32 %v4506, %v4355
        %v4508 = vadd.f32 %v4507, %v4356
        %v4509 = vadd.f32 %v4508, %v4357
        %v4510 = vadd.f32 %v4509, %v4358
        %v4511 = vrot.slane %v4510, 4
        %v4512 = vadd.f32 %v4510, %v4511
        %v4513 = vrot.slane %v4512, 2
        %v4514 = vadd.f32 %v4512, %v4513
        %v4515 = vrot.slane %v4514, 1
        %v4516 = vadd.f32 %v4514, %v4515
        %v4517 = vadd.f32 %v4359, %v4360
        %v4518 = vadd.f32 %v4517, %v4361
        %v4519 = vadd.f32 %v4518, %v4362
        %v4520 = vadd.f32 %v4519, %v4363
        %v4521 = vadd.f32 %v4520, %v4364
        %v4522 = vadd.f32 %v4521, %v4365
        %v4523 = vadd.f32 %v4522, %v4366
        %v4524 = vadd.f32 %v4523, %v4367
        %v4525 = vadd.f32 %v4524, %v4368
        %v4526 = vadd.f32 %v4525, %v4369
        %v4527 = vadd.f32 %v4526, %v4370
        %v4528 = vadd.f32 %v4527, %v4371
        %v4529 = vadd.f32 %v4528, %v4372
        %v4530 = vadd.f32 %v4529, %v4373
        %v4531 = vadd.f32 %v4530, %v4374
        %v4532 = vrot.slane %v4531, 4
        %v4533 = vadd.f32 %v4531, %v4532
        %v4534 = vrot.slane %v4533, 2
        %v4535 = vadd.f32 %v4533, %v4534
        %v4536 = vrot.slane %v4535, 1
        %v4537 = vadd.f32 %v4535, %v4536
        %v4538 = vadd.f32 %v4375, %v4376
        %v4539 = vadd.f32 %v4538, %v4377
        %v4540 = vadd.f32 %v4539, %v4378
        %v4541 = vadd.f32 %v4540, %v4379
        %v4542 = vadd.f32 %v4541, %v4380
        %v4543 = vadd.f32 %v4542, %v4381
        %v4544 = vadd.f32 %v4543, %v4382
        %v4545 = vadd.f32 %v4544, %v4383
        %v4546 = vadd.f32 %v4545, %v4384
        %v4547 = vadd.f32 %v4546, %v4385
        %v4548 = vadd.f32 %v4547, %v4386
        %v4549 = vadd.f32 %v4548, %v4387
        %v4550 = vadd.f32 %v4549, %v4388
        %v4551 = vadd.f32 %v4550, %v4389
        %v4552 = vadd.f32 %v4551, %v4390
        %v4553 = vrot.slane %v4552, 4
        %v4554 = vadd.f32 %v4552, %v4553
        %v4555 = vrot.slane %v4554, 2
        %v4556 = vadd.f32 %v4554, %v4555
        %v4557 = vrot.slane %v4556, 1
        %v4558 = vadd.f32 %v4556, %v4557
        %v4559 = vadd.f32 %v4411, 0.0
        %v4560 = vadd.f32 %v4432, 0.0
        %v4561 = vadd.f32 %v4453, 0.0
        %v4562 = vadd.f32 %v4474, 0.0
        %v4563 = vadd.f32 %v4495, 0.0
        %v4564 = vadd.f32 %v4516, 0.0
        %v4565 = vadd.f32 %v4537, 0.0
        %v4566 = vadd.f32 %v4558, 0.0
        %vm4567 = vcmp.lt.s32.totalorder %v1728, %v3210
        %vm4568 = vcmp.lt.s32.totalorder %v1729, %v3210
        %vm4569 = vcmp.lt.s32.totalorder %v1730, %v3210
        %vm4570 = vcmp.lt.s32.totalorder %v1731, %v3210
        %vm4571 = vcmp.lt.s32.totalorder %v1732, %v3210
        %vm4572 = vcmp.lt.s32.totalorder %v1733, %v3210
        %vm4573 = vcmp.lt.s32.totalorder %v1734, %v3210
        %vm4574 = vcmp.lt.s32.totalorder %v1735, %v3210
        %vm4575 = vcmp.lt.s32.totalorder %v1736, %v3210
        %vm4576 = vcmp.lt.s32.totalorder %v1737, %v3210
        %vm4577 = vcmp.lt.s32.totalorder %v1738, %v3210
        %vm4578 = vcmp.lt.s32.totalorder %v1739, %v3210
        %vm4579 = vcmp.lt.s32.totalorder %v1740, %v3210
        %vm4580 = vcmp.lt.s32.totalorder %v1741, %v3210
        %vm4581 = vcmp.lt.s32.totalorder %v1742, %v3210
        %vm4582 = vcmp.lt.s32.totalorder %v1743, %v3210
        %vm4583 = vcmp.lt.s32.totalorder %v1728, %v3214
        %vm4584 = vcmp.lt.s32.totalorder %v1729, %v3214
        %vm4585 = vcmp.lt.s32.totalorder %v1730, %v3214
        %vm4586 = vcmp.lt.s32.totalorder %v1731, %v3214
        %vm4587 = vcmp.lt.s32.totalorder %v1732, %v3214
        %vm4588 = vcmp.lt.s32.totalorder %v1733, %v3214
        %vm4589 = vcmp.lt.s32.totalorder %v1734, %v3214
        %vm4590 = vcmp.lt.s32.totalorder %v1735, %v3214
        %vm4591 = vcmp.lt.s32.totalorder %v1736, %v3214
        %vm4592 = vcmp.lt.s32.totalorder %v1737, %v3214
        %vm4593 = vcmp.lt.s32.totalorder %v1738, %v3214
        %vm4594 = vcmp.lt.s32.totalorder %v1739, %v3214
        %vm4595 = vcmp.lt.s32.totalorder %v1740, %v3214
        %vm4596 = vcmp.lt.s32.totalorder %v1741, %v3214
        %vm4597 = vcmp.lt.s32.totalorder %v1742, %v3214
        %vm4598 = vcmp.lt.s32.totalorder %v1743, %v3214
        %vm4599 = vcmp.lt.s32.totalorder %v1728, %v3218
        %vm4600 = vcmp.lt.s32.totalorder %v1729, %v3218
        %vm4601 = vcmp.lt.s32.totalorder %v1730, %v3218
        %vm4602 = vcmp.lt.s32.totalorder %v1731, %v3218
        %vm4603 = vcmp.lt.s32.totalorder %v1732, %v3218
        %vm4604 = vcmp.lt.s32.totalorder %v1733, %v3218
        %vm4605 = vcmp.lt.s32.totalorder %v1734, %v3218
        %vm4606 = vcmp.lt.s32.totalorder %v1735, %v3218
        %vm4607 = vcmp.lt.s32.totalorder %v1736, %v3218
        %vm4608 = vcmp.lt.s32.totalorder %v1737, %v3218
        %vm4609 = vcmp.lt.s32.totalorder %v1738, %v3218
        %vm4610 = vcmp.lt.s32.totalorder %v1739, %v3218
        %vm4611 = vcmp.lt.s32.totalorder %v1740, %v3218
        %vm4612 = vcmp.lt.s32.totalorder %v1741, %v3218
        %vm4613 = vcmp.lt.s32.totalorder %v1742, %v3218
        %vm4614 = vcmp.lt.s32.totalorder %v1743, %v3218
        %vm4615 = vcmp.lt.s32.totalorder %v1728, %v3222
        %vm4616 = vcmp.lt.s32.totalorder %v1729, %v3222
        %vm4617 = vcmp.lt.s32.totalorder %v1730, %v3222
        %vm4618 = vcmp.lt.s32.totalorder %v1731, %v3222
        %vm4619 = vcmp.lt.s32.totalorder %v1732, %v3222
        %vm4620 = vcmp.lt.s32.totalorder %v1733, %v3222
        %vm4621 = vcmp.lt.s32.totalorder %v1734, %v3222
        %vm4622 = vcmp.lt.s32.totalorder %v1735, %v3222
        %vm4623 = vcmp.lt.s32.totalorder %v1736, %v3222
        %vm4624 = vcmp.lt.s32.totalorder %v1737, %v3222
        %vm4625 = vcmp.lt.s32.totalorder %v1738, %v3222
        %vm4626 = vcmp.lt.s32.totalorder %v1739, %v3222
        %vm4627 = vcmp.lt.s32.totalorder %v1740, %v3222
        %vm4628 = vcmp.lt.s32.totalorder %v1741, %v3222
        %vm4629 = vcmp.lt.s32.totalorder %v1742, %v3222
        %vm4630 = vcmp.lt.s32.totalorder %v1743, %v3222
        %vm4631 = vcmp.lt.s32.totalorder %v1728, %v3226
        %vm4632 = vcmp.lt.s32.totalorder %v1729, %v3226
        %vm4633 = vcmp.lt.s32.totalorder %v1730, %v3226
        %vm4634 = vcmp.lt.s32.totalorder %v1731, %v3226
        %vm4635 = vcmp.lt.s32.totalorder %v1732, %v3226
        %vm4636 = vcmp.lt.s32.totalorder %v1733, %v3226
        %vm4637 = vcmp.lt.s32.totalorder %v1734, %v3226
        %vm4638 = vcmp.lt.s32.totalorder %v1735, %v3226
        %vm4639 = vcmp.lt.s32.totalorder %v1736, %v3226
        %vm4640 = vcmp.lt.s32.totalorder %v1737, %v3226
        %vm4641 = vcmp.lt.s32.totalorder %v1738, %v3226
        %vm4642 = vcmp.lt.s32.totalorder %v1739, %v3226
        %vm4643 = vcmp.lt.s32.totalorder %v1740, %v3226
        %vm4644 = vcmp.lt.s32.totalorder %v1741, %v3226
        %vm4645 = vcmp.lt.s32.totalorder %v1742, %v3226
        %vm4646 = vcmp.lt.s32.totalorder %v1743, %v3226
        %vm4647 = vcmp.lt.s32.totalorder %v1728, %v3230
        %vm4648 = vcmp.lt.s32.totalorder %v1729, %v3230
        %vm4649 = vcmp.lt.s32.totalorder %v1730, %v3230
        %vm4650 = vcmp.lt.s32.totalorder %v1731, %v3230
        %vm4651 = vcmp.lt.s32.totalorder %v1732, %v3230
        %vm4652 = vcmp.lt.s32.totalorder %v1733, %v3230
        %vm4653 = vcmp.lt.s32.totalorder %v1734, %v3230
        %vm4654 = vcmp.lt.s32.totalorder %v1735, %v3230
        %vm4655 = vcmp.lt.s32.totalorder %v1736, %v3230
        %vm4656 = vcmp.lt.s32.totalorder %v1737, %v3230
        %vm4657 = vcmp.lt.s32.totalorder %v1738, %v3230
        %vm4658 = vcmp.lt.s32.totalorder %v1739, %v3230
        %vm4659 = vcmp.lt.s32.totalorder %v1740, %v3230
        %vm4660 = vcmp.lt.s32.totalorder %v1741, %v3230
        %vm4661 = vcmp.lt.s32.totalorder %v1742, %v3230
        %vm4662 = vcmp.lt.s32.totalorder %v1743, %v3230
        %vm4663 = vcmp.lt.s32.totalorder %v1728, %v3234
        %vm4664 = vcmp.lt.s32.totalorder %v1729, %v3234
        %vm4665 = vcmp.lt.s32.totalorder %v1730, %v3234
        %vm4666 = vcmp.lt.s32.totalorder %v1731, %v3234
        %vm4667 = vcmp.lt.s32.totalorder %v1732, %v3234
        %vm4668 = vcmp.lt.s32.totalorder %v1733, %v3234
        %vm4669 = vcmp.lt.s32.totalorder %v1734, %v3234
        %vm4670 = vcmp.lt.s32.totalorder %v1735, %v3234
        %vm4671 = vcmp.lt.s32.totalorder %v1736, %v3234
        %vm4672 = vcmp.lt.s32.totalorder %v1737, %v3234
        %vm4673 = vcmp.lt.s32.totalorder %v1738, %v3234
        %vm4674 = vcmp.lt.s32.totalorder %v1739, %v3234
        %vm4675 = vcmp.lt.s32.totalorder %v1740, %v3234
        %vm4676 = vcmp.lt.s32.totalorder %v1741, %v3234
        %vm4677 = vcmp.lt.s32.totalorder %v1742, %v3234
        %vm4678 = vcmp.lt.s32.totalorder %v1743, %v3234
        %vm4679 = vcmp.lt.s32.totalorder %v1728, %v3238
        %vm4680 = vcmp.lt.s32.totalorder %v1729, %v3238
        %vm4681 = vcmp.lt.s32.totalorder %v1730, %v3238
        %vm4682 = vcmp.lt.s32.totalorder %v1731, %v3238
        %vm4683 = vcmp.lt.s32.totalorder %v1732, %v3238
        %vm4684 = vcmp.lt.s32.totalorder %v1733, %v3238
        %vm4685 = vcmp.lt.s32.totalorder %v1734, %v3238
        %vm4686 = vcmp.lt.s32.totalorder %v1735, %v3238
        %vm4687 = vcmp.lt.s32.totalorder %v1736, %v3238
        %vm4688 = vcmp.lt.s32.totalorder %v1737, %v3238
        %vm4689 = vcmp.lt.s32.totalorder %v1738, %v3238
        %vm4690 = vcmp.lt.s32.totalorder %v1739, %v3238
        %vm4691 = vcmp.lt.s32.totalorder %v1740, %v3238
        %vm4692 = vcmp.lt.s32.totalorder %v1741, %v3238
        %vm4693 = vcmp.lt.s32.totalorder %v1742, %v3238
        %vm4694 = vcmp.lt.s32.totalorder %v1743, %v3238
        %s4695 = scalar_lea.vmem %s239, 64 [#allocation7]
        %v4696 = vld [vmem:[%s4695] sm:$0xf]
        %v4697 = vld [vmem:[%s4695 + $0x4] sm:$0xf]
        %v4698 = vld [vmem:[%s4695 + $0x8] sm:$0xf]
        %v4699 = vld [vmem:[%s4695 + $0xc] sm:$0xf]
        %v4700 = vld [vmem:[%s4695 + $0x10] sm:$0xf]
        %v4701 = vld [vmem:[%s4695 + $0x14] sm:$0xf]
        %v4702 = vld [vmem:[%s4695 + $0x18] sm:$0xf]
        %v4703 = vld [vmem:[%s4695 + $0x1c] sm:$0xf]
        %v4704 = vld [vmem:[%s4695 + $0x20] sm:$0xf]
        %v4705 = vld [vmem:[%s4695 + $0x24] sm:$0xf]
        %v4706 = vld [vmem:[%s4695 + $0x28] sm:$0xf]
        %v4707 = vld [vmem:[%s4695 + $0x2c] sm:$0xf]
        %v4708 = vld [vmem:[%s4695 + $0x30] sm:$0xf]
        %v4709 = vld [vmem:[%s4695 + $0x34] sm:$0xf]
        %v4710 = vld [vmem:[%s4695 + $0x38] sm:$0xf]
        %v4711 = vld [vmem:[%s4695 + $0x3c] sm:$0xf]
        %v4712 = vld [vmem:[%s4695 + $0x80] sm:$0xf]
        %v4713 = vld [vmem:[%s4695 + $0x84] sm:$0xf]
        %v4714 = vld [vmem:[%s4695 + $0x88] sm:$0xf]
        %v4715 = vld [vmem:[%s4695 + $0x8c] sm:$0xf]
        %v4716 = vld [vmem:[%s4695 + $0x90] sm:$0xf]
        %v4717 = vld [vmem:[%s4695 + $0x94] sm:$0xf]
        %v4718 = vld [vmem:[%s4695 + $0x98] sm:$0xf]
        %v4719 = vld [vmem:[%s4695 + $0x9c] sm:$0xf]
        %v4720 = vld [vmem:[%s4695 + $0xa0] sm:$0xf]
        %v4721 = vld [vmem:[%s4695 + $0xa4] sm:$0xf]
        %v4722 = vld [vmem:[%s4695 + $0xa8] sm:$0xf]
        %v4723 = vld [vmem:[%s4695 + $0xac] sm:$0xf]
        %v4724 = vld [vmem:[%s4695 + $0xb0] sm:$0xf]
        %v4725 = vld [vmem:[%s4695 + $0xb4] sm:$0xf]
        %v4726 = vld [vmem:[%s4695 + $0xb8] sm:$0xf]
        %v4727 = vld [vmem:[%s4695 + $0xbc] sm:$0xf]
        %v4728 = vld [vmem:[%s4695 + $0x100] sm:$0xf]
        %v4729 = vld [vmem:[%s4695 + $0x104] sm:$0xf]
        %v4730 = vld [vmem:[%s4695 + $0x108] sm:$0xf]
        %v4731 = vld [vmem:[%s4695 + $0x10c] sm:$0xf]
        %v4732 = vld [vmem:[%s4695 + $0x110] sm:$0xf]
        %v4733 = vld [vmem:[%s4695 + $0x114] sm:$0xf]
        %v4734 = vld [vmem:[%s4695 + $0x118] sm:$0xf]
        %v4735 = vld [vmem:[%s4695 + $0x11c] sm:$0xf]
        %v4736 = vld [vmem:[%s4695 + $0x120] sm:$0xf]
        %v4737 = vld [vmem:[%s4695 + $0x124] sm:$0xf]
        %v4738 = vld [vmem:[%s4695 + $0x128] sm:$0xf]
        %v4739 = vld [vmem:[%s4695 + $0x12c] sm:$0xf]
        %v4740 = vld [vmem:[%s4695 + $0x130] sm:$0xf]
        %v4741 = vld [vmem:[%s4695 + $0x134] sm:$0xf]
        %v4742 = vld [vmem:[%s4695 + $0x138] sm:$0xf]
        %v4743 = vld [vmem:[%s4695 + $0x13c] sm:$0xf]
        %v4744 = vld [vmem:[%s4695 + $0x180] sm:$0xf]
        %v4745 = vld [vmem:[%s4695 + $0x184] sm:$0xf]
        %v4746 = vld [vmem:[%s4695 + $0x188] sm:$0xf]
        %v4747 = vld [vmem:[%s4695 + $0x18c] sm:$0xf]
        %v4748 = vld [vmem:[%s4695 + $0x190] sm:$0xf]
        %v4749 = vld [vmem:[%s4695 + $0x194] sm:$0xf]
        %v4750 = vld [vmem:[%s4695 + $0x198] sm:$0xf]
        %v4751 = vld [vmem:[%s4695 + $0x19c] sm:$0xf]
        %v4752 = vld [vmem:[%s4695 + $0x1a0] sm:$0xf]
        %v4753 = vld [vmem:[%s4695 + $0x1a4] sm:$0xf]
        %v4754 = vld [vmem:[%s4695 + $0x1a8] sm:$0xf]
        %v4755 = vld [vmem:[%s4695 + $0x1ac] sm:$0xf]
        %v4756 = vld [vmem:[%s4695 + $0x1b0] sm:$0xf]
        %v4757 = vld [vmem:[%s4695 + $0x1b4] sm:$0xf]
        %v4758 = vld [vmem:[%s4695 + $0x1b8] sm:$0xf]
        %v4759 = vld [vmem:[%s4695 + $0x1bc] sm:$0xf]
        %v4760 = vld [vmem:[%s4695 + $0x200] sm:$0xf]
        %v4761 = vld [vmem:[%s4695 + $0x204] sm:$0xf]
        %v4762 = vld [vmem:[%s4695 + $0x208] sm:$0xf]
        %v4763 = vld [vmem:[%s4695 + $0x20c] sm:$0xf]
        %v4764 = vld [vmem:[%s4695 + $0x210] sm:$0xf]
        %v4765 = vld [vmem:[%s4695 + $0x214] sm:$0xf]
        %v4766 = vld [vmem:[%s4695 + $0x218] sm:$0xf]
        %v4767 = vld [vmem:[%s4695 + $0x21c] sm:$0xf]
        %v4768 = vld [vmem:[%s4695 + $0x220] sm:$0xf]
        %v4769 = vld [vmem:[%s4695 + $0x224] sm:$0xf]
        %v4770 = vld [vmem:[%s4695 + $0x228] sm:$0xf]
        %v4771 = vld [vmem:[%s4695 + $0x22c] sm:$0xf]
        %v4772 = vld [vmem:[%s4695 + $0x230] sm:$0xf]
        %v4773 = vld [vmem:[%s4695 + $0x234] sm:$0xf]
        %v4774 = vld [vmem:[%s4695 + $0x238] sm:$0xf]
        %v4775 = vld [vmem:[%s4695 + $0x23c] sm:$0xf]
        %v4776 = vld [vmem:[%s4695 + $0x280] sm:$0xf]
        %v4777 = vld [vmem:[%s4695 + $0x284] sm:$0xf]
        %v4778 = vld [vmem:[%s4695 + $0x288] sm:$0xf]
        %v4779 = vld [vmem:[%s4695 + $0x28c] sm:$0xf]
        %v4780 = vld [vmem:[%s4695 + $0x290] sm:$0xf]
        %v4781 = vld [vmem:[%s4695 + $0x294] sm:$0xf]
        %v4782 = vld [vmem:[%s4695 + $0x298] sm:$0xf]
        %v4783 = vld [vmem:[%s4695 + $0x29c] sm:$0xf]
        %v4784 = vld [vmem:[%s4695 + $0x2a0] sm:$0xf]
        %v4785 = vld [vmem:[%s4695 + $0x2a4] sm:$0xf]
        %v4786 = vld [vmem:[%s4695 + $0x2a8] sm:$0xf]
        %v4787 = vld [vmem:[%s4695 + $0x2ac] sm:$0xf]
        %v4788 = vld [vmem:[%s4695 + $0x2b0] sm:$0xf]
        %v4789 = vld [vmem:[%s4695 + $0x2b4] sm:$0xf]
        %v4790 = vld [vmem:[%s4695 + $0x2b8] sm:$0xf]
        %v4791 = vld [vmem:[%s4695 + $0x2bc] sm:$0xf]
        %v4792 = vld [vmem:[%s4695 + $0x300] sm:$0xf]
        %v4793 = vld [vmem:[%s4695 + $0x304] sm:$0xf]
        %v4794 = vld [vmem:[%s4695 + $0x308] sm:$0xf]
        %v4795 = vld [vmem:[%s4695 + $0x30c] sm:$0xf]
        %v4796 = vld [vmem:[%s4695 + $0x310] sm:$0xf]
        %v4797 = vld [vmem:[%s4695 + $0x314] sm:$0xf]
        %v4798 = vld [vmem:[%s4695 + $0x318] sm:$0xf]
        %v4799 = vld [vmem:[%s4695 + $0x31c] sm:$0xf]
        %v4800 = vld [vmem:[%s4695 + $0x320] sm:$0xf]
        %v4801 = vld [vmem:[%s4695 + $0x324] sm:$0xf]
        %v4802 = vld [vmem:[%s4695 + $0x328] sm:$0xf]
        %v4803 = vld [vmem:[%s4695 + $0x32c] sm:$0xf]
        %v4804 = vld [vmem:[%s4695 + $0x330] sm:$0xf]
        %v4805 = vld [vmem:[%s4695 + $0x334] sm:$0xf]
        %v4806 = vld [vmem:[%s4695 + $0x338] sm:$0xf]
        %v4807 = vld [vmem:[%s4695 + $0x33c] sm:$0xf]
        %v4808 = vld [vmem:[%s4695 + $0x380] sm:$0xf]
        %v4809 = vld [vmem:[%s4695 + $0x384] sm:$0xf]
        %v4810 = vld [vmem:[%s4695 + $0x388] sm:$0xf]
        %v4811 = vld [vmem:[%s4695 + $0x38c] sm:$0xf]
        %v4812 = vld [vmem:[%s4695 + $0x390] sm:$0xf]
        %v4813 = vld [vmem:[%s4695 + $0x394] sm:$0xf]
        %v4814 = vld [vmem:[%s4695 + $0x398] sm:$0xf]
        %v4815 = vld [vmem:[%s4695 + $0x39c] sm:$0xf]
        %v4816 = vld [vmem:[%s4695 + $0x3a0] sm:$0xf]
        %v4817 = vld [vmem:[%s4695 + $0x3a4] sm:$0xf]
        %v4818 = vld [vmem:[%s4695 + $0x3a8] sm:$0xf]
        %v4819 = vld [vmem:[%s4695 + $0x3ac] sm:$0xf]
        %v4820 = vld [vmem:[%s4695 + $0x3b0] sm:$0xf]
        %v4821 = vld [vmem:[%s4695 + $0x3b4] sm:$0xf]
        %v4822 = vld [vmem:[%s4695 + $0x3b8] sm:$0xf]
        %v4823 = vld [vmem:[%s4695 + $0x3bc] sm:$0xf]
        %v4824 = vunpack.c.l.bf16 %v4696
        %v4825 = vunpack.c.l.bf16 %v4697
        %v4826 = vunpack.c.l.bf16 %v4698
        %v4827 = vunpack.c.l.bf16 %v4699
        %v4828 = vunpack.c.l.bf16 %v4700
        %v4829 = vunpack.c.l.bf16 %v4701
        %v4830 = vunpack.c.l.bf16 %v4702
        %v4831 = vunpack.c.l.bf16 %v4703
        %v4832 = vunpack.c.l.bf16 %v4704
        %v4833 = vunpack.c.l.bf16 %v4705
        %v4834 = vunpack.c.l.bf16 %v4706
        %v4835 = vunpack.c.l.bf16 %v4707
        %v4836 = vunpack.c.l.bf16 %v4708
        %v4837 = vunpack.c.l.bf16 %v4709
        %v4838 = vunpack.c.l.bf16 %v4710
        %v4839 = vunpack.c.l.bf16 %v4711
        %v4840 = vunpack.c.l.bf16 %v4712
        %v4841 = vunpack.c.l.bf16 %v4713
        %v4842 = vunpack.c.l.bf16 %v4714
        %v4843 = vunpack.c.l.bf16 %v4715
        %v4844 = vunpack.c.l.bf16 %v4716
        %v4845 = vunpack.c.l.bf16 %v4717
        %v4846 = vunpack.c.l.bf16 %v4718
        %v4847 = vunpack.c.l.bf16 %v4719
        %v4848 = vunpack.c.l.bf16 %v4720
        %v4849 = vunpack.c.l.bf16 %v4721
        %v4850 = vunpack.c.l.bf16 %v4722
        %v4851 = vunpack.c.l.bf16 %v4723
        %v4852 = vunpack.c.l.bf16 %v4724
        %v4853 = vunpack.c.l.bf16 %v4725
        %v4854 = vunpack.c.l.bf16 %v4726
        %v4855 = vunpack.c.l.bf16 %v4727
        %v4856 = vunpack.c.l.bf16 %v4728
        %v4857 = vunpack.c.l.bf16 %v4729
        %v4858 = vunpack.c.l.bf16 %v4730
        %v4859 = vunpack.c.l.bf16 %v4731
        %v4860 = vunpack.c.l.bf16 %v4732
        %v4861 = vunpack.c.l.bf16 %v4733
        %v4862 = vunpack.c.l.bf16 %v4734
        %v4863 = vunpack.c.l.bf16 %v4735
        %v4864 = vunpack.c.l.bf16 %v4736
        %v4865 = vunpack.c.l.bf16 %v4737
        %v4866 = vunpack.c.l.bf16 %v4738
        %v4867 = vunpack.c.l.bf16 %v4739
        %v4868 = vunpack.c.l.bf16 %v4740
        %v4869 = vunpack.c.l.bf16 %v4741
        %v4870 = vunpack.c.l.bf16 %v4742
        %v4871 = vunpack.c.l.bf16 %v4743
        %v4872 = vunpack.c.l.bf16 %v4744
        %v4873 = vunpack.c.l.bf16 %v4745
        %v4874 = vunpack.c.l.bf16 %v4746
        %v4875 = vunpack.c.l.bf16 %v4747
        %v4876 = vunpack.c.l.bf16 %v4748
        %v4877 = vunpack.c.l.bf16 %v4749
        %v4878 = vunpack.c.l.bf16 %v4750
        %v4879 = vunpack.c.l.bf16 %v4751
        %v4880 = vunpack.c.l.bf16 %v4752
        %v4881 = vunpack.c.l.bf16 %v4753
        %v4882 = vunpack.c.l.bf16 %v4754
        %v4883 = vunpack.c.l.bf16 %v4755
        %v4884 = vunpack.c.l.bf16 %v4756
        %v4885 = vunpack.c.l.bf16 %v4757
        %v4886 = vunpack.c.l.bf16 %v4758
        %v4887 = vunpack.c.l.bf16 %v4759
        %v4888 = vunpack.c.l.bf16 %v4760
        %v4889 = vunpack.c.l.bf16 %v4761
        %v4890 = vunpack.c.l.bf16 %v4762
        %v4891 = vunpack.c.l.bf16 %v4763
        %v4892 = vunpack.c.l.bf16 %v4764
        %v4893 = vunpack.c.l.bf16 %v4765
        %v4894 = vunpack.c.l.bf16 %v4766
        %v4895 = vunpack.c.l.bf16 %v4767
        %v4896 = vunpack.c.l.bf16 %v4768
        %v4897 = vunpack.c.l.bf16 %v4769
        %v4898 = vunpack.c.l.bf16 %v4770
        %v4899 = vunpack.c.l.bf16 %v4771
        %v4900 = vunpack.c.l.bf16 %v4772
        %v4901 = vunpack.c.l.bf16 %v4773
        %v4902 = vunpack.c.l.bf16 %v4774
        %v4903 = vunpack.c.l.bf16 %v4775
        %v4904 = vunpack.c.l.bf16 %v4776
        %v4905 = vunpack.c.l.bf16 %v4777
        %v4906 = vunpack.c.l.bf16 %v4778
        %v4907 = vunpack.c.l.bf16 %v4779
        %v4908 = vunpack.c.l.bf16 %v4780
        %v4909 = vunpack.c.l.bf16 %v4781
        %v4910 = vunpack.c.l.bf16 %v4782
        %v4911 = vunpack.c.l.bf16 %v4783
        %v4912 = vunpack.c.l.bf16 %v4784
        %v4913 = vunpack.c.l.bf16 %v4785
        %v4914 = vunpack.c.l.bf16 %v4786
        %v4915 = vunpack.c.l.bf16 %v4787
        %v4916 = vunpack.c.l.bf16 %v4788
        %v4917 = vunpack.c.l.bf16 %v4789
        %v4918 = vunpack.c.l.bf16 %v4790
        %v4919 = vunpack.c.l.bf16 %v4791
        %v4920 = vunpack.c.l.bf16 %v4792
        %v4921 = vunpack.c.l.bf16 %v4793
        %v4922 = vunpack.c.l.bf16 %v4794
        %v4923 = vunpack.c.l.bf16 %v4795
        %v4924 = vunpack.c.l.bf16 %v4796
        %v4925 = vunpack.c.l.bf16 %v4797
        %v4926 = vunpack.c.l.bf16 %v4798
        %v4927 = vunpack.c.l.bf16 %v4799
        %v4928 = vunpack.c.l.bf16 %v4800
        %v4929 = vunpack.c.l.bf16 %v4801
        %v4930 = vunpack.c.l.bf16 %v4802
        %v4931 = vunpack.c.l.bf16 %v4803
        %v4932 = vunpack.c.l.bf16 %v4804
        %v4933 = vunpack.c.l.bf16 %v4805
        %v4934 = vunpack.c.l.bf16 %v4806
        %v4935 = vunpack.c.l.bf16 %v4807
        %v4936 = vunpack.c.l.bf16 %v4808
        %v4937 = vunpack.c.l.bf16 %v4809
        %v4938 = vunpack.c.l.bf16 %v4810
        %v4939 = vunpack.c.l.bf16 %v4811
        %v4940 = vunpack.c.l.bf16 %v4812
        %v4941 = vunpack.c.l.bf16 %v4813
        %v4942 = vunpack.c.l.bf16 %v4814
        %v4943 = vunpack.c.l.bf16 %v4815
        %v4944 = vunpack.c.l.bf16 %v4816
        %v4945 = vunpack.c.l.bf16 %v4817
        %v4946 = vunpack.c.l.bf16 %v4818
        %v4947 = vunpack.c.l.bf16 %v4819
        %v4948 = vunpack.c.l.bf16 %v4820
        %v4949 = vunpack.c.l.bf16 %v4821
        %v4950 = vunpack.c.l.bf16 %v4822
        %v4951 = vunpack.c.l.bf16 %v4823
        %v4952 = vsel %vm4567, 1, 0
        %v4953 = vsel %vm4568, 1, 0
        %v4954 = vsel %vm4569, 1, 0
        %v4955 = vsel %vm4570, 1, 0
        %v4956 = vsel %vm4571, 1, 0
        %v4957 = vsel %vm4572, 1, 0
        %v4958 = vsel %vm4573, 1, 0
        %v4959 = vsel %vm4574, 1, 0
        %v4960 = vsel %vm4575, 1, 0
        %v4961 = vsel %vm4576, 1, 0
        %v4962 = vsel %vm4577, 1, 0
        %v4963 = vsel %vm4578, 1, 0
        %v4964 = vsel %vm4579, 1, 0
        %v4965 = vsel %vm4580, 1, 0
        %v4966 = vsel %vm4581, 1, 0
        %v4967 = vsel %vm4582, 1, 0
        %v4968 = vsel %vm4583, 1, 0
        %v4969 = vsel %vm4584, 1, 0
        %v4970 = vsel %vm4585, 1, 0
        %v4971 = vsel %vm4586, 1, 0
        %v4972 = vsel %vm4587, 1, 0
        %v4973 = vsel %vm4588, 1, 0
        %v4974 = vsel %vm4589, 1, 0
        %v4975 = vsel %vm4590, 1, 0
        %v4976 = vsel %vm4591, 1, 0
        %v4977 = vsel %vm4592, 1, 0
        %v4978 = vsel %vm4593, 1, 0
        %v4979 = vsel %vm4594, 1, 0
        %v4980 = vsel %vm4595, 1, 0
        %v4981 = vsel %vm4596, 1, 0
        %v4982 = vsel %vm4597, 1, 0
        %v4983 = vsel %vm4598, 1, 0
        %v4984 = vsel %vm4599, 1, 0
        %v4985 = vsel %vm4600, 1, 0
        %v4986 = vsel %vm4601, 1, 0
        %v4987 = vsel %vm4602, 1, 0
        %v4988 = vsel %vm4603, 1, 0
        %v4989 = vsel %vm4604, 1, 0
        %v4990 = vsel %vm4605, 1, 0
        %v4991 = vsel %vm4606, 1, 0
        %v4992 = vsel %vm4607, 1, 0
        %v4993 = vsel %vm4608, 1, 0
        %v4994 = vsel %vm4609, 1, 0
        %v4995 = vsel %vm4610, 1, 0
        %v4996 = vsel %vm4611, 1, 0
        %v4997 = vsel %vm4612, 1, 0
        %v4998 = vsel %vm4613, 1, 0
        %v4999 = vsel %vm4614, 1, 0
        %v5000 = vsel %vm4615, 1, 0
        %v5001 = vsel %vm4616, 1, 0
        %v5002 = vsel %vm4617, 1, 0
        %v5003 = vsel %vm4618, 1, 0
        %v5004 = vsel %vm4619, 1, 0
        %v5005 = vsel %vm4620, 1, 0
        %v5006 = vsel %vm4621, 1, 0
        %v5007 = vsel %vm4622, 1, 0
        %v5008 = vsel %vm4623, 1, 0
        %v5009 = vsel %vm4624, 1, 0
        %v5010 = vsel %vm4625, 1, 0
        %v5011 = vsel %vm4626, 1, 0
        %v5012 = vsel %vm4627, 1, 0
        %v5013 = vsel %vm4628, 1, 0
        %v5014 = vsel %vm4629, 1, 0
        %v5015 = vsel %vm4630, 1, 0
        %v5016 = vsel %vm4631, 1, 0
        %v5017 = vsel %vm4632, 1, 0
        %v5018 = vsel %vm4633, 1, 0
        %v5019 = vsel %vm4634, 1, 0
        %v5020 = vsel %vm4635, 1, 0
        %v5021 = vsel %vm4636, 1, 0
        %v5022 = vsel %vm4637, 1, 0
        %v5023 = vsel %vm4638, 1, 0
        %v5024 = vsel %vm4639, 1, 0
        %v5025 = vsel %vm4640, 1, 0
        %v5026 = vsel %vm4641, 1, 0
        %v5027 = vsel %vm4642, 1, 0
        %v5028 = vsel %vm4643, 1, 0
        %v5029 = vsel %vm4644, 1, 0
        %v5030 = vsel %vm4645, 1, 0
        %v5031 = vsel %vm4646, 1, 0
        %v5032 = vsel %vm4647, 1, 0
        %v5033 = vsel %vm4648, 1, 0
        %v5034 = vsel %vm4649, 1, 0
        %v5035 = vsel %vm4650, 1, 0
        %v5036 = vsel %vm4651, 1, 0
        %v5037 = vsel %vm4652, 1, 0
        %v5038 = vsel %vm4653, 1, 0
        %v5039 = vsel %vm4654, 1, 0
        %v5040 = vsel %vm4655, 1, 0
        %v5041 = vsel %vm4656, 1, 0
        %v5042 = vsel %vm4657, 1, 0
        %v5043 = vsel %vm4658, 1, 0
        %v5044 = vsel %vm4659, 1, 0
        %v5045 = vsel %vm4660, 1, 0
        %v5046 = vsel %vm4661, 1, 0
        %v5047 = vsel %vm4662, 1, 0
        %v5048 = vsel %vm4663, 1, 0
        %v5049 = vsel %vm4664, 1, 0
        %v5050 = vsel %vm4665, 1, 0
        %v5051 = vsel %vm4666, 1, 0
        %v5052 = vsel %vm4667, 1, 0
        %v5053 = vsel %vm4668, 1, 0
        %v5054 = vsel %vm4669, 1, 0
        %v5055 = vsel %vm4670, 1, 0
        %v5056 = vsel %vm4671, 1, 0
        %v5057 = vsel %vm4672, 1, 0
        %v5058 = vsel %vm4673, 1, 0
        %v5059 = vsel %vm4674, 1, 0
        %v5060 = vsel %vm4675, 1, 0
        %v5061 = vsel %vm4676, 1, 0
        %v5062 = vsel %vm4677, 1, 0
        %v5063 = vsel %vm4678, 1, 0
        %v5064 = vsel %vm4679, 1, 0
        %v5065 = vsel %vm4680, 1, 0
        %v5066 = vsel %vm4681, 1, 0
        %v5067 = vsel %vm4682, 1, 0
        %v5068 = vsel %vm4683, 1, 0
        %v5069 = vsel %vm4684, 1, 0
        %v5070 = vsel %vm4685, 1, 0
        %v5071 = vsel %vm4686, 1, 0
        %v5072 = vsel %vm4687, 1, 0
        %v5073 = vsel %vm4688, 1, 0
        %v5074 = vsel %vm4689, 1, 0
        %v5075 = vsel %vm4690, 1, 0
        %v5076 = vsel %vm4691, 1, 0
        %v5077 = vsel %vm4692, 1, 0
        %v5078 = vsel %vm4693, 1, 0
        %v5079 = vsel %vm4694, 1, 0
        %5080 = vset.pattern.permute.xlu0 0
        %5081 = vperm.xlu0 %5080, %v4952
        %v5082 = vpop.permute.xlu0 %5081
        %5083 = vset.pattern.permute.xlu0 0
        %5084 = vperm.xlu0 %5083, %v4953
        %v5085 = vpop.permute.xlu0 %5084
        %5086 = vset.pattern.permute.xlu0 0
        %5087 = vperm.xlu0 %5086, %v4954
        %v5088 = vpop.permute.xlu0 %5087
        %5089 = vset.pattern.permute.xlu0 0
        %5090 = vperm.xlu0 %5089, %v4955
        %v5091 = vpop.permute.xlu0 %5090
        %5092 = vset.pattern.permute.xlu0 0
        %5093 = vperm.xlu0 %5092, %v4956
        %v5094 = vpop.permute.xlu0 %5093
        %5095 = vset.pattern.permute.xlu0 0
        %5096 = vperm.xlu0 %5095, %v4957
        %v5097 = vpop.permute.xlu0 %5096
        %5098 = vset.pattern.permute.xlu0 0
        %5099 = vperm.xlu0 %5098, %v4958
        %v5100 = vpop.permute.xlu0 %5099
        %5101 = vset.pattern.permute.xlu0 0
        %5102 = vperm.xlu0 %5101, %v4959
        %v5103 = vpop.permute.xlu0 %5102
        %5104 = vset.pattern.permute.xlu0 0
        %5105 = vperm.xlu0 %5104, %v4960
        %v5106 = vpop.permute.xlu0 %5105
        %5107 = vset.pattern.permute.xlu0 0
        %5108 = vperm.xlu0 %5107, %v4961
        %v5109 = vpop.permute.xlu0 %5108
        %5110 = vset.pattern.permute.xlu0 0
        %5111 = vperm.xlu0 %5110, %v4962
        %v5112 = vpop.permute.xlu0 %5111
        %5113 = vset.pattern.permute.xlu0 0
        %5114 = vperm.xlu0 %5113, %v4963
        %v5115 = vpop.permute.xlu0 %5114
        %5116 = vset.pattern.permute.xlu0 0
        %5117 = vperm.xlu0 %5116, %v4964
        %v5118 = vpop.permute.xlu0 %5117
        %5119 = vset.pattern.permute.xlu0 0
        %5120 = vperm.xlu0 %5119, %v4965
        %v5121 = vpop.permute.xlu0 %5120
        %5122 = vset.pattern.permute.xlu0 0
        %5123 = vperm.xlu0 %5122, %v4966
        %v5124 = vpop.permute.xlu0 %5123
        %5125 = vset.pattern.permute.xlu0 0
        %5126 = vperm.xlu0 %5125, %v4967
        %v5127 = vpop.permute.xlu0 %5126
        %5128 = vset.pattern.permute.xlu0 0
        %5129 = vperm.xlu0 %5128, %v4968
        %v5130 = vpop.permute.xlu0 %5129
        %5131 = vset.pattern.permute.xlu0 0
        %5132 = vperm.xlu0 %5131, %v4969
        %v5133 = vpop.permute.xlu0 %5132
        %5134 = vset.pattern.permute.xlu0 0
        %5135 = vperm.xlu0 %5134, %v4970
        %v5136 = vpop.permute.xlu0 %5135
        %5137 = vset.pattern.permute.xlu0 0
        %5138 = vperm.xlu0 %5137, %v4971
        %v5139 = vpop.permute.xlu0 %5138
        %5140 = vset.pattern.permute.xlu0 0
        %5141 = vperm.xlu0 %5140, %v4972
        %v5142 = vpop.permute.xlu0 %5141
        %5143 = vset.pattern.permute.xlu0 0
        %5144 = vperm.xlu0 %5143, %v4973
        %v5145 = vpop.permute.xlu0 %5144
        %5146 = vset.pattern.permute.xlu0 0
        %5147 = vperm.xlu0 %5146, %v4974
        %v5148 = vpop.permute.xlu0 %5147
        %5149 = vset.pattern.permute.xlu0 0
        %5150 = vperm.xlu0 %5149, %v4975
        %v5151 = vpop.permute.xlu0 %5150
        %5152 = vset.pattern.permute.xlu0 0
        %5153 = vperm.xlu0 %5152, %v4976
        %v5154 = vpop.permute.xlu0 %5153
        %5155 = vset.pattern.permute.xlu0 0
        %5156 = vperm.xlu0 %5155, %v4977
        %v5157 = vpop.permute.xlu0 %5156
        %5158 = vset.pattern.permute.xlu0 0
        %5159 = vperm.xlu0 %5158, %v4978
        %v5160 = vpop.permute.xlu0 %5159
        %5161 = vset.pattern.permute.xlu0 0
        %5162 = vperm.xlu0 %5161, %v4979
        %v5163 = vpop.permute.xlu0 %5162
        %5164 = vset.pattern.permute.xlu0 0
        %5165 = vperm.xlu0 %5164, %v4980
        %v5166 = vpop.permute.xlu0 %5165
        %5167 = vset.pattern.permute.xlu0 0
        %5168 = vperm.xlu0 %5167, %v4981
        %v5169 = vpop.permute.xlu0 %5168
        %5170 = vset.pattern.permute.xlu0 0
        %5171 = vperm.xlu0 %5170, %v4982
        %v5172 = vpop.permute.xlu0 %5171
        %5173 = vset.pattern.permute.xlu0 0
        %5174 = vperm.xlu0 %5173, %v4983
        %v5175 = vpop.permute.xlu0 %5174
        %5176 = vset.pattern.permute.xlu0 0
        %5177 = vperm.xlu0 %5176, %v4984
        %v5178 = vpop.permute.xlu0 %5177
        %5179 = vset.pattern.permute.xlu0 0
        %5180 = vperm.xlu0 %5179, %v4985
        %v5181 = vpop.permute.xlu0 %5180
        %5182 = vset.pattern.permute.xlu0 0
        %5183 = vperm.xlu0 %5182, %v4986
        %v5184 = vpop.permute.xlu0 %5183
        %5185 = vset.pattern.permute.xlu0 0
        %5186 = vperm.xlu0 %5185, %v4987
        %v5187 = vpop.permute.xlu0 %5186
        %5188 = vset.pattern.permute.xlu0 0
        %5189 = vperm.xlu0 %5188, %v4988
        %v5190 = vpop.permute.xlu0 %5189
        %5191 = vset.pattern.permute.xlu0 0
        %5192 = vperm.xlu0 %5191, %v4989
        %v5193 = vpop.permute.xlu0 %5192
        %5194 = vset.pattern.permute.xlu0 0
        %5195 = vperm.xlu0 %5194, %v4990
        %v5196 = vpop.permute.xlu0 %5195
        %5197 = vset.pattern.permute.xlu0 0
        %5198 = vperm.xlu0 %5197, %v4991
        %v5199 = vpop.permute.xlu0 %5198
        %5200 = vset.pattern.permute.xlu0 0
        %5201 = vperm.xlu0 %5200, %v4992
        %v5202 = vpop.permute.xlu0 %5201
        %5203 = vset.pattern.permute.xlu0 0
        %5204 = vperm.xlu0 %5203, %v4993
        %v5205 = vpop.permute.xlu0 %5204
        %5206 = vset.pattern.permute.xlu0 0
        %5207 = vperm.xlu0 %5206, %v4994
        %v5208 = vpop.permute.xlu0 %5207
        %5209 = vset.pattern.permute.xlu0 0
        %5210 = vperm.xlu0 %5209, %v4995
        %v5211 = vpop.permute.xlu0 %5210
        %5212 = vset.pattern.permute.xlu0 0
        %5213 = vperm.xlu0 %5212, %v4996
        %v5214 = vpop.permute.xlu0 %5213
        %5215 = vset.pattern.permute.xlu0 0
        %5216 = vperm.xlu0 %5215, %v4997
        %v5217 = vpop.permute.xlu0 %5216
        %5218 = vset.pattern.permute.xlu0 0
        %5219 = vperm.xlu0 %5218, %v4998
        %v5220 = vpop.permute.xlu0 %5219
        %5221 = vset.pattern.permute.xlu0 0
        %5222 = vperm.xlu0 %5221, %v4999
        %v5223 = vpop.permute.xlu0 %5222
        %5224 = vset.pattern.permute.xlu0 0
        %5225 = vperm.xlu0 %5224, %v5000
        %v5226 = vpop.permute.xlu0 %5225
        %5227 = vset.pattern.permute.xlu0 0
        %5228 = vperm.xlu0 %5227, %v5001
        %v5229 = vpop.permute.xlu0 %5228
        %5230 = vset.pattern.permute.xlu0 0
        %5231 = vperm.xlu0 %5230, %v5002
        %v5232 = vpop.permute.xlu0 %5231
        %5233 = vset.pattern.permute.xlu0 0
        %5234 = vperm.xlu0 %5233, %v5003
        %v5235 = vpop.permute.xlu0 %5234
        %5236 = vset.pattern.permute.xlu0 0
        %5237 = vperm.xlu0 %5236, %v5004
        %v5238 = vpop.permute.xlu0 %5237
        %5239 = vset.pattern.permute.xlu0 0
        %5240 = vperm.xlu0 %5239, %v5005
        %v5241 = vpop.permute.xlu0 %5240
        %5242 = vset.pattern.permute.xlu0 0
        %5243 = vperm.xlu0 %5242, %v5006
        %v5244 = vpop.permute.xlu0 %5243
        %5245 = vset.pattern.permute.xlu0 0
        %5246 = vperm.xlu0 %5245, %v5007
        %v5247 = vpop.permute.xlu0 %5246
        %5248 = vset.pattern.permute.xlu0 0
        %5249 = vperm.xlu0 %5248, %v5008
        %v5250 = vpop.permute.xlu0 %5249
        %5251 = vset.pattern.permute.xlu0 0
        %5252 = vperm.xlu0 %5251, %v5009
        %v5253 = vpop.permute.xlu0 %5252
        %5254 = vset.pattern.permute.xlu0 0
        %5255 = vperm.xlu0 %5254, %v5010
        %v5256 = vpop.permute.xlu0 %5255
        %5257 = vset.pattern.permute.xlu0 0
        %5258 = vperm.xlu0 %5257, %v5011
        %v5259 = vpop.permute.xlu0 %5258
        %5260 = vset.pattern.permute.xlu0 0
        %5261 = vperm.xlu0 %5260, %v5012
        %v5262 = vpop.permute.xlu0 %5261
        %5263 = vset.pattern.permute.xlu0 0
        %5264 = vperm.xlu0 %5263, %v5013
        %v5265 = vpop.permute.xlu0 %5264
        %5266 = vset.pattern.permute.xlu0 0
        %5267 = vperm.xlu0 %5266, %v5014
        %v5268 = vpop.permute.xlu0 %5267
        %5269 = vset.pattern.permute.xlu0 0
        %5270 = vperm.xlu0 %5269, %v5015
        %v5271 = vpop.permute.xlu0 %5270
        %5272 = vset.pattern.permute.xlu0 0
        %5273 = vperm.xlu0 %5272, %v5016
        %v5274 = vpop.permute.xlu0 %5273
        %5275 = vset.pattern.permute.xlu0 0
        %5276 = vperm.xlu0 %5275, %v5017
        %v5277 = vpop.permute.xlu0 %5276
        %5278 = vset.pattern.permute.xlu0 0
        %5279 = vperm.xlu0 %5278, %v5018
        %v5280 = vpop.permute.xlu0 %5279
        %5281 = vset.pattern.permute.xlu0 0
        %5282 = vperm.xlu0 %5281, %v5019
        %v5283 = vpop.permute.xlu0 %5282
        %5284 = vset.pattern.permute.xlu0 0
        %5285 = vperm.xlu0 %5284, %v5020
        %v5286 = vpop.permute.xlu0 %5285
        %5287 = vset.pattern.permute.xlu0 0
        %5288 = vperm.xlu0 %5287, %v5021
        %v5289 = vpop.permute.xlu0 %5288
        %5290 = vset.pattern.permute.xlu0 0
        %5291 = vperm.xlu0 %5290, %v5022
        %v5292 = vpop.permute.xlu0 %5291
        %5293 = vset.pattern.permute.xlu0 0
        %5294 = vperm.xlu0 %5293, %v5023
        %v5295 = vpop.permute.xlu0 %5294
        %5296 = vset.pattern.permute.xlu0 0
        %5297 = vperm.xlu0 %5296, %v5024
        %v5298 = vpop.permute.xlu0 %5297
        %5299 = vset.pattern.permute.xlu0 0
        %5300 = vperm.xlu0 %5299, %v5025
        %v5301 = vpop.permute.xlu0 %5300
        %5302 = vset.pattern.permute.xlu0 0
        %5303 = vperm.xlu0 %5302, %v5026
        %v5304 = vpop.permute.xlu0 %5303
        %5305 = vset.pattern.permute.xlu0 0
        %5306 = vperm.xlu0 %5305, %v5027
        %v5307 = vpop.permute.xlu0 %5306
        %5308 = vset.pattern.permute.xlu0 0
        %5309 = vperm.xlu0 %5308, %v5028
        %v5310 = vpop.permute.xlu0 %5309
        %5311 = vset.pattern.permute.xlu0 0
        %5312 = vperm.xlu0 %5311, %v5029
        %v5313 = vpop.permute.xlu0 %5312
        %5314 = vset.pattern.permute.xlu0 0
        %5315 = vperm.xlu0 %5314, %v5030
        %v5316 = vpop.permute.xlu0 %5315
        %5317 = vset.pattern.permute.xlu0 0
        %5318 = vperm.xlu0 %5317, %v5031
        %v5319 = vpop.permute.xlu0 %5318
        %5320 = vset.pattern.permute.xlu0 0
        %5321 = vperm.xlu0 %5320, %v5032
        %v5322 = vpop.permute.xlu0 %5321
        %5323 = vset.pattern.permute.xlu0 0
        %5324 = vperm.xlu0 %5323, %v5033
        %v5325 = vpop.permute.xlu0 %5324
        %5326 = vset.pattern.permute.xlu0 0
        %5327 = vperm.xlu0 %5326, %v5034
        %v5328 = vpop.permute.xlu0 %5327
        %5329 = vset.pattern.permute.xlu0 0
        %5330 = vperm.xlu0 %5329, %v5035
        %v5331 = vpop.permute.xlu0 %5330
        %5332 = vset.pattern.permute.xlu0 0
        %5333 = vperm.xlu0 %5332, %v5036
        %v5334 = vpop.permute.xlu0 %5333
        %5335 = vset.pattern.permute.xlu0 0
        %5336 = vperm.xlu0 %5335, %v5037
        %v5337 = vpop.permute.xlu0 %5336
        %5338 = vset.pattern.permute.xlu0 0
        %5339 = vperm.xlu0 %5338, %v5038
        %v5340 = vpop.permute.xlu0 %5339
        %5341 = vset.pattern.permute.xlu0 0
        %5342 = vperm.xlu0 %5341, %v5039
        %v5343 = vpop.permute.xlu0 %5342
        %5344 = vset.pattern.permute.xlu0 0
        %5345 = vperm.xlu0 %5344, %v5040
        %v5346 = vpop.permute.xlu0 %5345
        %5347 = vset.pattern.permute.xlu0 0
        %5348 = vperm.xlu0 %5347, %v5041
        %v5349 = vpop.permute.xlu0 %5348
        %5350 = vset.pattern.permute.xlu0 0
        %5351 = vperm.xlu0 %5350, %v5042
        %v5352 = vpop.permute.xlu0 %5351
        %5353 = vset.pattern.permute.xlu0 0
        %5354 = vperm.xlu0 %5353, %v5043
        %v5355 = vpop.permute.xlu0 %5354
        %5356 = vset.pattern.permute.xlu0 0
        %5357 = vperm.xlu0 %5356, %v5044
        %v5358 = vpop.permute.xlu0 %5357
        %5359 = vset.pattern.permute.xlu0 0
        %5360 = vperm.xlu0 %5359, %v5045
        %v5361 = vpop.permute.xlu0 %5360
        %5362 = vset.pattern.permute.xlu0 0
        %5363 = vperm.xlu0 %5362, %v5046
        %v5364 = vpop.permute.xlu0 %5363
        %5365 = vset.pattern.permute.xlu0 0
        %5366 = vperm.xlu0 %5365, %v5047
        %v5367 = vpop.permute.xlu0 %5366
        %5368 = vset.pattern.permute.xlu0 0
        %5369 = vperm.xlu0 %5368, %v5048
        %v5370 = vpop.permute.xlu0 %5369
        %5371 = vset.pattern.permute.xlu0 0
        %5372 = vperm.xlu0 %5371, %v5049
        %v5373 = vpop.permute.xlu0 %5372
        %5374 = vset.pattern.permute.xlu0 0
        %5375 = vperm.xlu0 %5374, %v5050
        %v5376 = vpop.permute.xlu0 %5375
        %5377 = vset.pattern.permute.xlu0 0
        %5378 = vperm.xlu0 %5377, %v5051
        %v5379 = vpop.permute.xlu0 %5378
        %5380 = vset.pattern.permute.xlu0 0
        %5381 = vperm.xlu0 %5380, %v5052
        %v5382 = vpop.permute.xlu0 %5381
        %5383 = vset.pattern.permute.xlu0 0
        %5384 = vperm.xlu0 %5383, %v5053
        %v5385 = vpop.permute.xlu0 %5384
        %5386 = vset.pattern.permute.xlu0 0
        %5387 = vperm.xlu0 %5386, %v5054
        %v5388 = vpop.permute.xlu0 %5387
        %5389 = vset.pattern.permute.xlu0 0
        %5390 = vperm.xlu0 %5389, %v5055
        %v5391 = vpop.permute.xlu0 %5390
        %5392 = vset.pattern.permute.xlu0 0
        %5393 = vperm.xlu0 %5392, %v5056
        %v5394 = vpop.permute.xlu0 %5393
        %5395 = vset.pattern.permute.xlu0 0
        %5396 = vperm.xlu0 %5395, %v5057
        %v5397 = vpop.permute.xlu0 %5396
        %5398 = vset.pattern.permute.xlu0 0
        %5399 = vperm.xlu0 %5398, %v5058
        %v5400 = vpop.permute.xlu0 %5399
        %5401 = vset.pattern.permute.xlu0 0
        %5402 = vperm.xlu0 %5401, %v5059
        %v5403 = vpop.permute.xlu0 %5402
        %5404 = vset.pattern.permute.xlu0 0
        %5405 = vperm.xlu0 %5404, %v5060
        %v5406 = vpop.permute.xlu0 %5405
        %5407 = vset.pattern.permute.xlu0 0
        %5408 = vperm.xlu0 %5407, %v5061
        %v5409 = vpop.permute.xlu0 %5408
        %5410 = vset.pattern.permute.xlu0 0
        %5411 = vperm.xlu0 %5410, %v5062
        %v5412 = vpop.permute.xlu0 %5411
        %5413 = vset.pattern.permute.xlu0 0
        %5414 = vperm.xlu0 %5413, %v5063
        %v5415 = vpop.permute.xlu0 %5414
        %5416 = vset.pattern.permute.xlu0 0
        %5417 = vperm.xlu0 %5416, %v5064
        %v5418 = vpop.permute.xlu0 %5417
        %5419 = vset.pattern.permute.xlu0 0
        %5420 = vperm.xlu0 %5419, %v5065
        %v5421 = vpop.permute.xlu0 %5420
        %5422 = vset.pattern.permute.xlu0 0
        %5423 = vperm.xlu0 %5422, %v5066
        %v5424 = vpop.permute.xlu0 %5423
        %5425 = vset.pattern.permute.xlu0 0
        %5426 = vperm.xlu0 %5425, %v5067
        %v5427 = vpop.permute.xlu0 %5426
        %5428 = vset.pattern.permute.xlu0 0
        %5429 = vperm.xlu0 %5428, %v5068
        %v5430 = vpop.permute.xlu0 %5429
        %5431 = vset.pattern.permute.xlu0 0
        %5432 = vperm.xlu0 %5431, %v5069
        %v5433 = vpop.permute.xlu0 %5432
        %5434 = vset.pattern.permute.xlu0 0
        %5435 = vperm.xlu0 %5434, %v5070
        %v5436 = vpop.permute.xlu0 %5435
        %5437 = vset.pattern.permute.xlu0 0
        %5438 = vperm.xlu0 %5437, %v5071
        %v5439 = vpop.permute.xlu0 %5438
        %5440 = vset.pattern.permute.xlu0 0
        %5441 = vperm.xlu0 %5440, %v5072
        %v5442 = vpop.permute.xlu0 %5441
        %5443 = vset.pattern.permute.xlu0 0
        %5444 = vperm.xlu0 %5443, %v5073
        %v5445 = vpop.permute.xlu0 %5444
        %5446 = vset.pattern.permute.xlu0 0
        %5447 = vperm.xlu0 %5446, %v5074
        %v5448 = vpop.permute.xlu0 %5447
        %5449 = vset.pattern.permute.xlu0 0
        %5450 = vperm.xlu0 %5449, %v5075
        %v5451 = vpop.permute.xlu0 %5450
        %5452 = vset.pattern.permute.xlu0 0
        %5453 = vperm.xlu0 %5452, %v5076
        %v5454 = vpop.permute.xlu0 %5453
        %5455 = vset.pattern.permute.xlu0 0
        %5456 = vperm.xlu0 %5455, %v5077
        %v5457 = vpop.permute.xlu0 %5456
        %5458 = vset.pattern.permute.xlu0 0
        %5459 = vperm.xlu0 %5458, %v5078
        %v5460 = vpop.permute.xlu0 %5459
        %5461 = vset.pattern.permute.xlu0 0
        %5462 = vperm.xlu0 %5461, %v5079
        %v5463 = vpop.permute.xlu0 %5462
        %vm5464 = vcmp.eq.s32.totalorder %v5082, 1
        %vm5465 = vcmp.eq.s32.totalorder %v5085, 1
        %vm5466 = vcmp.eq.s32.totalorder %v5088, 1
        %vm5467 = vcmp.eq.s32.totalorder %v5091, 1
        %vm5468 = vcmp.eq.s32.totalorder %v5094, 1
        %vm5469 = vcmp.eq.s32.totalorder %v5097, 1
        %vm5470 = vcmp.eq.s32.totalorder %v5100, 1
        %vm5471 = vcmp.eq.s32.totalorder %v5103, 1
        %vm5472 = vcmp.eq.s32.totalorder %v5106, 1
        %vm5473 = vcmp.eq.s32.totalorder %v5109, 1
        %vm5474 = vcmp.eq.s32.totalorder %v5112, 1
        %vm5475 = vcmp.eq.s32.totalorder %v5115, 1
        %vm5476 = vcmp.eq.s32.totalorder %v5118, 1
        %vm5477 = vcmp.eq.s32.totalorder %v5121, 1
        %vm5478 = vcmp.eq.s32.totalorder %v5124, 1
        %vm5479 = vcmp.eq.s32.totalorder %v5127, 1
        %vm5480 = vcmp.eq.s32.totalorder %v5130, 1
        %vm5481 = vcmp.eq.s32.totalorder %v5133, 1
        %vm5482 = vcmp.eq.s32.totalorder %v5136, 1
        %vm5483 = vcmp.eq.s32.totalorder %v5139, 1
        %vm5484 = vcmp.eq.s32.totalorder %v5142, 1
        %vm5485 = vcmp.eq.s32.totalorder %v5145, 1
        %vm5486 = vcmp.eq.s32.totalorder %v5148, 1
        %vm5487 = vcmp.eq.s32.totalorder %v5151, 1
        %vm5488 = vcmp.eq.s32.totalorder %v5154, 1
        %vm5489 = vcmp.eq.s32.totalorder %v5157, 1
        %vm5490 = vcmp.eq.s32.totalorder %v5160, 1
        %vm5491 = vcmp.eq.s32.totalorder %v5163, 1
        %vm5492 = vcmp.eq.s32.totalorder %v5166, 1
        %vm5493 = vcmp.eq.s32.totalorder %v5169, 1
        %vm5494 = vcmp.eq.s32.totalorder %v5172, 1
        %vm5495 = vcmp.eq.s32.totalorder %v5175, 1
        %vm5496 = vcmp.eq.s32.totalorder %v5178, 1
        %vm5497 = vcmp.eq.s32.totalorder %v5181, 1
        %vm5498 = vcmp.eq.s32.totalorder %v5184, 1
        %vm5499 = vcmp.eq.s32.totalorder %v5187, 1
        %vm5500 = vcmp.eq.s32.totalorder %v5190, 1
        %vm5501 = vcmp.eq.s32.totalorder %v5193, 1
        %vm5502 = vcmp.eq.s32.totalorder %v5196, 1
        %vm5503 = vcmp.eq.s32.totalorder %v5199, 1
        %vm5504 = vcmp.eq.s32.totalorder %v5202, 1
        %vm5505 = vcmp.eq.s32.totalorder %v5205, 1
        %vm5506 = vcmp.eq.s32.totalorder %v5208, 1
        %vm5507 = vcmp.eq.s32.totalorder %v5211, 1
        %vm5508 = vcmp.eq.s32.totalorder %v5214, 1
        %vm5509 = vcmp.eq.s32.totalorder %v5217, 1
        %vm5510 = vcmp.eq.s32.totalorder %v5220, 1
        %vm5511 = vcmp.eq.s32.totalorder %v5223, 1
        %vm5512 = vcmp.eq.s32.totalorder %v5226, 1
        %vm5513 = vcmp.eq.s32.totalorder %v5229, 1
        %vm5514 = vcmp.eq.s32.totalorder %v5232, 1
        %vm5515 = vcmp.eq.s32.totalorder %v5235, 1
        %vm5516 = vcmp.eq.s32.totalorder %v5238, 1
        %vm5517 = vcmp.eq.s32.totalorder %v5241, 1
        %vm5518 = vcmp.eq.s32.totalorder %v5244, 1
        %vm5519 = vcmp.eq.s32.totalorder %v5247, 1
        %vm5520 = vcmp.eq.s32.totalorder %v5250, 1
        %vm5521 = vcmp.eq.s32.totalorder %v5253, 1
        %vm5522 = vcmp.eq.s32.totalorder %v5256, 1
        %vm5523 = vcmp.eq.s32.totalorder %v5259, 1
        %vm5524 = vcmp.eq.s32.totalorder %v5262, 1
        %vm5525 = vcmp.eq.s32.totalorder %v5265, 1
        %vm5526 = vcmp.eq.s32.totalorder %v5268, 1
        %vm5527 = vcmp.eq.s32.totalorder %v5271, 1
        %vm5528 = vcmp.eq.s32.totalorder %v5274, 1
        %vm5529 = vcmp.eq.s32.totalorder %v5277, 1
        %vm5530 = vcmp.eq.s32.totalorder %v5280, 1
        %vm5531 = vcmp.eq.s32.totalorder %v5283, 1
        %vm5532 = vcmp.eq.s32.totalorder %v5286, 1
        %vm5533 = vcmp.eq.s32.totalorder %v5289, 1
        %vm5534 = vcmp.eq.s32.totalorder %v5292, 1
        %vm5535 = vcmp.eq.s32.totalorder %v5295, 1
        %vm5536 = vcmp.eq.s32.totalorder %v5298, 1
        %vm5537 = vcmp.eq.s32.totalorder %v5301, 1
        %vm5538 = vcmp.eq.s32.totalorder %v5304, 1
        %vm5539 = vcmp.eq.s32.totalorder %v5307, 1
        %vm5540 = vcmp.eq.s32.totalorder %v5310, 1
        %vm5541 = vcmp.eq.s32.totalorder %v5313, 1
        %vm5542 = vcmp.eq.s32.totalorder %v5316, 1
        %vm5543 = vcmp.eq.s32.totalorder %v5319, 1
        %vm5544 = vcmp.eq.s32.totalorder %v5322, 1
        %vm5545 = vcmp.eq.s32.totalorder %v5325, 1
        %vm5546 = vcmp.eq.s32.totalorder %v5328, 1
        %vm5547 = vcmp.eq.s32.totalorder %v5331, 1
        %vm5548 = vcmp.eq.s32.totalorder %v5334, 1
        %vm5549 = vcmp.eq.s32.totalorder %v5337, 1
        %vm5550 = vcmp.eq.s32.totalorder %v5340, 1
        %vm5551 = vcmp.eq.s32.totalorder %v5343, 1
        %vm5552 = vcmp.eq.s32.totalorder %v5346, 1
        %vm5553 = vcmp.eq.s32.totalorder %v5349, 1
        %vm5554 = vcmp.eq.s32.totalorder %v5352, 1
        %vm5555 = vcmp.eq.s32.totalorder %v5355, 1
        %vm5556 = vcmp.eq.s32.totalorder %v5358, 1
        %vm5557 = vcmp.eq.s32.totalorder %v5361, 1
        %vm5558 = vcmp.eq.s32.totalorder %v5364, 1
        %vm5559 = vcmp.eq.s32.totalorder %v5367, 1
        %vm5560 = vcmp.eq.s32.totalorder %v5370, 1
        %vm5561 = vcmp.eq.s32.totalorder %v5373, 1
        %vm5562 = vcmp.eq.s32.totalorder %v5376, 1
        %vm5563 = vcmp.eq.s32.totalorder %v5379, 1
        %vm5564 = vcmp.eq.s32.totalorder %v5382, 1
        %vm5565 = vcmp.eq.s32.totalorder %v5385, 1
        %vm5566 = vcmp.eq.s32.totalorder %v5388, 1
        %vm5567 = vcmp.eq.s32.totalorder %v5391, 1
        %vm5568 = vcmp.eq.s32.totalorder %v5394, 1
        %vm5569 = vcmp.eq.s32.totalorder %v5397, 1
        %vm5570 = vcmp.eq.s32.totalorder %v5400, 1
        %vm5571 = vcmp.eq.s32.totalorder %v5403, 1
        %vm5572 = vcmp.eq.s32.totalorder %v5406, 1
        %vm5573 = vcmp.eq.s32.totalorder %v5409, 1
        %vm5574 = vcmp.eq.s32.totalorder %v5412, 1
        %vm5575 = vcmp.eq.s32.totalorder %v5415, 1
        %vm5576 = vcmp.eq.s32.totalorder %v5418, 1
        %vm5577 = vcmp.eq.s32.totalorder %v5421, 1
        %vm5578 = vcmp.eq.s32.totalorder %v5424, 1
        %vm5579 = vcmp.eq.s32.totalorder %v5427, 1
        %vm5580 = vcmp.eq.s32.totalorder %v5430, 1
        %vm5581 = vcmp.eq.s32.totalorder %v5433, 1
        %vm5582 = vcmp.eq.s32.totalorder %v5436, 1
        %vm5583 = vcmp.eq.s32.totalorder %v5439, 1
        %vm5584 = vcmp.eq.s32.totalorder %v5442, 1
        %vm5585 = vcmp.eq.s32.totalorder %v5445, 1
        %vm5586 = vcmp.eq.s32.totalorder %v5448, 1
        %vm5587 = vcmp.eq.s32.totalorder %v5451, 1
        %vm5588 = vcmp.eq.s32.totalorder %v5454, 1
        %vm5589 = vcmp.eq.s32.totalorder %v5457, 1
        %vm5590 = vcmp.eq.s32.totalorder %v5460, 1
        %vm5591 = vcmp.eq.s32.totalorder %v5463, 1
        %v5592 = vsel %vm5464, %v4824, 0.0
        %v5593 = vsel %vm5465, %v4825, 0.0
        %v5594 = vsel %vm5466, %v4826, 0.0
        %v5595 = vsel %vm5467, %v4827, 0.0
        %v5596 = vsel %vm5468, %v4828, 0.0
        %v5597 = vsel %vm5469, %v4829, 0.0
        %v5598 = vsel %vm5470, %v4830, 0.0
        %v5599 = vsel %vm5471, %v4831, 0.0
        %v5600 = vsel %vm5472, %v4832, 0.0
        %v5601 = vsel %vm5473, %v4833, 0.0
        %v5602 = vsel %vm5474, %v4834, 0.0
        %v5603 = vsel %vm5475, %v4835, 0.0
        %v5604 = vsel %vm5476, %v4836, 0.0
        %v5605 = vsel %vm5477, %v4837, 0.0
        %v5606 = vsel %vm5478, %v4838, 0.0
        %v5607 = vsel %vm5479, %v4839, 0.0
        %v5608 = vsel %vm5480, %v4840, 0.0
        %v5609 = vsel %vm5481, %v4841, 0.0
        %v5610 = vsel %vm5482, %v4842, 0.0
        %v5611 = vsel %vm5483, %v4843, 0.0
        %v5612 = vsel %vm5484, %v4844, 0.0
        %v5613 = vsel %vm5485, %v4845, 0.0
        %v5614 = vsel %vm5486, %v4846, 0.0
        %v5615 = vsel %vm5487, %v4847, 0.0
        %v5616 = vsel %vm5488, %v4848, 0.0
        %v5617 = vsel %vm5489, %v4849, 0.0
        %v5618 = vsel %vm5490, %v4850, 0.0
        %v5619 = vsel %vm5491, %v4851, 0.0
        %v5620 = vsel %vm5492, %v4852, 0.0
        %v5621 = vsel %vm5493, %v4853, 0.0
        %v5622 = vsel %vm5494, %v4854, 0.0
        %v5623 = vsel %vm5495, %v4855, 0.0
        %v5624 = vsel %vm5496, %v4856, 0.0
        %v5625 = vsel %vm5497, %v4857, 0.0
        %v5626 = vsel %vm5498, %v4858, 0.0
        %v5627 = vsel %vm5499, %v4859, 0.0
        %v5628 = vsel %vm5500, %v4860, 0.0
        %v5629 = vsel %vm5501, %v4861, 0.0
        %v5630 = vsel %vm5502, %v4862, 0.0
        %v5631 = vsel %vm5503, %v4863, 0.0
        %v5632 = vsel %vm5504, %v4864, 0.0
        %v5633 = vsel %vm5505, %v4865, 0.0
        %v5634 = vsel %vm5506, %v4866, 0.0
        %v5635 = vsel %vm5507, %v4867, 0.0
        %v5636 = vsel %vm5508, %v4868, 0.0
        %v5637 = vsel %vm5509, %v4869, 0.0
        %v5638 = vsel %vm5510, %v4870, 0.0
        %v5639 = vsel %vm5511, %v4871, 0.0
        %v5640 = vsel %vm5512, %v4872, 0.0
        %v5641 = vsel %vm5513, %v4873, 0.0
        %v5642 = vsel %vm5514, %v4874, 0.0
        %v5643 = vsel %vm5515, %v4875, 0.0
        %v5644 = vsel %vm5516, %v4876, 0.0
        %v5645 = vsel %vm5517, %v4877, 0.0
        %v5646 = vsel %vm5518, %v4878, 0.0
        %v5647 = vsel %vm5519, %v4879, 0.0
        %v5648 = vsel %vm5520, %v4880, 0.0
        %v5649 = vsel %vm5521, %v4881, 0.0
        %v5650 = vsel %vm5522, %v4882, 0.0
        %v5651 = vsel %vm5523, %v4883, 0.0
        %v5652 = vsel %vm5524, %v4884, 0.0
        %v5653 = vsel %vm5525, %v4885, 0.0
        %v5654 = vsel %vm5526, %v4886, 0.0
        %v5655 = vsel %vm5527, %v4887, 0.0
        %v5656 = vsel %vm5528, %v4888, 0.0
        %v5657 = vsel %vm5529, %v4889, 0.0
        %v5658 = vsel %vm5530, %v4890, 0.0
        %v5659 = vsel %vm5531, %v4891, 0.0
        %v5660 = vsel %vm5532, %v4892, 0.0
        %v5661 = vsel %vm5533, %v4893, 0.0
        %v5662 = vsel %vm5534, %v4894, 0.0
        %v5663 = vsel %vm5535, %v4895, 0.0
        %v5664 = vsel %vm5536, %v4896, 0.0
        %v5665 = vsel %vm5537, %v4897, 0.0
        %v5666 = vsel %vm5538, %v4898, 0.0
        %v5667 = vsel %vm5539, %v4899, 0.0
        %v5668 = vsel %vm5540, %v4900, 0.0
        %v5669 = vsel %vm5541, %v4901, 0.0
        %v5670 = vsel %vm5542, %v4902, 0.0
        %v5671 = vsel %vm5543, %v4903, 0.0
        %v5672 = vsel %vm5544, %v4904, 0.0
        %v5673 = vsel %vm5545, %v4905, 0.0
        %v5674 = vsel %vm5546, %v4906, 0.0
        %v5675 = vsel %vm5547, %v4907, 0.0
        %v5676 = vsel %vm5548, %v4908, 0.0
        %v5677 = vsel %vm5549, %v4909, 0.0
        %v5678 = vsel %vm5550, %v4910, 0.0
        %v5679 = vsel %vm5551, %v4911, 0.0
        %v5680 = vsel %vm5552, %v4912, 0.0
        %v5681 = vsel %vm5553, %v4913, 0.0
        %v5682 = vsel %vm5554, %v4914, 0.0
        %v5683 = vsel %vm5555, %v4915, 0.0
        %v5684 = vsel %vm5556, %v4916, 0.0
        %v5685 = vsel %vm5557, %v4917, 0.0
        %v5686 = vsel %vm5558, %v4918, 0.0
        %v5687 = vsel %vm5559, %v4919, 0.0
        %v5688 = vsel %vm5560, %v4920, 0.0
        %v5689 = vsel %vm5561, %v4921, 0.0
        %v5690 = vsel %vm5562, %v4922, 0.0
        %v5691 = vsel %vm5563, %v4923, 0.0
        %v5692 = vsel %vm5564, %v4924, 0.0
        %v5693 = vsel %vm5565, %v4925, 0.0
        %v5694 = vsel %vm5566, %v4926, 0.0
        %v5695 = vsel %vm5567, %v4927, 0.0
        %v5696 = vsel %vm5568, %v4928, 0.0
        %v5697 = vsel %vm5569, %v4929, 0.0
        %v5698 = vsel %vm5570, %v4930, 0.0
        %v5699 = vsel %vm5571, %v4931, 0.0
        %v5700 = vsel %vm5572, %v4932, 0.0
        %v5701 = vsel %vm5573, %v4933, 0.0
        %v5702 = vsel %vm5574, %v4934, 0.0
        %v5703 = vsel %vm5575, %v4935, 0.0
        %v5704 = vsel %vm5576, %v4936, 0.0
        %v5705 = vsel %vm5577, %v4937, 0.0
        %v5706 = vsel %vm5578, %v4938, 0.0
        %v5707 = vsel %vm5579, %v4939, 0.0
        %v5708 = vsel %vm5580, %v4940, 0.0
        %v5709 = vsel %vm5581, %v4941, 0.0
        %v5710 = vsel %vm5582, %v4942, 0.0
        %v5711 = vsel %vm5583, %v4943, 0.0
        %v5712 = vsel %vm5584, %v4944, 0.0
        %v5713 = vsel %vm5585, %v4945, 0.0
        %v5714 = vsel %vm5586, %v4946, 0.0
        %v5715 = vsel %vm5587, %v4947, 0.0
        %v5716 = vsel %vm5588, %v4948, 0.0
        %v5717 = vsel %vm5589, %v4949, 0.0
        %v5718 = vsel %vm5590, %v4950, 0.0
        %v5719 = vsel %vm5591, %v4951, 0.0
        %v5720 = vadd.f32 %v5592, %v5593
        %v5721 = vadd.f32 %v5720, %v5594
        %v5722 = vadd.f32 %v5721, %v5595
        %v5723 = vadd.f32 %v5722, %v5596
        %v5724 = vadd.f32 %v5723, %v5597
        %v5725 = vadd.f32 %v5724, %v5598
        %v5726 = vadd.f32 %v5725, %v5599
        %v5727 = vadd.f32 %v5726, %v5600
        %v5728 = vadd.f32 %v5727, %v5601
        %v5729 = vadd.f32 %v5728, %v5602
        %v5730 = vadd.f32 %v5729, %v5603
        %v5731 = vadd.f32 %v5730, %v5604
        %v5732 = vadd.f32 %v5731, %v5605
        %v5733 = vadd.f32 %v5732, %v5606
        %v5734 = vadd.f32 %v5733, %v5607
        %v5735 = vrot.slane %v5734, 4
        %v5736 = vadd.f32 %v5734, %v5735
        %v5737 = vrot.slane %v5736, 2
        %v5738 = vadd.f32 %v5736, %v5737
        %v5739 = vrot.slane %v5738, 1
        %v5740 = vadd.f32 %v5738, %v5739
        %v5741 = vadd.f32 %v5608, %v5609
        %v5742 = vadd.f32 %v5741, %v5610
        %v5743 = vadd.f32 %v5742, %v5611
        %v5744 = vadd.f32 %v5743, %v5612
        %v5745 = vadd.f32 %v5744, %v5613
        %v5746 = vadd.f32 %v5745, %v5614
        %v5747 = vadd.f32 %v5746, %v5615
        %v5748 = vadd.f32 %v5747, %v5616
        %v5749 = vadd.f32 %v5748, %v5617
        %v5750 = vadd.f32 %v5749, %v5618
        %v5751 = vadd.f32 %v5750, %v5619
        %v5752 = vadd.f32 %v5751, %v5620
        %v5753 = vadd.f32 %v5752, %v5621
        %v5754 = vadd.f32 %v5753, %v5622
        %v5755 = vadd.f32 %v5754, %v5623
        %v5756 = vrot.slane %v5755, 4
        %v5757 = vadd.f32 %v5755, %v5756
        %v5758 = vrot.slane %v5757, 2
        %v5759 = vadd.f32 %v5757, %v5758
        %v5760 = vrot.slane %v5759, 1
        %v5761 = vadd.f32 %v5759, %v5760
        %v5762 = vadd.f32 %v5624, %v5625
        %v5763 = vadd.f32 %v5762, %v5626
        %v5764 = vadd.f32 %v5763, %v5627
        %v5765 = vadd.f32 %v5764, %v5628
        %v5766 = vadd.f32 %v5765, %v5629
        %v5767 = vadd.f32 %v5766, %v5630
        %v5768 = vadd.f32 %v5767, %v5631
        %v5769 = vadd.f32 %v5768, %v5632
        %v5770 = vadd.f32 %v5769, %v5633
        %v5771 = vadd.f32 %v5770, %v5634
        %v5772 = vadd.f32 %v5771, %v5635
        %v5773 = vadd.f32 %v5772, %v5636
        %v5774 = vadd.f32 %v5773, %v5637
        %v5775 = vadd.f32 %v5774, %v5638
        %v5776 = vadd.f32 %v5775, %v5639
        %v5777 = vrot.slane %v5776, 4
        %v5778 = vadd.f32 %v5776, %v5777
        %v5779 = vrot.slane %v5778, 2
        %v5780 = vadd.f32 %v5778, %v5779
        %v5781 = vrot.slane %v5780, 1
        %v5782 = vadd.f32 %v5780, %v5781
        %v5783 = vadd.f32 %v5640, %v5641
        %v5784 = vadd.f32 %v5783, %v5642
        %v5785 = vadd.f32 %v5784, %v5643
        %v5786 = vadd.f32 %v5785, %v5644
        %v5787 = vadd.f32 %v5786, %v5645
        %v5788 = vadd.f32 %v5787, %v5646
        %v5789 = vadd.f32 %v5788, %v5647
        %v5790 = vadd.f32 %v5789, %v5648
        %v5791 = vadd.f32 %v5790, %v5649
        %v5792 = vadd.f32 %v5791, %v5650
        %v5793 = vadd.f32 %v5792, %v5651
        %v5794 = vadd.f32 %v5793, %v5652
        %v5795 = vadd.f32 %v5794, %v5653
        %v5796 = vadd.f32 %v5795, %v5654
        %v5797 = vadd.f32 %v5796, %v5655
        %v5798 = vrot.slane %v5797, 4
        %v5799 = vadd.f32 %v5797, %v5798
        %v5800 = vrot.slane %v5799, 2
        %v5801 = vadd.f32 %v5799, %v5800
        %v5802 = vrot.slane %v5801, 1
        %v5803 = vadd.f32 %v5801, %v5802
        %v5804 = vadd.f32 %v5656, %v5657
        %v5805 = vadd.f32 %v5804, %v5658
        %v5806 = vadd.f32 %v5805, %v5659
        %v5807 = vadd.f32 %v5806, %v5660
        %v5808 = vadd.f32 %v5807, %v5661
        %v5809 = vadd.f32 %v5808, %v5662
        %v5810 = vadd.f32 %v5809, %v5663
        %v5811 = vadd.f32 %v5810, %v5664
        %v5812 = vadd.f32 %v5811, %v5665
        %v5813 = vadd.f32 %v5812, %v5666
        %v5814 = vadd.f32 %v5813, %v5667
        %v5815 = vadd.f32 %v5814, %v5668
        %v5816 = vadd.f32 %v5815, %v5669
        %v5817 = vadd.f32 %v5816, %v5670
        %v5818 = vadd.f32 %v5817, %v5671
        %v5819 = vrot.slane %v5818, 4
        %v5820 = vadd.f32 %v5818, %v5819
        %v5821 = vrot.slane %v5820, 2
        %v5822 = vadd.f32 %v5820, %v5821
        %v5823 = vrot.slane %v5822, 1
        %v5824 = vadd.f32 %v5822, %v5823
        %v5825 = vadd.f32 %v5672, %v5673
        %v5826 = vadd.f32 %v5825, %v5674
        %v5827 = vadd.f32 %v5826, %v5675
        %v5828 = vadd.f32 %v5827, %v5676
        %v5829 = vadd.f32 %v5828, %v5677
        %v5830 = vadd.f32 %v5829, %v5678
        %v5831 = vadd.f32 %v5830, %v5679
        %v5832 = vadd.f32 %v5831, %v5680
        %v5833 = vadd.f32 %v5832, %v5681
        %v5834 = vadd.f32 %v5833, %v5682
        %v5835 = vadd.f32 %v5834, %v5683
        %v5836 = vadd.f32 %v5835, %v5684
        %v5837 = vadd.f32 %v5836, %v5685
        %v5838 = vadd.f32 %v5837, %v5686
        %v5839 = vadd.f32 %v5838, %v5687
        %v5840 = vrot.slane %v5839, 4
        %v5841 = vadd.f32 %v5839, %v5840
        %v5842 = vrot.slane %v5841, 2
        %v5843 = vadd.f32 %v5841, %v5842
        %v5844 = vrot.slane %v5843, 1
        %v5845 = vadd.f32 %v5843, %v5844
        %v5846 = vadd.f32 %v5688, %v5689
        %v5847 = vadd.f32 %v5846, %v5690
        %v5848 = vadd.f32 %v5847, %v5691
        %v5849 = vadd.f32 %v5848, %v5692
        %v5850 = vadd.f32 %v5849, %v5693
        %v5851 = vadd.f32 %v5850, %v5694
        %v5852 = vadd.f32 %v5851, %v5695
        %v5853 = vadd.f32 %v5852, %v5696
        %v5854 = vadd.f32 %v5853, %v5697
        %v5855 = vadd.f32 %v5854, %v5698
        %v5856 = vadd.f32 %v5855, %v5699
        %v5857 = vadd.f32 %v5856, %v5700
        %v5858 = vadd.f32 %v5857, %v5701
        %v5859 = vadd.f32 %v5858, %v5702
        %v5860 = vadd.f32 %v5859, %v5703
        %v5861 = vrot.slane %v5860, 4
        %v5862 = vadd.f32 %v5860, %v5861
        %v5863 = vrot.slane %v5862, 2
        %v5864 = vadd.f32 %v5862, %v5863
        %v5865 = vrot.slane %v5864, 1
        %v5866 = vadd.f32 %v5864, %v5865
        %v5867 = vadd.f32 %v5704, %v5705
        %v5868 = vadd.f32 %v5867, %v5706
        %v5869 = vadd.f32 %v5868, %v5707
        %v5870 = vadd.f32 %v5869, %v5708
        %v5871 = vadd.f32 %v5870, %v5709
        %v5872 = vadd.f32 %v5871, %v5710
        %v5873 = vadd.f32 %v5872, %v5711
        %v5874 = vadd.f32 %v5873, %v5712
        %v5875 = vadd.f32 %v5874, %v5713
        %v5876 = vadd.f32 %v5875, %v5714
        %v5877 = vadd.f32 %v5876, %v5715
        %v5878 = vadd.f32 %v5877, %v5716
        %v5879 = vadd.f32 %v5878, %v5717
        %v5880 = vadd.f32 %v5879, %v5718
        %v5881 = vadd.f32 %v5880, %v5719
        %v5882 = vrot.slane %v5881, 4
        %v5883 = vadd.f32 %v5881, %v5882
        %v5884 = vrot.slane %v5883, 2
        %v5885 = vadd.f32 %v5883, %v5884
        %v5886 = vrot.slane %v5885, 1
        %v5887 = vadd.f32 %v5885, %v5886
        %v5888 = vadd.f32 %v4559, %v5740
        %v5889 = vadd.f32 %v4560, %v5761
        %v5890 = vadd.f32 %v4561, %v5782
        %v5891 = vadd.f32 %v4562, %v5803
        %v5892 = vadd.f32 %v4563, %v5824
        %v5893 = vadd.f32 %v4564, %v5845
        %v5894 = vadd.f32 %v4565, %v5866
        %v5895 = vadd.f32 %v4566, %v5887
        %v5896 = vmul.f32 %v5888, %v5888
        %v5897 = vmul.f32 %v5889, %v5889
        %v5898 = vmul.f32 %v5890, %v5890
        %v5899 = vmul.f32 %v5891, %v5891
        %v5900 = vmul.f32 %v5892, %v5892
        %v5901 = vmul.f32 %v5893, %v5893
        %v5902 = vmul.f32 %v5894, %v5894
        %v5903 = vmul.f32 %v5895, %v5895
        %v5912 = vsel %vm3089, %v5897, %v5896
        %v5913 = vsel %vm3091, %v5898, %v5912
        %v5914 = vsel %vm3093, %v5899, %v5913
        %v5915 = vsel %vm3095, %v5900, %v5914
        %v5916 = vsel %vm3097, %v5901, %v5915
        %v5917 = vsel %vm3099, %v5902, %v5916
        %v5918 = vsel %vm3101, %v5903, %v5917
        %5920 = vadd.xlane.f32.xlu0 %v5918
        %v5921 = vpop.xlane.xlu0 %5920
        %v5922 = vmax.f32 %v5921, 1e-24
        %v5923 = vrsqrt.pop %v5922
        %v5925 = vrot.slane %v5923, 1
        %v5926 = vrot.slane %v5923, 2
        %v5927 = vrot.slane %v5923, 3
        %v5928 = vrot.slane %v5923, 4
        %v5929 = vrot.slane %v5923, 5
        %v5930 = vrot.slane %v5923, 6
        %v5931 = vrot.slane %v5923, 7
        %v5940 = vmul.f32 %v5888, %v5923
        %v5941 = vmul.f32 %v5889, %v5925
        %v5942 = vmul.f32 %v5890, %v5926
        %v5943 = vmul.f32 %v5891, %v5927
        %v5944 = vmul.f32 %v5892, %v5928
        %v5945 = vmul.f32 %v5893, %v5929
        %v5946 = vmul.f32 %v5894, %v5930
        %v5947 = vmul.f32 %v5895, %v5931
        %v5956 = vrot.slane %v5941, 7
        %v5957 = vsel %vm3089, %v5956, %v5940
        %v5958 = vrot.slane %v5942, 6
        %v5959 = vsel %vm3091, %v5958, %v5957
        %v5960 = vrot.slane %v5943, 5
        %v5961 = vsel %vm3093, %v5960, %v5959
        %v5962 = vrot.slane %v5944, 4
        %v5963 = vsel %vm3095, %v5962, %v5961
        %v5964 = vrot.slane %v5945, 3
        %v5965 = vsel %vm3097, %v5964, %v5963
        %v5966 = vrot.slane %v5946, 2
        %v5967 = vsel %vm3099, %v5966, %v5965
        %v5968 = vrot.slane %v5947, 1
        %v5969 = vsel %vm3101, %v5968, %v5967
        %s5971 = scalar_lea.vmem [#allocation3], %s282
        %5972 = vst [vmem:[%s5971] sm:$0xff] %v5969
        %p5973 = scmp.eq.s32.totalorder %s22, 1
        // Predicated region
        $region45: #{_lambda_.1} parent=35 // pred_check
          %p5974 = pneg %p5973
        $region46: #{_lambda_.1} parent=35 // pred_check_branch
          %5976 = sbr.rel (%p5974) target = $region48
        $region47: #{_lambda_.1} parent=35 // pred_region
          %v5977 = vld [vmem:[#allocation2] sm:$0xff]
          %v5978 = vld [vmem:[#allocation2 + $0x8] sm:$0xff]
          %v5979 = vld [vmem:[#allocation3] sm:$0xff]
          %v5980 = vld [vmem:[#allocation3 + $0x8] sm:$0xff]
          %5981 = vmatprep.subr.mxu0 0.0
          %5982 = vmatpush1.xpose.msra.mxu0 %v5977
          %5983 = vmatprep.subr.mxu0 0.0
          %5984 = vmatpush1.xpose.msra.mxu0 %v5978
          %5985 = vmatprep.subr.mxu0 0.0
          %5986 = vmatpush1.xpose.msra.mxu0 0.0
          %5987 = vmatprep.subr.mxu0 0.0
          %5988 = vmatpush1.xpose.msra.mxu0 0.0
          %5989 = vmatprep.subr.mxu0 0.0
          %5990 = vmatpush1.xpose.msra.mxu0 0.0
          %5991 = vmatprep.subr.mxu0 0.0
          %5992 = vmatpush1.xpose.msra.mxu0 0.0
          %5993 = vmatprep.subr.mxu0 0.0
          %5994 = vmatpush1.xpose.msra.mxu0 0.0
          %5995 = vmatprep.subr.mxu0 0.0
          %5996 = vmatpush1.xpose.msra.mxu0 0.0
          %5997 = vmatprep.subr.mxu0 0.0
          %5998 = vmatpush1.xpose.msra.mxu0 0.0
          %5999 = vmatprep.subr.mxu0 0.0
          %6000 = vmatpush1.xpose.msra.mxu0 0.0
          %6001 = vmatprep.subr.mxu0 0.0
          %6002 = vmatpush1.xpose.msra.mxu0 0.0
          %6003 = vmatprep.subr.mxu0 0.0
          %6004 = vmatpush1.xpose.msra.mxu0 0.0
          %6005 = vmatprep.subr.mxu0 0.0
          %6006 = vmatpush1.xpose.msra.mxu0 0.0
          %6007 = vmatprep.subr.mxu0 0.0
          %6008 = vmatpush1.xpose.msra.mxu0 0.0
          %6009 = vmatprep.subr.mxu0 0.0
          %6010 = vmatpush1.xpose.msra.mxu0 0.0
          %6011 = vmatprep.subr.mxu0 0.0
          %6012 = vmatpush1.xpose.msra.mxu0 0.0
          %6013 = vmatprep.subr.mxu0 0.0
          %6014 = vmatpush1.xpose.msra.mxu0 0.0
          %6015 = vmatprep.subr.mxu0 0.0
          %6016 = vmatpush1.xpose.msra.mxu0 0.0
          %6017 = vmatprep.subr.mxu0 0.0
          %6018 = vmatpush1.xpose.msra.mxu0 0.0
          %6019 = vmatprep.subr.mxu0 0.0
          %6020 = vmatpush1.xpose.msra.mxu0 0.0
          %6021 = vmatprep.subr.mxu0 0.0
          %6022 = vmatpush1.xpose.msra.mxu0 0.0
          %6023 = vmatprep.subr.mxu0 0.0
          %6024 = vmatpush1.xpose.msra.mxu0 0.0
          %6025 = vmatprep.subr.mxu0 0.0
          %6026 = vmatpush1.xpose.msra.mxu0 0.0
          %6027 = vmatprep.subr.mxu0 0.0
          %6028 = vmatpush1.xpose.msra.mxu0 0.0
          %6029 = vmatprep.subr.mxu0 0.0
          %6030 = vmatpush1.xpose.msra.mxu0 0.0
          %6031 = vmatprep.subr.mxu0 0.0
          %6032 = vmatpush1.xpose.msra.mxu0 0.0
          %6033 = vmatprep.subr.mxu0 0.0
          %6034 = vmatpush1.xpose.msra.mxu0 0.0
          %6035 = vmatprep.subr.mxu0 0.0
          %6036 = vmatpush1.xpose.msra.mxu0 0.0
          %6037 = vmatprep.subr.mxu0 0.0
          %6038 = vmatpush1.xpose.msra.mxu0 0.0
          %6039 = vmatprep.subr.mxu0 0.0
          %6040 = vmatpush1.xpose.msra.mxu0 0.0
          %6041 = vmatprep.subr.mxu0 0.0
          %6042 = vmatpush1.xpose.msra.mxu0 0.0
          %6043 = vmatprep.subr.mxu0 0.0
          %6044 = vmatpush1.xpose.msra.mxu0 0.0
          %6045 = vmatprep.mubr.f32.mxu0 0.0
          %6046 = vmatmul.mubr.f32.gmra.mrb[0].mxu0 %v5979
          %v6047 = vpop.f32.mrb[0].mxu0
          %v6048 = vadd.f32 0.0, %v6047
          %v6049 = vpop.f32.mrb[0].mxu0
          %6050 = vmatprep.mubr.f32.mxu0 0.0
          %6051 = vmatmul.mubr.f32.gmra.mrb[0].mxu0 %v5980
          %v6052 = vpop.f32.mrb[0].mxu0
          %v6053 = vadd.f32 0.0, %v6052
          %v6054 = vpop.f32.mrb[0].mxu0
          %6055 = vdwg.mxu0
          %vm6056 = vcmask 130048
          %v6057 = vsel %vm6056, %v6048, -inf
          %6058 = vmax.xlane.f32.xlu0 %v6057
          %v6059 = vpop.xlane.xlu0 %6058
          %v6060 = vsel %vm6056, %v6053, -inf
          %6061 = vmax.xlane.f32.xlu0 %v6060
          %v6062 = vpop.xlane.xlu0 %6061
          %v6063 = vsub.f32 %v6048, %v6059
          %v6064 = vsub.f32 %v6053, %v6062
          %v6065 = vmul.f32 %v6063, 1.442695
          %v6066 = vpow.pop %v6065
          %v6067 = vmul.f32 %v6064, 1.442695
          %v6068 = vpow.pop %v6067
          %v6069 = vsel %vm6056, %v6066, 0.0
          %6070 = vadd.xlane.f32.xlu0 %v6069
          %v6071 = vpop.xlane.xlu0 %6070
          %v6072 = vsel %vm6056, %v6068, 0.0
          %6073 = vadd.xlane.f32.xlu0 %v6072
          %v6074 = vpop.xlane.xlu0 %6073
          %v6075 = vlog2.pop %v6071
          %v6076 = vmul.f32 %v6075, 0.6931472
          %v6077 = vlog2.pop %v6074
          %v6078 = vmul.f32 %v6077, 0.6931472
          %v6079 = vadd.f32 %v6076, %v6059
          %v6080 = vadd.f32 %v6078, %v6062
          %v6081 = vmul.f32 %v5979, %v5977
          %v6082 = vmul.f32 %v5980, %v5978
          %6083 = vadd.xlane.f32.xlu0 %v6081
          %v6084 = vpop.xlane.xlu0 %6083
          %6085 = vadd.xlane.f32.xlu0 %v6082
          %v6086 = vpop.xlane.xlu0 %6085
          %v6087 = vsub.f32 %v6079, %v6084
          %v6088 = vsub.f32 %v6080, %v6086
          %v6089 = vadd.f32 %v6087, %v6088
          %v6090 = vrot.slane %v6089, 4
          %v6091 = vadd.f32 %v6089, %v6090
          %v6092 = vrot.slane %v6091, 2
          %v6093 = vadd.f32 %v6091, %v6092
          %v6094 = vrot.slane %v6093, 1
          %v6095 = vadd.f32 %v6093, %v6094
          %v6096 = vmul.f32 %v6095, 0.0625
          %vm6097 = vcmask 0
          %6098 = vst.msk [vmem:[#allocation9] sm:$0x1] %vm6097, %v6096
        $region48: #{_lambda_.1} parent=35 // pred_fallthru
          _
        // Predicated region
        $region49: #{_lambda_.1} parent=35 // pred_check
          %p6099 = pneg %p139
        $region50: #{_lambda_.1} parent=35 // pred_check_branch
          %6101 = sbr.rel (%p6099) target = $region52
        $region51: #{_lambda_.1} parent=35 // pred_region
          %s6103 = ssub.s32 16, 16
          %6104 = vsyncadd [#allocation6], %s6103
          %s6106 = sshll.u32 [#allocation9], 4
          %s6107 = int_to_ptr.vmem [resolvable:$true] %s6106
          %6109 = dma.vmem_to_hbm [thread:$0]  %s6107, 16, %s4, [#allocation6]
        $region52: #{_lambda_.1} parent=35 // pred_fallthru
          _
        // Predicated region
        $region53: #{_lambda_.1} parent=35 // pred_check
          %p6110 = pneg %p139
        $region54: #{_lambda_.1} parent=35 // pred_check_branch
          %6112 = sbr.rel (%p6110) target = $region56
        $region55: #{_lambda_.1} parent=35 // pred_region
          %6113 = dma.done [#allocation6], 16
        $region56: #{_lambda_.1} parent=35 // pred_fallthru
          _
      $region36: #{_lambda_.1} parent=5 // pred_fallthru
        _
      %p6114 = scmp.le.s32.totalorder 2, %s17
      // Predicated region
      $region57: #{_lambda_.1} parent=5 // pred_check
        %p6115 = pneg %p6114
      $region58: #{_lambda_.1} parent=5 // pred_check_branch
        %6117 = sbr.rel (%p6115) target = $region60
      $region59: #{_lambda_.1} parent=5 // pred_region
        %s6118 = ssub.s32 %s17, 2
      $region60: #{_lambda_.1} parent=5 // pred_fallthru
        _
    $region6: #{_lambda_.1} parent=1 // loop_footer
      %s21 = sadd.s32 1, %s17
    $region7: #{_lambda_.1} parent=1 // loop_footer_branch
      %16 = sbr.rel target = $region3
    $region8: #{_lambda_.1} parent=1 // loop_exit
      _
    %6119 = vsyncpa [#allocation5], 1
    %s6120 = scalar_lea.sflag [#allocation5], 1
    %6121 = vsyncpa %s6120, 1
    %6122 = vsyncpa [#allocation8], 1
    %s6123 = scalar_lea.sflag [#allocation8], 1
    %6124 = vsyncpa %s6123, 1
    %6125 = vsyncpa [#allocation6], 1
    %s6126 = scalar_lea.sflag [#allocation6], 1
    %6127 = vsyncpa %s6126, 1

</llo_original>
